<compile_context>
chip_gen: v7x
topology: tpu7x:2x2x1
jax: 0.10.0
libtpu: 0.0.40
codegen_flags: <defaults>
</compile_context>

<pallas_src>
import functools

import jax
import jax.numpy as jnp
import numpy as np
from jax.experimental import pallas as pl
from jax.experimental.pallas import tpu as pltpu


# --------------------------------------------------------------------------
# Kernel A: fused linear (+ mean gate via block-diagonal weight) + gs scale
# + scatter-max into a resident [sizes, units] accumulator.
# --------------------------------------------------------------------------
def fused_point_kernel(x_ref, *rest, activate, has_gs, has_mean, units, sizes):
    it = iter(rest)
    gs_ref = next(it) if has_gs else None
    idx_ref = next(it)      # [tn, 1] int32 (point -> voxel id)
    w_ref = next(it)        # [K, W_out]  (block-diagonal [W^T ; Wm^T] if has_mean)
    b_ref = next(it)        # [1, W_out]
    o_ref = next(it)        # [tn, units]          per-tile output
    mf_ref = next(it)       # [sizes, units]       resident accumulator

    # One MXU matmul covers both linears when `mean` is present.
    z = jnp.dot(x_ref[...], w_ref[...], preferred_element_type=jnp.float32)
    z = z + b_ref[...]
    if activate:
        z = jnp.maximum(z, 0.0)
    if has_mean:
        x = z[:, :units] * z[:, units:]
    else:
        x = z
    if has_gs:
        x = x * gs_ref[...]
    o_ref[...] = x

    # ---- scatter-max (torch_scatter.scatter_max with zero-initialised out) ----
    @pl.when(pl.program_id(0) == 0)
    def _():
        mf_ref[...] = jnp.zeros_like(mf_ref)

    ids = idx_ref[...]                                               # [tn, 1]
    vox = jax.lax.broadcasted_iota(jnp.int32, (1, sizes), 1)         # [1, sizes]
    mask = ids == vox                                                # [tn, sizes], one lane-dense compare
    rows = []
    for v in range(sizes):
        # zero-init `out` => masked-out points contribute 0 (max with 0).
        masked = jnp.where(mask[:, v:v + 1], x, 0.0)                 # [tn, units]
        rows.append(jnp.max(masked, axis=0, keepdims=True))          # [1, units]
    tile_max = jnp.concatenate(rows, axis=0)                         # [sizes, units]
    mf_ref[...] = jnp.maximum(mf_ref[...], tile_max)                 # single store
    # TODO(synk): for very large `sizes`, replace this unrolled per-voxel loop
    # with a sorted-segment reduction driven by PrefetchScalarGridSpec offsets.


# --------------------------------------------------------------------------
# Kernel B: gather max_feature rows by idx (chunked one-hot matmul) and
# concatenate with x; single lane-dense store of the [tn, 2*units] tile.
# --------------------------------------------------------------------------
def gather_concat_kernel(idx_ref, x_ref, mf_ref, o_ref, *, sizes, units, vchunk):
    tn = x_ref.shape[0]
    ids = idx_ref[...]                                               # [tn, 1]
    gathered = jnp.zeros((tn, units), jnp.float32)
    for c0 in range(0, sizes, vchunk):
        c = min(vchunk, sizes - c0)
        vox = c0 + jax.lax.broadcasted_iota(jnp.int32, (1, c), 1)    # [1, c]
        onehot = (ids == vox).astype(jnp.float32)                    # [tn, c]
        gathered = gathered + jnp.dot(onehot, mf_ref[pl.ds(c0, c), :],
                                      preferred_element_type=jnp.float32)
    o_ref[...] = jnp.concatenate([x_ref[...], gathered], axis=1)


# --------------------------------------------------------------------------
# Wrapper mirroring VFELayerMinus.forward
# --------------------------------------------------------------------------
def vfe_layer_minus_forward(params, inputs, idx, idx_used, sizes,
                            mean=None, activate=False, gs=None,
                            tn=256, vchunk=512):
    n, cin = inputs.shape
    units = params["w"].shape[0]
    assert n % tn == 0, "n_points must be divisible by the point tile tn"
    has_mean = mean is not None
    has_gs = gs is not None

    if has_mean:
        wd = mean.shape[1]
        k_dim = cin + wd
        feat = jnp.concatenate([inputs, mean], axis=1)               # [n, cin+wd]
        w_in = jnp.zeros((k_dim, 2 * units), jnp.float32)
        w_in = w_in.at[:cin, :units].set(params["w"].T)              # linear
        w_in = w_in.at[cin:, units:].set(params["wm"].T)             # weight_linear
        b_in = jnp.concatenate([params["b"], params["bm"]])[None, :]  # [1, 2*units]
        w_out = 2 * units
    else:
        k_dim = cin
        feat = inputs
        w_in = params["w"].T
        b_in = params["b"][None, :]
        w_out = units

    idx2 = idx.astype(jnp.int32).reshape(n, 1)
    idx_used2 = idx_used.astype(jnp.int32).reshape(n, 1)

    # ---- Kernel A: fused linear + gate + gs + scatter-max ----
    arrays = [feat]
    specs = [pl.BlockSpec((tn, k_dim), lambda i: (i, 0))]
    if has_gs:
        gs2 = gs if gs.ndim == 2 else gs[:, None]
        arrays.append(gs2)
        specs.append(pl.BlockSpec((tn, gs2.shape[1]), lambda i: (i, 0)))
    arrays += [idx_used2, w_in, b_in]
    specs += [pl.BlockSpec((tn, 1), lambda i: (i, 0)),
              pl.BlockSpec((k_dim, w_out), lambda i: (0, 0)),
              pl.BlockSpec((1, w_out), lambda i: (0, 0))]

    x, max_feature = pl.pallas_call(
        functools.partial(fused_point_kernel, activate=activate, has_gs=has_gs,
                          has_mean=has_mean, units=units, sizes=sizes),
        out_shape=(jax.ShapeDtypeStruct((n, units), jnp.float32),
                   jax.ShapeDtypeStruct((sizes, units), jnp.float32)),
        grid=(n // tn,),
        in_specs=specs,
        out_specs=[pl.BlockSpec((tn, units), lambda i: (i, 0)),
                   pl.BlockSpec((sizes, units), lambda i: (0, 0))],  # resident accumulator
        compiler_params=pltpu.CompilerParams(
            dimension_semantics=("arbitrary",)),   # point axis carries the accumulator
    )(*arrays)

    # ---- Kernel B: gather + concat ----
    x_concated = pl.pallas_call(
        functools.partial(gather_concat_kernel, sizes=sizes, units=units,
                          vchunk=min(vchunk, sizes)),
        out_shape=jax.ShapeDtypeStruct((n, 2 * units), jnp.float32),
        grid=(n // tn,),
        in_specs=[pl.BlockSpec((tn, 1), lambda i: (i, 0)),
                  pl.BlockSpec((tn, units), lambda i: (i, 0)),
                  pl.BlockSpec((sizes, units), lambda i: (0, 0))],
        out_specs=pl.BlockSpec((tn, 2 * units), lambda i: (i, 0)),
        compiler_params=pltpu.CompilerParams(
            dimension_semantics=("parallel",)),
    )(idx2, x, max_feature)

    return x_concated, max_feature


# --------------------------------------------------------------------------
# Pure-JAX reference (for correctness check)
# --------------------------------------------------------------------------
def reference_forward(params, inputs, idx, idx_used, sizes, mean, activate, gs):
    x = inputs @ params["w"].T + params["b"]
    if activate:
        x = jnp.maximum(x, 0.0)
    if gs is not None:
        x = x * gs
    if mean is not None:
        xw = mean @ params["wm"].T + params["bm"]
        if activate:
            xw = jnp.maximum(xw, 0.0)
        x = x * xw
    seg = jax.ops.segment_max(x, idx_used, num_segments=sizes)
    max_feature = jnp.maximum(seg, 0.0)        # zero-initialized `out` in scatter_max
    gathered = max_feature[idx, :]
    return jnp.concatenate([x, gathered], axis=1), max_feature


if __name__ == "__main__":
    # Module config: in_channels=16, out_channels=32, last_layer=False -> units=16
    in_channels = 16
    out_channels = 32
    units = out_channels // 2
    weight_dims = 7

    n_points = 1024
    sizes = 32          # number of voxels
    tn = 256            # point tile (sized for the 256x256 MXU on v6e/v7x)

    key = jax.random.PRNGKey(0)
    k1, k2, k3, k4, k5, k6, k7, k8 = jax.random.split(key, 8)

    # Deterministic parameter init (synthetic, not a checkpoint)
    params = {
        "w":  0.1 * jax.random.normal(k1, (units, in_channels), jnp.float32),
        "b":  0.1 * jax.random.normal(k2, (units,), jnp.float32),
        "wm": 0.1 * jax.random.normal(k3, (units, weight_dims), jnp.float32),
        "bm": 0.1 * jax.random.normal(k4, (units,), jnp.float32),
    }

    inputs = jax.random.normal(k5, (n_points, in_channels), jnp.float32)
    mean = jax.random.normal(k6, (n_points, weight_dims), jnp.float32)
    gs = jax.random.uniform(k7, (n_points, 1), jnp.float32)
    idx = jax.random.randint(k8, (n_points,), 0, sizes, jnp.int32)  # must lie in [0, sizes)
    idx_used = idx  # same point->voxel mapping used for scatter and gather

    x_cat, max_feat = vfe_layer_minus_forward(
        params, inputs, idx, idx_used, sizes,
        mean=mean, activate=True, gs=gs, tn=tn)
    x_cat = jax.block_until_ready(x_cat)
    max_feat = jax.block_until_ready(max_feat)

    x_cat_ref, max_feat_ref = reference_forward(
        params, inputs, idx, idx_used, sizes, mean, True, gs)

    assert x_cat.shape == (n_points, 2 * units)
    assert max_feat.shape == (sizes, units)
    np.testing.assert_allclose(np.asarray(x_cat), np.asarray(x_cat_ref),
                               rtol=1e-5, atol=1e-5)
    np.testing.assert_allclose(np.asarray(max_feat), np.asarray(max_feat_ref),
                               rtol=1e-5, atol=1e-5)
    print("KERNEL_OK")
</pallas_src>

<mosaic_0001>
module attributes {stable_mosaic.version = 11 : i64} {
  func.func @fused_point_kernel(%arg0: i32, %arg1: memref<256x23xf32, #tpu.memory_space<vmem>>, %arg2: memref<256x1xf32, #tpu.memory_space<vmem>>, %arg3: memref<256x1xi32, #tpu.memory_space<vmem>>, %arg4: memref<23x32xf32, #tpu.memory_space<vmem>>, %arg5: memref<1x32xf32, #tpu.memory_space<vmem>>, %arg6: memref<256x16xf32, #tpu.memory_space<vmem>>, %arg7: memref<32x16xf32, #tpu.memory_space<vmem>>) attributes {dimension_semantics = [#tpu.dimension_semantics<arbitrary>], iteration_bounds = array<i64: 4>, scalar_prefetch = 0 : i64, scratch_operands = 0 : i64, tpu.core_type = #tpu.core_type<tc>, window_params = [{transform_indices = @transform_0, window_bounds = array<i64: 256, 23>}, {transform_indices = @transform_1, window_bounds = array<i64: 256, 1>}, {transform_indices = @transform_2, window_bounds = array<i64: 256, 1>}, {pipeline_mode = #tpu.pipeline_mode<synchronous>, transform_indices = @transform_3, window_bounds = array<i64: 23, 32>}, {pipeline_mode = #tpu.pipeline_mode<synchronous>, transform_indices = @transform_4, window_bounds = array<i64: 1, 32>}, {transform_indices = @transform_5, window_bounds = array<i64: 256, 16>}, {pipeline_mode = #tpu.pipeline_mode<synchronous>, transform_indices = @transform_6, window_bounds = array<i64: 32, 16>}]} {
    %c0 = arith.constant 0 : index
    %c0_0 = arith.constant 0 : index
    %0 = vector.load %arg1[%c0, %c0_0] : memref<256x23xf32, #tpu.memory_space<vmem>>, vector<256x23xf32>
    %c0_1 = arith.constant 0 : index
    %c0_2 = arith.constant 0 : index
    %1 = vector.load %arg4[%c0_1, %c0_2] : memref<23x32xf32, #tpu.memory_space<vmem>>, vector<23x32xf32>
    %cst = arith.constant dense<0.000000e+00> : vector<256x32xf32>
    %2 = tpu.matmul %0, %1, %cst {dimension_numbers = #tpu.dot_dimension_numbers<[1], [0], [0], [1], [0, 0, 1, 1], [], []>} : vector<256x23xf32>, vector<23x32xf32>, vector<256x32xf32> -> vector<256x32xf32>
    %c0_3 = arith.constant 0 : index
    %c0_4 = arith.constant 0 : index
    %3 = vector.load %arg5[%c0_3, %c0_4] : memref<1x32xf32, #tpu.memory_space<vmem>>, vector<1x32xf32>
    %4 = vector.broadcast %3 : vector<1x32xf32> to vector<256x32xf32>
    %5 = arith.addf %2, %4 : vector<256x32xf32>
    %cst_5 = arith.constant 0.000000e+00 : f32
    %6 = vector.broadcast %cst_5 : f32 to vector<256x32xf32>
    %7 = arith.maximumf %5, %6 : vector<256x32xf32>
    %8 = vector.extract_strided_slice %7 {offsets = [0, 0], sizes = [256, 16], strides = [1, 1]} : vector<256x32xf32> to vector<256x16xf32>
    %9 = vector.extract_strided_slice %7 {offsets = [0, 16], sizes = [256, 16], strides = [1, 1]} : vector<256x32xf32> to vector<256x16xf32>
    %10 = arith.mulf %8, %9 : vector<256x16xf32>
    %c0_6 = arith.constant 0 : index
    %c0_7 = arith.constant 0 : index
    %11 = vector.load %arg2[%c0_6, %c0_7] : memref<256x1xf32, #tpu.memory_space<vmem>>, vector<256x1xf32>
    %12 = vector.broadcast %11 : vector<256x1xf32> to vector<256x16xf32>
    %13 = arith.mulf %10, %12 : vector<256x16xf32>
    %c0_8 = arith.constant 0 : index
    %c0_9 = arith.constant 0 : index
    %14 = vector.load %arg6[%c0_8, %c0_9] : memref<256x16xf32, #tpu.memory_space<vmem>>, vector<256x16xf32>
    tpu.vector_store %arg6[%c0_8, %c0_9], %13 {strides = array<i32>} : memref<256x16xf32, #tpu.memory_space<vmem>>, vector<256x16xf32>,
    %c0_i32 = arith.constant 0 : i32
    %15 = arith.cmpi eq, %arg0, %c0_i32 : i32
    %16 = arith.extui %15 : i1 to i32
    %c0_i32_10 = arith.constant 0 : i32
    %17 = arith.cmpi ne, %16, %c0_i32_10 : i32
    scf.if %17 {
      %cst_81 = arith.constant 0.000000e+00 : f32
      %253 = vector.broadcast %cst_81 : f32 to vector<32x16xf32>
      %c0_82 = arith.constant 0 : index
      %c0_83 = arith.constant 0 : index
      %254 = vector.load %arg7[%c0_82, %c0_83] : memref<32x16xf32, #tpu.memory_space<vmem>>, vector<32x16xf32>
      tpu.vector_store %arg7[%c0_82, %c0_83], %253 {strides = array<i32>} : memref<32x16xf32, #tpu.memory_space<vmem>>, vector<32x16xf32>,
    } else {
    }
    %c0_11 = arith.constant 0 : index
    %c0_12 = arith.constant 0 : index
    %18 = vector.load %arg3[%c0_11, %c0_12] : memref<256x1xi32, #tpu.memory_space<vmem>>, vector<256x1xi32>
    %19 = tpu.iota {dimensions = array<i32: 1>} : vector<1x32xi32>
    %20 = vector.broadcast %18 : vector<256x1xi32> to vector<256x32xi32>
    %21 = vector.broadcast %19 : vector<1x32xi32> to vector<256x32xi32>
    %22 = arith.cmpi eq, %20, %21 : vector<256x32xi32>
    %23 = vector.extract_strided_slice %22 {offsets = [0, 0], sizes = [256, 1], strides = [1, 1]} : vector<256x32xi1> to vector<256x1xi1>
    %cst_13 = arith.constant 0.000000e+00 : f32
    %24 = vector.shape_cast %23 : vector<256x1xi1> to vector<256x1xi1>
    %25 = vector.broadcast %24 : vector<256x1xi1> to vector<256x16xi1>
    %26 = vector.broadcast %cst_13 : f32 to vector<256x16xf32>
    %27 = arith.select %25, %13, %26 : vector<256x16xi1>, vector<256x16xf32>
    %cst_14 = arith.constant dense<0xFF800000> : vector<16xf32>
    %28 = vector.multi_reduction <maximumf>, %27, %cst_14 [0] : vector<256x16xf32> to vector<16xf32>
    %29 = vector.shape_cast %28 : vector<16xf32> to vector<1x16xf32>
    %30 = vector.extract_strided_slice %22 {offsets = [0, 1], sizes = [256, 1], strides = [1, 1]} : vector<256x32xi1> to vector<256x1xi1>
    %cst_15 = arith.constant 0.000000e+00 : f32
    %31 = vector.shape_cast %30 : vector<256x1xi1> to vector<256x1xi1>
    %32 = vector.broadcast %31 : vector<256x1xi1> to vector<256x16xi1>
    %33 = vector.broadcast %cst_15 : f32 to vector<256x16xf32>
    %34 = arith.select %32, %13, %33 : vector<256x16xi1>, vector<256x16xf32>
    %cst_16 = arith.constant dense<0xFF800000> : vector<16xf32>
    %35 = vector.multi_reduction <maximumf>, %34, %cst_16 [0] : vector<256x16xf32> to vector<16xf32>
    %36 = vector.shape_cast %35 : vector<16xf32> to vector<1x16xf32>
    %37 = vector.extract_strided_slice %22 {offsets = [0, 2], sizes = [256, 1], strides = [1, 1]} : vector<256x32xi1> to vector<256x1xi1>
    %cst_17 = arith.constant 0.000000e+00 : f32
    %38 = vector.shape_cast %37 : vector<256x1xi1> to vector<256x1xi1>
    %39 = vector.broadcast %38 : vector<256x1xi1> to vector<256x16xi1>
    %40 = vector.broadcast %cst_17 : f32 to vector<256x16xf32>
    %41 = arith.select %39, %13, %40 : vector<256x16xi1>, vector<256x16xf32>
    %cst_18 = arith.constant dense<0xFF800000> : vector<16xf32>
    %42 = vector.multi_reduction <maximumf>, %41, %cst_18 [0] : vector<256x16xf32> to vector<16xf32>
    %43 = vector.shape_cast %42 : vector<16xf32> to vector<1x16xf32>
    %44 = vector.extract_strided_slice %22 {offsets = [0, 3], sizes = [256, 1], strides = [1, 1]} : vector<256x32xi1> to vector<256x1xi1>
    %cst_19 = arith.constant 0.000000e+00 : f32
    %45 = vector.shape_cast %44 : vector<256x1xi1> to vector<256x1xi1>
    %46 = vector.broadcast %45 : vector<256x1xi1> to vector<256x16xi1>
    %47 = vector.broadcast %cst_19 : f32 to vector<256x16xf32>
    %48 = arith.select %46, %13, %47 : vector<256x16xi1>, vector<256x16xf32>
    %cst_20 = arith.constant dense<0xFF800000> : vector<16xf32>
    %49 = vector.multi_reduction <maximumf>, %48, %cst_20 [0] : vector<256x16xf32> to vector<16xf32>
    %50 = vector.shape_cast %49 : vector<16xf32> to vector<1x16xf32>
    %51 = vector.extract_strided_slice %22 {offsets = [0, 4], sizes = [256, 1], strides = [1, 1]} : vector<256x32xi1> to vector<256x1xi1>
    %cst_21 = arith.constant 0.000000e+00 : f32
    %52 = vector.shape_cast %51 : vector<256x1xi1> to vector<256x1xi1>
    %53 = vector.broadcast %52 : vector<256x1xi1> to vector<256x16xi1>
    %54 = vector.broadcast %cst_21 : f32 to vector<256x16xf32>
    %55 = arith.select %53, %13, %54 : vector<256x16xi1>, vector<256x16xf32>
    %cst_22 = arith.constant dense<0xFF800000> : vector<16xf32>
    %56 = vector.multi_reduction <maximumf>, %55, %cst_22 [0] : vector<256x16xf32> to vector<16xf32>
    %57 = vector.shape_cast %56 : vector<16xf32> to vector<1x16xf32>
    %58 = vector.extract_strided_slice %22 {offsets = [0, 5], sizes = [256, 1], strides = [1, 1]} : vector<256x32xi1> to vector<256x1xi1>
    %cst_23 = arith.constant 0.000000e+00 : f32
    %59 = vector.shape_cast %58 : vector<256x1xi1> to vector<256x1xi1>
    %60 = vector.broadcast %59 : vector<256x1xi1> to vector<256x16xi1>
    %61 = vector.broadcast %cst_23 : f32 to vector<256x16xf32>
    %62 = arith.select %60, %13, %61 : vector<256x16xi1>, vector<256x16xf32>
    %cst_24 = arith.constant dense<0xFF800000> : vector<16xf32>
    %63 = vector.multi_reduction <maximumf>, %62, %cst_24 [0] : vector<256x16xf32> to vector<16xf32>
    %64 = vector.shape_cast %63 : vector<16xf32> to vector<1x16xf32>
    %65 = vector.extract_strided_slice %22 {offsets = [0, 6], sizes = [256, 1], strides = [1, 1]} : vector<256x32xi1> to vector<256x1xi1>
    %cst_25 = arith.constant 0.000000e+00 : f32
    %66 = vector.shape_cast %65 : vector<256x1xi1> to vector<256x1xi1>
    %67 = vector.broadcast %66 : vector<256x1xi1> to vector<256x16xi1>
    %68 = vector.broadcast %cst_25 : f32 to vector<256x16xf32>
    %69 = arith.select %67, %13, %68 : vector<256x16xi1>, vector<256x16xf32>
    %cst_26 = arith.constant dense<0xFF800000> : vector<16xf32>
    %70 = vector.multi_reduction <maximumf>, %69, %cst_26 [0] : vector<256x16xf32> to vector<16xf32>
    %71 = vector.shape_cast %70 : vector<16xf32> to vector<1x16xf32>
    %72 = vector.extract_strided_slice %22 {offsets = [0, 7], sizes = [256, 1], strides = [1, 1]} : vector<256x32xi1> to vector<256x1xi1>
    %cst_27 = arith.constant 0.000000e+00 : f32
    %73 = vector.shape_cast %72 : vector<256x1xi1> to vector<256x1xi1>
    %74 = vector.broadcast %73 : vector<256x1xi1> to vector<256x16xi1>
    %75 = vector.broadcast %cst_27 : f32 to vector<256x16xf32>
    %76 = arith.select %74, %13, %75 : vector<256x16xi1>, vector<256x16xf32>
    %cst_28 = arith.constant dense<0xFF800000> : vector<16xf32>
    %77 = vector.multi_reduction <maximumf>, %76, %cst_28 [0] : vector<256x16xf32> to vector<16xf32>
    %78 = vector.shape_cast %77 : vector<16xf32> to vector<1x16xf32>
    %79 = vector.extract_strided_slice %22 {offsets = [0, 8], sizes = [256, 1], strides = [1, 1]} : vector<256x32xi1> to vector<256x1xi1>
    %cst_29 = arith.constant 0.000000e+00 : f32
    %80 = vector.shape_cast %79 : vector<256x1xi1> to vector<256x1xi1>
    %81 = vector.broadcast %80 : vector<256x1xi1> to vector<256x16xi1>
    %82 = vector.broadcast %cst_29 : f32 to vector<256x16xf32>
    %83 = arith.select %81, %13, %82 : vector<256x16xi1>, vector<256x16xf32>
    %cst_30 = arith.constant dense<0xFF800000> : vector<16xf32>
    %84 = vector.multi_reduction <maximumf>, %83, %cst_30 [0] : vector<256x16xf32> to vector<16xf32>
    %85 = vector.shape_cast %84 : vector<16xf32> to vector<1x16xf32>
    %86 = vector.extract_strided_slice %22 {offsets = [0, 9], sizes = [256, 1], strides = [1, 1]} : vector<256x32xi1> to vector<256x1xi1>
    %cst_31 = arith.constant 0.000000e+00 : f32
    %87 = vector.shape_cast %86 : vector<256x1xi1> to vector<256x1xi1>
    %88 = vector.broadcast %87 : vector<256x1xi1> to vector<256x16xi1>
    %89 = vector.broadcast %cst_31 : f32 to vector<256x16xf32>
    %90 = arith.select %88, %13, %89 : vector<256x16xi1>, vector<256x16xf32>
    %cst_32 = arith.constant dense<0xFF800000> : vector<16xf32>
    %91 = vector.multi_reduction <maximumf>, %90, %cst_32 [0] : vector<256x16xf32> to vector<16xf32>
    %92 = vector.shape_cast %91 : vector<16xf32> to vector<1x16xf32>
    %93 = vector.extract_strided_slice %22 {offsets = [0, 10], sizes = [256, 1], strides = [1, 1]} : vector<256x32xi1> to vector<256x1xi1>
    %cst_33 = arith.constant 0.000000e+00 : f32
    %94 = vector.shape_cast %93 : vector<256x1xi1> to vector<256x1xi1>
    %95 = vector.broadcast %94 : vector<256x1xi1> to vector<256x16xi1>
    %96 = vector.broadcast %cst_33 : f32 to vector<256x16xf32>
    %97 = arith.select %95, %13, %96 : vector<256x16xi1>, vector<256x16xf32>
    %cst_34 = arith.constant dense<0xFF800000> : vector<16xf32>
    %98 = vector.multi_reduction <maximumf>, %97, %cst_34 [0] : vector<256x16xf32> to vector<16xf32>
    %99 = vector.shape_cast %98 : vector<16xf32> to vector<1x16xf32>
    %100 = vector.extract_strided_slice %22 {offsets = [0, 11], sizes = [256, 1], strides = [1, 1]} : vector<256x32xi1> to vector<256x1xi1>
    %cst_35 = arith.constant 0.000000e+00 : f32
    %101 = vector.shape_cast %100 : vector<256x1xi1> to vector<256x1xi1>
    %102 = vector.broadcast %101 : vector<256x1xi1> to vector<256x16xi1>
    %103 = vector.broadcast %cst_35 : f32 to vector<256x16xf32>
    %104 = arith.select %102, %13, %103 : vector<256x16xi1>, vector<256x16xf32>
    %cst_36 = arith.constant dense<0xFF800000> : vector<16xf32>
    %105 = vector.multi_reduction <maximumf>, %104, %cst_36 [0] : vector<256x16xf32> to vector<16xf32>
    %106 = vector.shape_cast %105 : vector<16xf32> to vector<1x16xf32>
    %107 = vector.extract_strided_slice %22 {offsets = [0, 12], sizes = [256, 1], strides = [1, 1]} : vector<256x32xi1> to vector<256x1xi1>
    %cst_37 = arith.constant 0.000000e+00 : f32
    %108 = vector.shape_cast %107 : vector<256x1xi1> to vector<256x1xi1>
    %109 = vector.broadcast %108 : vector<256x1xi1> to vector<256x16xi1>
    %110 = vector.broadcast %cst_37 : f32 to vector<256x16xf32>
    %111 = arith.select %109, %13, %110 : vector<256x16xi1>, vector<256x16xf32>
    %cst_38 = arith.constant dense<0xFF800000> : vector<16xf32>
    %112 = vector.multi_reduction <maximumf>, %111, %cst_38 [0] : vector<256x16xf32> to vector<16xf32>
    %113 = vector.shape_cast %112 : vector<16xf32> to vector<1x16xf32>
    %114 = vector.extract_strided_slice %22 {offsets = [0, 13], sizes = [256, 1], strides = [1, 1]} : vector<256x32xi1> to vector<256x1xi1>
    %cst_39 = arith.constant 0.000000e+00 : f32
    %115 = vector.shape_cast %114 : vector<256x1xi1> to vector<256x1xi1>
    %116 = vector.broadcast %115 : vector<256x1xi1> to vector<256x16xi1>
    %117 = vector.broadcast %cst_39 : f32 to vector<256x16xf32>
    %118 = arith.select %116, %13, %117 : vector<256x16xi1>, vector<256x16xf32>
    %cst_40 = arith.constant dense<0xFF800000> : vector<16xf32>
    %119 = vector.multi_reduction <maximumf>, %118, %cst_40 [0] : vector<256x16xf32> to vector<16xf32>
    %120 = vector.shape_cast %119 : vector<16xf32> to vector<1x16xf32>
    %121 = vector.extract_strided_slice %22 {offsets = [0, 14], sizes = [256, 1], strides = [1, 1]} : vector<256x32xi1> to vector<256x1xi1>
    %cst_41 = arith.constant 0.000000e+00 : f32
    %122 = vector.shape_cast %121 : vector<256x1xi1> to vector<256x1xi1>
    %123 = vector.broadcast %122 : vector<256x1xi1> to vector<256x16xi1>
    %124 = vector.broadcast %cst_41 : f32 to vector<256x16xf32>
    %125 = arith.select %123, %13, %124 : vector<256x16xi1>, vector<256x16xf32>
    %cst_42 = arith.constant dense<0xFF800000> : vector<16xf32>
    %126 = vector.multi_reduction <maximumf>, %125, %cst_42 [0] : vector<256x16xf32> to vector<16xf32>
    %127 = vector.shape_cast %126 : vector<16xf32> to vector<1x16xf32>
    %128 = vector.extract_strided_slice %22 {offsets = [0, 15], sizes = [256, 1], strides = [1, 1]} : vector<256x32xi1> to vector<256x1xi1>
    %cst_43 = arith.constant 0.000000e+00 : f32
    %129 = vector.shape_cast %128 : vector<256x1xi1> to vector<256x1xi1>
    %130 = vector.broadcast %129 : vector<256x1xi1> to vector<256x16xi1>
    %131 = vector.broadcast %cst_43 : f32 to vector<256x16xf32>
    %132 = arith.select %130, %13, %131 : vector<256x16xi1>, vector<256x16xf32>
    %cst_44 = arith.constant dense<0xFF800000> : vector<16xf32>
    %133 = vector.multi_reduction <maximumf>, %132, %cst_44 [0] : vector<256x16xf32> to vector<16xf32>
    %134 = vector.shape_cast %133 : vector<16xf32> to vector<1x16xf32>
    %135 = vector.extract_strided_slice %22 {offsets = [0, 16], sizes = [256, 1], strides = [1, 1]} : vector<256x32xi1> to vector<256x1xi1>
    %cst_45 = arith.constant 0.000000e+00 : f32
    %136 = vector.shape_cast %135 : vector<256x1xi1> to vector<256x1xi1>
    %137 = vector.broadcast %136 : vector<256x1xi1> to vector<256x16xi1>
    %138 = vector.broadcast %cst_45 : f32 to vector<256x16xf32>
    %139 = arith.select %137, %13, %138 : vector<256x16xi1>, vector<256x16xf32>
    %cst_46 = arith.constant dense<0xFF800000> : vector<16xf32>
    %140 = vector.multi_reduction <maximumf>, %139, %cst_46 [0] : vector<256x16xf32> to vector<16xf32>
    %141 = vector.shape_cast %140 : vector<16xf32> to vector<1x16xf32>
    %142 = vector.extract_strided_slice %22 {offsets = [0, 17], sizes = [256, 1], strides = [1, 1]} : vector<256x32xi1> to vector<256x1xi1>
    %cst_47 = arith.constant 0.000000e+00 : f32
    %143 = vector.shape_cast %142 : vector<256x1xi1> to vector<256x1xi1>
    %144 = vector.broadcast %143 : vector<256x1xi1> to vector<256x16xi1>
    %145 = vector.broadcast %cst_47 : f32 to vector<256x16xf32>
    %146 = arith.select %144, %13, %145 : vector<256x16xi1>, vector<256x16xf32>
    %cst_48 = arith.constant dense<0xFF800000> : vector<16xf32>
    %147 = vector.multi_reduction <maximumf>, %146, %cst_48 [0] : vector<256x16xf32> to vector<16xf32>
    %148 = vector.shape_cast %147 : vector<16xf32> to vector<1x16xf32>
    %149 = vector.extract_strided_slice %22 {offsets = [0, 18], sizes = [256, 1], strides = [1, 1]} : vector<256x32xi1> to vector<256x1xi1>
    %cst_49 = arith.constant 0.000000e+00 : f32
    %150 = vector.shape_cast %149 : vector<256x1xi1> to vector<256x1xi1>
    %151 = vector.broadcast %150 : vector<256x1xi1> to vector<256x16xi1>
    %152 = vector.broadcast %cst_49 : f32 to vector<256x16xf32>
    %153 = arith.select %151, %13, %152 : vector<256x16xi1>, vector<256x16xf32>
    %cst_50 = arith.constant dense<0xFF800000> : vector<16xf32>
    %154 = vector.multi_reduction <maximumf>, %153, %cst_50 [0] : vector<256x16xf32> to vector<16xf32>
    %155 = vector.shape_cast %154 : vector<16xf32> to vector<1x16xf32>
    %156 = vector.extract_strided_slice %22 {offsets = [0, 19], sizes = [256, 1], strides = [1, 1]} : vector<256x32xi1> to vector<256x1xi1>
    %cst_51 = arith.constant 0.000000e+00 : f32
    %157 = vector.shape_cast %156 : vector<256x1xi1> to vector<256x1xi1>
    %158 = vector.broadcast %157 : vector<256x1xi1> to vector<256x16xi1>
    %159 = vector.broadcast %cst_51 : f32 to vector<256x16xf32>
    %160 = arith.select %158, %13, %159 : vector<256x16xi1>, vector<256x16xf32>
    %cst_52 = arith.constant dense<0xFF800000> : vector<16xf32>
    %161 = vector.multi_reduction <maximumf>, %160, %cst_52 [0] : vector<256x16xf32> to vector<16xf32>
    %162 = vector.shape_cast %161 : vector<16xf32> to vector<1x16xf32>
    %163 = vector.extract_strided_slice %22 {offsets = [0, 20], sizes = [256, 1], strides = [1, 1]} : vector<256x32xi1> to vector<256x1xi1>
    %cst_53 = arith.constant 0.000000e+00 : f32
    %164 = vector.shape_cast %163 : vector<256x1xi1> to vector<256x1xi1>
    %165 = vector.broadcast %164 : vector<256x1xi1> to vector<256x16xi1>
    %166 = vector.broadcast %cst_53 : f32 to vector<256x16xf32>
    %167 = arith.select %165, %13, %166 : vector<256x16xi1>, vector<256x16xf32>
    %cst_54 = arith.constant dense<0xFF800000> : vector<16xf32>
    %168 = vector.multi_reduction <maximumf>, %167, %cst_54 [0] : vector<256x16xf32> to vector<16xf32>
    %169 = vector.shape_cast %168 : vector<16xf32> to vector<1x16xf32>
    %170 = vector.extract_strided_slice %22 {offsets = [0, 21], sizes = [256, 1], strides = [1, 1]} : vector<256x32xi1> to vector<256x1xi1>
    %cst_55 = arith.constant 0.000000e+00 : f32
    %171 = vector.shape_cast %170 : vector<256x1xi1> to vector<256x1xi1>
    %172 = vector.broadcast %171 : vector<256x1xi1> to vector<256x16xi1>
    %173 = vector.broadcast %cst_55 : f32 to vector<256x16xf32>
    %174 = arith.select %172, %13, %173 : vector<256x16xi1>, vector<256x16xf32>
    %cst_56 = arith.constant dense<0xFF800000> : vector<16xf32>
    %175 = vector.multi_reduction <maximumf>, %174, %cst_56 [0] : vector<256x16xf32> to vector<16xf32>
    %176 = vector.shape_cast %175 : vector<16xf32> to vector<1x16xf32>
    %177 = vector.extract_strided_slice %22 {offsets = [0, 22], sizes = [256, 1], strides = [1, 1]} : vector<256x32xi1> to vector<256x1xi1>
    %cst_57 = arith.constant 0.000000e+00 : f32
    %178 = vector.shape_cast %177 : vector<256x1xi1> to vector<256x1xi1>
    %179 = vector.broadcast %178 : vector<256x1xi1> to vector<256x16xi1>
    %180 = vector.broadcast %cst_57 : f32 to vector<256x16xf32>
    %181 = arith.select %179, %13, %180 : vector<256x16xi1>, vector<256x16xf32>
    %cst_58 = arith.constant dense<0xFF800000> : vector<16xf32>
    %182 = vector.multi_reduction <maximumf>, %181, %cst_58 [0] : vector<256x16xf32> to vector<16xf32>
    %183 = vector.shape_cast %182 : vector<16xf32> to vector<1x16xf32>
    %184 = vector.extract_strided_slice %22 {offsets = [0, 23], sizes = [256, 1], strides = [1, 1]} : vector<256x32xi1> to vector<256x1xi1>
    %cst_59 = arith.constant 0.000000e+00 : f32
    %185 = vector.shape_cast %184 : vector<256x1xi1> to vector<256x1xi1>
    %186 = vector.broadcast %185 : vector<256x1xi1> to vector<256x16xi1>
    %187 = vector.broadcast %cst_59 : f32 to vector<256x16xf32>
    %188 = arith.select %186, %13, %187 : vector<256x16xi1>, vector<256x16xf32>
    %cst_60 = arith.constant dense<0xFF800000> : vector<16xf32>
    %189 = vector.multi_reduction <maximumf>, %188, %cst_60 [0] : vector<256x16xf32> to vector<16xf32>
    %190 = vector.shape_cast %189 : vector<16xf32> to vector<1x16xf32>
    %191 = vector.extract_strided_slice %22 {offsets = [0, 24], sizes = [256, 1], strides = [1, 1]} : vector<256x32xi1> to vector<256x1xi1>
    %cst_61 = arith.constant 0.000000e+00 : f32
    %192 = vector.shape_cast %191 : vector<256x1xi1> to vector<256x1xi1>
    %193 = vector.broadcast %192 : vector<256x1xi1> to vector<256x16xi1>
    %194 = vector.broadcast %cst_61 : f32 to vector<256x16xf32>
    %195 = arith.select %193, %13, %194 : vector<256x16xi1>, vector<256x16xf32>
    %cst_62 = arith.constant dense<0xFF800000> : vector<16xf32>
    %196 = vector.multi_reduction <maximumf>, %195, %cst_62 [0] : vector<256x16xf32> to vector<16xf32>
    %197 = vector.shape_cast %196 : vector<16xf32> to vector<1x16xf32>
    %198 = vector.extract_strided_slice %22 {offsets = [0, 25], sizes = [256, 1], strides = [1, 1]} : vector<256x32xi1> to vector<256x1xi1>
    %cst_63 = arith.constant 0.000000e+00 : f32
    %199 = vector.shape_cast %198 : vector<256x1xi1> to vector<256x1xi1>
    %200 = vector.broadcast %199 : vector<256x1xi1> to vector<256x16xi1>
    %201 = vector.broadcast %cst_63 : f32 to vector<256x16xf32>
    %202 = arith.select %200, %13, %201 : vector<256x16xi1>, vector<256x16xf32>
    %cst_64 = arith.constant dense<0xFF800000> : vector<16xf32>
    %203 = vector.multi_reduction <maximumf>, %202, %cst_64 [0] : vector<256x16xf32> to vector<16xf32>
    %204 = vector.shape_cast %203 : vector<16xf32> to vector<1x16xf32>
    %205 = vector.extract_strided_slice %22 {offsets = [0, 26], sizes = [256, 1], strides = [1, 1]} : vector<256x32xi1> to vector<256x1xi1>
    %cst_65 = arith.constant 0.000000e+00 : f32
    %206 = vector.shape_cast %205 : vector<256x1xi1> to vector<256x1xi1>
    %207 = vector.broadcast %206 : vector<256x1xi1> to vector<256x16xi1>
    %208 = vector.broadcast %cst_65 : f32 to vector<256x16xf32>
    %209 = arith.select %207, %13, %208 : vector<256x16xi1>, vector<256x16xf32>
    %cst_66 = arith.constant dense<0xFF800000> : vector<16xf32>
    %210 = vector.multi_reduction <maximumf>, %209, %cst_66 [0] : vector<256x16xf32> to vector<16xf32>
    %211 = vector.shape_cast %210 : vector<16xf32> to vector<1x16xf32>
    %212 = vector.extract_strided_slice %22 {offsets = [0, 27], sizes = [256, 1], strides = [1, 1]} : vector<256x32xi1> to vector<256x1xi1>
    %cst_67 = arith.constant 0.000000e+00 : f32
    %213 = vector.shape_cast %212 : vector<256x1xi1> to vector<256x1xi1>
    %214 = vector.broadcast %213 : vector<256x1xi1> to vector<256x16xi1>
    %215 = vector.broadcast %cst_67 : f32 to vector<256x16xf32>
    %216 = arith.select %214, %13, %215 : vector<256x16xi1>, vector<256x16xf32>
    %cst_68 = arith.constant dense<0xFF800000> : vector<16xf32>
    %217 = vector.multi_reduction <maximumf>, %216, %cst_68 [0] : vector<256x16xf32> to vector<16xf32>
    %218 = vector.shape_cast %217 : vector<16xf32> to vector<1x16xf32>
    %219 = vector.extract_strided_slice %22 {offsets = [0, 28], sizes = [256, 1], strides = [1, 1]} : vector<256x32xi1> to vector<256x1xi1>
    %cst_69 = arith.constant 0.000000e+00 : f32
    %220 = vector.shape_cast %219 : vector<256x1xi1> to vector<256x1xi1>
    %221 = vector.broadcast %220 : vector<256x1xi1> to vector<256x16xi1>
    %222 = vector.broadcast %cst_69 : f32 to vector<256x16xf32>
    %223 = arith.select %221, %13, %222 : vector<256x16xi1>, vector<256x16xf32>
    %cst_70 = arith.constant dense<0xFF800000> : vector<16xf32>
    %224 = vector.multi_reduction <maximumf>, %223, %cst_70 [0] : vector<256x16xf32> to vector<16xf32>
    %225 = vector.shape_cast %224 : vector<16xf32> to vector<1x16xf32>
    %226 = vector.extract_strided_slice %22 {offsets = [0, 29], sizes = [256, 1], strides = [1, 1]} : vector<256x32xi1> to vector<256x1xi1>
    %cst_71 = arith.constant 0.000000e+00 : f32
    %227 = vector.shape_cast %226 : vector<256x1xi1> to vector<256x1xi1>
    %228 = vector.broadcast %227 : vector<256x1xi1> to vector<256x16xi1>
    %229 = vector.broadcast %cst_71 : f32 to vector<256x16xf32>
    %230 = arith.select %228, %13, %229 : vector<256x16xi1>, vector<256x16xf32>
    %cst_72 = arith.constant dense<0xFF800000> : vector<16xf32>
    %231 = vector.multi_reduction <maximumf>, %230, %cst_72 [0] : vector<256x16xf32> to vector<16xf32>
    %232 = vector.shape_cast %231 : vector<16xf32> to vector<1x16xf32>
    %233 = vector.extract_strided_slice %22 {offsets = [0, 30], sizes = [256, 1], strides = [1, 1]} : vector<256x32xi1> to vector<256x1xi1>
    %cst_73 = arith.constant 0.000000e+00 : f32
    %234 = vector.shape_cast %233 : vector<256x1xi1> to vector<256x1xi1>
    %235 = vector.broadcast %234 : vector<256x1xi1> to vector<256x16xi1>
    %236 = vector.broadcast %cst_73 : f32 to vector<256x16xf32>
    %237 = arith.select %235, %13, %236 : vector<256x16xi1>, vector<256x16xf32>
    %cst_74 = arith.constant dense<0xFF800000> : vector<16xf32>
    %238 = vector.multi_reduction <maximumf>, %237, %cst_74 [0] : vector<256x16xf32> to vector<16xf32>
    %239 = vector.shape_cast %238 : vector<16xf32> to vector<1x16xf32>
    %240 = vector.extract_strided_slice %22 {offsets = [0, 31], sizes = [256, 1], strides = [1, 1]} : vector<256x32xi1> to vector<256x1xi1>
    %cst_75 = arith.constant 0.000000e+00 : f32
    %241 = vector.shape_cast %240 : vector<256x1xi1> to vector<256x1xi1>
    %242 = vector.broadcast %241 : vector<256x1xi1> to vector<256x16xi1>
    %243 = vector.broadcast %cst_75 : f32 to vector<256x16xf32>
    %244 = arith.select %242, %13, %243 : vector<256x16xi1>, vector<256x16xf32>
    %cst_76 = arith.constant dense<0xFF800000> : vector<16xf32>
    %245 = vector.multi_reduction <maximumf>, %244, %cst_76 [0] : vector<256x16xf32> to vector<16xf32>
    %246 = vector.shape_cast %245 : vector<16xf32> to vector<1x16xf32>
    %247 = tpu.concatenate %29, %36, %43, %50, %57, %64, %71, %78, %85, %92, %99, %106, %113, %120, %127, %134 in 0 : vector<1x16xf32>, vector<1x16xf32>, vector<1x16xf32>, vector<1x16xf32>, vector<1x16xf32>, vector<1x16xf32>, vector<1x16xf32>, vector<1x16xf32>, vector<1x16xf32>, vector<1x16xf32>, vector<1x16xf32>, vector<1x16xf32>, vector<1x16xf32>, vector<1x16xf32>, vector<1x16xf32>, vector<1x16xf32> -> vector<16x16xf32>
    %248 = tpu.concatenate %141, %148, %155, %162, %169, %176, %183, %190, %197, %204, %211, %218, %225, %232, %239, %246 in 0 : vector<1x16xf32>, vector<1x16xf32>, vector<1x16xf32>, vector<1x16xf32>, vector<1x16xf32>, vector<1x16xf32>, vector<1x16xf32>, vector<1x16xf32>, vector<1x16xf32>, vector<1x16xf32>, vector<1x16xf32>, vector<1x16xf32>, vector<1x16xf32>, vector<1x16xf32>, vector<1x16xf32>, vector<1x16xf32> -> vector<16x16xf32>
    %249 = tpu.concatenate %247, %248 in 0 : vector<16x16xf32>, vector<16x16xf32> -> vector<32x16xf32>
    %c0_77 = arith.constant 0 : index
    %c0_78 = arith.constant 0 : index
    %250 = vector.load %arg7[%c0_77, %c0_78] : memref<32x16xf32, #tpu.memory_space<vmem>>, vector<32x16xf32>
    %251 = arith.maximumf %250, %249 : vector<32x16xf32>
    %c0_79 = arith.constant 0 : index
    %c0_80 = arith.constant 0 : index
    %252 = vector.load %arg7[%c0_79, %c0_80] : memref<32x16xf32, #tpu.memory_space<vmem>>, vector<32x16xf32>
    tpu.vector_store %arg7[%c0_79, %c0_80], %251 {strides = array<i32>} : memref<32x16xf32, #tpu.memory_space<vmem>>, vector<32x16xf32>,
    return
  }
  func.func @transform_0(%arg0: i32) -> (i32, i32) {
    %c0_i32 = arith.constant 0 : i32
    %c0_i32_0 = arith.constant 0 : i32
    return %arg0, %c0_i32 : i32, i32
  }
  func.func @transform_1(%arg0: i32) -> (i32, i32) {
    %c0_i32 = arith.constant 0 : i32
    %c0_i32_0 = arith.constant 0 : i32
    return %arg0, %c0_i32 : i32, i32
  }
  func.func @transform_2(%arg0: i32) -> (i32, i32) {
    %c0_i32 = arith.constant 0 : i32
    %c0_i32_0 = arith.constant 0 : i32
    return %arg0, %c0_i32 : i32, i32
  }
  func.func @transform_3(%arg0: i32) -> (i32, i32) {
    %c0_i32 = arith.constant 0 : i32
    %c0_i32_0 = arith.constant 0 : i32
    %c0_i32_1 = arith.constant 0 : i32
    return %c0_i32, %c0_i32_0 : i32, i32
  }
  func.func @transform_4(%arg0: i32) -> (i32, i32) {
    %c0_i32 = arith.constant 0 : i32
    %c0_i32_0 = arith.constant 0 : i32
    %c0_i32_1 = arith.constant 0 : i32
    return %c0_i32, %c0_i32_0 : i32, i32
  }
  func.func @transform_5(%arg0: i32) -> (i32, i32) {
    %c0_i32 = arith.constant 0 : i32
    %c0_i32_0 = arith.constant 0 : i32
    return %arg0, %c0_i32 : i32, i32
  }
  func.func @transform_6(%arg0: i32) -> (i32, i32) {
    %c0_i32 = arith.constant 0 : i32
    %c0_i32_0 = arith.constant 0 : i32
    %c0_i32_1 = arith.constant 0 : i32
    return %c0_i32, %c0_i32_0 : i32, i32
  }
}

</mosaic_0001>

<llo_original>
// kernel: tpu_custom_call.1
$region0: #{tpu_custom_call.1}
  #allocation0 [shape = 'u32[]', space=smem, size = 0x4, offset = 0x4, fixed_abs, tag = 'smem constant byte address 0x4 - core index']
  #allocation1 [shape = 'u32[144,128]{1,0:T(1,128)}', space=vmem, size = 0x12000, scoped, tag = 'internal scratch']
  %s0 = inlined_call_operand.vmem [shape: f32[1024,23], index: 0, kind: input, shape index: {}]
  %s1 = inlined_call_operand.vmem [shape: f32[1024,1], index: 1, kind: input, shape index: {}]
  %s2 = inlined_call_operand.vmem [shape: s32[1024,1], index: 2, kind: input, shape index: {}]
  %s3 = inlined_call_operand.vmem [shape: f32[23,32], index: 3, kind: input, shape index: {}]
  %s4 = inlined_call_operand.vmem [shape: f32[1,32], index: 4, kind: input, shape index: {}]
  %s5 = inlined_call_operand.vmem [shape: f32[1024,16], index: 5, kind: output, shape index: {0}]
  %s6 = inlined_call_operand.vmem [shape: f32[32,16], index: 6, kind: output, shape index: {1}]
  %7 = xla_tuple %s5, %s6
  %s8 = sld [smem:[#allocation0]]
  $region65: #{tpu_custom_call.1} parent=0
    _
  %s10 = ssub.s32 1, %s8
  %s11 = scalar_select 0, %s10, %s8
  loop: start=0, step=1, limit=6
  $region2: #{tpu_custom_call.1} parent=0 // loop_pre_header
    _
  $region3: #{tpu_custom_call.1} parent=0 // loop_header
    %s13 = sphi 0, %s17
    %p14 = scmp.ge.s32.totalorder %s13, 6
    %s23 = sphi 0, %s25
    %s26 = sphi 0, %s23
    %s27 = sphi 0, %s26
    %s43 = sphi 0, %s27
    %s49 = sphi 0, %s51
    %s52 = sphi 0, %s49
    %s53 = sphi 0, %s52
    %s69 = sphi 0, %s53
    %s75 = sphi 0, %s77
    %s78 = sphi 0, %s75
    %s79 = sphi 0, %s78
    %s95 = sphi 0, %s79
    %s99 = sphi 0, %s99
    %s101 = sphi 0, %s99
    %s102 = sphi 0, %s101
    %s116 = sphi 0, %s102
    %s120 = sphi 0, %s120
    %s122 = sphi 0, %s120
    %s123 = sphi 0, %s122
    %s137 = sphi 0, %s123
    %s143 = sphi 0, %s145
    %s146 = sphi 0, %s143
    %s147 = sphi 0, %s146
    %s163 = sphi 0, %s147
    %s167 = sphi 0, %s167
    %s169 = sphi 0, %s167
    %s170 = sphi 0, %s169
    %s184 = sphi 0, %s170
  $region4: #{tpu_custom_call.1} parent=0 // loop_header_branch
    %16 = sbr.rel (%p14) target = $region8
  $region5: #{tpu_custom_call.1} parent=0 // loop_body
    %s18 = ssub.s32 %s13, 1
    %s19 = ssub.s32 %s13, 2
    %s20 = sadd.s32 %s13, 1
    %s21 = ssub.s32 %s13, %s20
    %p22 = scmp.eq.s32.totalorder %s21, 0
    %s24 = sadd.s32 %s23, 1
    %s25 = scalar_select %p22, %s23, %s24
    %p28 = pneg %p22
    %p29 = scmp.eq.s32.totalorder %s13, 3
    %p30 = por %p28, %p29
    %p31 = scmp.ne.s32.totalorder %s23, %s26
    %p32 = scmp.eq.s32.totalorder %s13, 0
    %p33 = por %p31, %p32
    %p34 = scmp.ne.s32.totalorder %s23, %s26
    %p35 = scmp.eq.s32.totalorder %s18, 3
    %p36 = por %p34, %p35
    %p37 = scmp.ne.s32.totalorder %s26, %s27
    %p38 = scmp.eq.s32.totalorder %s18, 0
    %p39 = por %p37, %p38
    %p40 = scmp.ne.s32.totalorder %s26, %s27
    %p41 = scmp.eq.s32.totalorder %s19, 3
    %p42 = por %p40, %p41
    %p44 = scmp.ne.s32.totalorder %s27, %s43
    %p45 = scmp.eq.s32.totalorder %s19, 0
    %p46 = por %p44, %p45
    %s47 = ssub.s32 %s13, %s20
    %p48 = scmp.eq.s32.totalorder %s47, 0
    %s50 = sadd.s32 %s49, 1
    %s51 = scalar_select %p48, %s49, %s50
    %p54 = pneg %p48
    %p55 = scmp.eq.s32.totalorder %s13, 3
    %p56 = por %p54, %p55
    %p57 = scmp.ne.s32.totalorder %s49, %s52
    %p58 = scmp.eq.s32.totalorder %s13, 0
    %p59 = por %p57, %p58
    %p60 = scmp.ne.s32.totalorder %s49, %s52
    %p61 = scmp.eq.s32.totalorder %s18, 3
    %p62 = por %p60, %p61
    %p63 = scmp.ne.s32.totalorder %s52, %s53
    %p64 = scmp.eq.s32.totalorder %s18, 0
    %p65 = por %p63, %p64
    %p66 = scmp.ne.s32.totalorder %s52, %s53
    %p67 = scmp.eq.s32.totalorder %s19, 3
    %p68 = por %p66, %p67
    %p70 = scmp.ne.s32.totalorder %s53, %s69
    %p71 = scmp.eq.s32.totalorder %s19, 0
    %p72 = por %p70, %p71
    %s73 = ssub.s32 %s13, %s20
    %p74 = scmp.eq.s32.totalorder %s73, 0
    %s76 = sadd.s32 %s75, 1
    %s77 = scalar_select %p74, %s75, %s76
    %p80 = pneg %p74
    %p81 = scmp.eq.s32.totalorder %s13, 3
    %p82 = por %p80, %p81
    %p83 = scmp.ne.s32.totalorder %s75, %s78
    %p84 = scmp.eq.s32.totalorder %s13, 0
    %p85 = por %p83, %p84
    %p86 = scmp.ne.s32.totalorder %s75, %s78
    %p87 = scmp.eq.s32.totalorder %s18, 3
    %p88 = por %p86, %p87
    %p89 = scmp.ne.s32.totalorder %s78, %s79
    %p90 = scmp.eq.s32.totalorder %s18, 0
    %p91 = por %p89, %p90
    %p92 = scmp.ne.s32.totalorder %s78, %s79
    %p93 = scmp.eq.s32.totalorder %s19, 3
    %p94 = por %p92, %p93
    %p96 = scmp.ne.s32.totalorder %s79, %s95
    %p97 = scmp.eq.s32.totalorder %s19, 0
    %p98 = por %p96, %p97
    %s100 = sadd.s32 %s99, 1
    %p103 = scmp.eq.s32.totalorder %s13, 3
    %p104 = scmp.ne.s32.totalorder %s99, %s101
    %p105 = scmp.eq.s32.totalorder %s13, 0
    %p106 = por %p104, %p105
    %p107 = scmp.ne.s32.totalorder %s99, %s101
    %p108 = scmp.eq.s32.totalorder %s18, 3
    %p109 = por %p107, %p108
    %p110 = scmp.ne.s32.totalorder %s101, %s102
    %p111 = scmp.eq.s32.totalorder %s18, 0
    %p112 = por %p110, %p111
    %p113 = scmp.ne.s32.totalorder %s101, %s102
    %p114 = scmp.eq.s32.totalorder %s19, 3
    %p115 = por %p113, %p114
    %p117 = scmp.ne.s32.totalorder %s102, %s116
    %p118 = scmp.eq.s32.totalorder %s19, 0
    %p119 = por %p117, %p118
    %s121 = sadd.s32 %s120, 1
    %p124 = scmp.eq.s32.totalorder %s13, 3
    %p125 = scmp.ne.s32.totalorder %s120, %s122
    %p126 = scmp.eq.s32.totalorder %s13, 0
    %p127 = por %p125, %p126
    %p128 = scmp.ne.s32.totalorder %s120, %s122
    %p129 = scmp.eq.s32.totalorder %s18, 3
    %p130 = por %p128, %p129
    %p131 = scmp.ne.s32.totalorder %s122, %s123
    %p132 = scmp.eq.s32.totalorder %s18, 0
    %p133 = por %p131, %p132
    %p134 = scmp.ne.s32.totalorder %s122, %s123
    %p135 = scmp.eq.s32.totalorder %s19, 3
    %p136 = por %p134, %p135
    %p138 = scmp.ne.s32.totalorder %s123, %s137
    %p139 = scmp.eq.s32.totalorder %s19, 0
    %p140 = por %p138, %p139
    %s141 = ssub.s32 %s13, %s20
    %p142 = scmp.eq.s32.totalorder %s141, 0
    %s144 = sadd.s32 %s143, 1
    %s145 = scalar_select %p142, %s143, %s144
    %p148 = pneg %p142
    %p149 = scmp.eq.s32.totalorder %s13, 3
    %p150 = por %p148, %p149
    %p151 = scmp.ne.s32.totalorder %s143, %s146
    %p152 = scmp.eq.s32.totalorder %s13, 0
    %p153 = por %p151, %p152
    %p154 = scmp.ne.s32.totalorder %s143, %s146
    %p155 = scmp.eq.s32.totalorder %s18, 3
    %p156 = por %p154, %p155
    %p157 = scmp.ne.s32.totalorder %s146, %s147
    %p158 = scmp.eq.s32.totalorder %s18, 0
    %p159 = por %p157, %p158
    %p160 = scmp.ne.s32.totalorder %s146, %s147
    %p161 = scmp.eq.s32.totalorder %s19, 3
    %p162 = por %p160, %p161
    %p164 = scmp.ne.s32.totalorder %s147, %s163
    %p165 = scmp.eq.s32.totalorder %s19, 0
    %p166 = por %p164, %p165
    %s168 = sadd.s32 %s167, 1
    %p171 = scmp.eq.s32.totalorder %s13, 3
    %p172 = scmp.ne.s32.totalorder %s167, %s169
    %p173 = scmp.eq.s32.totalorder %s13, 0
    %p174 = por %p172, %p173
    %p175 = scmp.ne.s32.totalorder %s167, %s169
    %p176 = scmp.eq.s32.totalorder %s18, 3
    %p177 = por %p175, %p176
    %p178 = scmp.ne.s32.totalorder %s169, %s170
    %p179 = scmp.eq.s32.totalorder %s18, 0
    %p180 = por %p178, %p179
    %p181 = scmp.ne.s32.totalorder %s169, %s170
    %p182 = scmp.eq.s32.totalorder %s19, 3
    %p183 = por %p181, %p182
    %p185 = scmp.ne.s32.totalorder %s170, %s184
    %p186 = scmp.eq.s32.totalorder %s19, 0
    %p187 = por %p185, %p186
    %p188 = scmp.le.s32.totalorder 1, %s13
    %p189 = scmp.lt.s32.totalorder %s13, 5
    %p190 = pnand %p188, %p189
    %p191 = pneg %p190
    // Predicated region
    $region9: #{tpu_custom_call.1} parent=5 // pred_check
      _
    $region10: #{tpu_custom_call.1} parent=5 // pred_check_branch
      %193 = sbr.rel (%p190) target = $region12
    $region11: #{tpu_custom_call.1} parent=5 // pred_region
      %s194 = ssub.s32 %s13, 1
      // Predicated region
      $region13: #{tpu_custom_call.1} parent=11 // pred_check
        %p195 = pneg %p112
      $region14: #{tpu_custom_call.1} parent=11 // pred_check_branch
        %197 = sbr.rel (%p195) target = $region16
      $region15: #{tpu_custom_call.1} parent=11 // pred_region
        _
      $region16: #{tpu_custom_call.1} parent=11 // pred_fallthru
        _
      // Predicated region
      $region17: #{tpu_custom_call.1} parent=11 // pred_check
        %p198 = pneg %p133
      $region18: #{tpu_custom_call.1} parent=11 // pred_check_branch
        %200 = sbr.rel (%p198) target = $region20
      $region19: #{tpu_custom_call.1} parent=11 // pred_region
        _
      $region20: #{tpu_custom_call.1} parent=11 // pred_fallthru
        _
    $region12: #{tpu_custom_call.1} parent=5 // pred_fallthru
      _
    %p201 = scmp.lt.s32.totalorder %s13, 4
    // Predicated region
    $region21: #{tpu_custom_call.1} parent=5 // pred_check
      %p202 = pneg %p201
    $region22: #{tpu_custom_call.1} parent=5 // pred_check_branch
      %204 = sbr.rel (%p202) target = $region24
    $region23: #{tpu_custom_call.1} parent=5 // pred_region
      // Predicated region
      $region25: #{tpu_custom_call.1} parent=23 // pred_check
        %p205 = pneg %p33
      $region26: #{tpu_custom_call.1} parent=23 // pred_check_branch
        %207 = sbr.rel (%p205) target = $region28
      $region27: #{tpu_custom_call.1} parent=23 // pred_region
        %s208 = smul.u32 32, %s13
        %p209 = scmp.lt.s32.totalorder %s208, 127
        %s210 = scalar_select %p209, %s208, 127
        %s211 = smul.addr %s210, 8
        %s212 = scalar_lea.vmem %s0, %s211
        %s213 = smul.u32 32, %s13
      $region28: #{tpu_custom_call.1} parent=23 // pred_fallthru
        _
      // Predicated region
      $region29: #{tpu_custom_call.1} parent=23 // pred_check
        %p214 = pneg %p59
      $region30: #{tpu_custom_call.1} parent=23 // pred_check_branch
        %216 = sbr.rel (%p214) target = $region32
      $region31: #{tpu_custom_call.1} parent=23 // pred_region
        %s217 = smul.u32 32, %s13
        %p218 = scmp.lt.s32.totalorder %s217, 127
        %s219 = scalar_select %p218, %s217, 127
        %s220 = smul.addr %s219, 8
        %s221 = scalar_lea.vmem %s1, %s220
        %s222 = smul.u32 32, %s13
      $region32: #{tpu_custom_call.1} parent=23 // pred_fallthru
        _
      // Predicated region
      $region33: #{tpu_custom_call.1} parent=23 // pred_check
        %p223 = pneg %p85
      $region34: #{tpu_custom_call.1} parent=23 // pred_check_branch
        %225 = sbr.rel (%p223) target = $region36
      $region35: #{tpu_custom_call.1} parent=23 // pred_region
        %s226 = smul.u32 32, %s13
        %p227 = scmp.lt.s32.totalorder %s226, 127
        %s228 = scalar_select %p227, %s226, 127
        %s229 = smul.addr %s228, 8
        %s230 = scalar_lea.vmem %s2, %s229
        %s231 = smul.u32 32, %s13
      $region36: #{tpu_custom_call.1} parent=23 // pred_fallthru
        _
    $region24: #{tpu_custom_call.1} parent=5 // pred_fallthru
      _
    %p232 = scmp.le.s32.totalorder 1, %s13
    %p233 = scmp.lt.s32.totalorder %s13, 5
    %p234 = pnand %p232, %p233
    %p235 = pneg %p234
    // Predicated region
    $region37: #{tpu_custom_call.1} parent=5 // pred_check
      _
    $region38: #{tpu_custom_call.1} parent=5 // pred_check_branch
      %237 = sbr.rel (%p234) target = $region40
    $region39: #{tpu_custom_call.1} parent=5 // pred_region
      %s238 = ssub.s32 %s13, 1
      %s239 = smul.u32 32, %s18
      %p240 = scmp.lt.s32.totalorder %s239, 127
      %s241 = scalar_select %p240, %s239, 127
      %s242 = smul.addr %s241, 8
      %s243 = scalar_lea.vmem %s0, %s242
      %p244 = pneg %p39
      %p245 = pneg %p36
      %s246 = smul.u32 32, %s18
      %p247 = scmp.lt.s32.totalorder %s246, 127
      %s248 = scalar_select %p247, %s246, 127
      %s249 = smul.addr %s248, 8
      %s250 = scalar_lea.vmem %s1, %s249
      %p251 = pneg %p65
      %p252 = pneg %p62
      %s253 = smul.u32 32, %s18
      %p254 = scmp.lt.s32.totalorder %s253, 127
      %s255 = scalar_select %p254, %s253, 127
      %s256 = smul.addr %s255, 8
      %s257 = scalar_lea.vmem %s2, %s256
      %p258 = pneg %p91
      %p259 = pneg %p88
      %p260 = pneg %p112
      %p261 = pneg %p109
      %p262 = pneg %p133
      %p263 = pneg %p130
      %p264 = pneg %p159
      %p265 = pneg %p156
      %s266 = smul.u32 32, %s18
      %p267 = scmp.lt.s32.totalorder %s266, 127
      %s268 = scalar_select %p267, %s266, 127
      %s269 = smul.addr %s268, 8
      %s270 = scalar_lea.vmem %s5, %s269
      %p271 = pneg %p180
      %p272 = pneg %p177
      %s273 = smul.u32 32, %s18
      %p274 = scmp.lt.s32.totalorder %s273, 127
      %s275 = scalar_select %p274, %s273, 127
      %s276 = smul.addr %s275, 8
      %s277 = scalar_lea.vmem %s0, %s276
      %s278 = smul.u32 32, %s18
      %s279 = smul.u32 32, %s18
      %p280 = scmp.lt.s32.totalorder %s279, 127
      %s281 = scalar_select %p280, %s279, 127
      %s282 = smul.addr %s281, 8
      %s283 = scalar_lea.vmem %s1, %s282
      %s284 = smul.u32 32, %s18
      %s285 = smul.u32 32, %s18
      %p286 = scmp.lt.s32.totalorder %s285, 127
      %s287 = scalar_select %p286, %s285, 127
      %s288 = smul.addr %s287, 8
      %s289 = scalar_lea.vmem %s2, %s288
      %s290 = smul.u32 32, %s18
      %s291 = smul.u32 32, %s18
      %p292 = scmp.lt.s32.totalorder %s291, 127
      %s293 = scalar_select %p292, %s291, 127
      %s294 = smul.addr %s293, 8
      %s295 = scalar_lea.vmem %s5, %s294
      %s296 = smul.u32 32, %s18
      %v297 = vld [vmem:[%s277] sm:$0xff]
      %v298 = vld [vmem:[%s277 + $0x8] sm:$0xff]
      %v299 = vld [vmem:[%s277 + $0x10] sm:$0xff]
      %v300 = vld [vmem:[%s277 + $0x18] sm:$0xff]
      %v301 = vld [vmem:[%s277 + $0x20] sm:$0xff]
      %v302 = vld [vmem:[%s277 + $0x28] sm:$0xff]
      %v303 = vld [vmem:[%s277 + $0x30] sm:$0xff]
      %v304 = vld [vmem:[%s277 + $0x38] sm:$0xff]
      %v305 = vld [vmem:[%s277 + $0x40] sm:$0xff]
      %v306 = vld [vmem:[%s277 + $0x48] sm:$0xff]
      %v307 = vld [vmem:[%s277 + $0x50] sm:$0xff]
      %v308 = vld [vmem:[%s277 + $0x58] sm:$0xff]
      %v309 = vld [vmem:[%s277 + $0x60] sm:$0xff]
      %v310 = vld [vmem:[%s277 + $0x68] sm:$0xff]
      %v311 = vld [vmem:[%s277 + $0x70] sm:$0xff]
      %v312 = vld [vmem:[%s277 + $0x78] sm:$0xff]
      %v313 = vld [vmem:[%s277 + $0x80] sm:$0xff]
      %v314 = vld [vmem:[%s277 + $0x88] sm:$0xff]
      %v315 = vld [vmem:[%s277 + $0x90] sm:$0xff]
      %v316 = vld [vmem:[%s277 + $0x98] sm:$0xff]
      %v317 = vld [vmem:[%s277 + $0xa0] sm:$0xff]
      %v318 = vld [vmem:[%s277 + $0xa8] sm:$0xff]
      %v319 = vld [vmem:[%s277 + $0xb0] sm:$0xff]
      %v320 = vld [vmem:[%s277 + $0xb8] sm:$0xff]
      %v321 = vld [vmem:[%s277 + $0xc0] sm:$0xff]
      %v322 = vld [vmem:[%s277 + $0xc8] sm:$0xff]
      %v323 = vld [vmem:[%s277 + $0xd0] sm:$0xff]
      %v324 = vld [vmem:[%s277 + $0xd8] sm:$0xff]
      %v325 = vld [vmem:[%s277 + $0xe0] sm:$0xff]
      %v326 = vld [vmem:[%s277 + $0xe8] sm:$0xff]
      %v327 = vld [vmem:[%s277 + $0xf0] sm:$0xff]
      %v328 = vld [vmem:[%s277 + $0xf8] sm:$0xff]
      %v329 = vld [vmem:[%s3] sm:$0xff]
      %v330 = vld [vmem:[%s3 + $0x8] sm:$0xff]
      %v331 = vld [vmem:[%s3 + $0x10] sm:$0x7f]
      %v332 = vld [vmem:[%s4] sm:$0x1]
      %v334 = vlaneseq
      %v335 = vshrl.u32 %v334, 7
      %v336 = vsub.s32 0, %v335
      %v337 = vrot.slane %v332, %v336
      %vm339 = vcmask 187392
      %v341 = vsel %vm339, %v297, 0
      %v344 = vsel %vm339, %v298, 0
      %v347 = vsel %vm339, %v299, 0
      %v350 = vsel %vm339, %v300, 0
      %v353 = vsel %vm339, %v301, 0
      %v356 = vsel %vm339, %v302, 0
      %v359 = vsel %vm339, %v303, 0
      %v362 = vsel %vm339, %v304, 0
      %v365 = vsel %vm339, %v305, 0
      %v368 = vsel %vm339, %v306, 0
      %v371 = vsel %vm339, %v307, 0
      %v374 = vsel %vm339, %v308, 0
      %v377 = vsel %vm339, %v309, 0
      %v380 = vsel %vm339, %v310, 0
      %v383 = vsel %vm339, %v311, 0
      %v386 = vsel %vm339, %v312, 0
      %v389 = vsel %vm339, %v313, 0
      %v392 = vsel %vm339, %v314, 0
      %v395 = vsel %vm339, %v315, 0
      %v398 = vsel %vm339, %v316, 0
      %v401 = vsel %vm339, %v317, 0
      %v404 = vsel %vm339, %v318, 0
      %v407 = vsel %vm339, %v319, 0
      %v410 = vsel %vm339, %v320, 0
      %v413 = vsel %vm339, %v321, 0
      %v416 = vsel %vm339, %v322, 0
      %v419 = vsel %vm339, %v323, 0
      %v422 = vsel %vm339, %v324, 0
      %v425 = vsel %vm339, %v325, 0
      %v428 = vsel %vm339, %v326, 0
      %v431 = vsel %vm339, %v327, 0
      %v434 = vsel %vm339, %v328, 0
      %vm436 = vcmask 1046528
      %v438 = vsel %vm436, %v331, 0
      %440 = vmatprep.subr.mxu0 0.0
      %441 = vmatpush1.msra.mxu0 %v329
      %442 = vmatprep.subr.mxu0 0.0
      %443 = vmatpush1.msra.mxu0 %v330
      %444 = vmatprep.subr.mxu0 0.0
      %445 = vmatpush1.msra.mxu0 %v438
      %446 = vmatprep.subr.mxu0 0.0
      %447 = vmatpush1.msra.mxu0 0.0
      %448 = vmatprep.subr.mxu0 0.0
      %449 = vmatpush1.msra.mxu0 0.0
      %450 = vmatprep.subr.mxu0 0.0
      %451 = vmatpush1.msra.mxu0 0.0
      %452 = vmatprep.subr.mxu0 0.0
      %453 = vmatpush1.msra.mxu0 0.0
      %454 = vmatprep.subr.mxu0 0.0
      %455 = vmatpush1.msra.mxu0 0.0
      %456 = vmatprep.subr.mxu0 0.0
      %457 = vmatpush1.msra.mxu0 0.0
      %458 = vmatprep.subr.mxu0 0.0
      %459 = vmatpush1.msra.mxu0 0.0
      %460 = vmatprep.subr.mxu0 0.0
      %461 = vmatpush1.msra.mxu0 0.0
      %462 = vmatprep.subr.mxu0 0.0
      %463 = vmatpush1.msra.mxu0 0.0
      %464 = vmatprep.subr.mxu0 0.0
      %465 = vmatpush1.msra.mxu0 0.0
      %466 = vmatprep.subr.mxu0 0.0
      %467 = vmatpush1.msra.mxu0 0.0
      %468 = vmatprep.subr.mxu0 0.0
      %469 = vmatpush1.msra.mxu0 0.0
      %470 = vmatprep.subr.mxu0 0.0
      %471 = vmatpush1.msra.mxu0 0.0
      %472 = vmatprep.subr.mxu0 0.0
      %473 = vmatpush1.msra.mxu0 0.0
      %474 = vmatprep.subr.mxu0 0.0
      %475 = vmatpush1.msra.mxu0 0.0
      %476 = vmatprep.subr.mxu0 0.0
      %477 = vmatpush1.msra.mxu0 0.0
      %478 = vmatprep.subr.mxu0 0.0
      %479 = vmatpush1.msra.mxu0 0.0
      %480 = vmatprep.subr.mxu0 0.0
      %481 = vmatpush1.msra.mxu0 0.0
      %482 = vmatprep.subr.mxu0 0.0
      %483 = vmatpush1.msra.mxu0 0.0
      %484 = vmatprep.subr.mxu0 0.0
      %485 = vmatpush1.msra.mxu0 0.0
      %486 = vmatprep.subr.mxu0 0.0
      %487 = vmatpush1.msra.mxu0 0.0
      %488 = vmatprep.subr.mxu0 0.0
      %489 = vmatpush1.msra.mxu0 0.0
      %490 = vmatprep.subr.mxu0 0.0
      %491 = vmatpush1.msra.mxu0 0.0
      %492 = vmatprep.subr.mxu0 0.0
      %493 = vmatpush1.msra.mxu0 0.0
      %494 = vmatprep.subr.mxu0 0.0
      %495 = vmatpush1.msra.mxu0 0.0
      %496 = vmatprep.subr.mxu0 0.0
      %497 = vmatpush1.msra.mxu0 0.0
      %498 = vmatprep.subr.mxu0 0.0
      %499 = vmatpush1.msra.mxu0 0.0
      %500 = vmatprep.subr.mxu0 0.0
      %501 = vmatpush1.msra.mxu0 0.0
      %502 = vmatprep.subr.mxu0 0.0
      %503 = vmatpush1.msra.mxu0 0.0
      %504 = vmatprep.mubr.f32.mxu0 0.0
      %505 = vmatmul.mubr.f32.gmra.mrb[0].mxu0 %v341
      %v506 = vpop.f32.mrb[0].mxu0
      %v507 = vadd.f32 %v337, %v506
      %v508 = vpop.f32.mrb[0].mxu0
      %509 = vmatprep.mubr.f32.mxu0 0.0
      %510 = vmatmul.mubr.f32.gmra.mrb[0].mxu0 %v344
      %v511 = vpop.f32.mrb[0].mxu0
      %v512 = vadd.f32 %v337, %v511
      %v513 = vpop.f32.mrb[0].mxu0
      %514 = vmatprep.mubr.f32.mxu0 0.0
      %515 = vmatmul.mubr.f32.gmra.mrb[0].mxu0 %v347
      %v516 = vpop.f32.mrb[0].mxu0
      %v517 = vadd.f32 %v337, %v516
      %v518 = vpop.f32.mrb[0].mxu0
      %519 = vmatprep.mubr.f32.mxu0 0.0
      %520 = vmatmul.mubr.f32.gmra.mrb[0].mxu0 %v350
      %v521 = vpop.f32.mrb[0].mxu0
      %v522 = vadd.f32 %v337, %v521
      %v523 = vpop.f32.mrb[0].mxu0
      %524 = vmatprep.mubr.f32.mxu0 0.0
      %525 = vmatmul.mubr.f32.gmra.mrb[0].mxu0 %v353
      %v526 = vpop.f32.mrb[0].mxu0
      %v527 = vadd.f32 %v337, %v526
      %v528 = vpop.f32.mrb[0].mxu0
      %529 = vmatprep.mubr.f32.mxu0 0.0
      %530 = vmatmul.mubr.f32.gmra.mrb[0].mxu0 %v356
      %v531 = vpop.f32.mrb[0].mxu0
      %v532 = vadd.f32 %v337, %v531
      %v533 = vpop.f32.mrb[0].mxu0
      %534 = vmatprep.mubr.f32.mxu0 0.0
      %535 = vmatmul.mubr.f32.gmra.mrb[0].mxu0 %v359
      %v536 = vpop.f32.mrb[0].mxu0
      %v537 = vadd.f32 %v337, %v536
      %v538 = vpop.f32.mrb[0].mxu0
      %539 = vmatprep.mubr.f32.mxu0 0.0
      %540 = vmatmul.mubr.f32.gmra.mrb[0].mxu0 %v362
      %v541 = vpop.f32.mrb[0].mxu0
      %v542 = vadd.f32 %v337, %v541
      %v543 = vpop.f32.mrb[0].mxu0
      %544 = vmatprep.mubr.f32.mxu0 0.0
      %545 = vmatmul.mubr.f32.gmra.mrb[0].mxu0 %v365
      %v546 = vpop.f32.mrb[0].mxu0
      %v547 = vadd.f32 %v337, %v546
      %v548 = vpop.f32.mrb[0].mxu0
      %549 = vmatprep.mubr.f32.mxu0 0.0
      %550 = vmatmul.mubr.f32.gmra.mrb[0].mxu0 %v368
      %v551 = vpop.f32.mrb[0].mxu0
      %v552 = vadd.f32 %v337, %v551
      %v553 = vpop.f32.mrb[0].mxu0
      %554 = vmatprep.mubr.f32.mxu0 0.0
      %555 = vmatmul.mubr.f32.gmra.mrb[0].mxu0 %v371
      %v556 = vpop.f32.mrb[0].mxu0
      %v557 = vadd.f32 %v337, %v556
      %v558 = vpop.f32.mrb[0].mxu0
      %559 = vmatprep.mubr.f32.mxu0 0.0
      %560 = vmatmul.mubr.f32.gmra.mrb[0].mxu0 %v374
      %v561 = vpop.f32.mrb[0].mxu0
      %v562 = vadd.f32 %v337, %v561
      %v563 = vpop.f32.mrb[0].mxu0
      %564 = vmatprep.mubr.f32.mxu0 0.0
      %565 = vmatmul.mubr.f32.gmra.mrb[0].mxu0 %v377
      %v566 = vpop.f32.mrb[0].mxu0
      %v567 = vadd.f32 %v337, %v566
      %v568 = vpop.f32.mrb[0].mxu0
      %569 = vmatprep.mubr.f32.mxu0 0.0
      %570 = vmatmul.mubr.f32.gmra.mrb[0].mxu0 %v380
      %v571 = vpop.f32.mrb[0].mxu0
      %v572 = vadd.f32 %v337, %v571
      %v573 = vpop.f32.mrb[0].mxu0
      %574 = vmatprep.mubr.f32.mxu0 0.0
      %575 = vmatmul.mubr.f32.gmra.mrb[0].mxu0 %v383
      %v576 = vpop.f32.mrb[0].mxu0
      %v577 = vadd.f32 %v337, %v576
      %v578 = vpop.f32.mrb[0].mxu0
      %579 = vmatprep.mubr.f32.mxu0 0.0
      %580 = vmatmul.mubr.f32.gmra.mrb[0].mxu0 %v386
      %v581 = vpop.f32.mrb[0].mxu0
      %v582 = vadd.f32 %v337, %v581
      %v583 = vpop.f32.mrb[0].mxu0
      %584 = vmatprep.mubr.f32.mxu0 0.0
      %585 = vmatmul.mubr.f32.gmra.mrb[0].mxu0 %v389
      %v586 = vpop.f32.mrb[0].mxu0
      %v587 = vadd.f32 %v337, %v586
      %v588 = vpop.f32.mrb[0].mxu0
      %589 = vmatprep.mubr.f32.mxu0 0.0
      %590 = vmatmul.mubr.f32.gmra.mrb[0].mxu0 %v392
      %v591 = vpop.f32.mrb[0].mxu0
      %v592 = vadd.f32 %v337, %v591
      %v593 = vpop.f32.mrb[0].mxu0
      %594 = vmatprep.mubr.f32.mxu0 0.0
      %595 = vmatmul.mubr.f32.gmra.mrb[0].mxu0 %v395
      %v596 = vpop.f32.mrb[0].mxu0
      %v597 = vadd.f32 %v337, %v596
      %v598 = vpop.f32.mrb[0].mxu0
      %599 = vmatprep.mubr.f32.mxu0 0.0
      %600 = vmatmul.mubr.f32.gmra.mrb[0].mxu0 %v398
      %v601 = vpop.f32.mrb[0].mxu0
      %v602 = vadd.f32 %v337, %v601
      %v603 = vpop.f32.mrb[0].mxu0
      %604 = vmatprep.mubr.f32.mxu0 0.0
      %605 = vmatmul.mubr.f32.gmra.mrb[0].mxu0 %v401
      %v606 = vpop.f32.mrb[0].mxu0
      %v607 = vadd.f32 %v337, %v606
      %v608 = vpop.f32.mrb[0].mxu0
      %609 = vmatprep.mubr.f32.mxu0 0.0
      %610 = vmatmul.mubr.f32.gmra.mrb[0].mxu0 %v404
      %v611 = vpop.f32.mrb[0].mxu0
      %v612 = vadd.f32 %v337, %v611
      %v613 = vpop.f32.mrb[0].mxu0
      %614 = vmatprep.mubr.f32.mxu0 0.0
      %615 = vmatmul.mubr.f32.gmra.mrb[0].mxu0 %v407
      %v616 = vpop.f32.mrb[0].mxu0
      %v617 = vadd.f32 %v337, %v616
      %v618 = vpop.f32.mrb[0].mxu0
      %619 = vmatprep.mubr.f32.mxu0 0.0
      %620 = vmatmul.mubr.f32.gmra.mrb[0].mxu0 %v410
      %v621 = vpop.f32.mrb[0].mxu0
      %v622 = vadd.f32 %v337, %v621
      %v623 = vpop.f32.mrb[0].mxu0
      %624 = vmatprep.mubr.f32.mxu0 0.0
      %625 = vmatmul.mubr.f32.gmra.mrb[0].mxu0 %v413
      %v626 = vpop.f32.mrb[0].mxu0
      %v627 = vadd.f32 %v337, %v626
      %v628 = vpop.f32.mrb[0].mxu0
      %629 = vmatprep.mubr.f32.mxu0 0.0
      %630 = vmatmul.mubr.f32.gmra.mrb[0].mxu0 %v416
      %v631 = vpop.f32.mrb[0].mxu0
      %v632 = vadd.f32 %v337, %v631
      %v633 = vpop.f32.mrb[0].mxu0
      %634 = vmatprep.mubr.f32.mxu0 0.0
      %635 = vmatmul.mubr.f32.gmra.mrb[0].mxu0 %v419
      %v636 = vpop.f32.mrb[0].mxu0
      %v637 = vadd.f32 %v337, %v636
      %v638 = vpop.f32.mrb[0].mxu0
      %639 = vmatprep.mubr.f32.mxu0 0.0
      %640 = vmatmul.mubr.f32.gmra.mrb[0].mxu0 %v422
      %v641 = vpop.f32.mrb[0].mxu0
      %v642 = vadd.f32 %v337, %v641
      %v643 = vpop.f32.mrb[0].mxu0
      %644 = vmatprep.mubr.f32.mxu0 0.0
      %645 = vmatmul.mubr.f32.gmra.mrb[0].mxu0 %v425
      %v646 = vpop.f32.mrb[0].mxu0
      %v647 = vadd.f32 %v337, %v646
      %v648 = vpop.f32.mrb[0].mxu0
      %649 = vmatprep.mubr.f32.mxu0 0.0
      %650 = vmatmul.mubr.f32.gmra.mrb[0].mxu0 %v428
      %v651 = vpop.f32.mrb[0].mxu0
      %v652 = vadd.f32 %v337, %v651
      %v653 = vpop.f32.mrb[0].mxu0
      %654 = vmatprep.mubr.f32.mxu0 0.0
      %655 = vmatmul.mubr.f32.gmra.mrb[0].mxu0 %v431
      %v656 = vpop.f32.mrb[0].mxu0
      %v657 = vadd.f32 %v337, %v656
      %v658 = vpop.f32.mrb[0].mxu0
      %659 = vmatprep.mubr.f32.mxu0 0.0
      %660 = vmatmul.mubr.f32.gmra.mrb[0].mxu0 %v434
      %v661 = vpop.f32.mrb[0].mxu0
      %v662 = vadd.f32 %v337, %v661
      %v663 = vpop.f32.mrb[0].mxu0
      %664 = vdwg.mxu0
      %v665 = vmax.f32 %v507, 0.0
      %v666 = vmax.f32 %v512, 0.0
      %v667 = vmax.f32 %v517, 0.0
      %v668 = vmax.f32 %v522, 0.0
      %v669 = vmax.f32 %v527, 0.0
      %v670 = vmax.f32 %v532, 0.0
      %v671 = vmax.f32 %v537, 0.0
      %v672 = vmax.f32 %v542, 0.0
      %v673 = vmax.f32 %v547, 0.0
      %v674 = vmax.f32 %v552, 0.0
      %v675 = vmax.f32 %v557, 0.0
      %v676 = vmax.f32 %v562, 0.0
      %v677 = vmax.f32 %v567, 0.0
      %v678 = vmax.f32 %v572, 0.0
      %v679 = vmax.f32 %v577, 0.0
      %v680 = vmax.f32 %v582, 0.0
      %v681 = vmax.f32 %v587, 0.0
      %v682 = vmax.f32 %v592, 0.0
      %v683 = vmax.f32 %v597, 0.0
      %v684 = vmax.f32 %v602, 0.0
      %v685 = vmax.f32 %v607, 0.0
      %v686 = vmax.f32 %v612, 0.0
      %v687 = vmax.f32 %v617, 0.0
      %v688 = vmax.f32 %v622, 0.0
      %v689 = vmax.f32 %v627, 0.0
      %v690 = vmax.f32 %v632, 0.0
      %v691 = vmax.f32 %v637, 0.0
      %v692 = vmax.f32 %v642, 0.0
      %v693 = vmax.f32 %v647, 0.0
      %v694 = vmax.f32 %v652, 0.0
      %v695 = vmax.f32 %v657, 0.0
      %v696 = vmax.f32 %v662, 0.0
      %729 = vrot.lane.b32.xlu0 %v665, 112
      %v730 = vpop.permute.xlu0 %729
      %731 = vrot.lane.b32.xlu0 %v666, 112
      %v732 = vpop.permute.xlu0 %731
      %733 = vrot.lane.b32.xlu0 %v667, 112
      %v734 = vpop.permute.xlu0 %733
      %735 = vrot.lane.b32.xlu0 %v668, 112
      %v736 = vpop.permute.xlu0 %735
      %737 = vrot.lane.b32.xlu0 %v669, 112
      %v738 = vpop.permute.xlu0 %737
      %739 = vrot.lane.b32.xlu0 %v670, 112
      %v740 = vpop.permute.xlu0 %739
      %741 = vrot.lane.b32.xlu0 %v671, 112
      %v742 = vpop.permute.xlu0 %741
      %743 = vrot.lane.b32.xlu0 %v672, 112
      %v744 = vpop.permute.xlu0 %743
      %745 = vrot.lane.b32.xlu0 %v673, 112
      %v746 = vpop.permute.xlu0 %745
      %747 = vrot.lane.b32.xlu0 %v674, 112
      %v748 = vpop.permute.xlu0 %747
      %749 = vrot.lane.b32.xlu0 %v675, 112
      %v750 = vpop.permute.xlu0 %749
      %751 = vrot.lane.b32.xlu0 %v676, 112
      %v752 = vpop.permute.xlu0 %751
      %753 = vrot.lane.b32.xlu0 %v677, 112
      %v754 = vpop.permute.xlu0 %753
      %755 = vrot.lane.b32.xlu0 %v678, 112
      %v756 = vpop.permute.xlu0 %755
      %757 = vrot.lane.b32.xlu0 %v679, 112
      %v758 = vpop.permute.xlu0 %757
      %759 = vrot.lane.b32.xlu0 %v680, 112
      %v760 = vpop.permute.xlu0 %759
      %761 = vrot.lane.b32.xlu0 %v681, 112
      %v762 = vpop.permute.xlu0 %761
      %763 = vrot.lane.b32.xlu0 %v682, 112
      %v764 = vpop.permute.xlu0 %763
      %765 = vrot.lane.b32.xlu0 %v683, 112
      %v766 = vpop.permute.xlu0 %765
      %767 = vrot.lane.b32.xlu0 %v684, 112
      %v768 = vpop.permute.xlu0 %767
      %769 = vrot.lane.b32.xlu0 %v685, 112
      %v770 = vpop.permute.xlu0 %769
      %771 = vrot.lane.b32.xlu0 %v686, 112
      %v772 = vpop.permute.xlu0 %771
      %773 = vrot.lane.b32.xlu0 %v687, 112
      %v774 = vpop.permute.xlu0 %773
      %775 = vrot.lane.b32.xlu0 %v688, 112
      %v776 = vpop.permute.xlu0 %775
      %777 = vrot.lane.b32.xlu0 %v689, 112
      %v778 = vpop.permute.xlu0 %777
      %779 = vrot.lane.b32.xlu0 %v690, 112
      %v780 = vpop.permute.xlu0 %779
      %781 = vrot.lane.b32.xlu0 %v691, 112
      %v782 = vpop.permute.xlu0 %781
      %783 = vrot.lane.b32.xlu0 %v692, 112
      %v784 = vpop.permute.xlu0 %783
      %785 = vrot.lane.b32.xlu0 %v693, 112
      %v786 = vpop.permute.xlu0 %785
      %787 = vrot.lane.b32.xlu0 %v694, 112
      %v788 = vpop.permute.xlu0 %787
      %789 = vrot.lane.b32.xlu0 %v695, 112
      %v790 = vpop.permute.xlu0 %789
      %791 = vrot.lane.b32.xlu0 %v696, 112
      %v792 = vpop.permute.xlu0 %791
      %v825 = vmul.f32 %v665, %v730
      %v826 = vmul.f32 %v666, %v732
      %v827 = vmul.f32 %v667, %v734
      %v828 = vmul.f32 %v668, %v736
      %v829 = vmul.f32 %v669, %v738
      %v830 = vmul.f32 %v670, %v740
      %v831 = vmul.f32 %v671, %v742
      %v832 = vmul.f32 %v672, %v744
      %v833 = vmul.f32 %v673, %v746
      %v834 = vmul.f32 %v674, %v748
      %v835 = vmul.f32 %v675, %v750
      %v836 = vmul.f32 %v676, %v752
      %v837 = vmul.f32 %v677, %v754
      %v838 = vmul.f32 %v678, %v756
      %v839 = vmul.f32 %v679, %v758
      %v840 = vmul.f32 %v680, %v760
      %v841 = vmul.f32 %v681, %v762
      %v842 = vmul.f32 %v682, %v764
      %v843 = vmul.f32 %v683, %v766
      %v844 = vmul.f32 %v684, %v768
      %v845 = vmul.f32 %v685, %v770
      %v846 = vmul.f32 %v686, %v772
      %v847 = vmul.f32 %v687, %v774
      %v848 = vmul.f32 %v688, %v776
      %v849 = vmul.f32 %v689, %v778
      %v850 = vmul.f32 %v690, %v780
      %v851 = vmul.f32 %v691, %v782
      %v852 = vmul.f32 %v692, %v784
      %v853 = vmul.f32 %v693, %v786
      %v854 = vmul.f32 %v694, %v788
      %v855 = vmul.f32 %v695, %v790
      %v856 = vmul.f32 %v696, %v792
      %v857 = vld [vmem:[%s283] sm:$0xff]
      %v858 = vld [vmem:[%s283 + $0x8] sm:$0xff]
      %v859 = vld [vmem:[%s283 + $0x10] sm:$0xff]
      %v860 = vld [vmem:[%s283 + $0x18] sm:$0xff]
      %v861 = vld [vmem:[%s283 + $0x20] sm:$0xff]
      %v862 = vld [vmem:[%s283 + $0x28] sm:$0xff]
      %v863 = vld [vmem:[%s283 + $0x30] sm:$0xff]
      %v864 = vld [vmem:[%s283 + $0x38] sm:$0xff]
      %v865 = vld [vmem:[%s283 + $0x40] sm:$0xff]
      %v866 = vld [vmem:[%s283 + $0x48] sm:$0xff]
      %v867 = vld [vmem:[%s283 + $0x50] sm:$0xff]
      %v868 = vld [vmem:[%s283 + $0x58] sm:$0xff]
      %v869 = vld [vmem:[%s283 + $0x60] sm:$0xff]
      %v870 = vld [vmem:[%s283 + $0x68] sm:$0xff]
      %v871 = vld [vmem:[%s283 + $0x70] sm:$0xff]
      %v872 = vld [vmem:[%s283 + $0x78] sm:$0xff]
      %v873 = vld [vmem:[%s283 + $0x80] sm:$0xff]
      %v874 = vld [vmem:[%s283 + $0x88] sm:$0xff]
      %v875 = vld [vmem:[%s283 + $0x90] sm:$0xff]
      %v876 = vld [vmem:[%s283 + $0x98] sm:$0xff]
      %v877 = vld [vmem:[%s283 + $0xa0] sm:$0xff]
      %v878 = vld [vmem:[%s283 + $0xa8] sm:$0xff]
      %v879 = vld [vmem:[%s283 + $0xb0] sm:$0xff]
      %v880 = vld [vmem:[%s283 + $0xb8] sm:$0xff]
      %v881 = vld [vmem:[%s283 + $0xc0] sm:$0xff]
      %v882 = vld [vmem:[%s283 + $0xc8] sm:$0xff]
      %v883 = vld [vmem:[%s283 + $0xd0] sm:$0xff]
      %v884 = vld [vmem:[%s283 + $0xd8] sm:$0xff]
      %v885 = vld [vmem:[%s283 + $0xe0] sm:$0xff]
      %v886 = vld [vmem:[%s283 + $0xe8] sm:$0xff]
      %v887 = vld [vmem:[%s283 + $0xf0] sm:$0xff]
      %v888 = vld [vmem:[%s283 + $0xf8] sm:$0xff]
      %890 = vset.pattern.permute.xlu0 0
      %891 = vperm.xlu0 %890, %v857
      %v892 = vpop.permute.xlu0 %891
      %895 = vset.pattern.permute.xlu0 0
      %896 = vperm.xlu0 %895, %v858
      %v897 = vpop.permute.xlu0 %896
      %900 = vset.pattern.permute.xlu0 0
      %901 = vperm.xlu0 %900, %v859
      %v902 = vpop.permute.xlu0 %901
      %905 = vset.pattern.permute.xlu0 0
      %906 = vperm.xlu0 %905, %v860
      %v907 = vpop.permute.xlu0 %906
      %910 = vset.pattern.permute.xlu0 0
      %911 = vperm.xlu0 %910, %v861
      %v912 = vpop.permute.xlu0 %911
      %915 = vset.pattern.permute.xlu0 0
      %916 = vperm.xlu0 %915, %v862
      %v917 = vpop.permute.xlu0 %916
      %920 = vset.pattern.permute.xlu0 0
      %921 = vperm.xlu0 %920, %v863
      %v922 = vpop.permute.xlu0 %921
      %925 = vset.pattern.permute.xlu0 0
      %926 = vperm.xlu0 %925, %v864
      %v927 = vpop.permute.xlu0 %926
      %930 = vset.pattern.permute.xlu0 0
      %931 = vperm.xlu0 %930, %v865
      %v932 = vpop.permute.xlu0 %931
      %935 = vset.pattern.permute.xlu0 0
      %936 = vperm.xlu0 %935, %v866
      %v937 = vpop.permute.xlu0 %936
      %940 = vset.pattern.permute.xlu0 0
      %941 = vperm.xlu0 %940, %v867
      %v942 = vpop.permute.xlu0 %941
      %945 = vset.pattern.permute.xlu0 0
      %946 = vperm.xlu0 %945, %v868
      %v947 = vpop.permute.xlu0 %946
      %950 = vset.pattern.permute.xlu0 0
      %951 = vperm.xlu0 %950, %v869
      %v952 = vpop.permute.xlu0 %951
      %955 = vset.pattern.permute.xlu0 0
      %956 = vperm.xlu0 %955, %v870
      %v957 = vpop.permute.xlu0 %956
      %960 = vset.pattern.permute.xlu0 0
      %961 = vperm.xlu0 %960, %v871
      %v962 = vpop.permute.xlu0 %961
      %965 = vset.pattern.permute.xlu0 0
      %966 = vperm.xlu0 %965, %v872
      %v967 = vpop.permute.xlu0 %966
      %970 = vset.pattern.permute.xlu0 0
      %971 = vperm.xlu0 %970, %v873
      %v972 = vpop.permute.xlu0 %971
      %975 = vset.pattern.permute.xlu0 0
      %976 = vperm.xlu0 %975, %v874
      %v977 = vpop.permute.xlu0 %976
      %980 = vset.pattern.permute.xlu0 0
      %981 = vperm.xlu0 %980, %v875
      %v982 = vpop.permute.xlu0 %981
      %985 = vset.pattern.permute.xlu0 0
      %986 = vperm.xlu0 %985, %v876
      %v987 = vpop.permute.xlu0 %986
      %990 = vset.pattern.permute.xlu0 0
      %991 = vperm.xlu0 %990, %v877
      %v992 = vpop.permute.xlu0 %991
      %995 = vset.pattern.permute.xlu0 0
      %996 = vperm.xlu0 %995, %v878
      %v997 = vpop.permute.xlu0 %996
      %1000 = vset.pattern.permute.xlu0 0
      %1001 = vperm.xlu0 %1000, %v879
      %v1002 = vpop.permute.xlu0 %1001
      %1005 = vset.pattern.permute.xlu0 0
      %1006 = vperm.xlu0 %1005, %v880
      %v1007 = vpop.permute.xlu0 %1006
      %1010 = vset.pattern.permute.xlu0 0
      %1011 = vperm.xlu0 %1010, %v881
      %v1012 = vpop.permute.xlu0 %1011
      %1015 = vset.pattern.permute.xlu0 0
      %1016 = vperm.xlu0 %1015, %v882
      %v1017 = vpop.permute.xlu0 %1016
      %1020 = vset.pattern.permute.xlu0 0
      %1021 = vperm.xlu0 %1020, %v883
      %v1022 = vpop.permute.xlu0 %1021
      %1025 = vset.pattern.permute.xlu0 0
      %1026 = vperm.xlu0 %1025, %v884
      %v1027 = vpop.permute.xlu0 %1026
      %1030 = vset.pattern.permute.xlu0 0
      %1031 = vperm.xlu0 %1030, %v885
      %v1032 = vpop.permute.xlu0 %1031
      %1035 = vset.pattern.permute.xlu0 0
      %1036 = vperm.xlu0 %1035, %v886
      %v1037 = vpop.permute.xlu0 %1036
      %1040 = vset.pattern.permute.xlu0 0
      %1041 = vperm.xlu0 %1040, %v887
      %v1042 = vpop.permute.xlu0 %1041
      %1045 = vset.pattern.permute.xlu0 0
      %1046 = vperm.xlu0 %1045, %v888
      %v1047 = vpop.permute.xlu0 %1046
      %v1049 = vmul.f32 %v825, %v892
      %v1050 = vmul.f32 %v826, %v897
      %v1051 = vmul.f32 %v827, %v902
      %v1052 = vmul.f32 %v828, %v907
      %v1053 = vmul.f32 %v829, %v912
      %v1054 = vmul.f32 %v830, %v917
      %v1055 = vmul.f32 %v831, %v922
      %v1056 = vmul.f32 %v832, %v927
      %v1057 = vmul.f32 %v833, %v932
      %v1058 = vmul.f32 %v834, %v937
      %v1059 = vmul.f32 %v835, %v942
      %v1060 = vmul.f32 %v836, %v947
      %v1061 = vmul.f32 %v837, %v952
      %v1062 = vmul.f32 %v838, %v957
      %v1063 = vmul.f32 %v839, %v962
      %v1064 = vmul.f32 %v840, %v967
      %v1065 = vmul.f32 %v841, %v972
      %v1066 = vmul.f32 %v842, %v977
      %v1067 = vmul.f32 %v843, %v982
      %v1068 = vmul.f32 %v844, %v987
      %v1069 = vmul.f32 %v845, %v992
      %v1070 = vmul.f32 %v846, %v997
      %v1071 = vmul.f32 %v847, %v1002
      %v1072 = vmul.f32 %v848, %v1007
      %v1073 = vmul.f32 %v849, %v1012
      %v1074 = vmul.f32 %v850, %v1017
      %v1075 = vmul.f32 %v851, %v1022
      %v1076 = vmul.f32 %v852, %v1027
      %v1077 = vmul.f32 %v853, %v1032
      %v1078 = vmul.f32 %v854, %v1037
      %v1079 = vmul.f32 %v855, %v1042
      %v1080 = vmul.f32 %v856, %v1047
      %vm1081 = vcmask 130048
      %1082 = vst.msk [vmem:[%s295] sm:$0xff] %vm1081, %v1049
      %1083 = vst.msk [vmem:[%s295 + $0x8] sm:$0xff] %vm1081, %v1050
      %1084 = vst.msk [vmem:[%s295 + $0x10] sm:$0xff] %vm1081, %v1051
      %1085 = vst.msk [vmem:[%s295 + $0x18] sm:$0xff] %vm1081, %v1052
      %1086 = vst.msk [vmem:[%s295 + $0x20] sm:$0xff] %vm1081, %v1053
      %1087 = vst.msk [vmem:[%s295 + $0x28] sm:$0xff] %vm1081, %v1054
      %1088 = vst.msk [vmem:[%s295 + $0x30] sm:$0xff] %vm1081, %v1055
      %1089 = vst.msk [vmem:[%s295 + $0x38] sm:$0xff] %vm1081, %v1056
      %1090 = vst.msk [vmem:[%s295 + $0x40] sm:$0xff] %vm1081, %v1057
      %1091 = vst.msk [vmem:[%s295 + $0x48] sm:$0xff] %vm1081, %v1058
      %1092 = vst.msk [vmem:[%s295 + $0x50] sm:$0xff] %vm1081, %v1059
      %1093 = vst.msk [vmem:[%s295 + $0x58] sm:$0xff] %vm1081, %v1060
      %1094 = vst.msk [vmem:[%s295 + $0x60] sm:$0xff] %vm1081, %v1061
      %1095 = vst.msk [vmem:[%s295 + $0x68] sm:$0xff] %vm1081, %v1062
      %1096 = vst.msk [vmem:[%s295 + $0x70] sm:$0xff] %vm1081, %v1063
      %1097 = vst.msk [vmem:[%s295 + $0x78] sm:$0xff] %vm1081, %v1064
      %1098 = vst.msk [vmem:[%s295 + $0x80] sm:$0xff] %vm1081, %v1065
      %1099 = vst.msk [vmem:[%s295 + $0x88] sm:$0xff] %vm1081, %v1066
      %1100 = vst.msk [vmem:[%s295 + $0x90] sm:$0xff] %vm1081, %v1067
      %1101 = vst.msk [vmem:[%s295 + $0x98] sm:$0xff] %vm1081, %v1068
      %1102 = vst.msk [vmem:[%s295 + $0xa0] sm:$0xff] %vm1081, %v1069
      %1103 = vst.msk [vmem:[%s295 + $0xa8] sm:$0xff] %vm1081, %v1070
      %1104 = vst.msk [vmem:[%s295 + $0xb0] sm:$0xff] %vm1081, %v1071
      %1105 = vst.msk [vmem:[%s295 + $0xb8] sm:$0xff] %vm1081, %v1072
      %1106 = vst.msk [vmem:[%s295 + $0xc0] sm:$0xff] %vm1081, %v1073
      %1107 = vst.msk [vmem:[%s295 + $0xc8] sm:$0xff] %vm1081, %v1074
      %1108 = vst.msk [vmem:[%s295 + $0xd0] sm:$0xff] %vm1081, %v1075
      %1109 = vst.msk [vmem:[%s295 + $0xd8] sm:$0xff] %vm1081, %v1076
      %1110 = vst.msk [vmem:[%s295 + $0xe0] sm:$0xff] %vm1081, %v1077
      %1111 = vst.msk [vmem:[%s295 + $0xe8] sm:$0xff] %vm1081, %v1078
      %1112 = vst.msk [vmem:[%s295 + $0xf0] sm:$0xff] %vm1081, %v1079
      %1113 = vst.msk [vmem:[%s295 + $0xf8] sm:$0xff] %vm1081, %v1080
      %p1114 = scmp.eq.s32.totalorder %s18, 0
      // Predicated region
      $region41: #{tpu_custom_call.1} parent=39 // pred_check
        %p1115 = pneg %p1114
      $region42: #{tpu_custom_call.1} parent=39 // pred_check_branch
        %1117 = sbr.rel (%p1115) target = $region44
      $region43: #{tpu_custom_call.1} parent=39 // pred_region
        %1118 = vst.msk [vmem:[%s6] sm:$0xff] %vm1081, 0.0
        %1119 = vst.msk [vmem:[%s6 + $0x8] sm:$0xff] %vm1081, 0.0
        %1120 = vst.msk [vmem:[%s6 + $0x10] sm:$0xff] %vm1081, 0.0
        %1121 = vst.msk [vmem:[%s6 + $0x18] sm:$0xff] %vm1081, 0.0
      $region44: #{tpu_custom_call.1} parent=39 // pred_fallthru
        _
      %v1122 = vld [vmem:[%s289] sm:$0xff]
      %v1123 = vld [vmem:[%s289 + $0x8] sm:$0xff]
      %v1124 = vld [vmem:[%s289 + $0x10] sm:$0xff]
      %v1125 = vld [vmem:[%s289 + $0x18] sm:$0xff]
      %v1126 = vld [vmem:[%s289 + $0x20] sm:$0xff]
      %v1127 = vld [vmem:[%s289 + $0x28] sm:$0xff]
      %v1128 = vld [vmem:[%s289 + $0x30] sm:$0xff]
      %v1129 = vld [vmem:[%s289 + $0x38] sm:$0xff]
      %v1130 = vld [vmem:[%s289 + $0x40] sm:$0xff]
      %v1131 = vld [vmem:[%s289 + $0x48] sm:$0xff]
      %v1132 = vld [vmem:[%s289 + $0x50] sm:$0xff]
      %v1133 = vld [vmem:[%s289 + $0x58] sm:$0xff]
      %v1134 = vld [vmem:[%s289 + $0x60] sm:$0xff]
      %v1135 = vld [vmem:[%s289 + $0x68] sm:$0xff]
      %v1136 = vld [vmem:[%s289 + $0x70] sm:$0xff]
      %v1137 = vld [vmem:[%s289 + $0x78] sm:$0xff]
      %v1138 = vld [vmem:[%s289 + $0x80] sm:$0xff]
      %v1139 = vld [vmem:[%s289 + $0x88] sm:$0xff]
      %v1140 = vld [vmem:[%s289 + $0x90] sm:$0xff]
      %v1141 = vld [vmem:[%s289 + $0x98] sm:$0xff]
      %v1142 = vld [vmem:[%s289 + $0xa0] sm:$0xff]
      %v1143 = vld [vmem:[%s289 + $0xa8] sm:$0xff]
      %v1144 = vld [vmem:[%s289 + $0xb0] sm:$0xff]
      %v1145 = vld [vmem:[%s289 + $0xb8] sm:$0xff]
      %v1146 = vld [vmem:[%s289 + $0xc0] sm:$0xff]
      %v1147 = vld [vmem:[%s289 + $0xc8] sm:$0xff]
      %v1148 = vld [vmem:[%s289 + $0xd0] sm:$0xff]
      %v1149 = vld [vmem:[%s289 + $0xd8] sm:$0xff]
      %v1150 = vld [vmem:[%s289 + $0xe0] sm:$0xff]
      %v1151 = vld [vmem:[%s289 + $0xe8] sm:$0xff]
      %v1152 = vld [vmem:[%s289 + $0xf0] sm:$0xff]
      %v1153 = vld [vmem:[%s289 + $0xf8] sm:$0xff]
      %v1154 = vlaneseq
      %v1155 = vand.u32 %v1154, 127
      %1156 = vset.pattern.permute.xlu0 0
      %1157 = vperm.xlu0 %1156, %v1122
      %v1158 = vpop.permute.xlu0 %1157
      %1159 = vset.pattern.permute.xlu0 0
      %1160 = vperm.xlu0 %1159, %v1123
      %v1161 = vpop.permute.xlu0 %1160
      %1162 = vset.pattern.permute.xlu0 0
      %1163 = vperm.xlu0 %1162, %v1124
      %v1164 = vpop.permute.xlu0 %1163
      %1165 = vset.pattern.permute.xlu0 0
      %1166 = vperm.xlu0 %1165, %v1125
      %v1167 = vpop.permute.xlu0 %1166
      %1168 = vset.pattern.permute.xlu0 0
      %1169 = vperm.xlu0 %1168, %v1126
      %v1170 = vpop.permute.xlu0 %1169
      %1171 = vset.pattern.permute.xlu0 0
      %1172 = vperm.xlu0 %1171, %v1127
      %v1173 = vpop.permute.xlu0 %1172
      %1174 = vset.pattern.permute.xlu0 0
      %1175 = vperm.xlu0 %1174, %v1128
      %v1176 = vpop.permute.xlu0 %1175
      %1177 = vset.pattern.permute.xlu0 0
      %1178 = vperm.xlu0 %1177, %v1129
      %v1179 = vpop.permute.xlu0 %1178
      %1180 = vset.pattern.permute.xlu0 0
      %1181 = vperm.xlu0 %1180, %v1130
      %v1182 = vpop.permute.xlu0 %1181
      %1183 = vset.pattern.permute.xlu0 0
      %1184 = vperm.xlu0 %1183, %v1131
      %v1185 = vpop.permute.xlu0 %1184
      %1186 = vset.pattern.permute.xlu0 0
      %1187 = vperm.xlu0 %1186, %v1132
      %v1188 = vpop.permute.xlu0 %1187
      %1189 = vset.pattern.permute.xlu0 0
      %1190 = vperm.xlu0 %1189, %v1133
      %v1191 = vpop.permute.xlu0 %1190
      %1192 = vset.pattern.permute.xlu0 0
      %1193 = vperm.xlu0 %1192, %v1134
      %v1194 = vpop.permute.xlu0 %1193
      %1195 = vset.pattern.permute.xlu0 0
      %1196 = vperm.xlu0 %1195, %v1135
      %v1197 = vpop.permute.xlu0 %1196
      %1198 = vset.pattern.permute.xlu0 0
      %1199 = vperm.xlu0 %1198, %v1136
      %v1200 = vpop.permute.xlu0 %1199
      %1201 = vset.pattern.permute.xlu0 0
      %1202 = vperm.xlu0 %1201, %v1137
      %v1203 = vpop.permute.xlu0 %1202
      %1204 = vset.pattern.permute.xlu0 0
      %1205 = vperm.xlu0 %1204, %v1138
      %v1206 = vpop.permute.xlu0 %1205
      %1207 = vset.pattern.permute.xlu0 0
      %1208 = vperm.xlu0 %1207, %v1139
      %v1209 = vpop.permute.xlu0 %1208
      %1210 = vset.pattern.permute.xlu0 0
      %1211 = vperm.xlu0 %1210, %v1140
      %v1212 = vpop.permute.xlu0 %1211
      %1213 = vset.pattern.permute.xlu0 0
      %1214 = vperm.xlu0 %1213, %v1141
      %v1215 = vpop.permute.xlu0 %1214
      %1216 = vset.pattern.permute.xlu0 0
      %1217 = vperm.xlu0 %1216, %v1142
      %v1218 = vpop.permute.xlu0 %1217
      %1219 = vset.pattern.permute.xlu0 0
      %1220 = vperm.xlu0 %1219, %v1143
      %v1221 = vpop.permute.xlu0 %1220
      %1222 = vset.pattern.permute.xlu0 0
      %1223 = vperm.xlu0 %1222, %v1144
      %v1224 = vpop.permute.xlu0 %1223
      %1225 = vset.pattern.permute.xlu0 0
      %1226 = vperm.xlu0 %1225, %v1145
      %v1227 = vpop.permute.xlu0 %1226
      %1228 = vset.pattern.permute.xlu0 0
      %1229 = vperm.xlu0 %1228, %v1146
      %v1230 = vpop.permute.xlu0 %1229
      %1231 = vset.pattern.permute.xlu0 0
      %1232 = vperm.xlu0 %1231, %v1147
      %v1233 = vpop.permute.xlu0 %1232
      %1234 = vset.pattern.permute.xlu0 0
      %1235 = vperm.xlu0 %1234, %v1148
      %v1236 = vpop.permute.xlu0 %1235
      %1237 = vset.pattern.permute.xlu0 0
      %1238 = vperm.xlu0 %1237, %v1149
      %v1239 = vpop.permute.xlu0 %1238
      %1240 = vset.pattern.permute.xlu0 0
      %1241 = vperm.xlu0 %1240, %v1150
      %v1242 = vpop.permute.xlu0 %1241
      %1243 = vset.pattern.permute.xlu0 0
      %1244 = vperm.xlu0 %1243, %v1151
      %v1245 = vpop.permute.xlu0 %1244
      %1246 = vset.pattern.permute.xlu0 0
      %1247 = vperm.xlu0 %1246, %v1152
      %v1248 = vpop.permute.xlu0 %1247
      %1249 = vset.pattern.permute.xlu0 0
      %1250 = vperm.xlu0 %1249, %v1153
      %v1251 = vpop.permute.xlu0 %1250
      %vm1252 = vcmp.eq.s32.totalorder %v1158, %v1155
      %vm1253 = vcmp.eq.s32.totalorder %v1161, %v1155
      %vm1254 = vcmp.eq.s32.totalorder %v1164, %v1155
      %vm1255 = vcmp.eq.s32.totalorder %v1167, %v1155
      %vm1256 = vcmp.eq.s32.totalorder %v1170, %v1155
      %vm1257 = vcmp.eq.s32.totalorder %v1173, %v1155
      %vm1258 = vcmp.eq.s32.totalorder %v1176, %v1155
      %vm1259 = vcmp.eq.s32.totalorder %v1179, %v1155
      %vm1260 = vcmp.eq.s32.totalorder %v1182, %v1155
      %vm1261 = vcmp.eq.s32.totalorder %v1185, %v1155
      %vm1262 = vcmp.eq.s32.totalorder %v1188, %v1155
      %vm1263 = vcmp.eq.s32.totalorder %v1191, %v1155
      %vm1264 = vcmp.eq.s32.totalorder %v1194, %v1155
      %vm1265 = vcmp.eq.s32.totalorder %v1197, %v1155
      %vm1266 = vcmp.eq.s32.totalorder %v1200, %v1155
      %vm1267 = vcmp.eq.s32.totalorder %v1203, %v1155
      %vm1268 = vcmp.eq.s32.totalorder %v1206, %v1155
      %vm1269 = vcmp.eq.s32.totalorder %v1209, %v1155
      %vm1270 = vcmp.eq.s32.totalorder %v1212, %v1155
      %vm1271 = vcmp.eq.s32.totalorder %v1215, %v1155
      %vm1272 = vcmp.eq.s32.totalorder %v1218, %v1155
      %vm1273 = vcmp.eq.s32.totalorder %v1221, %v1155
      %vm1274 = vcmp.eq.s32.totalorder %v1224, %v1155
      %vm1275 = vcmp.eq.s32.totalorder %v1227, %v1155
      %vm1276 = vcmp.eq.s32.totalorder %v1230, %v1155
      %vm1277 = vcmp.eq.s32.totalorder %v1233, %v1155
      %vm1278 = vcmp.eq.s32.totalorder %v1236, %v1155
      %vm1279 = vcmp.eq.s32.totalorder %v1239, %v1155
      %vm1280 = vcmp.eq.s32.totalorder %v1242, %v1155
      %vm1281 = vcmp.eq.s32.totalorder %v1245, %v1155
      %vm1282 = vcmp.eq.s32.totalorder %v1248, %v1155
      %vm1283 = vcmp.eq.s32.totalorder %v1251, %v1155
      %v1284 = vsel %vm1252, 1, 0
      %v1285 = vsel %vm1253, 1, 0
      %v1286 = vsel %vm1254, 1, 0
      %v1287 = vsel %vm1255, 1, 0
      %v1288 = vsel %vm1256, 1, 0
      %v1289 = vsel %vm1257, 1, 0
      %v1290 = vsel %vm1258, 1, 0
      %v1291 = vsel %vm1259, 1, 0
      %v1292 = vsel %vm1260, 1, 0
      %v1293 = vsel %vm1261, 1, 0
      %v1294 = vsel %vm1262, 1, 0
      %v1295 = vsel %vm1263, 1, 0
      %v1296 = vsel %vm1264, 1, 0
      %v1297 = vsel %vm1265, 1, 0
      %v1298 = vsel %vm1266, 1, 0
      %v1299 = vsel %vm1267, 1, 0
      %v1300 = vsel %vm1268, 1, 0
      %v1301 = vsel %vm1269, 1, 0
      %v1302 = vsel %vm1270, 1, 0
      %v1303 = vsel %vm1271, 1, 0
      %v1304 = vsel %vm1272, 1, 0
      %v1305 = vsel %vm1273, 1, 0
      %v1306 = vsel %vm1274, 1, 0
      %v1307 = vsel %vm1275, 1, 0
      %v1308 = vsel %vm1276, 1, 0
      %v1309 = vsel %vm1277, 1, 0
      %v1310 = vsel %vm1278, 1, 0
      %v1311 = vsel %vm1279, 1, 0
      %v1312 = vsel %vm1280, 1, 0
      %v1313 = vsel %vm1281, 1, 0
      %v1314 = vsel %vm1282, 1, 0
      %v1315 = vsel %vm1283, 1, 0
      %1316 = vset.pattern.permute.xlu0 0
      %1317 = vperm.xlu0 %1316, %v1284
      %v1318 = vpop.permute.xlu0 %1317
      %1319 = vset.pattern.permute.xlu0 0
      %1320 = vperm.xlu0 %1319, %v1285
      %v1321 = vpop.permute.xlu0 %1320
      %1322 = vset.pattern.permute.xlu0 0
      %1323 = vperm.xlu0 %1322, %v1286
      %v1324 = vpop.permute.xlu0 %1323
      %1325 = vset.pattern.permute.xlu0 0
      %1326 = vperm.xlu0 %1325, %v1287
      %v1327 = vpop.permute.xlu0 %1326
      %1328 = vset.pattern.permute.xlu0 0
      %1329 = vperm.xlu0 %1328, %v1288
      %v1330 = vpop.permute.xlu0 %1329
      %1331 = vset.pattern.permute.xlu0 0
      %1332 = vperm.xlu0 %1331, %v1289
      %v1333 = vpop.permute.xlu0 %1332
      %1334 = vset.pattern.permute.xlu0 0
      %1335 = vperm.xlu0 %1334, %v1290
      %v1336 = vpop.permute.xlu0 %1335
      %1337 = vset.pattern.permute.xlu0 0
      %1338 = vperm.xlu0 %1337, %v1291
      %v1339 = vpop.permute.xlu0 %1338
      %1340 = vset.pattern.permute.xlu0 0
      %1341 = vperm.xlu0 %1340, %v1292
      %v1342 = vpop.permute.xlu0 %1341
      %1343 = vset.pattern.permute.xlu0 0
      %1344 = vperm.xlu0 %1343, %v1293
      %v1345 = vpop.permute.xlu0 %1344
      %1346 = vset.pattern.permute.xlu0 0
      %1347 = vperm.xlu0 %1346, %v1294
      %v1348 = vpop.permute.xlu0 %1347
      %1349 = vset.pattern.permute.xlu0 0
      %1350 = vperm.xlu0 %1349, %v1295
      %v1351 = vpop.permute.xlu0 %1350
      %1352 = vset.pattern.permute.xlu0 0
      %1353 = vperm.xlu0 %1352, %v1296
      %v1354 = vpop.permute.xlu0 %1353
      %1355 = vset.pattern.permute.xlu0 0
      %1356 = vperm.xlu0 %1355, %v1297
      %v1357 = vpop.permute.xlu0 %1356
      %1358 = vset.pattern.permute.xlu0 0
      %1359 = vperm.xlu0 %1358, %v1298
      %v1360 = vpop.permute.xlu0 %1359
      %1361 = vset.pattern.permute.xlu0 0
      %1362 = vperm.xlu0 %1361, %v1299
      %v1363 = vpop.permute.xlu0 %1362
      %1364 = vset.pattern.permute.xlu0 0
      %1365 = vperm.xlu0 %1364, %v1300
      %v1366 = vpop.permute.xlu0 %1365
      %1367 = vset.pattern.permute.xlu0 0
      %1368 = vperm.xlu0 %1367, %v1301
      %v1369 = vpop.permute.xlu0 %1368
      %1370 = vset.pattern.permute.xlu0 0
      %1371 = vperm.xlu0 %1370, %v1302
      %v1372 = vpop.permute.xlu0 %1371
      %1373 = vset.pattern.permute.xlu0 0
      %1374 = vperm.xlu0 %1373, %v1303
      %v1375 = vpop.permute.xlu0 %1374
      %1376 = vset.pattern.permute.xlu0 0
      %1377 = vperm.xlu0 %1376, %v1304
      %v1378 = vpop.permute.xlu0 %1377
      %1379 = vset.pattern.permute.xlu0 0
      %1380 = vperm.xlu0 %1379, %v1305
      %v1381 = vpop.permute.xlu0 %1380
      %1382 = vset.pattern.permute.xlu0 0
      %1383 = vperm.xlu0 %1382, %v1306
      %v1384 = vpop.permute.xlu0 %1383
      %1385 = vset.pattern.permute.xlu0 0
      %1386 = vperm.xlu0 %1385, %v1307
      %v1387 = vpop.permute.xlu0 %1386
      %1388 = vset.pattern.permute.xlu0 0
      %1389 = vperm.xlu0 %1388, %v1308
      %v1390 = vpop.permute.xlu0 %1389
      %1391 = vset.pattern.permute.xlu0 0
      %1392 = vperm.xlu0 %1391, %v1309
      %v1393 = vpop.permute.xlu0 %1392
      %1394 = vset.pattern.permute.xlu0 0
      %1395 = vperm.xlu0 %1394, %v1310
      %v1396 = vpop.permute.xlu0 %1395
      %1397 = vset.pattern.permute.xlu0 0
      %1398 = vperm.xlu0 %1397, %v1311
      %v1399 = vpop.permute.xlu0 %1398
      %1400 = vset.pattern.permute.xlu0 0
      %1401 = vperm.xlu0 %1400, %v1312
      %v1402 = vpop.permute.xlu0 %1401
      %1403 = vset.pattern.permute.xlu0 0
      %1404 = vperm.xlu0 %1403, %v1313
      %v1405 = vpop.permute.xlu0 %1404
      %1406 = vset.pattern.permute.xlu0 0
      %1407 = vperm.xlu0 %1406, %v1314
      %v1408 = vpop.permute.xlu0 %1407
      %1409 = vset.pattern.permute.xlu0 0
      %1410 = vperm.xlu0 %1409, %v1315
      %v1411 = vpop.permute.xlu0 %1410
      %vm1412 = vcmp.eq.s32.totalorder %v1318, 1
      %vm1413 = vcmp.eq.s32.totalorder %v1321, 1
      %vm1414 = vcmp.eq.s32.totalorder %v1324, 1
      %vm1415 = vcmp.eq.s32.totalorder %v1327, 1
      %vm1416 = vcmp.eq.s32.totalorder %v1330, 1
      %vm1417 = vcmp.eq.s32.totalorder %v1333, 1
      %vm1418 = vcmp.eq.s32.totalorder %v1336, 1
      %vm1419 = vcmp.eq.s32.totalorder %v1339, 1
      %vm1420 = vcmp.eq.s32.totalorder %v1342, 1
      %vm1421 = vcmp.eq.s32.totalorder %v1345, 1
      %vm1422 = vcmp.eq.s32.totalorder %v1348, 1
      %vm1423 = vcmp.eq.s32.totalorder %v1351, 1
      %vm1424 = vcmp.eq.s32.totalorder %v1354, 1
      %vm1425 = vcmp.eq.s32.totalorder %v1357, 1
      %vm1426 = vcmp.eq.s32.totalorder %v1360, 1
      %vm1427 = vcmp.eq.s32.totalorder %v1363, 1
      %vm1428 = vcmp.eq.s32.totalorder %v1366, 1
      %vm1429 = vcmp.eq.s32.totalorder %v1369, 1
      %vm1430 = vcmp.eq.s32.totalorder %v1372, 1
      %vm1431 = vcmp.eq.s32.totalorder %v1375, 1
      %vm1432 = vcmp.eq.s32.totalorder %v1378, 1
      %vm1433 = vcmp.eq.s32.totalorder %v1381, 1
      %vm1434 = vcmp.eq.s32.totalorder %v1384, 1
      %vm1435 = vcmp.eq.s32.totalorder %v1387, 1
      %vm1436 = vcmp.eq.s32.totalorder %v1390, 1
      %vm1437 = vcmp.eq.s32.totalorder %v1393, 1
      %vm1438 = vcmp.eq.s32.totalorder %v1396, 1
      %vm1439 = vcmp.eq.s32.totalorder %v1399, 1
      %vm1440 = vcmp.eq.s32.totalorder %v1402, 1
      %vm1441 = vcmp.eq.s32.totalorder %v1405, 1
      %vm1442 = vcmp.eq.s32.totalorder %v1408, 1
      %vm1443 = vcmp.eq.s32.totalorder %v1411, 1
      %v1444 = vsel %vm1412, %v1049, 0.0
      %v1445 = vsel %vm1413, %v1050, 0.0
      %v1446 = vsel %vm1414, %v1051, 0.0
      %v1447 = vsel %vm1415, %v1052, 0.0
      %v1448 = vsel %vm1416, %v1053, 0.0
      %v1449 = vsel %vm1417, %v1054, 0.0
      %v1450 = vsel %vm1418, %v1055, 0.0
      %v1451 = vsel %vm1419, %v1056, 0.0
      %v1452 = vsel %vm1420, %v1057, 0.0
      %v1453 = vsel %vm1421, %v1058, 0.0
      %v1454 = vsel %vm1422, %v1059, 0.0
      %v1455 = vsel %vm1423, %v1060, 0.0
      %v1456 = vsel %vm1424, %v1061, 0.0
      %v1457 = vsel %vm1425, %v1062, 0.0
      %v1458 = vsel %vm1426, %v1063, 0.0
      %v1459 = vsel %vm1427, %v1064, 0.0
      %v1460 = vsel %vm1428, %v1065, 0.0
      %v1461 = vsel %vm1429, %v1066, 0.0
      %v1462 = vsel %vm1430, %v1067, 0.0
      %v1463 = vsel %vm1431, %v1068, 0.0
      %v1464 = vsel %vm1432, %v1069, 0.0
      %v1465 = vsel %vm1433, %v1070, 0.0
      %v1466 = vsel %vm1434, %v1071, 0.0
      %v1467 = vsel %vm1435, %v1072, 0.0
      %v1468 = vsel %vm1436, %v1073, 0.0
      %v1469 = vsel %vm1437, %v1074, 0.0
      %v1470 = vsel %vm1438, %v1075, 0.0
      %v1471 = vsel %vm1439, %v1076, 0.0
      %v1472 = vsel %vm1440, %v1077, 0.0
      %v1473 = vsel %vm1441, %v1078, 0.0
      %v1474 = vsel %vm1442, %v1079, 0.0
      %v1475 = vsel %vm1443, %v1080, 0.0
      %v1476 = vsel %vm1081, %v1444, -inf
      %v1477 = vsel %vm1081, %v1445, -inf
      %v1478 = vsel %vm1081, %v1446, -inf
      %v1479 = vsel %vm1081, %v1447, -inf
      %v1480 = vsel %vm1081, %v1448, -inf
      %v1481 = vmax.f32 %v1476, %v1480
      %v1482 = vsel %vm1081, %v1449, -inf
      %v1483 = vmax.f32 %v1477, %v1482
      %v1484 = vsel %vm1081, %v1450, -inf
      %v1485 = vmax.f32 %v1478, %v1484
      %v1486 = vsel %vm1081, %v1451, -inf
      %v1487 = vmax.f32 %v1479, %v1486
      %v1488 = vsel %vm1081, %v1452, -inf
      %v1489 = vmax.f32 %v1481, %v1488
      %v1490 = vsel %vm1081, %v1453, -inf
      %v1491 = vmax.f32 %v1483, %v1490
      %v1492 = vsel %vm1081, %v1454, -inf
      %v1493 = vmax.f32 %v1485, %v1492
      %v1494 = vsel %vm1081, %v1455, -inf
      %v1495 = vmax.f32 %v1487, %v1494
      %v1496 = vsel %vm1081, %v1456, -inf
      %v1497 = vmax.f32 %v1489, %v1496
      %v1498 = vsel %vm1081, %v1457, -inf
      %v1499 = vmax.f32 %v1491, %v1498
      %v1500 = vsel %vm1081, %v1458, -inf
      %v1501 = vmax.f32 %v1493, %v1500
      %v1502 = vsel %vm1081, %v1459, -inf
      %v1503 = vmax.f32 %v1495, %v1502
      %v1504 = vsel %vm1081, %v1460, -inf
      %v1505 = vmax.f32 %v1497, %v1504
      %v1506 = vsel %vm1081, %v1461, -inf
      %v1507 = vmax.f32 %v1499, %v1506
      %v1508 = vsel %vm1081, %v1462, -inf
      %v1509 = vmax.f32 %v1501, %v1508
      %v1510 = vsel %vm1081, %v1463, -inf
      %v1511 = vmax.f32 %v1503, %v1510
      %v1512 = vsel %vm1081, %v1464, -inf
      %v1513 = vmax.f32 %v1505, %v1512
      %v1514 = vsel %vm1081, %v1465, -inf
      %v1515 = vmax.f32 %v1507, %v1514
      %v1516 = vsel %vm1081, %v1466, -inf
      %v1517 = vmax.f32 %v1509, %v1516
      %v1518 = vsel %vm1081, %v1467, -inf
      %v1519 = vmax.f32 %v1511, %v1518
      %v1520 = vsel %vm1081, %v1468, -inf
      %v1521 = vmax.f32 %v1513, %v1520
      %v1522 = vsel %vm1081, %v1469, -inf
      %v1523 = vmax.f32 %v1515, %v1522
      %v1524 = vsel %vm1081, %v1470, -inf
      %v1525 = vmax.f32 %v1517, %v1524
      %v1526 = vsel %vm1081, %v1471, -inf
      %v1527 = vmax.f32 %v1519, %v1526
      %v1528 = vsel %vm1081, %v1472, -inf
      %v1529 = vmax.f32 %v1521, %v1528
      %v1530 = vsel %vm1081, %v1473, -inf
      %v1531 = vmax.f32 %v1523, %v1530
      %v1532 = vsel %vm1081, %v1474, -inf
      %v1533 = vmax.f32 %v1525, %v1532
      %v1534 = vsel %vm1081, %v1475, -inf
      %v1535 = vmax.f32 %v1527, %v1534
      %v1536 = vmax.f32 %v1529, %v1531
      %v1537 = vmax.f32 %v1533, %v1535
      %v1538 = vmax.f32 %v1536, %v1537
      %v1539 = vrot.slane %v1538, 4
      %v1540 = vmax.f32 %v1538, %v1539
      %v1541 = vrot.slane %v1540, 2
      %v1542 = vmax.f32 %v1540, %v1541
      %v1543 = vrot.slane %v1542, 1
      %v1544 = vmax.f32 %v1542, %v1543
      %1545 = vset.pattern.permute.xlu0 1
      %1546 = vperm.xlu0 %1545, %v1284
      %v1547 = vpop.permute.xlu0 %1546
      %1548 = vset.pattern.permute.xlu0 1
      %1549 = vperm.xlu0 %1548, %v1285
      %v1550 = vpop.permute.xlu0 %1549
      %1551 = vset.pattern.permute.xlu0 1
      %1552 = vperm.xlu0 %1551, %v1286
      %v1553 = vpop.permute.xlu0 %1552
      %1554 = vset.pattern.permute.xlu0 1
      %1555 = vperm.xlu0 %1554, %v1287
      %v1556 = vpop.permute.xlu0 %1555
      %1557 = vset.pattern.permute.xlu0 1
      %1558 = vperm.xlu0 %1557, %v1288
      %v1559 = vpop.permute.xlu0 %1558
      %1560 = vset.pattern.permute.xlu0 1
      %1561 = vperm.xlu0 %1560, %v1289
      %v1562 = vpop.permute.xlu0 %1561
      %1563 = vset.pattern.permute.xlu0 1
      %1564 = vperm.xlu0 %1563, %v1290
      %v1565 = vpop.permute.xlu0 %1564
      %1566 = vset.pattern.permute.xlu0 1
      %1567 = vperm.xlu0 %1566, %v1291
      %v1568 = vpop.permute.xlu0 %1567
      %1569 = vset.pattern.permute.xlu0 1
      %1570 = vperm.xlu0 %1569, %v1292
      %v1571 = vpop.permute.xlu0 %1570
      %1572 = vset.pattern.permute.xlu0 1
      %1573 = vperm.xlu0 %1572, %v1293
      %v1574 = vpop.permute.xlu0 %1573
      %1575 = vset.pattern.permute.xlu0 1
      %1576 = vperm.xlu0 %1575, %v1294
      %v1577 = vpop.permute.xlu0 %1576
      %1578 = vset.pattern.permute.xlu0 1
      %1579 = vperm.xlu0 %1578, %v1295
      %v1580 = vpop.permute.xlu0 %1579
      %1581 = vset.pattern.permute.xlu0 1
      %1582 = vperm.xlu0 %1581, %v1296
      %v1583 = vpop.permute.xlu0 %1582
      %1584 = vset.pattern.permute.xlu0 1
      %1585 = vperm.xlu0 %1584, %v1297
      %v1586 = vpop.permute.xlu0 %1585
      %1587 = vset.pattern.permute.xlu0 1
      %1588 = vperm.xlu0 %1587, %v1298
      %v1589 = vpop.permute.xlu0 %1588
      %1590 = vset.pattern.permute.xlu0 1
      %1591 = vperm.xlu0 %1590, %v1299
      %v1592 = vpop.permute.xlu0 %1591
      %1593 = vset.pattern.permute.xlu0 1
      %1594 = vperm.xlu0 %1593, %v1300
      %v1595 = vpop.permute.xlu0 %1594
      %1596 = vset.pattern.permute.xlu0 1
      %1597 = vperm.xlu0 %1596, %v1301
      %v1598 = vpop.permute.xlu0 %1597
      %1599 = vset.pattern.permute.xlu0 1
      %1600 = vperm.xlu0 %1599, %v1302
      %v1601 = vpop.permute.xlu0 %1600
      %1602 = vset.pattern.permute.xlu0 1
      %1603 = vperm.xlu0 %1602, %v1303
      %v1604 = vpop.permute.xlu0 %1603
      %1605 = vset.pattern.permute.xlu0 1
      %1606 = vperm.xlu0 %1605, %v1304
      %v1607 = vpop.permute.xlu0 %1606
      %1608 = vset.pattern.permute.xlu0 1
      %1609 = vperm.xlu0 %1608, %v1305
      %v1610 = vpop.permute.xlu0 %1609
      %1611 = vset.pattern.permute.xlu0 1
      %1612 = vperm.xlu0 %1611, %v1306
      %v1613 = vpop.permute.xlu0 %1612
      %1614 = vset.pattern.permute.xlu0 1
      %1615 = vperm.xlu0 %1614, %v1307
      %v1616 = vpop.permute.xlu0 %1615
      %1617 = vset.pattern.permute.xlu0 1
      %1618 = vperm.xlu0 %1617, %v1308
      %v1619 = vpop.permute.xlu0 %1618
      %1620 = vset.pattern.permute.xlu0 1
      %1621 = vperm.xlu0 %1620, %v1309
      %v1622 = vpop.permute.xlu0 %1621
      %1623 = vset.pattern.permute.xlu0 1
      %1624 = vperm.xlu0 %1623, %v1310
      %v1625 = vpop.permute.xlu0 %1624
      %1626 = vset.pattern.permute.xlu0 1
      %1627 = vperm.xlu0 %1626, %v1311
      %v1628 = vpop.permute.xlu0 %1627
      %1629 = vset.pattern.permute.xlu0 1
      %1630 = vperm.xlu0 %1629, %v1312
      %v1631 = vpop.permute.xlu0 %1630
      %1632 = vset.pattern.permute.xlu0 1
      %1633 = vperm.xlu0 %1632, %v1313
      %v1634 = vpop.permute.xlu0 %1633
      %1635 = vset.pattern.permute.xlu0 1
      %1636 = vperm.xlu0 %1635, %v1314
      %v1637 = vpop.permute.xlu0 %1636
      %1638 = vset.pattern.permute.xlu0 1
      %1639 = vperm.xlu0 %1638, %v1315
      %v1640 = vpop.permute.xlu0 %1639
      %vm1641 = vcmp.eq.s32.totalorder %v1547, 1
      %vm1642 = vcmp.eq.s32.totalorder %v1550, 1
      %vm1643 = vcmp.eq.s32.totalorder %v1553, 1
      %vm1644 = vcmp.eq.s32.totalorder %v1556, 1
      %vm1645 = vcmp.eq.s32.totalorder %v1559, 1
      %vm1646 = vcmp.eq.s32.totalorder %v1562, 1
      %vm1647 = vcmp.eq.s32.totalorder %v1565, 1
      %vm1648 = vcmp.eq.s32.totalorder %v1568, 1
      %vm1649 = vcmp.eq.s32.totalorder %v1571, 1
      %vm1650 = vcmp.eq.s32.totalorder %v1574, 1
      %vm1651 = vcmp.eq.s32.totalorder %v1577, 1
      %vm1652 = vcmp.eq.s32.totalorder %v1580, 1
      %vm1653 = vcmp.eq.s32.totalorder %v1583, 1
      %vm1654 = vcmp.eq.s32.totalorder %v1586, 1
      %vm1655 = vcmp.eq.s32.totalorder %v1589, 1
      %vm1656 = vcmp.eq.s32.totalorder %v1592, 1
      %vm1657 = vcmp.eq.s32.totalorder %v1595, 1
      %vm1658 = vcmp.eq.s32.totalorder %v1598, 1
      %vm1659 = vcmp.eq.s32.totalorder %v1601, 1
      %vm1660 = vcmp.eq.s32.totalorder %v1604, 1
      %vm1661 = vcmp.eq.s32.totalorder %v1607, 1
      %vm1662 = vcmp.eq.s32.totalorder %v1610, 1
      %vm1663 = vcmp.eq.s32.totalorder %v1613, 1
      %vm1664 = vcmp.eq.s32.totalorder %v1616, 1
      %vm1665 = vcmp.eq.s32.totalorder %v1619, 1
      %vm1666 = vcmp.eq.s32.totalorder %v1622, 1
      %vm1667 = vcmp.eq.s32.totalorder %v1625, 1
      %vm1668 = vcmp.eq.s32.totalorder %v1628, 1
      %vm1669 = vcmp.eq.s32.totalorder %v1631, 1
      %vm1670 = vcmp.eq.s32.totalorder %v1634, 1
      %vm1671 = vcmp.eq.s32.totalorder %v1637, 1
      %vm1672 = vcmp.eq.s32.totalorder %v1640, 1
      %v1673 = vsel %vm1641, %v1049, 0.0
      %v1674 = vsel %vm1642, %v1050, 0.0
      %v1675 = vsel %vm1643, %v1051, 0.0
      %v1676 = vsel %vm1644, %v1052, 0.0
      %v1677 = vsel %vm1645, %v1053, 0.0
      %v1678 = vsel %vm1646, %v1054, 0.0
      %v1679 = vsel %vm1647, %v1055, 0.0
      %v1680 = vsel %vm1648, %v1056, 0.0
      %v1681 = vsel %vm1649, %v1057, 0.0
      %v1682 = vsel %vm1650, %v1058, 0.0
      %v1683 = vsel %vm1651, %v1059, 0.0
      %v1684 = vsel %vm1652, %v1060, 0.0
      %v1685 = vsel %vm1653, %v1061, 0.0
      %v1686 = vsel %vm1654, %v1062, 0.0
      %v1687 = vsel %vm1655, %v1063, 0.0
      %v1688 = vsel %vm1656, %v1064, 0.0
      %v1689 = vsel %vm1657, %v1065, 0.0
      %v1690 = vsel %vm1658, %v1066, 0.0
      %v1691 = vsel %vm1659, %v1067, 0.0
      %v1692 = vsel %vm1660, %v1068, 0.0
      %v1693 = vsel %vm1661, %v1069, 0.0
      %v1694 = vsel %vm1662, %v1070, 0.0
      %v1695 = vsel %vm1663, %v1071, 0.0
      %v1696 = vsel %vm1664, %v1072, 0.0
      %v1697 = vsel %vm1665, %v1073, 0.0
      %v1698 = vsel %vm1666, %v1074, 0.0
      %v1699 = vsel %vm1667, %v1075, 0.0
      %v1700 = vsel %vm1668, %v1076, 0.0
      %v1701 = vsel %vm1669, %v1077, 0.0
      %v1702 = vsel %vm1670, %v1078, 0.0
      %v1703 = vsel %vm1671, %v1079, 0.0
      %v1704 = vsel %vm1672, %v1080, 0.0
      %v1705 = vsel %vm1081, %v1673, -inf
      %v1706 = vsel %vm1081, %v1674, -inf
      %v1707 = vsel %vm1081, %v1675, -inf
      %v1708 = vsel %vm1081, %v1676, -inf
      %v1709 = vsel %vm1081, %v1677, -inf
      %v1710 = vmax.f32 %v1705, %v1709
      %v1711 = vsel %vm1081, %v1678, -inf
      %v1712 = vmax.f32 %v1706, %v1711
      %v1713 = vsel %vm1081, %v1679, -inf
      %v1714 = vmax.f32 %v1707, %v1713
      %v1715 = vsel %vm1081, %v1680, -inf
      %v1716 = vmax.f32 %v1708, %v1715
      %v1717 = vsel %vm1081, %v1681, -inf
      %v1718 = vmax.f32 %v1710, %v1717
      %v1719 = vsel %vm1081, %v1682, -inf
      %v1720 = vmax.f32 %v1712, %v1719
      %v1721 = vsel %vm1081, %v1683, -inf
      %v1722 = vmax.f32 %v1714, %v1721
      %v1723 = vsel %vm1081, %v1684, -inf
      %v1724 = vmax.f32 %v1716, %v1723
      %v1725 = vsel %vm1081, %v1685, -inf
      %v1726 = vmax.f32 %v1718, %v1725
      %v1727 = vsel %vm1081, %v1686, -inf
      %v1728 = vmax.f32 %v1720, %v1727
      %v1729 = vsel %vm1081, %v1687, -inf
      %v1730 = vmax.f32 %v1722, %v1729
      %v1731 = vsel %vm1081, %v1688, -inf
      %v1732 = vmax.f32 %v1724, %v1731
      %v1733 = vsel %vm1081, %v1689, -inf
      %v1734 = vmax.f32 %v1726, %v1733
      %v1735 = vsel %vm1081, %v1690, -inf
      %v1736 = vmax.f32 %v1728, %v1735
      %v1737 = vsel %vm1081, %v1691, -inf
      %v1738 = vmax.f32 %v1730, %v1737
      %v1739 = vsel %vm1081, %v1692, -inf
      %v1740 = vmax.f32 %v1732, %v1739
      %v1741 = vsel %vm1081, %v1693, -inf
      %v1742 = vmax.f32 %v1734, %v1741
      %v1743 = vsel %vm1081, %v1694, -inf
      %v1744 = vmax.f32 %v1736, %v1743
      %v1745 = vsel %vm1081, %v1695, -inf
      %v1746 = vmax.f32 %v1738, %v1745
      %v1747 = vsel %vm1081, %v1696, -inf
      %v1748 = vmax.f32 %v1740, %v1747
      %v1749 = vsel %vm1081, %v1697, -inf
      %v1750 = vmax.f32 %v1742, %v1749
      %v1751 = vsel %vm1081, %v1698, -inf
      %v1752 = vmax.f32 %v1744, %v1751
      %v1753 = vsel %vm1081, %v1699, -inf
      %v1754 = vmax.f32 %v1746, %v1753
      %v1755 = vsel %vm1081, %v1700, -inf
      %v1756 = vmax.f32 %v1748, %v1755
      %v1757 = vsel %vm1081, %v1701, -inf
      %v1758 = vmax.f32 %v1750, %v1757
      %v1759 = vsel %vm1081, %v1702, -inf
      %v1760 = vmax.f32 %v1752, %v1759
      %v1761 = vsel %vm1081, %v1703, -inf
      %v1762 = vmax.f32 %v1754, %v1761
      %v1763 = vsel %vm1081, %v1704, -inf
      %v1764 = vmax.f32 %v1756, %v1763
      %v1765 = vmax.f32 %v1758, %v1760
      %v1766 = vmax.f32 %v1762, %v1764
      %v1767 = vmax.f32 %v1765, %v1766
      %v1768 = vrot.slane %v1767, 4
      %v1769 = vmax.f32 %v1767, %v1768
      %v1770 = vrot.slane %v1769, 2
      %v1771 = vmax.f32 %v1769, %v1770
      %v1772 = vrot.slane %v1771, 1
      %v1773 = vmax.f32 %v1771, %v1772
      %1774 = vset.pattern.permute.xlu0 2
      %1775 = vperm.xlu0 %1774, %v1284
      %v1776 = vpop.permute.xlu0 %1775
      %1777 = vset.pattern.permute.xlu0 2
      %1778 = vperm.xlu0 %1777, %v1285
      %v1779 = vpop.permute.xlu0 %1778
      %1780 = vset.pattern.permute.xlu0 2
      %1781 = vperm.xlu0 %1780, %v1286
      %v1782 = vpop.permute.xlu0 %1781
      %1783 = vset.pattern.permute.xlu0 2
      %1784 = vperm.xlu0 %1783, %v1287
      %v1785 = vpop.permute.xlu0 %1784
      %1786 = vset.pattern.permute.xlu0 2
      %1787 = vperm.xlu0 %1786, %v1288
      %v1788 = vpop.permute.xlu0 %1787
      %1789 = vset.pattern.permute.xlu0 2
      %1790 = vperm.xlu0 %1789, %v1289
      %v1791 = vpop.permute.xlu0 %1790
      %1792 = vset.pattern.permute.xlu0 2
      %1793 = vperm.xlu0 %1792, %v1290
      %v1794 = vpop.permute.xlu0 %1793
      %1795 = vset.pattern.permute.xlu0 2
      %1796 = vperm.xlu0 %1795, %v1291
      %v1797 = vpop.permute.xlu0 %1796
      %1798 = vset.pattern.permute.xlu0 2
      %1799 = vperm.xlu0 %1798, %v1292
      %v1800 = vpop.permute.xlu0 %1799
      %1801 = vset.pattern.permute.xlu0 2
      %1802 = vperm.xlu0 %1801, %v1293
      %v1803 = vpop.permute.xlu0 %1802
      %1804 = vset.pattern.permute.xlu0 2
      %1805 = vperm.xlu0 %1804, %v1294
      %v1806 = vpop.permute.xlu0 %1805
      %1807 = vset.pattern.permute.xlu0 2
      %1808 = vperm.xlu0 %1807, %v1295
      %v1809 = vpop.permute.xlu0 %1808
      %1810 = vset.pattern.permute.xlu0 2
      %1811 = vperm.xlu0 %1810, %v1296
      %v1812 = vpop.permute.xlu0 %1811
      %1813 = vset.pattern.permute.xlu0 2
      %1814 = vperm.xlu0 %1813, %v1297
      %v1815 = vpop.permute.xlu0 %1814
      %1816 = vset.pattern.permute.xlu0 2
      %1817 = vperm.xlu0 %1816, %v1298
      %v1818 = vpop.permute.xlu0 %1817
      %1819 = vset.pattern.permute.xlu0 2
      %1820 = vperm.xlu0 %1819, %v1299
      %v1821 = vpop.permute.xlu0 %1820
      %1822 = vset.pattern.permute.xlu0 2
      %1823 = vperm.xlu0 %1822, %v1300
      %v1824 = vpop.permute.xlu0 %1823
      %1825 = vset.pattern.permute.xlu0 2
      %1826 = vperm.xlu0 %1825, %v1301
      %v1827 = vpop.permute.xlu0 %1826
      %1828 = vset.pattern.permute.xlu0 2
      %1829 = vperm.xlu0 %1828, %v1302
      %v1830 = vpop.permute.xlu0 %1829
      %1831 = vset.pattern.permute.xlu0 2
      %1832 = vperm.xlu0 %1831, %v1303
      %v1833 = vpop.permute.xlu0 %1832
      %1834 = vset.pattern.permute.xlu0 2
      %1835 = vperm.xlu0 %1834, %v1304
      %v1836 = vpop.permute.xlu0 %1835
      %1837 = vset.pattern.permute.xlu0 2
      %1838 = vperm.xlu0 %1837, %v1305
      %v1839 = vpop.permute.xlu0 %1838
      %1840 = vset.pattern.permute.xlu0 2
      %1841 = vperm.xlu0 %1840, %v1306
      %v1842 = vpop.permute.xlu0 %1841
      %1843 = vset.pattern.permute.xlu0 2
      %1844 = vperm.xlu0 %1843, %v1307
      %v1845 = vpop.permute.xlu0 %1844
      %1846 = vset.pattern.permute.xlu0 2
      %1847 = vperm.xlu0 %1846, %v1308
      %v1848 = vpop.permute.xlu0 %1847
      %1849 = vset.pattern.permute.xlu0 2
      %1850 = vperm.xlu0 %1849, %v1309
      %v1851 = vpop.permute.xlu0 %1850
      %1852 = vset.pattern.permute.xlu0 2
      %1853 = vperm.xlu0 %1852, %v1310
      %v1854 = vpop.permute.xlu0 %1853
      %1855 = vset.pattern.permute.xlu0 2
      %1856 = vperm.xlu0 %1855, %v1311
      %v1857 = vpop.permute.xlu0 %1856
      %1858 = vset.pattern.permute.xlu0 2
      %1859 = vperm.xlu0 %1858, %v1312
      %v1860 = vpop.permute.xlu0 %1859
      %1861 = vset.pattern.permute.xlu0 2
      %1862 = vperm.xlu0 %1861, %v1313
      %v1863 = vpop.permute.xlu0 %1862
      %1864 = vset.pattern.permute.xlu0 2
      %1865 = vperm.xlu0 %1864, %v1314
      %v1866 = vpop.permute.xlu0 %1865
      %1867 = vset.pattern.permute.xlu0 2
      %1868 = vperm.xlu0 %1867, %v1315
      %v1869 = vpop.permute.xlu0 %1868
      %vm1870 = vcmp.eq.s32.totalorder %v1776, 1
      %vm1871 = vcmp.eq.s32.totalorder %v1779, 1
      %vm1872 = vcmp.eq.s32.totalorder %v1782, 1
      %vm1873 = vcmp.eq.s32.totalorder %v1785, 1
      %vm1874 = vcmp.eq.s32.totalorder %v1788, 1
      %vm1875 = vcmp.eq.s32.totalorder %v1791, 1
      %vm1876 = vcmp.eq.s32.totalorder %v1794, 1
      %vm1877 = vcmp.eq.s32.totalorder %v1797, 1
      %vm1878 = vcmp.eq.s32.totalorder %v1800, 1
      %vm1879 = vcmp.eq.s32.totalorder %v1803, 1
      %vm1880 = vcmp.eq.s32.totalorder %v1806, 1
      %vm1881 = vcmp.eq.s32.totalorder %v1809, 1
      %vm1882 = vcmp.eq.s32.totalorder %v1812, 1
      %vm1883 = vcmp.eq.s32.totalorder %v1815, 1
      %vm1884 = vcmp.eq.s32.totalorder %v1818, 1
      %vm1885 = vcmp.eq.s32.totalorder %v1821, 1
      %vm1886 = vcmp.eq.s32.totalorder %v1824, 1
      %vm1887 = vcmp.eq.s32.totalorder %v1827, 1
      %vm1888 = vcmp.eq.s32.totalorder %v1830, 1
      %vm1889 = vcmp.eq.s32.totalorder %v1833, 1
      %vm1890 = vcmp.eq.s32.totalorder %v1836, 1
      %vm1891 = vcmp.eq.s32.totalorder %v1839, 1
      %vm1892 = vcmp.eq.s32.totalorder %v1842, 1
      %vm1893 = vcmp.eq.s32.totalorder %v1845, 1
      %vm1894 = vcmp.eq.s32.totalorder %v1848, 1
      %vm1895 = vcmp.eq.s32.totalorder %v1851, 1
      %vm1896 = vcmp.eq.s32.totalorder %v1854, 1
      %vm1897 = vcmp.eq.s32.totalorder %v1857, 1
      %vm1898 = vcmp.eq.s32.totalorder %v1860, 1
      %vm1899 = vcmp.eq.s32.totalorder %v1863, 1
      %vm1900 = vcmp.eq.s32.totalorder %v1866, 1
      %vm1901 = vcmp.eq.s32.totalorder %v1869, 1
      %v1902 = vsel %vm1870, %v1049, 0.0
      %v1903 = vsel %vm1871, %v1050, 0.0
      %v1904 = vsel %vm1872, %v1051, 0.0
      %v1905 = vsel %vm1873, %v1052, 0.0
      %v1906 = vsel %vm1874, %v1053, 0.0
      %v1907 = vsel %vm1875, %v1054, 0.0
      %v1908 = vsel %vm1876, %v1055, 0.0
      %v1909 = vsel %vm1877, %v1056, 0.0
      %v1910 = vsel %vm1878, %v1057, 0.0
      %v1911 = vsel %vm1879, %v1058, 0.0
      %v1912 = vsel %vm1880, %v1059, 0.0
      %v1913 = vsel %vm1881, %v1060, 0.0
      %v1914 = vsel %vm1882, %v1061, 0.0
      %v1915 = vsel %vm1883, %v1062, 0.0
      %v1916 = vsel %vm1884, %v1063, 0.0
      %v1917 = vsel %vm1885, %v1064, 0.0
      %v1918 = vsel %vm1886, %v1065, 0.0
      %v1919 = vsel %vm1887, %v1066, 0.0
      %v1920 = vsel %vm1888, %v1067, 0.0
      %v1921 = vsel %vm1889, %v1068, 0.0
      %v1922 = vsel %vm1890, %v1069, 0.0
      %v1923 = vsel %vm1891, %v1070, 0.0
      %v1924 = vsel %vm1892, %v1071, 0.0
      %v1925 = vsel %vm1893, %v1072, 0.0
      %v1926 = vsel %vm1894, %v1073, 0.0
      %v1927 = vsel %vm1895, %v1074, 0.0
      %v1928 = vsel %vm1896, %v1075, 0.0
      %v1929 = vsel %vm1897, %v1076, 0.0
      %v1930 = vsel %vm1898, %v1077, 0.0
      %v1931 = vsel %vm1899, %v1078, 0.0
      %v1932 = vsel %vm1900, %v1079, 0.0
      %v1933 = vsel %vm1901, %v1080, 0.0
      %v1934 = vsel %vm1081, %v1902, -inf
      %v1935 = vsel %vm1081, %v1903, -inf
      %v1936 = vsel %vm1081, %v1904, -inf
      %v1937 = vsel %vm1081, %v1905, -inf
      %v1938 = vsel %vm1081, %v1906, -inf
      %v1939 = vmax.f32 %v1934, %v1938
      %v1940 = vsel %vm1081, %v1907, -inf
      %v1941 = vmax.f32 %v1935, %v1940
      %v1942 = vsel %vm1081, %v1908, -inf
      %v1943 = vmax.f32 %v1936, %v1942
      %v1944 = vsel %vm1081, %v1909, -inf
      %v1945 = vmax.f32 %v1937, %v1944
      %v1946 = vsel %vm1081, %v1910, -inf
      %v1947 = vmax.f32 %v1939, %v1946
      %v1948 = vsel %vm1081, %v1911, -inf
      %v1949 = vmax.f32 %v1941, %v1948
      %v1950 = vsel %vm1081, %v1912, -inf
      %v1951 = vmax.f32 %v1943, %v1950
      %v1952 = vsel %vm1081, %v1913, -inf
      %v1953 = vmax.f32 %v1945, %v1952
      %v1954 = vsel %vm1081, %v1914, -inf
      %v1955 = vmax.f32 %v1947, %v1954
      %v1956 = vsel %vm1081, %v1915, -inf
      %v1957 = vmax.f32 %v1949, %v1956
      %v1958 = vsel %vm1081, %v1916, -inf
      %v1959 = vmax.f32 %v1951, %v1958
      %v1960 = vsel %vm1081, %v1917, -inf
      %v1961 = vmax.f32 %v1953, %v1960
      %v1962 = vsel %vm1081, %v1918, -inf
      %v1963 = vmax.f32 %v1955, %v1962
      %v1964 = vsel %vm1081, %v1919, -inf
      %v1965 = vmax.f32 %v1957, %v1964
      %v1966 = vsel %vm1081, %v1920, -inf
      %v1967 = vmax.f32 %v1959, %v1966
      %v1968 = vsel %vm1081, %v1921, -inf
      %v1969 = vmax.f32 %v1961, %v1968
      %v1970 = vsel %vm1081, %v1922, -inf
      %v1971 = vmax.f32 %v1963, %v1970
      %v1972 = vsel %vm1081, %v1923, -inf
      %v1973 = vmax.f32 %v1965, %v1972
      %v1974 = vsel %vm1081, %v1924, -inf
      %v1975 = vmax.f32 %v1967, %v1974
      %v1976 = vsel %vm1081, %v1925, -inf
      %v1977 = vmax.f32 %v1969, %v1976
      %v1978 = vsel %vm1081, %v1926, -inf
      %v1979 = vmax.f32 %v1971, %v1978
      %v1980 = vsel %vm1081, %v1927, -inf
      %v1981 = vmax.f32 %v1973, %v1980
      %v1982 = vsel %vm1081, %v1928, -inf
      %v1983 = vmax.f32 %v1975, %v1982
      %v1984 = vsel %vm1081, %v1929, -inf
      %v1985 = vmax.f32 %v1977, %v1984
      %v1986 = vsel %vm1081, %v1930, -inf
      %v1987 = vmax.f32 %v1979, %v1986
      %v1988 = vsel %vm1081, %v1931, -inf
      %v1989 = vmax.f32 %v1981, %v1988
      %v1990 = vsel %vm1081, %v1932, -inf
      %v1991 = vmax.f32 %v1983, %v1990
      %v1992 = vsel %vm1081, %v1933, -inf
      %v1993 = vmax.f32 %v1985, %v1992
      %v1994 = vmax.f32 %v1987, %v1989
      %v1995 = vmax.f32 %v1991, %v1993
      %v1996 = vmax.f32 %v1994, %v1995
      %v1997 = vrot.slane %v1996, 4
      %v1998 = vmax.f32 %v1996, %v1997
      %v1999 = vrot.slane %v1998, 2
      %v2000 = vmax.f32 %v1998, %v1999
      %v2001 = vrot.slane %v2000, 1
      %v2002 = vmax.f32 %v2000, %v2001
      %2003 = vset.pattern.permute.xlu0 3
      %2004 = vperm.xlu0 %2003, %v1284
      %v2005 = vpop.permute.xlu0 %2004
      %2006 = vset.pattern.permute.xlu0 3
      %2007 = vperm.xlu0 %2006, %v1285
      %v2008 = vpop.permute.xlu0 %2007
      %2009 = vset.pattern.permute.xlu0 3
      %2010 = vperm.xlu0 %2009, %v1286
      %v2011 = vpop.permute.xlu0 %2010
      %2012 = vset.pattern.permute.xlu0 3
      %2013 = vperm.xlu0 %2012, %v1287
      %v2014 = vpop.permute.xlu0 %2013
      %2015 = vset.pattern.permute.xlu0 3
      %2016 = vperm.xlu0 %2015, %v1288
      %v2017 = vpop.permute.xlu0 %2016
      %2018 = vset.pattern.permute.xlu0 3
      %2019 = vperm.xlu0 %2018, %v1289
      %v2020 = vpop.permute.xlu0 %2019
      %2021 = vset.pattern.permute.xlu0 3
      %2022 = vperm.xlu0 %2021, %v1290
      %v2023 = vpop.permute.xlu0 %2022
      %2024 = vset.pattern.permute.xlu0 3
      %2025 = vperm.xlu0 %2024, %v1291
      %v2026 = vpop.permute.xlu0 %2025
      %2027 = vset.pattern.permute.xlu0 3
      %2028 = vperm.xlu0 %2027, %v1292
      %v2029 = vpop.permute.xlu0 %2028
      %2030 = vset.pattern.permute.xlu0 3
      %2031 = vperm.xlu0 %2030, %v1293
      %v2032 = vpop.permute.xlu0 %2031
      %2033 = vset.pattern.permute.xlu0 3
      %2034 = vperm.xlu0 %2033, %v1294
      %v2035 = vpop.permute.xlu0 %2034
      %2036 = vset.pattern.permute.xlu0 3
      %2037 = vperm.xlu0 %2036, %v1295
      %v2038 = vpop.permute.xlu0 %2037
      %2039 = vset.pattern.permute.xlu0 3
      %2040 = vperm.xlu0 %2039, %v1296
      %v2041 = vpop.permute.xlu0 %2040
      %2042 = vset.pattern.permute.xlu0 3
      %2043 = vperm.xlu0 %2042, %v1297
      %v2044 = vpop.permute.xlu0 %2043
      %2045 = vset.pattern.permute.xlu0 3
      %2046 = vperm.xlu0 %2045, %v1298
      %v2047 = vpop.permute.xlu0 %2046
      %2048 = vset.pattern.permute.xlu0 3
      %2049 = vperm.xlu0 %2048, %v1299
      %v2050 = vpop.permute.xlu0 %2049
      %2051 = vset.pattern.permute.xlu0 3
      %2052 = vperm.xlu0 %2051, %v1300
      %v2053 = vpop.permute.xlu0 %2052
      %2054 = vset.pattern.permute.xlu0 3
      %2055 = vperm.xlu0 %2054, %v1301
      %v2056 = vpop.permute.xlu0 %2055
      %2057 = vset.pattern.permute.xlu0 3
      %2058 = vperm.xlu0 %2057, %v1302
      %v2059 = vpop.permute.xlu0 %2058
      %2060 = vset.pattern.permute.xlu0 3
      %2061 = vperm.xlu0 %2060, %v1303
      %v2062 = vpop.permute.xlu0 %2061
      %2063 = vset.pattern.permute.xlu0 3
      %2064 = vperm.xlu0 %2063, %v1304
      %v2065 = vpop.permute.xlu0 %2064
      %2066 = vset.pattern.permute.xlu0 3
      %2067 = vperm.xlu0 %2066, %v1305
      %v2068 = vpop.permute.xlu0 %2067
      %2069 = vset.pattern.permute.xlu0 3
      %2070 = vperm.xlu0 %2069, %v1306
      %v2071 = vpop.permute.xlu0 %2070
      %2072 = vset.pattern.permute.xlu0 3
      %2073 = vperm.xlu0 %2072, %v1307
      %v2074 = vpop.permute.xlu0 %2073
      %2075 = vset.pattern.permute.xlu0 3
      %2076 = vperm.xlu0 %2075, %v1308
      %v2077 = vpop.permute.xlu0 %2076
      %2078 = vset.pattern.permute.xlu0 3
      %2079 = vperm.xlu0 %2078, %v1309
      %v2080 = vpop.permute.xlu0 %2079
      %2081 = vset.pattern.permute.xlu0 3
      %2082 = vperm.xlu0 %2081, %v1310
      %v2083 = vpop.permute.xlu0 %2082
      %2084 = vset.pattern.permute.xlu0 3
      %2085 = vperm.xlu0 %2084, %v1311
      %v2086 = vpop.permute.xlu0 %2085
      %2087 = vset.pattern.permute.xlu0 3
      %2088 = vperm.xlu0 %2087, %v1312
      %v2089 = vpop.permute.xlu0 %2088
      %2090 = vset.pattern.permute.xlu0 3
      %2091 = vperm.xlu0 %2090, %v1313
      %v2092 = vpop.permute.xlu0 %2091
      %2093 = vset.pattern.permute.xlu0 3
      %2094 = vperm.xlu0 %2093, %v1314
      %v2095 = vpop.permute.xlu0 %2094
      %2096 = vset.pattern.permute.xlu0 3
      %2097 = vperm.xlu0 %2096, %v1315
      %v2098 = vpop.permute.xlu0 %2097
      %vm2099 = vcmp.eq.s32.totalorder %v2005, 1
      %vm2100 = vcmp.eq.s32.totalorder %v2008, 1
      %vm2101 = vcmp.eq.s32.totalorder %v2011, 1
      %vm2102 = vcmp.eq.s32.totalorder %v2014, 1
      %vm2103 = vcmp.eq.s32.totalorder %v2017, 1
      %vm2104 = vcmp.eq.s32.totalorder %v2020, 1
      %vm2105 = vcmp.eq.s32.totalorder %v2023, 1
      %vm2106 = vcmp.eq.s32.totalorder %v2026, 1
      %vm2107 = vcmp.eq.s32.totalorder %v2029, 1
      %vm2108 = vcmp.eq.s32.totalorder %v2032, 1
      %vm2109 = vcmp.eq.s32.totalorder %v2035, 1
      %vm2110 = vcmp.eq.s32.totalorder %v2038, 1
      %vm2111 = vcmp.eq.s32.totalorder %v2041, 1
      %vm2112 = vcmp.eq.s32.totalorder %v2044, 1
      %vm2113 = vcmp.eq.s32.totalorder %v2047, 1
      %vm2114 = vcmp.eq.s32.totalorder %v2050, 1
      %vm2115 = vcmp.eq.s32.totalorder %v2053, 1
      %vm2116 = vcmp.eq.s32.totalorder %v2056, 1
      %vm2117 = vcmp.eq.s32.totalorder %v2059, 1
      %vm2118 = vcmp.eq.s32.totalorder %v2062, 1
      %vm2119 = vcmp.eq.s32.totalorder %v2065, 1
      %vm2120 = vcmp.eq.s32.totalorder %v2068, 1
      %vm2121 = vcmp.eq.s32.totalorder %v2071, 1
      %vm2122 = vcmp.eq.s32.totalorder %v2074, 1
      %vm2123 = vcmp.eq.s32.totalorder %v2077, 1
      %vm2124 = vcmp.eq.s32.totalorder %v2080, 1
      %vm2125 = vcmp.eq.s32.totalorder %v2083, 1
      %vm2126 = vcmp.eq.s32.totalorder %v2086, 1
      %vm2127 = vcmp.eq.s32.totalorder %v2089, 1
      %vm2128 = vcmp.eq.s32.totalorder %v2092, 1
      %vm2129 = vcmp.eq.s32.totalorder %v2095, 1
      %vm2130 = vcmp.eq.s32.totalorder %v2098, 1
      %v2131 = vsel %vm2099, %v1049, 0.0
      %v2132 = vsel %vm2100, %v1050, 0.0
      %v2133 = vsel %vm2101, %v1051, 0.0
      %v2134 = vsel %vm2102, %v1052, 0.0
      %v2135 = vsel %vm2103, %v1053, 0.0
      %v2136 = vsel %vm2104, %v1054, 0.0
      %v2137 = vsel %vm2105, %v1055, 0.0
      %v2138 = vsel %vm2106, %v1056, 0.0
      %v2139 = vsel %vm2107, %v1057, 0.0
      %v2140 = vsel %vm2108, %v1058, 0.0
      %v2141 = vsel %vm2109, %v1059, 0.0
      %v2142 = vsel %vm2110, %v1060, 0.0
      %v2143 = vsel %vm2111, %v1061, 0.0
      %v2144 = vsel %vm2112, %v1062, 0.0
      %v2145 = vsel %vm2113, %v1063, 0.0
      %v2146 = vsel %vm2114, %v1064, 0.0
      %v2147 = vsel %vm2115, %v1065, 0.0
      %v2148 = vsel %vm2116, %v1066, 0.0
      %v2149 = vsel %vm2117, %v1067, 0.0
      %v2150 = vsel %vm2118, %v1068, 0.0
      %v2151 = vsel %vm2119, %v1069, 0.0
      %v2152 = vsel %vm2120, %v1070, 0.0
      %v2153 = vsel %vm2121, %v1071, 0.0
      %v2154 = vsel %vm2122, %v1072, 0.0
      %v2155 = vsel %vm2123, %v1073, 0.0
      %v2156 = vsel %vm2124, %v1074, 0.0
      %v2157 = vsel %vm2125, %v1075, 0.0
      %v2158 = vsel %vm2126, %v1076, 0.0
      %v2159 = vsel %vm2127, %v1077, 0.0
      %v2160 = vsel %vm2128, %v1078, 0.0
      %v2161 = vsel %vm2129, %v1079, 0.0
      %v2162 = vsel %vm2130, %v1080, 0.0
      %v2163 = vsel %vm1081, %v2131, -inf
      %v2164 = vsel %vm1081, %v2132, -inf
      %v2165 = vsel %vm1081, %v2133, -inf
      %v2166 = vsel %vm1081, %v2134, -inf
      %v2167 = vsel %vm1081, %v2135, -inf
      %v2168 = vmax.f32 %v2163, %v2167
      %v2169 = vsel %vm1081, %v2136, -inf
      %v2170 = vmax.f32 %v2164, %v2169
      %v2171 = vsel %vm1081, %v2137, -inf
      %v2172 = vmax.f32 %v2165, %v2171
      %v2173 = vsel %vm1081, %v2138, -inf
      %v2174 = vmax.f32 %v2166, %v2173
      %v2175 = vsel %vm1081, %v2139, -inf
      %v2176 = vmax.f32 %v2168, %v2175
      %v2177 = vsel %vm1081, %v2140, -inf
      %v2178 = vmax.f32 %v2170, %v2177
      %v2179 = vsel %vm1081, %v2141, -inf
      %v2180 = vmax.f32 %v2172, %v2179
      %v2181 = vsel %vm1081, %v2142, -inf
      %v2182 = vmax.f32 %v2174, %v2181
      %v2183 = vsel %vm1081, %v2143, -inf
      %v2184 = vmax.f32 %v2176, %v2183
      %v2185 = vsel %vm1081, %v2144, -inf
      %v2186 = vmax.f32 %v2178, %v2185
      %v2187 = vsel %vm1081, %v2145, -inf
      %v2188 = vmax.f32 %v2180, %v2187
      %v2189 = vsel %vm1081, %v2146, -inf
      %v2190 = vmax.f32 %v2182, %v2189
      %v2191 = vsel %vm1081, %v2147, -inf
      %v2192 = vmax.f32 %v2184, %v2191
      %v2193 = vsel %vm1081, %v2148, -inf
      %v2194 = vmax.f32 %v2186, %v2193
      %v2195 = vsel %vm1081, %v2149, -inf
      %v2196 = vmax.f32 %v2188, %v2195
      %v2197 = vsel %vm1081, %v2150, -inf
      %v2198 = vmax.f32 %v2190, %v2197
      %v2199 = vsel %vm1081, %v2151, -inf
      %v2200 = vmax.f32 %v2192, %v2199
      %v2201 = vsel %vm1081, %v2152, -inf
      %v2202 = vmax.f32 %v2194, %v2201
      %v2203 = vsel %vm1081, %v2153, -inf
      %v2204 = vmax.f32 %v2196, %v2203
      %v2205 = vsel %vm1081, %v2154, -inf
      %v2206 = vmax.f32 %v2198, %v2205
      %v2207 = vsel %vm1081, %v2155, -inf
      %v2208 = vmax.f32 %v2200, %v2207
      %v2209 = vsel %vm1081, %v2156, -inf
      %v2210 = vmax.f32 %v2202, %v2209
      %v2211 = vsel %vm1081, %v2157, -inf
      %v2212 = vmax.f32 %v2204, %v2211
      %v2213 = vsel %vm1081, %v2158, -inf
      %v2214 = vmax.f32 %v2206, %v2213
      %v2215 = vsel %vm1081, %v2159, -inf
      %v2216 = vmax.f32 %v2208, %v2215
      %v2217 = vsel %vm1081, %v2160, -inf
      %v2218 = vmax.f32 %v2210, %v2217
      %v2219 = vsel %vm1081, %v2161, -inf
      %v2220 = vmax.f32 %v2212, %v2219
      %v2221 = vsel %vm1081, %v2162, -inf
      %v2222 = vmax.f32 %v2214, %v2221
      %v2223 = vmax.f32 %v2216, %v2218
      %v2224 = vmax.f32 %v2220, %v2222
      %v2225 = vmax.f32 %v2223, %v2224
      %v2226 = vrot.slane %v2225, 4
      %v2227 = vmax.f32 %v2225, %v2226
      %v2228 = vrot.slane %v2227, 2
      %v2229 = vmax.f32 %v2227, %v2228
      %v2230 = vrot.slane %v2229, 1
      %v2231 = vmax.f32 %v2229, %v2230
      %2232 = vset.pattern.permute.xlu0 4
      %2233 = vperm.xlu0 %2232, %v1284
      %v2234 = vpop.permute.xlu0 %2233
      %2235 = vset.pattern.permute.xlu0 4
      %2236 = vperm.xlu0 %2235, %v1285
      %v2237 = vpop.permute.xlu0 %2236
      %2238 = vset.pattern.permute.xlu0 4
      %2239 = vperm.xlu0 %2238, %v1286
      %v2240 = vpop.permute.xlu0 %2239
      %2241 = vset.pattern.permute.xlu0 4
      %2242 = vperm.xlu0 %2241, %v1287
      %v2243 = vpop.permute.xlu0 %2242
      %2244 = vset.pattern.permute.xlu0 4
      %2245 = vperm.xlu0 %2244, %v1288
      %v2246 = vpop.permute.xlu0 %2245
      %2247 = vset.pattern.permute.xlu0 4
      %2248 = vperm.xlu0 %2247, %v1289
      %v2249 = vpop.permute.xlu0 %2248
      %2250 = vset.pattern.permute.xlu0 4
      %2251 = vperm.xlu0 %2250, %v1290
      %v2252 = vpop.permute.xlu0 %2251
      %2253 = vset.pattern.permute.xlu0 4
      %2254 = vperm.xlu0 %2253, %v1291
      %v2255 = vpop.permute.xlu0 %2254
      %2256 = vset.pattern.permute.xlu0 4
      %2257 = vperm.xlu0 %2256, %v1292
      %v2258 = vpop.permute.xlu0 %2257
      %2259 = vset.pattern.permute.xlu0 4
      %2260 = vperm.xlu0 %2259, %v1293
      %v2261 = vpop.permute.xlu0 %2260
      %2262 = vset.pattern.permute.xlu0 4
      %2263 = vperm.xlu0 %2262, %v1294
      %v2264 = vpop.permute.xlu0 %2263
      %2265 = vset.pattern.permute.xlu0 4
      %2266 = vperm.xlu0 %2265, %v1295
      %v2267 = vpop.permute.xlu0 %2266
      %2268 = vset.pattern.permute.xlu0 4
      %2269 = vperm.xlu0 %2268, %v1296
      %v2270 = vpop.permute.xlu0 %2269
      %2271 = vset.pattern.permute.xlu0 4
      %2272 = vperm.xlu0 %2271, %v1297
      %v2273 = vpop.permute.xlu0 %2272
      %2274 = vset.pattern.permute.xlu0 4
      %2275 = vperm.xlu0 %2274, %v1298
      %v2276 = vpop.permute.xlu0 %2275
      %2277 = vset.pattern.permute.xlu0 4
      %2278 = vperm.xlu0 %2277, %v1299
      %v2279 = vpop.permute.xlu0 %2278
      %2280 = vset.pattern.permute.xlu0 4
      %2281 = vperm.xlu0 %2280, %v1300
      %v2282 = vpop.permute.xlu0 %2281
      %2283 = vset.pattern.permute.xlu0 4
      %2284 = vperm.xlu0 %2283, %v1301
      %v2285 = vpop.permute.xlu0 %2284
      %2286 = vset.pattern.permute.xlu0 4
      %2287 = vperm.xlu0 %2286, %v1302
      %v2288 = vpop.permute.xlu0 %2287
      %2289 = vset.pattern.permute.xlu0 4
      %2290 = vperm.xlu0 %2289, %v1303
      %v2291 = vpop.permute.xlu0 %2290
      %2292 = vset.pattern.permute.xlu0 4
      %2293 = vperm.xlu0 %2292, %v1304
      %v2294 = vpop.permute.xlu0 %2293
      %2295 = vset.pattern.permute.xlu0 4
      %2296 = vperm.xlu0 %2295, %v1305
      %v2297 = vpop.permute.xlu0 %2296
      %2298 = vset.pattern.permute.xlu0 4
      %2299 = vperm.xlu0 %2298, %v1306
      %v2300 = vpop.permute.xlu0 %2299
      %2301 = vset.pattern.permute.xlu0 4
      %2302 = vperm.xlu0 %2301, %v1307
      %v2303 = vpop.permute.xlu0 %2302
      %2304 = vset.pattern.permute.xlu0 4
      %2305 = vperm.xlu0 %2304, %v1308
      %v2306 = vpop.permute.xlu0 %2305
      %2307 = vset.pattern.permute.xlu0 4
      %2308 = vperm.xlu0 %2307, %v1309
      %v2309 = vpop.permute.xlu0 %2308
      %2310 = vset.pattern.permute.xlu0 4
      %2311 = vperm.xlu0 %2310, %v1310
      %v2312 = vpop.permute.xlu0 %2311
      %2313 = vset.pattern.permute.xlu0 4
      %2314 = vperm.xlu0 %2313, %v1311
      %v2315 = vpop.permute.xlu0 %2314
      %2316 = vset.pattern.permute.xlu0 4
      %2317 = vperm.xlu0 %2316, %v1312
      %v2318 = vpop.permute.xlu0 %2317
      %2319 = vset.pattern.permute.xlu0 4
      %2320 = vperm.xlu0 %2319, %v1313
      %v2321 = vpop.permute.xlu0 %2320
      %2322 = vset.pattern.permute.xlu0 4
      %2323 = vperm.xlu0 %2322, %v1314
      %v2324 = vpop.permute.xlu0 %2323
      %2325 = vset.pattern.permute.xlu0 4
      %2326 = vperm.xlu0 %2325, %v1315
      %v2327 = vpop.permute.xlu0 %2326
      %vm2328 = vcmp.eq.s32.totalorder %v2234, 1
      %vm2329 = vcmp.eq.s32.totalorder %v2237, 1
      %vm2330 = vcmp.eq.s32.totalorder %v2240, 1
      %vm2331 = vcmp.eq.s32.totalorder %v2243, 1
      %vm2332 = vcmp.eq.s32.totalorder %v2246, 1
      %vm2333 = vcmp.eq.s32.totalorder %v2249, 1
      %vm2334 = vcmp.eq.s32.totalorder %v2252, 1
      %vm2335 = vcmp.eq.s32.totalorder %v2255, 1
      %vm2336 = vcmp.eq.s32.totalorder %v2258, 1
      %vm2337 = vcmp.eq.s32.totalorder %v2261, 1
      %vm2338 = vcmp.eq.s32.totalorder %v2264, 1
      %vm2339 = vcmp.eq.s32.totalorder %v2267, 1
      %vm2340 = vcmp.eq.s32.totalorder %v2270, 1
      %vm2341 = vcmp.eq.s32.totalorder %v2273, 1
      %vm2342 = vcmp.eq.s32.totalorder %v2276, 1
      %vm2343 = vcmp.eq.s32.totalorder %v2279, 1
      %vm2344 = vcmp.eq.s32.totalorder %v2282, 1
      %vm2345 = vcmp.eq.s32.totalorder %v2285, 1
      %vm2346 = vcmp.eq.s32.totalorder %v2288, 1
      %vm2347 = vcmp.eq.s32.totalorder %v2291, 1
      %vm2348 = vcmp.eq.s32.totalorder %v2294, 1
      %vm2349 = vcmp.eq.s32.totalorder %v2297, 1
      %vm2350 = vcmp.eq.s32.totalorder %v2300, 1
      %vm2351 = vcmp.eq.s32.totalorder %v2303, 1
      %vm2352 = vcmp.eq.s32.totalorder %v2306, 1
      %vm2353 = vcmp.eq.s32.totalorder %v2309, 1
      %vm2354 = vcmp.eq.s32.totalorder %v2312, 1
      %vm2355 = vcmp.eq.s32.totalorder %v2315, 1
      %vm2356 = vcmp.eq.s32.totalorder %v2318, 1
      %vm2357 = vcmp.eq.s32.totalorder %v2321, 1
      %vm2358 = vcmp.eq.s32.totalorder %v2324, 1
      %vm2359 = vcmp.eq.s32.totalorder %v2327, 1
      %v2360 = vsel %vm2328, %v1049, 0.0
      %v2361 = vsel %vm2329, %v1050, 0.0
      %v2362 = vsel %vm2330, %v1051, 0.0
      %v2363 = vsel %vm2331, %v1052, 0.0
      %v2364 = vsel %vm2332, %v1053, 0.0
      %v2365 = vsel %vm2333, %v1054, 0.0
      %v2366 = vsel %vm2334, %v1055, 0.0
      %v2367 = vsel %vm2335, %v1056, 0.0
      %v2368 = vsel %vm2336, %v1057, 0.0
      %v2369 = vsel %vm2337, %v1058, 0.0
      %v2370 = vsel %vm2338, %v1059, 0.0
      %v2371 = vsel %vm2339, %v1060, 0.0
      %v2372 = vsel %vm2340, %v1061, 0.0
      %v2373 = vsel %vm2341, %v1062, 0.0
      %v2374 = vsel %vm2342, %v1063, 0.0
      %v2375 = vsel %vm2343, %v1064, 0.0
      %v2376 = vsel %vm2344, %v1065, 0.0
      %v2377 = vsel %vm2345, %v1066, 0.0
      %v2378 = vsel %vm2346, %v1067, 0.0
      %v2379 = vsel %vm2347, %v1068, 0.0
      %v2380 = vsel %vm2348, %v1069, 0.0
      %v2381 = vsel %vm2349, %v1070, 0.0
      %v2382 = vsel %vm2350, %v1071, 0.0
      %v2383 = vsel %vm2351, %v1072, 0.0
      %v2384 = vsel %vm2352, %v1073, 0.0
      %v2385 = vsel %vm2353, %v1074, 0.0
      %v2386 = vsel %vm2354, %v1075, 0.0
      %v2387 = vsel %vm2355, %v1076, 0.0
      %v2388 = vsel %vm2356, %v1077, 0.0
      %v2389 = vsel %vm2357, %v1078, 0.0
      %v2390 = vsel %vm2358, %v1079, 0.0
      %v2391 = vsel %vm2359, %v1080, 0.0
      %v2392 = vsel %vm1081, %v2360, -inf
      %v2393 = vsel %vm1081, %v2361, -inf
      %v2394 = vsel %vm1081, %v2362, -inf
      %v2395 = vsel %vm1081, %v2363, -inf
      %v2396 = vsel %vm1081, %v2364, -inf
      %v2397 = vmax.f32 %v2392, %v2396
      %v2398 = vsel %vm1081, %v2365, -inf
      %v2399 = vmax.f32 %v2393, %v2398
      %v2400 = vsel %vm1081, %v2366, -inf
      %v2401 = vmax.f32 %v2394, %v2400
      %v2402 = vsel %vm1081, %v2367, -inf
      %v2403 = vmax.f32 %v2395, %v2402
      %v2404 = vsel %vm1081, %v2368, -inf
      %v2405 = vmax.f32 %v2397, %v2404
      %v2406 = vsel %vm1081, %v2369, -inf
      %v2407 = vmax.f32 %v2399, %v2406
      %v2408 = vsel %vm1081, %v2370, -inf
      %v2409 = vmax.f32 %v2401, %v2408
      %v2410 = vsel %vm1081, %v2371, -inf
      %v2411 = vmax.f32 %v2403, %v2410
      %v2412 = vsel %vm1081, %v2372, -inf
      %v2413 = vmax.f32 %v2405, %v2412
      %v2414 = vsel %vm1081, %v2373, -inf
      %v2415 = vmax.f32 %v2407, %v2414
      %v2416 = vsel %vm1081, %v2374, -inf
      %v2417 = vmax.f32 %v2409, %v2416
      %v2418 = vsel %vm1081, %v2375, -inf
      %v2419 = vmax.f32 %v2411, %v2418
      %v2420 = vsel %vm1081, %v2376, -inf
      %v2421 = vmax.f32 %v2413, %v2420
      %v2422 = vsel %vm1081, %v2377, -inf
      %v2423 = vmax.f32 %v2415, %v2422
      %v2424 = vsel %vm1081, %v2378, -inf
      %v2425 = vmax.f32 %v2417, %v2424
      %v2426 = vsel %vm1081, %v2379, -inf
      %v2427 = vmax.f32 %v2419, %v2426
      %v2428 = vsel %vm1081, %v2380, -inf
      %v2429 = vmax.f32 %v2421, %v2428
      %v2430 = vsel %vm1081, %v2381, -inf
      %v2431 = vmax.f32 %v2423, %v2430
      %v2432 = vsel %vm1081, %v2382, -inf
      %v2433 = vmax.f32 %v2425, %v2432
      %v2434 = vsel %vm1081, %v2383, -inf
      %v2435 = vmax.f32 %v2427, %v2434
      %v2436 = vsel %vm1081, %v2384, -inf
      %v2437 = vmax.f32 %v2429, %v2436
      %v2438 = vsel %vm1081, %v2385, -inf
      %v2439 = vmax.f32 %v2431, %v2438
      %v2440 = vsel %vm1081, %v2386, -inf
      %v2441 = vmax.f32 %v2433, %v2440
      %v2442 = vsel %vm1081, %v2387, -inf
      %v2443 = vmax.f32 %v2435, %v2442
      %v2444 = vsel %vm1081, %v2388, -inf
      %v2445 = vmax.f32 %v2437, %v2444
      %v2446 = vsel %vm1081, %v2389, -inf
      %v2447 = vmax.f32 %v2439, %v2446
      %v2448 = vsel %vm1081, %v2390, -inf
      %v2449 = vmax.f32 %v2441, %v2448
      %v2450 = vsel %vm1081, %v2391, -inf
      %v2451 = vmax.f32 %v2443, %v2450
      %v2452 = vmax.f32 %v2445, %v2447
      %v2453 = vmax.f32 %v2449, %v2451
      %v2454 = vmax.f32 %v2452, %v2453
      %v2455 = vrot.slane %v2454, 4
      %v2456 = vmax.f32 %v2454, %v2455
      %v2457 = vrot.slane %v2456, 2
      %v2458 = vmax.f32 %v2456, %v2457
      %v2459 = vrot.slane %v2458, 1
      %v2460 = vmax.f32 %v2458, %v2459
      %2461 = vset.pattern.permute.xlu0 5
      %2462 = vperm.xlu0 %2461, %v1284
      %v2463 = vpop.permute.xlu0 %2462
      %2464 = vset.pattern.permute.xlu0 5
      %2465 = vperm.xlu0 %2464, %v1285
      %v2466 = vpop.permute.xlu0 %2465
      %2467 = vset.pattern.permute.xlu0 5
      %2468 = vperm.xlu0 %2467, %v1286
      %v2469 = vpop.permute.xlu0 %2468
      %2470 = vset.pattern.permute.xlu0 5
      %2471 = vperm.xlu0 %2470, %v1287
      %v2472 = vpop.permute.xlu0 %2471
      %2473 = vset.pattern.permute.xlu0 5
      %2474 = vperm.xlu0 %2473, %v1288
      %v2475 = vpop.permute.xlu0 %2474
      %2476 = vset.pattern.permute.xlu0 5
      %2477 = vperm.xlu0 %2476, %v1289
      %v2478 = vpop.permute.xlu0 %2477
      %2479 = vset.pattern.permute.xlu0 5
      %2480 = vperm.xlu0 %2479, %v1290
      %v2481 = vpop.permute.xlu0 %2480
      %2482 = vset.pattern.permute.xlu0 5
      %2483 = vperm.xlu0 %2482, %v1291
      %v2484 = vpop.permute.xlu0 %2483
      %2485 = vset.pattern.permute.xlu0 5
      %2486 = vperm.xlu0 %2485, %v1292
      %v2487 = vpop.permute.xlu0 %2486
      %2488 = vset.pattern.permute.xlu0 5
      %2489 = vperm.xlu0 %2488, %v1293
      %v2490 = vpop.permute.xlu0 %2489
      %2491 = vset.pattern.permute.xlu0 5
      %2492 = vperm.xlu0 %2491, %v1294
      %v2493 = vpop.permute.xlu0 %2492
      %2494 = vset.pattern.permute.xlu0 5
      %2495 = vperm.xlu0 %2494, %v1295
      %v2496 = vpop.permute.xlu0 %2495
      %2497 = vset.pattern.permute.xlu0 5
      %2498 = vperm.xlu0 %2497, %v1296
      %v2499 = vpop.permute.xlu0 %2498
      %2500 = vset.pattern.permute.xlu0 5
      %2501 = vperm.xlu0 %2500, %v1297
      %v2502 = vpop.permute.xlu0 %2501
      %2503 = vset.pattern.permute.xlu0 5
      %2504 = vperm.xlu0 %2503, %v1298
      %v2505 = vpop.permute.xlu0 %2504
      %2506 = vset.pattern.permute.xlu0 5
      %2507 = vperm.xlu0 %2506, %v1299
      %v2508 = vpop.permute.xlu0 %2507
      %2509 = vset.pattern.permute.xlu0 5
      %2510 = vperm.xlu0 %2509, %v1300
      %v2511 = vpop.permute.xlu0 %2510
      %2512 = vset.pattern.permute.xlu0 5
      %2513 = vperm.xlu0 %2512, %v1301
      %v2514 = vpop.permute.xlu0 %2513
      %2515 = vset.pattern.permute.xlu0 5
      %2516 = vperm.xlu0 %2515, %v1302
      %v2517 = vpop.permute.xlu0 %2516
      %2518 = vset.pattern.permute.xlu0 5
      %2519 = vperm.xlu0 %2518, %v1303
      %v2520 = vpop.permute.xlu0 %2519
      %2521 = vset.pattern.permute.xlu0 5
      %2522 = vperm.xlu0 %2521, %v1304
      %v2523 = vpop.permute.xlu0 %2522
      %2524 = vset.pattern.permute.xlu0 5
      %2525 = vperm.xlu0 %2524, %v1305
      %v2526 = vpop.permute.xlu0 %2525
      %2527 = vset.pattern.permute.xlu0 5
      %2528 = vperm.xlu0 %2527, %v1306
      %v2529 = vpop.permute.xlu0 %2528
      %2530 = vset.pattern.permute.xlu0 5
      %2531 = vperm.xlu0 %2530, %v1307
      %v2532 = vpop.permute.xlu0 %2531
      %2533 = vset.pattern.permute.xlu0 5
      %2534 = vperm.xlu0 %2533, %v1308
      %v2535 = vpop.permute.xlu0 %2534
      %2536 = vset.pattern.permute.xlu0 5
      %2537 = vperm.xlu0 %2536, %v1309
      %v2538 = vpop.permute.xlu0 %2537
      %2539 = vset.pattern.permute.xlu0 5
      %2540 = vperm.xlu0 %2539, %v1310
      %v2541 = vpop.permute.xlu0 %2540
      %2542 = vset.pattern.permute.xlu0 5
      %2543 = vperm.xlu0 %2542, %v1311
      %v2544 = vpop.permute.xlu0 %2543
      %2545 = vset.pattern.permute.xlu0 5
      %2546 = vperm.xlu0 %2545, %v1312
      %v2547 = vpop.permute.xlu0 %2546
      %2548 = vset.pattern.permute.xlu0 5
      %2549 = vperm.xlu0 %2548, %v1313
      %v2550 = vpop.permute.xlu0 %2549
      %2551 = vset.pattern.permute.xlu0 5
      %2552 = vperm.xlu0 %2551, %v1314
      %v2553 = vpop.permute.xlu0 %2552
      %2554 = vset.pattern.permute.xlu0 5
      %2555 = vperm.xlu0 %2554, %v1315
      %v2556 = vpop.permute.xlu0 %2555
      %vm2557 = vcmp.eq.s32.totalorder %v2463, 1
      %vm2558 = vcmp.eq.s32.totalorder %v2466, 1
      %vm2559 = vcmp.eq.s32.totalorder %v2469, 1
      %vm2560 = vcmp.eq.s32.totalorder %v2472, 1
      %vm2561 = vcmp.eq.s32.totalorder %v2475, 1
      %vm2562 = vcmp.eq.s32.totalorder %v2478, 1
      %vm2563 = vcmp.eq.s32.totalorder %v2481, 1
      %vm2564 = vcmp.eq.s32.totalorder %v2484, 1
      %vm2565 = vcmp.eq.s32.totalorder %v2487, 1
      %vm2566 = vcmp.eq.s32.totalorder %v2490, 1
      %vm2567 = vcmp.eq.s32.totalorder %v2493, 1
      %vm2568 = vcmp.eq.s32.totalorder %v2496, 1
      %vm2569 = vcmp.eq.s32.totalorder %v2499, 1
      %vm2570 = vcmp.eq.s32.totalorder %v2502, 1
      %vm2571 = vcmp.eq.s32.totalorder %v2505, 1
      %vm2572 = vcmp.eq.s32.totalorder %v2508, 1
      %vm2573 = vcmp.eq.s32.totalorder %v2511, 1
      %vm2574 = vcmp.eq.s32.totalorder %v2514, 1
      %vm2575 = vcmp.eq.s32.totalorder %v2517, 1
      %vm2576 = vcmp.eq.s32.totalorder %v2520, 1
      %vm2577 = vcmp.eq.s32.totalorder %v2523, 1
      %vm2578 = vcmp.eq.s32.totalorder %v2526, 1
      %vm2579 = vcmp.eq.s32.totalorder %v2529, 1
      %vm2580 = vcmp.eq.s32.totalorder %v2532, 1
      %vm2581 = vcmp.eq.s32.totalorder %v2535, 1
      %vm2582 = vcmp.eq.s32.totalorder %v2538, 1
      %vm2583 = vcmp.eq.s32.totalorder %v2541, 1
      %vm2584 = vcmp.eq.s32.totalorder %v2544, 1
      %vm2585 = vcmp.eq.s32.totalorder %v2547, 1
      %vm2586 = vcmp.eq.s32.totalorder %v2550, 1
      %vm2587 = vcmp.eq.s32.totalorder %v2553, 1
      %vm2588 = vcmp.eq.s32.totalorder %v2556, 1
      %v2589 = vsel %vm2557, %v1049, 0.0
      %v2590 = vsel %vm2558, %v1050, 0.0
      %v2591 = vsel %vm2559, %v1051, 0.0
      %v2592 = vsel %vm2560, %v1052, 0.0
      %v2593 = vsel %vm2561, %v1053, 0.0
      %v2594 = vsel %vm2562, %v1054, 0.0
      %v2595 = vsel %vm2563, %v1055, 0.0
      %v2596 = vsel %vm2564, %v1056, 0.0
      %v2597 = vsel %vm2565, %v1057, 0.0
      %v2598 = vsel %vm2566, %v1058, 0.0
      %v2599 = vsel %vm2567, %v1059, 0.0
      %v2600 = vsel %vm2568, %v1060, 0.0
      %v2601 = vsel %vm2569, %v1061, 0.0
      %v2602 = vsel %vm2570, %v1062, 0.0
      %v2603 = vsel %vm2571, %v1063, 0.0
      %v2604 = vsel %vm2572, %v1064, 0.0
      %v2605 = vsel %vm2573, %v1065, 0.0
      %v2606 = vsel %vm2574, %v1066, 0.0
      %v2607 = vsel %vm2575, %v1067, 0.0
      %v2608 = vsel %vm2576, %v1068, 0.0
      %v2609 = vsel %vm2577, %v1069, 0.0
      %v2610 = vsel %vm2578, %v1070, 0.0
      %v2611 = vsel %vm2579, %v1071, 0.0
      %v2612 = vsel %vm2580, %v1072, 0.0
      %v2613 = vsel %vm2581, %v1073, 0.0
      %v2614 = vsel %vm2582, %v1074, 0.0
      %v2615 = vsel %vm2583, %v1075, 0.0
      %v2616 = vsel %vm2584, %v1076, 0.0
      %v2617 = vsel %vm2585, %v1077, 0.0
      %v2618 = vsel %vm2586, %v1078, 0.0
      %v2619 = vsel %vm2587, %v1079, 0.0
      %v2620 = vsel %vm2588, %v1080, 0.0
      %v2621 = vsel %vm1081, %v2589, -inf
      %v2622 = vsel %vm1081, %v2590, -inf
      %v2623 = vsel %vm1081, %v2591, -inf
      %v2624 = vsel %vm1081, %v2592, -inf
      %v2625 = vsel %vm1081, %v2593, -inf
      %v2626 = vmax.f32 %v2621, %v2625
      %v2627 = vsel %vm1081, %v2594, -inf
      %v2628 = vmax.f32 %v2622, %v2627
      %v2629 = vsel %vm1081, %v2595, -inf
      %v2630 = vmax.f32 %v2623, %v2629
      %v2631 = vsel %vm1081, %v2596, -inf
      %v2632 = vmax.f32 %v2624, %v2631
      %v2633 = vsel %vm1081, %v2597, -inf
      %v2634 = vmax.f32 %v2626, %v2633
      %v2635 = vsel %vm1081, %v2598, -inf
      %v2636 = vmax.f32 %v2628, %v2635
      %v2637 = vsel %vm1081, %v2599, -inf
      %v2638 = vmax.f32 %v2630, %v2637
      %v2639 = vsel %vm1081, %v2600, -inf
      %v2640 = vmax.f32 %v2632, %v2639
      %v2641 = vsel %vm1081, %v2601, -inf
      %v2642 = vmax.f32 %v2634, %v2641
      %v2643 = vsel %vm1081, %v2602, -inf
      %v2644 = vmax.f32 %v2636, %v2643
      %v2645 = vsel %vm1081, %v2603, -inf
      %v2646 = vmax.f32 %v2638, %v2645
      %v2647 = vsel %vm1081, %v2604, -inf
      %v2648 = vmax.f32 %v2640, %v2647
      %v2649 = vsel %vm1081, %v2605, -inf
      %v2650 = vmax.f32 %v2642, %v2649
      %v2651 = vsel %vm1081, %v2606, -inf
      %v2652 = vmax.f32 %v2644, %v2651
      %v2653 = vsel %vm1081, %v2607, -inf
      %v2654 = vmax.f32 %v2646, %v2653
      %v2655 = vsel %vm1081, %v2608, -inf
      %v2656 = vmax.f32 %v2648, %v2655
      %v2657 = vsel %vm1081, %v2609, -inf
      %v2658 = vmax.f32 %v2650, %v2657
      %v2659 = vsel %vm1081, %v2610, -inf
      %v2660 = vmax.f32 %v2652, %v2659
      %v2661 = vsel %vm1081, %v2611, -inf
      %v2662 = vmax.f32 %v2654, %v2661
      %v2663 = vsel %vm1081, %v2612, -inf
      %v2664 = vmax.f32 %v2656, %v2663
      %v2665 = vsel %vm1081, %v2613, -inf
      %v2666 = vmax.f32 %v2658, %v2665
      %v2667 = vsel %vm1081, %v2614, -inf
      %v2668 = vmax.f32 %v2660, %v2667
      %v2669 = vsel %vm1081, %v2615, -inf
      %v2670 = vmax.f32 %v2662, %v2669
      %v2671 = vsel %vm1081, %v2616, -inf
      %v2672 = vmax.f32 %v2664, %v2671
      %v2673 = vsel %vm1081, %v2617, -inf
      %v2674 = vmax.f32 %v2666, %v2673
      %v2675 = vsel %vm1081, %v2618, -inf
      %v2676 = vmax.f32 %v2668, %v2675
      %v2677 = vsel %vm1081, %v2619, -inf
      %v2678 = vmax.f32 %v2670, %v2677
      %v2679 = vsel %vm1081, %v2620, -inf
      %v2680 = vmax.f32 %v2672, %v2679
      %v2681 = vmax.f32 %v2674, %v2676
      %v2682 = vmax.f32 %v2678, %v2680
      %v2683 = vmax.f32 %v2681, %v2682
      %v2684 = vrot.slane %v2683, 4
      %v2685 = vmax.f32 %v2683, %v2684
      %v2686 = vrot.slane %v2685, 2
      %v2687 = vmax.f32 %v2685, %v2686
      %v2688 = vrot.slane %v2687, 1
      %v2689 = vmax.f32 %v2687, %v2688
      %2690 = vset.pattern.permute.xlu0 6
      %2691 = vperm.xlu0 %2690, %v1284
      %v2692 = vpop.permute.xlu0 %2691
      %2693 = vset.pattern.permute.xlu0 6
      %2694 = vperm.xlu0 %2693, %v1285
      %v2695 = vpop.permute.xlu0 %2694
      %2696 = vset.pattern.permute.xlu0 6
      %2697 = vperm.xlu0 %2696, %v1286
      %v2698 = vpop.permute.xlu0 %2697
      %2699 = vset.pattern.permute.xlu0 6
      %2700 = vperm.xlu0 %2699, %v1287
      %v2701 = vpop.permute.xlu0 %2700
      %2702 = vset.pattern.permute.xlu0 6
      %2703 = vperm.xlu0 %2702, %v1288
      %v2704 = vpop.permute.xlu0 %2703
      %2705 = vset.pattern.permute.xlu0 6
      %2706 = vperm.xlu0 %2705, %v1289
      %v2707 = vpop.permute.xlu0 %2706
      %2708 = vset.pattern.permute.xlu0 6
      %2709 = vperm.xlu0 %2708, %v1290
      %v2710 = vpop.permute.xlu0 %2709
      %2711 = vset.pattern.permute.xlu0 6
      %2712 = vperm.xlu0 %2711, %v1291
      %v2713 = vpop.permute.xlu0 %2712
      %2714 = vset.pattern.permute.xlu0 6
      %2715 = vperm.xlu0 %2714, %v1292
      %v2716 = vpop.permute.xlu0 %2715
      %2717 = vset.pattern.permute.xlu0 6
      %2718 = vperm.xlu0 %2717, %v1293
      %v2719 = vpop.permute.xlu0 %2718
      %2720 = vset.pattern.permute.xlu0 6
      %2721 = vperm.xlu0 %2720, %v1294
      %v2722 = vpop.permute.xlu0 %2721
      %2723 = vset.pattern.permute.xlu0 6
      %2724 = vperm.xlu0 %2723, %v1295
      %v2725 = vpop.permute.xlu0 %2724
      %2726 = vset.pattern.permute.xlu0 6
      %2727 = vperm.xlu0 %2726, %v1296
      %v2728 = vpop.permute.xlu0 %2727
      %2729 = vset.pattern.permute.xlu0 6
      %2730 = vperm.xlu0 %2729, %v1297
      %v2731 = vpop.permute.xlu0 %2730
      %2732 = vset.pattern.permute.xlu0 6
      %2733 = vperm.xlu0 %2732, %v1298
      %v2734 = vpop.permute.xlu0 %2733
      %2735 = vset.pattern.permute.xlu0 6
      %2736 = vperm.xlu0 %2735, %v1299
      %v2737 = vpop.permute.xlu0 %2736
      %2738 = vset.pattern.permute.xlu0 6
      %2739 = vperm.xlu0 %2738, %v1300
      %v2740 = vpop.permute.xlu0 %2739
      %2741 = vset.pattern.permute.xlu0 6
      %2742 = vperm.xlu0 %2741, %v1301
      %v2743 = vpop.permute.xlu0 %2742
      %2744 = vset.pattern.permute.xlu0 6
      %2745 = vperm.xlu0 %2744, %v1302
      %v2746 = vpop.permute.xlu0 %2745
      %2747 = vset.pattern.permute.xlu0 6
      %2748 = vperm.xlu0 %2747, %v1303
      %v2749 = vpop.permute.xlu0 %2748
      %2750 = vset.pattern.permute.xlu0 6
      %2751 = vperm.xlu0 %2750, %v1304
      %v2752 = vpop.permute.xlu0 %2751
      %2753 = vset.pattern.permute.xlu0 6
      %2754 = vperm.xlu0 %2753, %v1305
      %v2755 = vpop.permute.xlu0 %2754
      %2756 = vset.pattern.permute.xlu0 6
      %2757 = vperm.xlu0 %2756, %v1306
      %v2758 = vpop.permute.xlu0 %2757
      %2759 = vset.pattern.permute.xlu0 6
      %2760 = vperm.xlu0 %2759, %v1307
      %v2761 = vpop.permute.xlu0 %2760
      %2762 = vset.pattern.permute.xlu0 6
      %2763 = vperm.xlu0 %2762, %v1308
      %v2764 = vpop.permute.xlu0 %2763
      %2765 = vset.pattern.permute.xlu0 6
      %2766 = vperm.xlu0 %2765, %v1309
      %v2767 = vpop.permute.xlu0 %2766
      %2768 = vset.pattern.permute.xlu0 6
      %2769 = vperm.xlu0 %2768, %v1310
      %v2770 = vpop.permute.xlu0 %2769
      %2771 = vset.pattern.permute.xlu0 6
      %2772 = vperm.xlu0 %2771, %v1311
      %v2773 = vpop.permute.xlu0 %2772
      %2774 = vset.pattern.permute.xlu0 6
      %2775 = vperm.xlu0 %2774, %v1312
      %v2776 = vpop.permute.xlu0 %2775
      %2777 = vset.pattern.permute.xlu0 6
      %2778 = vperm.xlu0 %2777, %v1313
      %v2779 = vpop.permute.xlu0 %2778
      %2780 = vset.pattern.permute.xlu0 6
      %2781 = vperm.xlu0 %2780, %v1314
      %v2782 = vpop.permute.xlu0 %2781
      %2783 = vset.pattern.permute.xlu0 6
      %2784 = vperm.xlu0 %2783, %v1315
      %v2785 = vpop.permute.xlu0 %2784
      %vm2786 = vcmp.eq.s32.totalorder %v2692, 1
      %vm2787 = vcmp.eq.s32.totalorder %v2695, 1
      %vm2788 = vcmp.eq.s32.totalorder %v2698, 1
      %vm2789 = vcmp.eq.s32.totalorder %v2701, 1
      %vm2790 = vcmp.eq.s32.totalorder %v2704, 1
      %vm2791 = vcmp.eq.s32.totalorder %v2707, 1
      %vm2792 = vcmp.eq.s32.totalorder %v2710, 1
      %vm2793 = vcmp.eq.s32.totalorder %v2713, 1
      %vm2794 = vcmp.eq.s32.totalorder %v2716, 1
      %vm2795 = vcmp.eq.s32.totalorder %v2719, 1
      %vm2796 = vcmp.eq.s32.totalorder %v2722, 1
      %vm2797 = vcmp.eq.s32.totalorder %v2725, 1
      %vm2798 = vcmp.eq.s32.totalorder %v2728, 1
      %vm2799 = vcmp.eq.s32.totalorder %v2731, 1
      %vm2800 = vcmp.eq.s32.totalorder %v2734, 1
      %vm2801 = vcmp.eq.s32.totalorder %v2737, 1
      %vm2802 = vcmp.eq.s32.totalorder %v2740, 1
      %vm2803 = vcmp.eq.s32.totalorder %v2743, 1
      %vm2804 = vcmp.eq.s32.totalorder %v2746, 1
      %vm2805 = vcmp.eq.s32.totalorder %v2749, 1
      %vm2806 = vcmp.eq.s32.totalorder %v2752, 1
      %vm2807 = vcmp.eq.s32.totalorder %v2755, 1
      %vm2808 = vcmp.eq.s32.totalorder %v2758, 1
      %vm2809 = vcmp.eq.s32.totalorder %v2761, 1
      %vm2810 = vcmp.eq.s32.totalorder %v2764, 1
      %vm2811 = vcmp.eq.s32.totalorder %v2767, 1
      %vm2812 = vcmp.eq.s32.totalorder %v2770, 1
      %vm2813 = vcmp.eq.s32.totalorder %v2773, 1
      %vm2814 = vcmp.eq.s32.totalorder %v2776, 1
      %vm2815 = vcmp.eq.s32.totalorder %v2779, 1
      %vm2816 = vcmp.eq.s32.totalorder %v2782, 1
      %vm2817 = vcmp.eq.s32.totalorder %v2785, 1
      %v2818 = vsel %vm2786, %v1049, 0.0
      %v2819 = vsel %vm2787, %v1050, 0.0
      %v2820 = vsel %vm2788, %v1051, 0.0
      %v2821 = vsel %vm2789, %v1052, 0.0
      %v2822 = vsel %vm2790, %v1053, 0.0
      %v2823 = vsel %vm2791, %v1054, 0.0
      %v2824 = vsel %vm2792, %v1055, 0.0
      %v2825 = vsel %vm2793, %v1056, 0.0
      %v2826 = vsel %vm2794, %v1057, 0.0
      %v2827 = vsel %vm2795, %v1058, 0.0
      %v2828 = vsel %vm2796, %v1059, 0.0
      %v2829 = vsel %vm2797, %v1060, 0.0
      %v2830 = vsel %vm2798, %v1061, 0.0
      %v2831 = vsel %vm2799, %v1062, 0.0
      %v2832 = vsel %vm2800, %v1063, 0.0
      %v2833 = vsel %vm2801, %v1064, 0.0
      %v2834 = vsel %vm2802, %v1065, 0.0
      %v2835 = vsel %vm2803, %v1066, 0.0
      %v2836 = vsel %vm2804, %v1067, 0.0
      %v2837 = vsel %vm2805, %v1068, 0.0
      %v2838 = vsel %vm2806, %v1069, 0.0
      %v2839 = vsel %vm2807, %v1070, 0.0
      %v2840 = vsel %vm2808, %v1071, 0.0
      %v2841 = vsel %vm2809, %v1072, 0.0
      %v2842 = vsel %vm2810, %v1073, 0.0
      %v2843 = vsel %vm2811, %v1074, 0.0
      %v2844 = vsel %vm2812, %v1075, 0.0
      %v2845 = vsel %vm2813, %v1076, 0.0
      %v2846 = vsel %vm2814, %v1077, 0.0
      %v2847 = vsel %vm2815, %v1078, 0.0
      %v2848 = vsel %vm2816, %v1079, 0.0
      %v2849 = vsel %vm2817, %v1080, 0.0
      %v2850 = vsel %vm1081, %v2818, -inf
      %v2851 = vsel %vm1081, %v2819, -inf
      %v2852 = vsel %vm1081, %v2820, -inf
      %v2853 = vsel %vm1081, %v2821, -inf
      %v2854 = vsel %vm1081, %v2822, -inf
      %v2855 = vmax.f32 %v2850, %v2854
      %v2856 = vsel %vm1081, %v2823, -inf
      %v2857 = vmax.f32 %v2851, %v2856
      %v2858 = vsel %vm1081, %v2824, -inf
      %v2859 = vmax.f32 %v2852, %v2858
      %v2860 = vsel %vm1081, %v2825, -inf
      %v2861 = vmax.f32 %v2853, %v2860
      %v2862 = vsel %vm1081, %v2826, -inf
      %v2863 = vmax.f32 %v2855, %v2862
      %v2864 = vsel %vm1081, %v2827, -inf
      %v2865 = vmax.f32 %v2857, %v2864
      %v2866 = vsel %vm1081, %v2828, -inf
      %v2867 = vmax.f32 %v2859, %v2866
      %v2868 = vsel %vm1081, %v2829, -inf
      %v2869 = vmax.f32 %v2861, %v2868
      %v2870 = vsel %vm1081, %v2830, -inf
      %v2871 = vmax.f32 %v2863, %v2870
      %v2872 = vsel %vm1081, %v2831, -inf
      %v2873 = vmax.f32 %v2865, %v2872
      %v2874 = vsel %vm1081, %v2832, -inf
      %v2875 = vmax.f32 %v2867, %v2874
      %v2876 = vsel %vm1081, %v2833, -inf
      %v2877 = vmax.f32 %v2869, %v2876
      %v2878 = vsel %vm1081, %v2834, -inf
      %v2879 = vmax.f32 %v2871, %v2878
      %v2880 = vsel %vm1081, %v2835, -inf
      %v2881 = vmax.f32 %v2873, %v2880
      %v2882 = vsel %vm1081, %v2836, -inf
      %v2883 = vmax.f32 %v2875, %v2882
      %v2884 = vsel %vm1081, %v2837, -inf
      %v2885 = vmax.f32 %v2877, %v2884
      %v2886 = vsel %vm1081, %v2838, -inf
      %v2887 = vmax.f32 %v2879, %v2886
      %v2888 = vsel %vm1081, %v2839, -inf
      %v2889 = vmax.f32 %v2881, %v2888
      %v2890 = vsel %vm1081, %v2840, -inf
      %v2891 = vmax.f32 %v2883, %v2890
      %v2892 = vsel %vm1081, %v2841, -inf
      %v2893 = vmax.f32 %v2885, %v2892
      %v2894 = vsel %vm1081, %v2842, -inf
      %v2895 = vmax.f32 %v2887, %v2894
      %v2896 = vsel %vm1081, %v2843, -inf
      %v2897 = vmax.f32 %v2889, %v2896
      %v2898 = vsel %vm1081, %v2844, -inf
      %v2899 = vmax.f32 %v2891, %v2898
      %v2900 = vsel %vm1081, %v2845, -inf
      %v2901 = vmax.f32 %v2893, %v2900
      %v2902 = vsel %vm1081, %v2846, -inf
      %v2903 = vmax.f32 %v2895, %v2902
      %v2904 = vsel %vm1081, %v2847, -inf
      %v2905 = vmax.f32 %v2897, %v2904
      %v2906 = vsel %vm1081, %v2848, -inf
      %v2907 = vmax.f32 %v2899, %v2906
      %v2908 = vsel %vm1081, %v2849, -inf
      %v2909 = vmax.f32 %v2901, %v2908
      %v2910 = vmax.f32 %v2903, %v2905
      %v2911 = vmax.f32 %v2907, %v2909
      %v2912 = vmax.f32 %v2910, %v2911
      %v2913 = vrot.slane %v2912, 4
      %v2914 = vmax.f32 %v2912, %v2913
      %v2915 = vrot.slane %v2914, 2
      %v2916 = vmax.f32 %v2914, %v2915
      %v2917 = vrot.slane %v2916, 1
      %v2918 = vmax.f32 %v2916, %v2917
      %2919 = vset.pattern.permute.xlu0 7
      %2920 = vperm.xlu0 %2919, %v1284
      %v2921 = vpop.permute.xlu0 %2920
      %2922 = vset.pattern.permute.xlu0 7
      %2923 = vperm.xlu0 %2922, %v1285
      %v2924 = vpop.permute.xlu0 %2923
      %2925 = vset.pattern.permute.xlu0 7
      %2926 = vperm.xlu0 %2925, %v1286
      %v2927 = vpop.permute.xlu0 %2926
      %2928 = vset.pattern.permute.xlu0 7
      %2929 = vperm.xlu0 %2928, %v1287
      %v2930 = vpop.permute.xlu0 %2929
      %2931 = vset.pattern.permute.xlu0 7
      %2932 = vperm.xlu0 %2931, %v1288
      %v2933 = vpop.permute.xlu0 %2932
      %2934 = vset.pattern.permute.xlu0 7
      %2935 = vperm.xlu0 %2934, %v1289
      %v2936 = vpop.permute.xlu0 %2935
      %2937 = vset.pattern.permute.xlu0 7
      %2938 = vperm.xlu0 %2937, %v1290
      %v2939 = vpop.permute.xlu0 %2938
      %2940 = vset.pattern.permute.xlu0 7
      %2941 = vperm.xlu0 %2940, %v1291
      %v2942 = vpop.permute.xlu0 %2941
      %2943 = vset.pattern.permute.xlu0 7
      %2944 = vperm.xlu0 %2943, %v1292
      %v2945 = vpop.permute.xlu0 %2944
      %2946 = vset.pattern.permute.xlu0 7
      %2947 = vperm.xlu0 %2946, %v1293
      %v2948 = vpop.permute.xlu0 %2947
      %2949 = vset.pattern.permute.xlu0 7
      %2950 = vperm.xlu0 %2949, %v1294
      %v2951 = vpop.permute.xlu0 %2950
      %2952 = vset.pattern.permute.xlu0 7
      %2953 = vperm.xlu0 %2952, %v1295
      %v2954 = vpop.permute.xlu0 %2953
      %2955 = vset.pattern.permute.xlu0 7
      %2956 = vperm.xlu0 %2955, %v1296
      %v2957 = vpop.permute.xlu0 %2956
      %2958 = vset.pattern.permute.xlu0 7
      %2959 = vperm.xlu0 %2958, %v1297
      %v2960 = vpop.permute.xlu0 %2959
      %2961 = vset.pattern.permute.xlu0 7
      %2962 = vperm.xlu0 %2961, %v1298
      %v2963 = vpop.permute.xlu0 %2962
      %2964 = vset.pattern.permute.xlu0 7
      %2965 = vperm.xlu0 %2964, %v1299
      %v2966 = vpop.permute.xlu0 %2965
      %2967 = vset.pattern.permute.xlu0 7
      %2968 = vperm.xlu0 %2967, %v1300
      %v2969 = vpop.permute.xlu0 %2968
      %2970 = vset.pattern.permute.xlu0 7
      %2971 = vperm.xlu0 %2970, %v1301
      %v2972 = vpop.permute.xlu0 %2971
      %2973 = vset.pattern.permute.xlu0 7
      %2974 = vperm.xlu0 %2973, %v1302
      %v2975 = vpop.permute.xlu0 %2974
      %2976 = vset.pattern.permute.xlu0 7
      %2977 = vperm.xlu0 %2976, %v1303
      %v2978 = vpop.permute.xlu0 %2977
      %2979 = vset.pattern.permute.xlu0 7
      %2980 = vperm.xlu0 %2979, %v1304
      %v2981 = vpop.permute.xlu0 %2980
      %2982 = vset.pattern.permute.xlu0 7
      %2983 = vperm.xlu0 %2982, %v1305
      %v2984 = vpop.permute.xlu0 %2983
      %2985 = vset.pattern.permute.xlu0 7
      %2986 = vperm.xlu0 %2985, %v1306
      %v2987 = vpop.permute.xlu0 %2986
      %2988 = vset.pattern.permute.xlu0 7
      %2989 = vperm.xlu0 %2988, %v1307
      %v2990 = vpop.permute.xlu0 %2989
      %2991 = vset.pattern.permute.xlu0 7
      %2992 = vperm.xlu0 %2991, %v1308
      %v2993 = vpop.permute.xlu0 %2992
      %2994 = vset.pattern.permute.xlu0 7
      %2995 = vperm.xlu0 %2994, %v1309
      %v2996 = vpop.permute.xlu0 %2995
      %2997 = vset.pattern.permute.xlu0 7
      %2998 = vperm.xlu0 %2997, %v1310
      %v2999 = vpop.permute.xlu0 %2998
      %3000 = vset.pattern.permute.xlu0 7
      %3001 = vperm.xlu0 %3000, %v1311
      %v3002 = vpop.permute.xlu0 %3001
      %3003 = vset.pattern.permute.xlu0 7
      %3004 = vperm.xlu0 %3003, %v1312
      %v3005 = vpop.permute.xlu0 %3004
      %3006 = vset.pattern.permute.xlu0 7
      %3007 = vperm.xlu0 %3006, %v1313
      %v3008 = vpop.permute.xlu0 %3007
      %3009 = vset.pattern.permute.xlu0 7
      %3010 = vperm.xlu0 %3009, %v1314
      %v3011 = vpop.permute.xlu0 %3010
      %3012 = vset.pattern.permute.xlu0 7
      %3013 = vperm.xlu0 %3012, %v1315
      %v3014 = vpop.permute.xlu0 %3013
      %vm3015 = vcmp.eq.s32.totalorder %v2921, 1
      %vm3016 = vcmp.eq.s32.totalorder %v2924, 1
      %vm3017 = vcmp.eq.s32.totalorder %v2927, 1
      %vm3018 = vcmp.eq.s32.totalorder %v2930, 1
      %vm3019 = vcmp.eq.s32.totalorder %v2933, 1
      %vm3020 = vcmp.eq.s32.totalorder %v2936, 1
      %vm3021 = vcmp.eq.s32.totalorder %v2939, 1
      %vm3022 = vcmp.eq.s32.totalorder %v2942, 1
      %vm3023 = vcmp.eq.s32.totalorder %v2945, 1
      %vm3024 = vcmp.eq.s32.totalorder %v2948, 1
      %vm3025 = vcmp.eq.s32.totalorder %v2951, 1
      %vm3026 = vcmp.eq.s32.totalorder %v2954, 1
      %vm3027 = vcmp.eq.s32.totalorder %v2957, 1
      %vm3028 = vcmp.eq.s32.totalorder %v2960, 1
      %vm3029 = vcmp.eq.s32.totalorder %v2963, 1
      %vm3030 = vcmp.eq.s32.totalorder %v2966, 1
      %vm3031 = vcmp.eq.s32.totalorder %v2969, 1
      %vm3032 = vcmp.eq.s32.totalorder %v2972, 1
      %vm3033 = vcmp.eq.s32.totalorder %v2975, 1
      %vm3034 = vcmp.eq.s32.totalorder %v2978, 1
      %vm3035 = vcmp.eq.s32.totalorder %v2981, 1
      %vm3036 = vcmp.eq.s32.totalorder %v2984, 1
      %vm3037 = vcmp.eq.s32.totalorder %v2987, 1
      %vm3038 = vcmp.eq.s32.totalorder %v2990, 1
      %vm3039 = vcmp.eq.s32.totalorder %v2993, 1
      %vm3040 = vcmp.eq.s32.totalorder %v2996, 1
      %vm3041 = vcmp.eq.s32.totalorder %v2999, 1
      %vm3042 = vcmp.eq.s32.totalorder %v3002, 1
      %vm3043 = vcmp.eq.s32.totalorder %v3005, 1
      %vm3044 = vcmp.eq.s32.totalorder %v3008, 1
      %vm3045 = vcmp.eq.s32.totalorder %v3011, 1
      %vm3046 = vcmp.eq.s32.totalorder %v3014, 1
      %v3047 = vsel %vm3015, %v1049, 0.0
      %v3048 = vsel %vm3016, %v1050, 0.0
      %v3049 = vsel %vm3017, %v1051, 0.0
      %v3050 = vsel %vm3018, %v1052, 0.0
      %v3051 = vsel %vm3019, %v1053, 0.0
      %v3052 = vsel %vm3020, %v1054, 0.0
      %v3053 = vsel %vm3021, %v1055, 0.0
      %v3054 = vsel %vm3022, %v1056, 0.0
      %v3055 = vsel %vm3023, %v1057, 0.0
      %v3056 = vsel %vm3024, %v1058, 0.0
      %v3057 = vsel %vm3025, %v1059, 0.0
      %v3058 = vsel %vm3026, %v1060, 0.0
      %v3059 = vsel %vm3027, %v1061, 0.0
      %v3060 = vsel %vm3028, %v1062, 0.0
      %v3061 = vsel %vm3029, %v1063, 0.0
      %v3062 = vsel %vm3030, %v1064, 0.0
      %v3063 = vsel %vm3031, %v1065, 0.0
      %v3064 = vsel %vm3032, %v1066, 0.0
      %v3065 = vsel %vm3033, %v1067, 0.0
      %v3066 = vsel %vm3034, %v1068, 0.0
      %v3067 = vsel %vm3035, %v1069, 0.0
      %v3068 = vsel %vm3036, %v1070, 0.0
      %v3069 = vsel %vm3037, %v1071, 0.0
      %v3070 = vsel %vm3038, %v1072, 0.0
      %v3071 = vsel %vm3039, %v1073, 0.0
      %v3072 = vsel %vm3040, %v1074, 0.0
      %v3073 = vsel %vm3041, %v1075, 0.0
      %v3074 = vsel %vm3042, %v1076, 0.0
      %v3075 = vsel %vm3043, %v1077, 0.0
      %v3076 = vsel %vm3044, %v1078, 0.0
      %v3077 = vsel %vm3045, %v1079, 0.0
      %v3078 = vsel %vm3046, %v1080, 0.0
      %v3079 = vsel %vm1081, %v3047, -inf
      %v3080 = vsel %vm1081, %v3048, -inf
      %v3081 = vsel %vm1081, %v3049, -inf
      %v3082 = vsel %vm1081, %v3050, -inf
      %v3083 = vsel %vm1081, %v3051, -inf
      %v3084 = vmax.f32 %v3079, %v3083
      %v3085 = vsel %vm1081, %v3052, -inf
      %v3086 = vmax.f32 %v3080, %v3085
      %v3087 = vsel %vm1081, %v3053, -inf
      %v3088 = vmax.f32 %v3081, %v3087
      %v3089 = vsel %vm1081, %v3054, -inf
      %v3090 = vmax.f32 %v3082, %v3089
      %v3091 = vsel %vm1081, %v3055, -inf
      %v3092 = vmax.f32 %v3084, %v3091
      %v3093 = vsel %vm1081, %v3056, -inf
      %v3094 = vmax.f32 %v3086, %v3093
      %v3095 = vsel %vm1081, %v3057, -inf
      %v3096 = vmax.f32 %v3088, %v3095
      %v3097 = vsel %vm1081, %v3058, -inf
      %v3098 = vmax.f32 %v3090, %v3097
      %v3099 = vsel %vm1081, %v3059, -inf
      %v3100 = vmax.f32 %v3092, %v3099
      %v3101 = vsel %vm1081, %v3060, -inf
      %v3102 = vmax.f32 %v3094, %v3101
      %v3103 = vsel %vm1081, %v3061, -inf
      %v3104 = vmax.f32 %v3096, %v3103
      %v3105 = vsel %vm1081, %v3062, -inf
      %v3106 = vmax.f32 %v3098, %v3105
      %v3107 = vsel %vm1081, %v3063, -inf
      %v3108 = vmax.f32 %v3100, %v3107
      %v3109 = vsel %vm1081, %v3064, -inf
      %v3110 = vmax.f32 %v3102, %v3109
      %v3111 = vsel %vm1081, %v3065, -inf
      %v3112 = vmax.f32 %v3104, %v3111
      %v3113 = vsel %vm1081, %v3066, -inf
      %v3114 = vmax.f32 %v3106, %v3113
      %v3115 = vsel %vm1081, %v3067, -inf
      %v3116 = vmax.f32 %v3108, %v3115
      %v3117 = vsel %vm1081, %v3068, -inf
      %v3118 = vmax.f32 %v3110, %v3117
      %v3119 = vsel %vm1081, %v3069, -inf
      %v3120 = vmax.f32 %v3112, %v3119
      %v3121 = vsel %vm1081, %v3070, -inf
      %v3122 = vmax.f32 %v3114, %v3121
      %v3123 = vsel %vm1081, %v3071, -inf
      %v3124 = vmax.f32 %v3116, %v3123
      %v3125 = vsel %vm1081, %v3072, -inf
      %v3126 = vmax.f32 %v3118, %v3125
      %v3127 = vsel %vm1081, %v3073, -inf
      %v3128 = vmax.f32 %v3120, %v3127
      %v3129 = vsel %vm1081, %v3074, -inf
      %v3130 = vmax.f32 %v3122, %v3129
      %v3131 = vsel %vm1081, %v3075, -inf
      %v3132 = vmax.f32 %v3124, %v3131
      %v3133 = vsel %vm1081, %v3076, -inf
      %v3134 = vmax.f32 %v3126, %v3133
      %v3135 = vsel %vm1081, %v3077, -inf
      %v3136 = vmax.f32 %v3128, %v3135
      %v3137 = vsel %vm1081, %v3078, -inf
      %v3138 = vmax.f32 %v3130, %v3137
      %v3139 = vmax.f32 %v3132, %v3134
      %v3140 = vmax.f32 %v3136, %v3138
      %v3141 = vmax.f32 %v3139, %v3140
      %v3142 = vrot.slane %v3141, 4
      %v3143 = vmax.f32 %v3141, %v3142
      %v3144 = vrot.slane %v3143, 2
      %v3145 = vmax.f32 %v3143, %v3144
      %v3146 = vrot.slane %v3145, 1
      %v3147 = vmax.f32 %v3145, %v3146
      %3148 = vset.pattern.permute.xlu0 8
      %3149 = vperm.xlu0 %3148, %v1284
      %v3150 = vpop.permute.xlu0 %3149
      %3151 = vset.pattern.permute.xlu0 8
      %3152 = vperm.xlu0 %3151, %v1285
      %v3153 = vpop.permute.xlu0 %3152
      %3154 = vset.pattern.permute.xlu0 8
      %3155 = vperm.xlu0 %3154, %v1286
      %v3156 = vpop.permute.xlu0 %3155
      %3157 = vset.pattern.permute.xlu0 8
      %3158 = vperm.xlu0 %3157, %v1287
      %v3159 = vpop.permute.xlu0 %3158
      %3160 = vset.pattern.permute.xlu0 8
      %3161 = vperm.xlu0 %3160, %v1288
      %v3162 = vpop.permute.xlu0 %3161
      %3163 = vset.pattern.permute.xlu0 8
      %3164 = vperm.xlu0 %3163, %v1289
      %v3165 = vpop.permute.xlu0 %3164
      %3166 = vset.pattern.permute.xlu0 8
      %3167 = vperm.xlu0 %3166, %v1290
      %v3168 = vpop.permute.xlu0 %3167
      %3169 = vset.pattern.permute.xlu0 8
      %3170 = vperm.xlu0 %3169, %v1291
      %v3171 = vpop.permute.xlu0 %3170
      %3172 = vset.pattern.permute.xlu0 8
      %3173 = vperm.xlu0 %3172, %v1292
      %v3174 = vpop.permute.xlu0 %3173
      %3175 = vset.pattern.permute.xlu0 8
      %3176 = vperm.xlu0 %3175, %v1293
      %v3177 = vpop.permute.xlu0 %3176
      %3178 = vset.pattern.permute.xlu0 8
      %3179 = vperm.xlu0 %3178, %v1294
      %v3180 = vpop.permute.xlu0 %3179
      %3181 = vset.pattern.permute.xlu0 8
      %3182 = vperm.xlu0 %3181, %v1295
      %v3183 = vpop.permute.xlu0 %3182
      %3184 = vset.pattern.permute.xlu0 8
      %3185 = vperm.xlu0 %3184, %v1296
      %v3186 = vpop.permute.xlu0 %3185
      %3187 = vset.pattern.permute.xlu0 8
      %3188 = vperm.xlu0 %3187, %v1297
      %v3189 = vpop.permute.xlu0 %3188
      %3190 = vset.pattern.permute.xlu0 8
      %3191 = vperm.xlu0 %3190, %v1298
      %v3192 = vpop.permute.xlu0 %3191
      %3193 = vset.pattern.permute.xlu0 8
      %3194 = vperm.xlu0 %3193, %v1299
      %v3195 = vpop.permute.xlu0 %3194
      %3196 = vset.pattern.permute.xlu0 8
      %3197 = vperm.xlu0 %3196, %v1300
      %v3198 = vpop.permute.xlu0 %3197
      %3199 = vset.pattern.permute.xlu0 8
      %3200 = vperm.xlu0 %3199, %v1301
      %v3201 = vpop.permute.xlu0 %3200
      %3202 = vset.pattern.permute.xlu0 8
      %3203 = vperm.xlu0 %3202, %v1302
      %v3204 = vpop.permute.xlu0 %3203
      %3205 = vset.pattern.permute.xlu0 8
      %3206 = vperm.xlu0 %3205, %v1303
      %v3207 = vpop.permute.xlu0 %3206
      %3208 = vset.pattern.permute.xlu0 8
      %3209 = vperm.xlu0 %3208, %v1304
      %v3210 = vpop.permute.xlu0 %3209
      %3211 = vset.pattern.permute.xlu0 8
      %3212 = vperm.xlu0 %3211, %v1305
      %v3213 = vpop.permute.xlu0 %3212
      %3214 = vset.pattern.permute.xlu0 8
      %3215 = vperm.xlu0 %3214, %v1306
      %v3216 = vpop.permute.xlu0 %3215
      %3217 = vset.pattern.permute.xlu0 8
      %3218 = vperm.xlu0 %3217, %v1307
      %v3219 = vpop.permute.xlu0 %3218
      %3220 = vset.pattern.permute.xlu0 8
      %3221 = vperm.xlu0 %3220, %v1308
      %v3222 = vpop.permute.xlu0 %3221
      %3223 = vset.pattern.permute.xlu0 8
      %3224 = vperm.xlu0 %3223, %v1309
      %v3225 = vpop.permute.xlu0 %3224
      %3226 = vset.pattern.permute.xlu0 8
      %3227 = vperm.xlu0 %3226, %v1310
      %v3228 = vpop.permute.xlu0 %3227
      %3229 = vset.pattern.permute.xlu0 8
      %3230 = vperm.xlu0 %3229, %v1311
      %v3231 = vpop.permute.xlu0 %3230
      %3232 = vset.pattern.permute.xlu0 8
      %3233 = vperm.xlu0 %3232, %v1312
      %v3234 = vpop.permute.xlu0 %3233
      %3235 = vset.pattern.permute.xlu0 8
      %3236 = vperm.xlu0 %3235, %v1313
      %v3237 = vpop.permute.xlu0 %3236
      %3238 = vset.pattern.permute.xlu0 8
      %3239 = vperm.xlu0 %3238, %v1314
      %v3240 = vpop.permute.xlu0 %3239
      %3241 = vset.pattern.permute.xlu0 8
      %3242 = vperm.xlu0 %3241, %v1315
      %v3243 = vpop.permute.xlu0 %3242
      %vm3244 = vcmp.eq.s32.totalorder %v3150, 1
      %vm3245 = vcmp.eq.s32.totalorder %v3153, 1
      %vm3246 = vcmp.eq.s32.totalorder %v3156, 1
      %vm3247 = vcmp.eq.s32.totalorder %v3159, 1
      %vm3248 = vcmp.eq.s32.totalorder %v3162, 1
      %vm3249 = vcmp.eq.s32.totalorder %v3165, 1
      %vm3250 = vcmp.eq.s32.totalorder %v3168, 1
      %vm3251 = vcmp.eq.s32.totalorder %v3171, 1
      %vm3252 = vcmp.eq.s32.totalorder %v3174, 1
      %vm3253 = vcmp.eq.s32.totalorder %v3177, 1
      %vm3254 = vcmp.eq.s32.totalorder %v3180, 1
      %vm3255 = vcmp.eq.s32.totalorder %v3183, 1
      %vm3256 = vcmp.eq.s32.totalorder %v3186, 1
      %vm3257 = vcmp.eq.s32.totalorder %v3189, 1
      %vm3258 = vcmp.eq.s32.totalorder %v3192, 1
      %vm3259 = vcmp.eq.s32.totalorder %v3195, 1
      %vm3260 = vcmp.eq.s32.totalorder %v3198, 1
      %vm3261 = vcmp.eq.s32.totalorder %v3201, 1
      %vm3262 = vcmp.eq.s32.totalorder %v3204, 1
      %vm3263 = vcmp.eq.s32.totalorder %v3207, 1
      %vm3264 = vcmp.eq.s32.totalorder %v3210, 1
      %vm3265 = vcmp.eq.s32.totalorder %v3213, 1
      %vm3266 = vcmp.eq.s32.totalorder %v3216, 1
      %vm3267 = vcmp.eq.s32.totalorder %v3219, 1
      %vm3268 = vcmp.eq.s32.totalorder %v3222, 1
      %vm3269 = vcmp.eq.s32.totalorder %v3225, 1
      %vm3270 = vcmp.eq.s32.totalorder %v3228, 1
      %vm3271 = vcmp.eq.s32.totalorder %v3231, 1
      %vm3272 = vcmp.eq.s32.totalorder %v3234, 1
      %vm3273 = vcmp.eq.s32.totalorder %v3237, 1
      %vm3274 = vcmp.eq.s32.totalorder %v3240, 1
      %vm3275 = vcmp.eq.s32.totalorder %v3243, 1
      %v3276 = vsel %vm3244, %v1049, 0.0
      %v3277 = vsel %vm3245, %v1050, 0.0
      %v3278 = vsel %vm3246, %v1051, 0.0
      %v3279 = vsel %vm3247, %v1052, 0.0
      %v3280 = vsel %vm3248, %v1053, 0.0
      %v3281 = vsel %vm3249, %v1054, 0.0
      %v3282 = vsel %vm3250, %v1055, 0.0
      %v3283 = vsel %vm3251, %v1056, 0.0
      %v3284 = vsel %vm3252, %v1057, 0.0
      %v3285 = vsel %vm3253, %v1058, 0.0
      %v3286 = vsel %vm3254, %v1059, 0.0
      %v3287 = vsel %vm3255, %v1060, 0.0
      %v3288 = vsel %vm3256, %v1061, 0.0
      %v3289 = vsel %vm3257, %v1062, 0.0
      %v3290 = vsel %vm3258, %v1063, 0.0
      %v3291 = vsel %vm3259, %v1064, 0.0
      %v3292 = vsel %vm3260, %v1065, 0.0
      %v3293 = vsel %vm3261, %v1066, 0.0
      %v3294 = vsel %vm3262, %v1067, 0.0
      %v3295 = vsel %vm3263, %v1068, 0.0
      %v3296 = vsel %vm3264, %v1069, 0.0
      %v3297 = vsel %vm3265, %v1070, 0.0
      %v3298 = vsel %vm3266, %v1071, 0.0
      %v3299 = vsel %vm3267, %v1072, 0.0
      %v3300 = vsel %vm3268, %v1073, 0.0
      %v3301 = vsel %vm3269, %v1074, 0.0
      %v3302 = vsel %vm3270, %v1075, 0.0
      %v3303 = vsel %vm3271, %v1076, 0.0
      %v3304 = vsel %vm3272, %v1077, 0.0
      %v3305 = vsel %vm3273, %v1078, 0.0
      %v3306 = vsel %vm3274, %v1079, 0.0
      %v3307 = vsel %vm3275, %v1080, 0.0
      %v3308 = vsel %vm1081, %v3276, -inf
      %v3309 = vsel %vm1081, %v3277, -inf
      %v3310 = vsel %vm1081, %v3278, -inf
      %v3311 = vsel %vm1081, %v3279, -inf
      %v3312 = vsel %vm1081, %v3280, -inf
      %v3313 = vmax.f32 %v3308, %v3312
      %v3314 = vsel %vm1081, %v3281, -inf
      %v3315 = vmax.f32 %v3309, %v3314
      %v3316 = vsel %vm1081, %v3282, -inf
      %v3317 = vmax.f32 %v3310, %v3316
      %v3318 = vsel %vm1081, %v3283, -inf
      %v3319 = vmax.f32 %v3311, %v3318
      %v3320 = vsel %vm1081, %v3284, -inf
      %v3321 = vmax.f32 %v3313, %v3320
      %v3322 = vsel %vm1081, %v3285, -inf
      %v3323 = vmax.f32 %v3315, %v3322
      %v3324 = vsel %vm1081, %v3286, -inf
      %v3325 = vmax.f32 %v3317, %v3324
      %v3326 = vsel %vm1081, %v3287, -inf
      %v3327 = vmax.f32 %v3319, %v3326
      %v3328 = vsel %vm1081, %v3288, -inf
      %v3329 = vmax.f32 %v3321, %v3328
      %v3330 = vsel %vm1081, %v3289, -inf
      %v3331 = vmax.f32 %v3323, %v3330
      %v3332 = vsel %vm1081, %v3290, -inf
      %v3333 = vmax.f32 %v3325, %v3332
      %v3334 = vsel %vm1081, %v3291, -inf
      %v3335 = vmax.f32 %v3327, %v3334
      %v3336 = vsel %vm1081, %v3292, -inf
      %v3337 = vmax.f32 %v3329, %v3336
      %v3338 = vsel %vm1081, %v3293, -inf
      %v3339 = vmax.f32 %v3331, %v3338
      %v3340 = vsel %vm1081, %v3294, -inf
      %v3341 = vmax.f32 %v3333, %v3340
      %v3342 = vsel %vm1081, %v3295, -inf
      %v3343 = vmax.f32 %v3335, %v3342
      %v3344 = vsel %vm1081, %v3296, -inf
      %v3345 = vmax.f32 %v3337, %v3344
      %v3346 = vsel %vm1081, %v3297, -inf
      %v3347 = vmax.f32 %v3339, %v3346
      %v3348 = vsel %vm1081, %v3298, -inf
      %v3349 = vmax.f32 %v3341, %v3348
      %v3350 = vsel %vm1081, %v3299, -inf
      %v3351 = vmax.f32 %v3343, %v3350
      %v3352 = vsel %vm1081, %v3300, -inf
      %v3353 = vmax.f32 %v3345, %v3352
      %v3354 = vsel %vm1081, %v3301, -inf
      %v3355 = vmax.f32 %v3347, %v3354
      %v3356 = vsel %vm1081, %v3302, -inf
      %v3357 = vmax.f32 %v3349, %v3356
      %v3358 = vsel %vm1081, %v3303, -inf
      %v3359 = vmax.f32 %v3351, %v3358
      %v3360 = vsel %vm1081, %v3304, -inf
      %v3361 = vmax.f32 %v3353, %v3360
      %v3362 = vsel %vm1081, %v3305, -inf
      %v3363 = vmax.f32 %v3355, %v3362
      %v3364 = vsel %vm1081, %v3306, -inf
      %v3365 = vmax.f32 %v3357, %v3364
      %v3366 = vsel %vm1081, %v3307, -inf
      %v3367 = vmax.f32 %v3359, %v3366
      %v3368 = vmax.f32 %v3361, %v3363
      %v3369 = vmax.f32 %v3365, %v3367
      %v3370 = vmax.f32 %v3368, %v3369
      %v3371 = vrot.slane %v3370, 4
      %v3372 = vmax.f32 %v3370, %v3371
      %v3373 = vrot.slane %v3372, 2
      %v3374 = vmax.f32 %v3372, %v3373
      %v3375 = vrot.slane %v3374, 1
      %v3376 = vmax.f32 %v3374, %v3375
      %3377 = vset.pattern.permute.xlu0 9
      %3378 = vperm.xlu0 %3377, %v1284
      %v3379 = vpop.permute.xlu0 %3378
      %3380 = vset.pattern.permute.xlu0 9
      %3381 = vperm.xlu0 %3380, %v1285
      %v3382 = vpop.permute.xlu0 %3381
      %3383 = vset.pattern.permute.xlu0 9
      %3384 = vperm.xlu0 %3383, %v1286
      %v3385 = vpop.permute.xlu0 %3384
      %3386 = vset.pattern.permute.xlu0 9
      %3387 = vperm.xlu0 %3386, %v1287
      %v3388 = vpop.permute.xlu0 %3387
      %3389 = vset.pattern.permute.xlu0 9
      %3390 = vperm.xlu0 %3389, %v1288
      %v3391 = vpop.permute.xlu0 %3390
      %3392 = vset.pattern.permute.xlu0 9
      %3393 = vperm.xlu0 %3392, %v1289
      %v3394 = vpop.permute.xlu0 %3393
      %3395 = vset.pattern.permute.xlu0 9
      %3396 = vperm.xlu0 %3395, %v1290
      %v3397 = vpop.permute.xlu0 %3396
      %3398 = vset.pattern.permute.xlu0 9
      %3399 = vperm.xlu0 %3398, %v1291
      %v3400 = vpop.permute.xlu0 %3399
      %3401 = vset.pattern.permute.xlu0 9
      %3402 = vperm.xlu0 %3401, %v1292
      %v3403 = vpop.permute.xlu0 %3402
      %3404 = vset.pattern.permute.xlu0 9
      %3405 = vperm.xlu0 %3404, %v1293
      %v3406 = vpop.permute.xlu0 %3405
      %3407 = vset.pattern.permute.xlu0 9
      %3408 = vperm.xlu0 %3407, %v1294
      %v3409 = vpop.permute.xlu0 %3408
      %3410 = vset.pattern.permute.xlu0 9
      %3411 = vperm.xlu0 %3410, %v1295
      %v3412 = vpop.permute.xlu0 %3411
      %3413 = vset.pattern.permute.xlu0 9
      %3414 = vperm.xlu0 %3413, %v1296
      %v3415 = vpop.permute.xlu0 %3414
      %3416 = vset.pattern.permute.xlu0 9
      %3417 = vperm.xlu0 %3416, %v1297
      %v3418 = vpop.permute.xlu0 %3417
      %3419 = vset.pattern.permute.xlu0 9
      %3420 = vperm.xlu0 %3419, %v1298
      %v3421 = vpop.permute.xlu0 %3420
      %3422 = vset.pattern.permute.xlu0 9
      %3423 = vperm.xlu0 %3422, %v1299
      %v3424 = vpop.permute.xlu0 %3423
      %3425 = vset.pattern.permute.xlu0 9
      %3426 = vperm.xlu0 %3425, %v1300
      %v3427 = vpop.permute.xlu0 %3426
      %3428 = vset.pattern.permute.xlu0 9
      %3429 = vperm.xlu0 %3428, %v1301
      %v3430 = vpop.permute.xlu0 %3429
      %3431 = vset.pattern.permute.xlu0 9
      %3432 = vperm.xlu0 %3431, %v1302
      %v3433 = vpop.permute.xlu0 %3432
      %3434 = vset.pattern.permute.xlu0 9
      %3435 = vperm.xlu0 %3434, %v1303
      %v3436 = vpop.permute.xlu0 %3435
      %3437 = vset.pattern.permute.xlu0 9
      %3438 = vperm.xlu0 %3437, %v1304
      %v3439 = vpop.permute.xlu0 %3438
      %3440 = vset.pattern.permute.xlu0 9
      %3441 = vperm.xlu0 %3440, %v1305
      %v3442 = vpop.permute.xlu0 %3441
      %3443 = vset.pattern.permute.xlu0 9
      %3444 = vperm.xlu0 %3443, %v1306
      %v3445 = vpop.permute.xlu0 %3444
      %3446 = vset.pattern.permute.xlu0 9
      %3447 = vperm.xlu0 %3446, %v1307
      %v3448 = vpop.permute.xlu0 %3447
      %3449 = vset.pattern.permute.xlu0 9
      %3450 = vperm.xlu0 %3449, %v1308
      %v3451 = vpop.permute.xlu0 %3450
      %3452 = vset.pattern.permute.xlu0 9
      %3453 = vperm.xlu0 %3452, %v1309
      %v3454 = vpop.permute.xlu0 %3453
      %3455 = vset.pattern.permute.xlu0 9
      %3456 = vperm.xlu0 %3455, %v1310
      %v3457 = vpop.permute.xlu0 %3456
      %3458 = vset.pattern.permute.xlu0 9
      %3459 = vperm.xlu0 %3458, %v1311
      %v3460 = vpop.permute.xlu0 %3459
      %3461 = vset.pattern.permute.xlu0 9
      %3462 = vperm.xlu0 %3461, %v1312
      %v3463 = vpop.permute.xlu0 %3462
      %3464 = vset.pattern.permute.xlu0 9
      %3465 = vperm.xlu0 %3464, %v1313
      %v3466 = vpop.permute.xlu0 %3465
      %3467 = vset.pattern.permute.xlu0 9
      %3468 = vperm.xlu0 %3467, %v1314
      %v3469 = vpop.permute.xlu0 %3468
      %3470 = vset.pattern.permute.xlu0 9
      %3471 = vperm.xlu0 %3470, %v1315
      %v3472 = vpop.permute.xlu0 %3471
      %vm3473 = vcmp.eq.s32.totalorder %v3379, 1
      %vm3474 = vcmp.eq.s32.totalorder %v3382, 1
      %vm3475 = vcmp.eq.s32.totalorder %v3385, 1
      %vm3476 = vcmp.eq.s32.totalorder %v3388, 1
      %vm3477 = vcmp.eq.s32.totalorder %v3391, 1
      %vm3478 = vcmp.eq.s32.totalorder %v3394, 1
      %vm3479 = vcmp.eq.s32.totalorder %v3397, 1
      %vm3480 = vcmp.eq.s32.totalorder %v3400, 1
      %vm3481 = vcmp.eq.s32.totalorder %v3403, 1
      %vm3482 = vcmp.eq.s32.totalorder %v3406, 1
      %vm3483 = vcmp.eq.s32.totalorder %v3409, 1
      %vm3484 = vcmp.eq.s32.totalorder %v3412, 1
      %vm3485 = vcmp.eq.s32.totalorder %v3415, 1
      %vm3486 = vcmp.eq.s32.totalorder %v3418, 1
      %vm3487 = vcmp.eq.s32.totalorder %v3421, 1
      %vm3488 = vcmp.eq.s32.totalorder %v3424, 1
      %vm3489 = vcmp.eq.s32.totalorder %v3427, 1
      %vm3490 = vcmp.eq.s32.totalorder %v3430, 1
      %vm3491 = vcmp.eq.s32.totalorder %v3433, 1
      %vm3492 = vcmp.eq.s32.totalorder %v3436, 1
      %vm3493 = vcmp.eq.s32.totalorder %v3439, 1
      %vm3494 = vcmp.eq.s32.totalorder %v3442, 1
      %vm3495 = vcmp.eq.s32.totalorder %v3445, 1
      %vm3496 = vcmp.eq.s32.totalorder %v3448, 1
      %vm3497 = vcmp.eq.s32.totalorder %v3451, 1
      %vm3498 = vcmp.eq.s32.totalorder %v3454, 1
      %vm3499 = vcmp.eq.s32.totalorder %v3457, 1
      %vm3500 = vcmp.eq.s32.totalorder %v3460, 1
      %vm3501 = vcmp.eq.s32.totalorder %v3463, 1
      %vm3502 = vcmp.eq.s32.totalorder %v3466, 1
      %vm3503 = vcmp.eq.s32.totalorder %v3469, 1
      %vm3504 = vcmp.eq.s32.totalorder %v3472, 1
      %v3505 = vsel %vm3473, %v1049, 0.0
      %v3506 = vsel %vm3474, %v1050, 0.0
      %v3507 = vsel %vm3475, %v1051, 0.0
      %v3508 = vsel %vm3476, %v1052, 0.0
      %v3509 = vsel %vm3477, %v1053, 0.0
      %v3510 = vsel %vm3478, %v1054, 0.0
      %v3511 = vsel %vm3479, %v1055, 0.0
      %v3512 = vsel %vm3480, %v1056, 0.0
      %v3513 = vsel %vm3481, %v1057, 0.0
      %v3514 = vsel %vm3482, %v1058, 0.0
      %v3515 = vsel %vm3483, %v1059, 0.0
      %v3516 = vsel %vm3484, %v1060, 0.0
      %v3517 = vsel %vm3485, %v1061, 0.0
      %v3518 = vsel %vm3486, %v1062, 0.0
      %v3519 = vsel %vm3487, %v1063, 0.0
      %v3520 = vsel %vm3488, %v1064, 0.0
      %v3521 = vsel %vm3489, %v1065, 0.0
      %v3522 = vsel %vm3490, %v1066, 0.0
      %v3523 = vsel %vm3491, %v1067, 0.0
      %v3524 = vsel %vm3492, %v1068, 0.0
      %v3525 = vsel %vm3493, %v1069, 0.0
      %v3526 = vsel %vm3494, %v1070, 0.0
      %v3527 = vsel %vm3495, %v1071, 0.0
      %v3528 = vsel %vm3496, %v1072, 0.0
      %v3529 = vsel %vm3497, %v1073, 0.0
      %v3530 = vsel %vm3498, %v1074, 0.0
      %v3531 = vsel %vm3499, %v1075, 0.0
      %v3532 = vsel %vm3500, %v1076, 0.0
      %v3533 = vsel %vm3501, %v1077, 0.0
      %v3534 = vsel %vm3502, %v1078, 0.0
      %v3535 = vsel %vm3503, %v1079, 0.0
      %v3536 = vsel %vm3504, %v1080, 0.0
      %v3537 = vsel %vm1081, %v3505, -inf
      %v3538 = vsel %vm1081, %v3506, -inf
      %v3539 = vsel %vm1081, %v3507, -inf
      %v3540 = vsel %vm1081, %v3508, -inf
      %v3541 = vsel %vm1081, %v3509, -inf
      %v3542 = vmax.f32 %v3537, %v3541
      %v3543 = vsel %vm1081, %v3510, -inf
      %v3544 = vmax.f32 %v3538, %v3543
      %v3545 = vsel %vm1081, %v3511, -inf
      %v3546 = vmax.f32 %v3539, %v3545
      %v3547 = vsel %vm1081, %v3512, -inf
      %v3548 = vmax.f32 %v3540, %v3547
      %v3549 = vsel %vm1081, %v3513, -inf
      %v3550 = vmax.f32 %v3542, %v3549
      %v3551 = vsel %vm1081, %v3514, -inf
      %v3552 = vmax.f32 %v3544, %v3551
      %v3553 = vsel %vm1081, %v3515, -inf
      %v3554 = vmax.f32 %v3546, %v3553
      %v3555 = vsel %vm1081, %v3516, -inf
      %v3556 = vmax.f32 %v3548, %v3555
      %v3557 = vsel %vm1081, %v3517, -inf
      %v3558 = vmax.f32 %v3550, %v3557
      %v3559 = vsel %vm1081, %v3518, -inf
      %v3560 = vmax.f32 %v3552, %v3559
      %v3561 = vsel %vm1081, %v3519, -inf
      %v3562 = vmax.f32 %v3554, %v3561
      %v3563 = vsel %vm1081, %v3520, -inf
      %v3564 = vmax.f32 %v3556, %v3563
      %v3565 = vsel %vm1081, %v3521, -inf
      %v3566 = vmax.f32 %v3558, %v3565
      %v3567 = vsel %vm1081, %v3522, -inf
      %v3568 = vmax.f32 %v3560, %v3567
      %v3569 = vsel %vm1081, %v3523, -inf
      %v3570 = vmax.f32 %v3562, %v3569
      %v3571 = vsel %vm1081, %v3524, -inf
      %v3572 = vmax.f32 %v3564, %v3571
      %v3573 = vsel %vm1081, %v3525, -inf
      %v3574 = vmax.f32 %v3566, %v3573
      %v3575 = vsel %vm1081, %v3526, -inf
      %v3576 = vmax.f32 %v3568, %v3575
      %v3577 = vsel %vm1081, %v3527, -inf
      %v3578 = vmax.f32 %v3570, %v3577
      %v3579 = vsel %vm1081, %v3528, -inf
      %v3580 = vmax.f32 %v3572, %v3579
      %v3581 = vsel %vm1081, %v3529, -inf
      %v3582 = vmax.f32 %v3574, %v3581
      %v3583 = vsel %vm1081, %v3530, -inf
      %v3584 = vmax.f32 %v3576, %v3583
      %v3585 = vsel %vm1081, %v3531, -inf
      %v3586 = vmax.f32 %v3578, %v3585
      %v3587 = vsel %vm1081, %v3532, -inf
      %v3588 = vmax.f32 %v3580, %v3587
      %v3589 = vsel %vm1081, %v3533, -inf
      %v3590 = vmax.f32 %v3582, %v3589
      %v3591 = vsel %vm1081, %v3534, -inf
      %v3592 = vmax.f32 %v3584, %v3591
      %v3593 = vsel %vm1081, %v3535, -inf
      %v3594 = vmax.f32 %v3586, %v3593
      %v3595 = vsel %vm1081, %v3536, -inf
      %v3596 = vmax.f32 %v3588, %v3595
      %v3597 = vmax.f32 %v3590, %v3592
      %v3598 = vmax.f32 %v3594, %v3596
      %v3599 = vmax.f32 %v3597, %v3598
      %v3600 = vrot.slane %v3599, 4
      %v3601 = vmax.f32 %v3599, %v3600
      %v3602 = vrot.slane %v3601, 2
      %v3603 = vmax.f32 %v3601, %v3602
      %v3604 = vrot.slane %v3603, 1
      %v3605 = vmax.f32 %v3603, %v3604
      %3606 = vset.pattern.permute.xlu0 10
      %3607 = vperm.xlu0 %3606, %v1284
      %v3608 = vpop.permute.xlu0 %3607
      %3609 = vset.pattern.permute.xlu0 10
      %3610 = vperm.xlu0 %3609, %v1285
      %v3611 = vpop.permute.xlu0 %3610
      %3612 = vset.pattern.permute.xlu0 10
      %3613 = vperm.xlu0 %3612, %v1286
      %v3614 = vpop.permute.xlu0 %3613
      %3615 = vset.pattern.permute.xlu0 10
      %3616 = vperm.xlu0 %3615, %v1287
      %v3617 = vpop.permute.xlu0 %3616
      %3618 = vset.pattern.permute.xlu0 10
      %3619 = vperm.xlu0 %3618, %v1288
      %v3620 = vpop.permute.xlu0 %3619
      %3621 = vset.pattern.permute.xlu0 10
      %3622 = vperm.xlu0 %3621, %v1289
      %v3623 = vpop.permute.xlu0 %3622
      %3624 = vset.pattern.permute.xlu0 10
      %3625 = vperm.xlu0 %3624, %v1290
      %v3626 = vpop.permute.xlu0 %3625
      %3627 = vset.pattern.permute.xlu0 10
      %3628 = vperm.xlu0 %3627, %v1291
      %v3629 = vpop.permute.xlu0 %3628
      %3630 = vset.pattern.permute.xlu0 10
      %3631 = vperm.xlu0 %3630, %v1292
      %v3632 = vpop.permute.xlu0 %3631
      %3633 = vset.pattern.permute.xlu0 10
      %3634 = vperm.xlu0 %3633, %v1293
      %v3635 = vpop.permute.xlu0 %3634
      %3636 = vset.pattern.permute.xlu0 10
      %3637 = vperm.xlu0 %3636, %v1294
      %v3638 = vpop.permute.xlu0 %3637
      %3639 = vset.pattern.permute.xlu0 10
      %3640 = vperm.xlu0 %3639, %v1295
      %v3641 = vpop.permute.xlu0 %3640
      %3642 = vset.pattern.permute.xlu0 10
      %3643 = vperm.xlu0 %3642, %v1296
      %v3644 = vpop.permute.xlu0 %3643
      %3645 = vset.pattern.permute.xlu0 10
      %3646 = vperm.xlu0 %3645, %v1297
      %v3647 = vpop.permute.xlu0 %3646
      %3648 = vset.pattern.permute.xlu0 10
      %3649 = vperm.xlu0 %3648, %v1298
      %v3650 = vpop.permute.xlu0 %3649
      %3651 = vset.pattern.permute.xlu0 10
      %3652 = vperm.xlu0 %3651, %v1299
      %v3653 = vpop.permute.xlu0 %3652
      %3654 = vset.pattern.permute.xlu0 10
      %3655 = vperm.xlu0 %3654, %v1300
      %v3656 = vpop.permute.xlu0 %3655
      %3657 = vset.pattern.permute.xlu0 10
      %3658 = vperm.xlu0 %3657, %v1301
      %v3659 = vpop.permute.xlu0 %3658
      %3660 = vset.pattern.permute.xlu0 10
      %3661 = vperm.xlu0 %3660, %v1302
      %v3662 = vpop.permute.xlu0 %3661
      %3663 = vset.pattern.permute.xlu0 10
      %3664 = vperm.xlu0 %3663, %v1303
      %v3665 = vpop.permute.xlu0 %3664
      %3666 = vset.pattern.permute.xlu0 10
      %3667 = vperm.xlu0 %3666, %v1304
      %v3668 = vpop.permute.xlu0 %3667
      %3669 = vset.pattern.permute.xlu0 10
      %3670 = vperm.xlu0 %3669, %v1305
      %v3671 = vpop.permute.xlu0 %3670
      %3672 = vset.pattern.permute.xlu0 10
      %3673 = vperm.xlu0 %3672, %v1306
      %v3674 = vpop.permute.xlu0 %3673
      %3675 = vset.pattern.permute.xlu0 10
      %3676 = vperm.xlu0 %3675, %v1307
      %v3677 = vpop.permute.xlu0 %3676
      %3678 = vset.pattern.permute.xlu0 10
      %3679 = vperm.xlu0 %3678, %v1308
      %v3680 = vpop.permute.xlu0 %3679
      %3681 = vset.pattern.permute.xlu0 10
      %3682 = vperm.xlu0 %3681, %v1309
      %v3683 = vpop.permute.xlu0 %3682
      %3684 = vset.pattern.permute.xlu0 10
      %3685 = vperm.xlu0 %3684, %v1310
      %v3686 = vpop.permute.xlu0 %3685
      %3687 = vset.pattern.permute.xlu0 10
      %3688 = vperm.xlu0 %3687, %v1311
      %v3689 = vpop.permute.xlu0 %3688
      %3690 = vset.pattern.permute.xlu0 10
      %3691 = vperm.xlu0 %3690, %v1312
      %v3692 = vpop.permute.xlu0 %3691
      %3693 = vset.pattern.permute.xlu0 10
      %3694 = vperm.xlu0 %3693, %v1313
      %v3695 = vpop.permute.xlu0 %3694
      %3696 = vset.pattern.permute.xlu0 10
      %3697 = vperm.xlu0 %3696, %v1314
      %v3698 = vpop.permute.xlu0 %3697
      %3699 = vset.pattern.permute.xlu0 10
      %3700 = vperm.xlu0 %3699, %v1315
      %v3701 = vpop.permute.xlu0 %3700
      %vm3702 = vcmp.eq.s32.totalorder %v3608, 1
      %vm3703 = vcmp.eq.s32.totalorder %v3611, 1
      %vm3704 = vcmp.eq.s32.totalorder %v3614, 1
      %vm3705 = vcmp.eq.s32.totalorder %v3617, 1
      %vm3706 = vcmp.eq.s32.totalorder %v3620, 1
      %vm3707 = vcmp.eq.s32.totalorder %v3623, 1
      %vm3708 = vcmp.eq.s32.totalorder %v3626, 1
      %vm3709 = vcmp.eq.s32.totalorder %v3629, 1
      %vm3710 = vcmp.eq.s32.totalorder %v3632, 1
      %vm3711 = vcmp.eq.s32.totalorder %v3635, 1
      %vm3712 = vcmp.eq.s32.totalorder %v3638, 1
      %vm3713 = vcmp.eq.s32.totalorder %v3641, 1
      %vm3714 = vcmp.eq.s32.totalorder %v3644, 1
      %vm3715 = vcmp.eq.s32.totalorder %v3647, 1
      %vm3716 = vcmp.eq.s32.totalorder %v3650, 1
      %vm3717 = vcmp.eq.s32.totalorder %v3653, 1
      %vm3718 = vcmp.eq.s32.totalorder %v3656, 1
      %vm3719 = vcmp.eq.s32.totalorder %v3659, 1
      %vm3720 = vcmp.eq.s32.totalorder %v3662, 1
      %vm3721 = vcmp.eq.s32.totalorder %v3665, 1
      %vm3722 = vcmp.eq.s32.totalorder %v3668, 1
      %vm3723 = vcmp.eq.s32.totalorder %v3671, 1
      %vm3724 = vcmp.eq.s32.totalorder %v3674, 1
      %vm3725 = vcmp.eq.s32.totalorder %v3677, 1
      %vm3726 = vcmp.eq.s32.totalorder %v3680, 1
      %vm3727 = vcmp.eq.s32.totalorder %v3683, 1
      %vm3728 = vcmp.eq.s32.totalorder %v3686, 1
      %vm3729 = vcmp.eq.s32.totalorder %v3689, 1
      %vm3730 = vcmp.eq.s32.totalorder %v3692, 1
      %vm3731 = vcmp.eq.s32.totalorder %v3695, 1
      %vm3732 = vcmp.eq.s32.totalorder %v3698, 1
      %vm3733 = vcmp.eq.s32.totalorder %v3701, 1
      %v3734 = vsel %vm3702, %v1049, 0.0
      %v3735 = vsel %vm3703, %v1050, 0.0
      %v3736 = vsel %vm3704, %v1051, 0.0
      %v3737 = vsel %vm3705, %v1052, 0.0
      %v3738 = vsel %vm3706, %v1053, 0.0
      %v3739 = vsel %vm3707, %v1054, 0.0
      %v3740 = vsel %vm3708, %v1055, 0.0
      %v3741 = vsel %vm3709, %v1056, 0.0
      %v3742 = vsel %vm3710, %v1057, 0.0
      %v3743 = vsel %vm3711, %v1058, 0.0
      %v3744 = vsel %vm3712, %v1059, 0.0
      %v3745 = vsel %vm3713, %v1060, 0.0
      %v3746 = vsel %vm3714, %v1061, 0.0
      %v3747 = vsel %vm3715, %v1062, 0.0
      %v3748 = vsel %vm3716, %v1063, 0.0
      %v3749 = vsel %vm3717, %v1064, 0.0
      %v3750 = vsel %vm3718, %v1065, 0.0
      %v3751 = vsel %vm3719, %v1066, 0.0
      %v3752 = vsel %vm3720, %v1067, 0.0
      %v3753 = vsel %vm3721, %v1068, 0.0
      %v3754 = vsel %vm3722, %v1069, 0.0
      %v3755 = vsel %vm3723, %v1070, 0.0
      %v3756 = vsel %vm3724, %v1071, 0.0
      %v3757 = vsel %vm3725, %v1072, 0.0
      %v3758 = vsel %vm3726, %v1073, 0.0
      %v3759 = vsel %vm3727, %v1074, 0.0
      %v3760 = vsel %vm3728, %v1075, 0.0
      %v3761 = vsel %vm3729, %v1076, 0.0
      %v3762 = vsel %vm3730, %v1077, 0.0
      %v3763 = vsel %vm3731, %v1078, 0.0
      %v3764 = vsel %vm3732, %v1079, 0.0
      %v3765 = vsel %vm3733, %v1080, 0.0
      %v3766 = vsel %vm1081, %v3734, -inf
      %v3767 = vsel %vm1081, %v3735, -inf
      %v3768 = vsel %vm1081, %v3736, -inf
      %v3769 = vsel %vm1081, %v3737, -inf
      %v3770 = vsel %vm1081, %v3738, -inf
      %v3771 = vmax.f32 %v3766, %v3770
      %v3772 = vsel %vm1081, %v3739, -inf
      %v3773 = vmax.f32 %v3767, %v3772
      %v3774 = vsel %vm1081, %v3740, -inf
      %v3775 = vmax.f32 %v3768, %v3774
      %v3776 = vsel %vm1081, %v3741, -inf
      %v3777 = vmax.f32 %v3769, %v3776
      %v3778 = vsel %vm1081, %v3742, -inf
      %v3779 = vmax.f32 %v3771, %v3778
      %v3780 = vsel %vm1081, %v3743, -inf
      %v3781 = vmax.f32 %v3773, %v3780
      %v3782 = vsel %vm1081, %v3744, -inf
      %v3783 = vmax.f32 %v3775, %v3782
      %v3784 = vsel %vm1081, %v3745, -inf
      %v3785 = vmax.f32 %v3777, %v3784
      %v3786 = vsel %vm1081, %v3746, -inf
      %v3787 = vmax.f32 %v3779, %v3786
      %v3788 = vsel %vm1081, %v3747, -inf
      %v3789 = vmax.f32 %v3781, %v3788
      %v3790 = vsel %vm1081, %v3748, -inf
      %v3791 = vmax.f32 %v3783, %v3790
      %v3792 = vsel %vm1081, %v3749, -inf
      %v3793 = vmax.f32 %v3785, %v3792
      %v3794 = vsel %vm1081, %v3750, -inf
      %v3795 = vmax.f32 %v3787, %v3794
      %v3796 = vsel %vm1081, %v3751, -inf
      %v3797 = vmax.f32 %v3789, %v3796
      %v3798 = vsel %vm1081, %v3752, -inf
      %v3799 = vmax.f32 %v3791, %v3798
      %v3800 = vsel %vm1081, %v3753, -inf
      %v3801 = vmax.f32 %v3793, %v3800
      %v3802 = vsel %vm1081, %v3754, -inf
      %v3803 = vmax.f32 %v3795, %v3802
      %v3804 = vsel %vm1081, %v3755, -inf
      %v3805 = vmax.f32 %v3797, %v3804
      %v3806 = vsel %vm1081, %v3756, -inf
      %v3807 = vmax.f32 %v3799, %v3806
      %v3808 = vsel %vm1081, %v3757, -inf
      %v3809 = vmax.f32 %v3801, %v3808
      %v3810 = vsel %vm1081, %v3758, -inf
      %v3811 = vmax.f32 %v3803, %v3810
      %v3812 = vsel %vm1081, %v3759, -inf
      %v3813 = vmax.f32 %v3805, %v3812
      %v3814 = vsel %vm1081, %v3760, -inf
      %v3815 = vmax.f32 %v3807, %v3814
      %v3816 = vsel %vm1081, %v3761, -inf
      %v3817 = vmax.f32 %v3809, %v3816
      %v3818 = vsel %vm1081, %v3762, -inf
      %v3819 = vmax.f32 %v3811, %v3818
      %v3820 = vsel %vm1081, %v3763, -inf
      %v3821 = vmax.f32 %v3813, %v3820
      %v3822 = vsel %vm1081, %v3764, -inf
      %v3823 = vmax.f32 %v3815, %v3822
      %v3824 = vsel %vm1081, %v3765, -inf
      %v3825 = vmax.f32 %v3817, %v3824
      %v3826 = vmax.f32 %v3819, %v3821
      %v3827 = vmax.f32 %v3823, %v3825
      %v3828 = vmax.f32 %v3826, %v3827
      %v3829 = vrot.slane %v3828, 4
      %v3830 = vmax.f32 %v3828, %v3829
      %v3831 = vrot.slane %v3830, 2
      %v3832 = vmax.f32 %v3830, %v3831
      %v3833 = vrot.slane %v3832, 1
      %v3834 = vmax.f32 %v3832, %v3833
      %3835 = vset.pattern.permute.xlu0 11
      %3836 = vperm.xlu0 %3835, %v1284
      %v3837 = vpop.permute.xlu0 %3836
      %3838 = vset.pattern.permute.xlu0 11
      %3839 = vperm.xlu0 %3838, %v1285
      %v3840 = vpop.permute.xlu0 %3839
      %3841 = vset.pattern.permute.xlu0 11
      %3842 = vperm.xlu0 %3841, %v1286
      %v3843 = vpop.permute.xlu0 %3842
      %3844 = vset.pattern.permute.xlu0 11
      %3845 = vperm.xlu0 %3844, %v1287
      %v3846 = vpop.permute.xlu0 %3845
      %3847 = vset.pattern.permute.xlu0 11
      %3848 = vperm.xlu0 %3847, %v1288
      %v3849 = vpop.permute.xlu0 %3848
      %3850 = vset.pattern.permute.xlu0 11
      %3851 = vperm.xlu0 %3850, %v1289
      %v3852 = vpop.permute.xlu0 %3851
      %3853 = vset.pattern.permute.xlu0 11
      %3854 = vperm.xlu0 %3853, %v1290
      %v3855 = vpop.permute.xlu0 %3854
      %3856 = vset.pattern.permute.xlu0 11
      %3857 = vperm.xlu0 %3856, %v1291
      %v3858 = vpop.permute.xlu0 %3857
      %3859 = vset.pattern.permute.xlu0 11
      %3860 = vperm.xlu0 %3859, %v1292
      %v3861 = vpop.permute.xlu0 %3860
      %3862 = vset.pattern.permute.xlu0 11
      %3863 = vperm.xlu0 %3862, %v1293
      %v3864 = vpop.permute.xlu0 %3863
      %3865 = vset.pattern.permute.xlu0 11
      %3866 = vperm.xlu0 %3865, %v1294
      %v3867 = vpop.permute.xlu0 %3866
      %3868 = vset.pattern.permute.xlu0 11
      %3869 = vperm.xlu0 %3868, %v1295
      %v3870 = vpop.permute.xlu0 %3869
      %3871 = vset.pattern.permute.xlu0 11
      %3872 = vperm.xlu0 %3871, %v1296
      %v3873 = vpop.permute.xlu0 %3872
      %3874 = vset.pattern.permute.xlu0 11
      %3875 = vperm.xlu0 %3874, %v1297
      %v3876 = vpop.permute.xlu0 %3875
      %3877 = vset.pattern.permute.xlu0 11
      %3878 = vperm.xlu0 %3877, %v1298
      %v3879 = vpop.permute.xlu0 %3878
      %3880 = vset.pattern.permute.xlu0 11
      %3881 = vperm.xlu0 %3880, %v1299
      %v3882 = vpop.permute.xlu0 %3881
      %3883 = vset.pattern.permute.xlu0 11
      %3884 = vperm.xlu0 %3883, %v1300
      %v3885 = vpop.permute.xlu0 %3884
      %3886 = vset.pattern.permute.xlu0 11
      %3887 = vperm.xlu0 %3886, %v1301
      %v3888 = vpop.permute.xlu0 %3887
      %3889 = vset.pattern.permute.xlu0 11
      %3890 = vperm.xlu0 %3889, %v1302
      %v3891 = vpop.permute.xlu0 %3890
      %3892 = vset.pattern.permute.xlu0 11
      %3893 = vperm.xlu0 %3892, %v1303
      %v3894 = vpop.permute.xlu0 %3893
      %3895 = vset.pattern.permute.xlu0 11
      %3896 = vperm.xlu0 %3895, %v1304
      %v3897 = vpop.permute.xlu0 %3896
      %3898 = vset.pattern.permute.xlu0 11
      %3899 = vperm.xlu0 %3898, %v1305
      %v3900 = vpop.permute.xlu0 %3899
      %3901 = vset.pattern.permute.xlu0 11
      %3902 = vperm.xlu0 %3901, %v1306
      %v3903 = vpop.permute.xlu0 %3902
      %3904 = vset.pattern.permute.xlu0 11
      %3905 = vperm.xlu0 %3904, %v1307
      %v3906 = vpop.permute.xlu0 %3905
      %3907 = vset.pattern.permute.xlu0 11
      %3908 = vperm.xlu0 %3907, %v1308
      %v3909 = vpop.permute.xlu0 %3908
      %3910 = vset.pattern.permute.xlu0 11
      %3911 = vperm.xlu0 %3910, %v1309
      %v3912 = vpop.permute.xlu0 %3911
      %3913 = vset.pattern.permute.xlu0 11
      %3914 = vperm.xlu0 %3913, %v1310
      %v3915 = vpop.permute.xlu0 %3914
      %3916 = vset.pattern.permute.xlu0 11
      %3917 = vperm.xlu0 %3916, %v1311
      %v3918 = vpop.permute.xlu0 %3917
      %3919 = vset.pattern.permute.xlu0 11
      %3920 = vperm.xlu0 %3919, %v1312
      %v3921 = vpop.permute.xlu0 %3920
      %3922 = vset.pattern.permute.xlu0 11
      %3923 = vperm.xlu0 %3922, %v1313
      %v3924 = vpop.permute.xlu0 %3923
      %3925 = vset.pattern.permute.xlu0 11
      %3926 = vperm.xlu0 %3925, %v1314
      %v3927 = vpop.permute.xlu0 %3926
      %3928 = vset.pattern.permute.xlu0 11
      %3929 = vperm.xlu0 %3928, %v1315
      %v3930 = vpop.permute.xlu0 %3929
      %vm3931 = vcmp.eq.s32.totalorder %v3837, 1
      %vm3932 = vcmp.eq.s32.totalorder %v3840, 1
      %vm3933 = vcmp.eq.s32.totalorder %v3843, 1
      %vm3934 = vcmp.eq.s32.totalorder %v3846, 1
      %vm3935 = vcmp.eq.s32.totalorder %v3849, 1
      %vm3936 = vcmp.eq.s32.totalorder %v3852, 1
      %vm3937 = vcmp.eq.s32.totalorder %v3855, 1
      %vm3938 = vcmp.eq.s32.totalorder %v3858, 1
      %vm3939 = vcmp.eq.s32.totalorder %v3861, 1
      %vm3940 = vcmp.eq.s32.totalorder %v3864, 1
      %vm3941 = vcmp.eq.s32.totalorder %v3867, 1
      %vm3942 = vcmp.eq.s32.totalorder %v3870, 1
      %vm3943 = vcmp.eq.s32.totalorder %v3873, 1
      %vm3944 = vcmp.eq.s32.totalorder %v3876, 1
      %vm3945 = vcmp.eq.s32.totalorder %v3879, 1
      %vm3946 = vcmp.eq.s32.totalorder %v3882, 1
      %vm3947 = vcmp.eq.s32.totalorder %v3885, 1
      %vm3948 = vcmp.eq.s32.totalorder %v3888, 1
      %vm3949 = vcmp.eq.s32.totalorder %v3891, 1
      %vm3950 = vcmp.eq.s32.totalorder %v3894, 1
      %vm3951 = vcmp.eq.s32.totalorder %v3897, 1
      %vm3952 = vcmp.eq.s32.totalorder %v3900, 1
      %vm3953 = vcmp.eq.s32.totalorder %v3903, 1
      %vm3954 = vcmp.eq.s32.totalorder %v3906, 1
      %vm3955 = vcmp.eq.s32.totalorder %v3909, 1
      %vm3956 = vcmp.eq.s32.totalorder %v3912, 1
      %vm3957 = vcmp.eq.s32.totalorder %v3915, 1
      %vm3958 = vcmp.eq.s32.totalorder %v3918, 1
      %vm3959 = vcmp.eq.s32.totalorder %v3921, 1
      %vm3960 = vcmp.eq.s32.totalorder %v3924, 1
      %vm3961 = vcmp.eq.s32.totalorder %v3927, 1
      %vm3962 = vcmp.eq.s32.totalorder %v3930, 1
      %v3963 = vsel %vm3931, %v1049, 0.0
      %v3964 = vsel %vm3932, %v1050, 0.0
      %v3965 = vsel %vm3933, %v1051, 0.0
      %v3966 = vsel %vm3934, %v1052, 0.0
      %v3967 = vsel %vm3935, %v1053, 0.0
      %v3968 = vsel %vm3936, %v1054, 0.0
      %v3969 = vsel %vm3937, %v1055, 0.0
      %v3970 = vsel %vm3938, %v1056, 0.0
      %v3971 = vsel %vm3939, %v1057, 0.0
      %v3972 = vsel %vm3940, %v1058, 0.0
      %v3973 = vsel %vm3941, %v1059, 0.0
      %v3974 = vsel %vm3942, %v1060, 0.0
      %v3975 = vsel %vm3943, %v1061, 0.0
      %v3976 = vsel %vm3944, %v1062, 0.0
      %v3977 = vsel %vm3945, %v1063, 0.0
      %v3978 = vsel %vm3946, %v1064, 0.0
      %v3979 = vsel %vm3947, %v1065, 0.0
      %v3980 = vsel %vm3948, %v1066, 0.0
      %v3981 = vsel %vm3949, %v1067, 0.0
      %v3982 = vsel %vm3950, %v1068, 0.0
      %v3983 = vsel %vm3951, %v1069, 0.0
      %v3984 = vsel %vm3952, %v1070, 0.0
      %v3985 = vsel %vm3953, %v1071, 0.0
      %v3986 = vsel %vm3954, %v1072, 0.0
      %v3987 = vsel %vm3955, %v1073, 0.0
      %v3988 = vsel %vm3956, %v1074, 0.0
      %v3989 = vsel %vm3957, %v1075, 0.0
      %v3990 = vsel %vm3958, %v1076, 0.0
      %v3991 = vsel %vm3959, %v1077, 0.0
      %v3992 = vsel %vm3960, %v1078, 0.0
      %v3993 = vsel %vm3961, %v1079, 0.0
      %v3994 = vsel %vm3962, %v1080, 0.0
      %v3995 = vsel %vm1081, %v3963, -inf
      %v3996 = vsel %vm1081, %v3964, -inf
      %v3997 = vsel %vm1081, %v3965, -inf
      %v3998 = vsel %vm1081, %v3966, -inf
      %v3999 = vsel %vm1081, %v3967, -inf
      %v4000 = vmax.f32 %v3995, %v3999
      %v4001 = vsel %vm1081, %v3968, -inf
      %v4002 = vmax.f32 %v3996, %v4001
      %v4003 = vsel %vm1081, %v3969, -inf
      %v4004 = vmax.f32 %v3997, %v4003
      %v4005 = vsel %vm1081, %v3970, -inf
      %v4006 = vmax.f32 %v3998, %v4005
      %v4007 = vsel %vm1081, %v3971, -inf
      %v4008 = vmax.f32 %v4000, %v4007
      %v4009 = vsel %vm1081, %v3972, -inf
      %v4010 = vmax.f32 %v4002, %v4009
      %v4011 = vsel %vm1081, %v3973, -inf
      %v4012 = vmax.f32 %v4004, %v4011
      %v4013 = vsel %vm1081, %v3974, -inf
      %v4014 = vmax.f32 %v4006, %v4013
      %v4015 = vsel %vm1081, %v3975, -inf
      %v4016 = vmax.f32 %v4008, %v4015
      %v4017 = vsel %vm1081, %v3976, -inf
      %v4018 = vmax.f32 %v4010, %v4017
      %v4019 = vsel %vm1081, %v3977, -inf
      %v4020 = vmax.f32 %v4012, %v4019
      %v4021 = vsel %vm1081, %v3978, -inf
      %v4022 = vmax.f32 %v4014, %v4021
      %v4023 = vsel %vm1081, %v3979, -inf
      %v4024 = vmax.f32 %v4016, %v4023
      %v4025 = vsel %vm1081, %v3980, -inf
      %v4026 = vmax.f32 %v4018, %v4025
      %v4027 = vsel %vm1081, %v3981, -inf
      %v4028 = vmax.f32 %v4020, %v4027
      %v4029 = vsel %vm1081, %v3982, -inf
      %v4030 = vmax.f32 %v4022, %v4029
      %v4031 = vsel %vm1081, %v3983, -inf
      %v4032 = vmax.f32 %v4024, %v4031
      %v4033 = vsel %vm1081, %v3984, -inf
      %v4034 = vmax.f32 %v4026, %v4033
      %v4035 = vsel %vm1081, %v3985, -inf
      %v4036 = vmax.f32 %v4028, %v4035
      %v4037 = vsel %vm1081, %v3986, -inf
      %v4038 = vmax.f32 %v4030, %v4037
      %v4039 = vsel %vm1081, %v3987, -inf
      %v4040 = vmax.f32 %v4032, %v4039
      %v4041 = vsel %vm1081, %v3988, -inf
      %v4042 = vmax.f32 %v4034, %v4041
      %v4043 = vsel %vm1081, %v3989, -inf
      %v4044 = vmax.f32 %v4036, %v4043
      %v4045 = vsel %vm1081, %v3990, -inf
      %v4046 = vmax.f32 %v4038, %v4045
      %v4047 = vsel %vm1081, %v3991, -inf
      %v4048 = vmax.f32 %v4040, %v4047
      %v4049 = vsel %vm1081, %v3992, -inf
      %v4050 = vmax.f32 %v4042, %v4049
      %v4051 = vsel %vm1081, %v3993, -inf
      %v4052 = vmax.f32 %v4044, %v4051
      %v4053 = vsel %vm1081, %v3994, -inf
      %v4054 = vmax.f32 %v4046, %v4053
      %v4055 = vmax.f32 %v4048, %v4050
      %v4056 = vmax.f32 %v4052, %v4054
      %v4057 = vmax.f32 %v4055, %v4056
      %v4058 = vrot.slane %v4057, 4
      %v4059 = vmax.f32 %v4057, %v4058
      %v4060 = vrot.slane %v4059, 2
      %v4061 = vmax.f32 %v4059, %v4060
      %v4062 = vrot.slane %v4061, 1
      %v4063 = vmax.f32 %v4061, %v4062
      %4064 = vset.pattern.permute.xlu0 12
      %4065 = vperm.xlu0 %4064, %v1284
      %v4066 = vpop.permute.xlu0 %4065
      %4067 = vset.pattern.permute.xlu0 12
      %4068 = vperm.xlu0 %4067, %v1285
      %v4069 = vpop.permute.xlu0 %4068
      %4070 = vset.pattern.permute.xlu0 12
      %4071 = vperm.xlu0 %4070, %v1286
      %v4072 = vpop.permute.xlu0 %4071
      %4073 = vset.pattern.permute.xlu0 12
      %4074 = vperm.xlu0 %4073, %v1287
      %v4075 = vpop.permute.xlu0 %4074
      %4076 = vset.pattern.permute.xlu0 12
      %4077 = vperm.xlu0 %4076, %v1288
      %v4078 = vpop.permute.xlu0 %4077
      %4079 = vset.pattern.permute.xlu0 12
      %4080 = vperm.xlu0 %4079, %v1289
      %v4081 = vpop.permute.xlu0 %4080
      %4082 = vset.pattern.permute.xlu0 12
      %4083 = vperm.xlu0 %4082, %v1290
      %v4084 = vpop.permute.xlu0 %4083
      %4085 = vset.pattern.permute.xlu0 12
      %4086 = vperm.xlu0 %4085, %v1291
      %v4087 = vpop.permute.xlu0 %4086
      %4088 = vset.pattern.permute.xlu0 12
      %4089 = vperm.xlu0 %4088, %v1292
      %v4090 = vpop.permute.xlu0 %4089
      %4091 = vset.pattern.permute.xlu0 12
      %4092 = vperm.xlu0 %4091, %v1293
      %v4093 = vpop.permute.xlu0 %4092
      %4094 = vset.pattern.permute.xlu0 12
      %4095 = vperm.xlu0 %4094, %v1294
      %v4096 = vpop.permute.xlu0 %4095
      %4097 = vset.pattern.permute.xlu0 12
      %4098 = vperm.xlu0 %4097, %v1295
      %v4099 = vpop.permute.xlu0 %4098
      %4100 = vset.pattern.permute.xlu0 12
      %4101 = vperm.xlu0 %4100, %v1296
      %v4102 = vpop.permute.xlu0 %4101
      %4103 = vset.pattern.permute.xlu0 12
      %4104 = vperm.xlu0 %4103, %v1297
      %v4105 = vpop.permute.xlu0 %4104
      %4106 = vset.pattern.permute.xlu0 12
      %4107 = vperm.xlu0 %4106, %v1298
      %v4108 = vpop.permute.xlu0 %4107
      %4109 = vset.pattern.permute.xlu0 12
      %4110 = vperm.xlu0 %4109, %v1299
      %v4111 = vpop.permute.xlu0 %4110
      %4112 = vset.pattern.permute.xlu0 12
      %4113 = vperm.xlu0 %4112, %v1300
      %v4114 = vpop.permute.xlu0 %4113
      %4115 = vset.pattern.permute.xlu0 12
      %4116 = vperm.xlu0 %4115, %v1301
      %v4117 = vpop.permute.xlu0 %4116
      %4118 = vset.pattern.permute.xlu0 12
      %4119 = vperm.xlu0 %4118, %v1302
      %v4120 = vpop.permute.xlu0 %4119
      %4121 = vset.pattern.permute.xlu0 12
      %4122 = vperm.xlu0 %4121, %v1303
      %v4123 = vpop.permute.xlu0 %4122
      %4124 = vset.pattern.permute.xlu0 12
      %4125 = vperm.xlu0 %4124, %v1304
      %v4126 = vpop.permute.xlu0 %4125
      %4127 = vset.pattern.permute.xlu0 12
      %4128 = vperm.xlu0 %4127, %v1305
      %v4129 = vpop.permute.xlu0 %4128
      %4130 = vset.pattern.permute.xlu0 12
      %4131 = vperm.xlu0 %4130, %v1306
      %v4132 = vpop.permute.xlu0 %4131
      %4133 = vset.pattern.permute.xlu0 12
      %4134 = vperm.xlu0 %4133, %v1307
      %v4135 = vpop.permute.xlu0 %4134
      %4136 = vset.pattern.permute.xlu0 12
      %4137 = vperm.xlu0 %4136, %v1308
      %v4138 = vpop.permute.xlu0 %4137
      %4139 = vset.pattern.permute.xlu0 12
      %4140 = vperm.xlu0 %4139, %v1309
      %v4141 = vpop.permute.xlu0 %4140
      %4142 = vset.pattern.permute.xlu0 12
      %4143 = vperm.xlu0 %4142, %v1310
      %v4144 = vpop.permute.xlu0 %4143
      %4145 = vset.pattern.permute.xlu0 12
      %4146 = vperm.xlu0 %4145, %v1311
      %v4147 = vpop.permute.xlu0 %4146
      %4148 = vset.pattern.permute.xlu0 12
      %4149 = vperm.xlu0 %4148, %v1312
      %v4150 = vpop.permute.xlu0 %4149
      %4151 = vset.pattern.permute.xlu0 12
      %4152 = vperm.xlu0 %4151, %v1313
      %v4153 = vpop.permute.xlu0 %4152
      %4154 = vset.pattern.permute.xlu0 12
      %4155 = vperm.xlu0 %4154, %v1314
      %v4156 = vpop.permute.xlu0 %4155
      %4157 = vset.pattern.permute.xlu0 12
      %4158 = vperm.xlu0 %4157, %v1315
      %v4159 = vpop.permute.xlu0 %4158
      %vm4160 = vcmp.eq.s32.totalorder %v4066, 1
      %vm4161 = vcmp.eq.s32.totalorder %v4069, 1
      %vm4162 = vcmp.eq.s32.totalorder %v4072, 1
      %vm4163 = vcmp.eq.s32.totalorder %v4075, 1
      %vm4164 = vcmp.eq.s32.totalorder %v4078, 1
      %vm4165 = vcmp.eq.s32.totalorder %v4081, 1
      %vm4166 = vcmp.eq.s32.totalorder %v4084, 1
      %vm4167 = vcmp.eq.s32.totalorder %v4087, 1
      %vm4168 = vcmp.eq.s32.totalorder %v4090, 1
      %vm4169 = vcmp.eq.s32.totalorder %v4093, 1
      %vm4170 = vcmp.eq.s32.totalorder %v4096, 1
      %vm4171 = vcmp.eq.s32.totalorder %v4099, 1
      %vm4172 = vcmp.eq.s32.totalorder %v4102, 1
      %vm4173 = vcmp.eq.s32.totalorder %v4105, 1
      %vm4174 = vcmp.eq.s32.totalorder %v4108, 1
      %vm4175 = vcmp.eq.s32.totalorder %v4111, 1
      %vm4176 = vcmp.eq.s32.totalorder %v4114, 1
      %vm4177 = vcmp.eq.s32.totalorder %v4117, 1
      %vm4178 = vcmp.eq.s32.totalorder %v4120, 1
      %vm4179 = vcmp.eq.s32.totalorder %v4123, 1
      %vm4180 = vcmp.eq.s32.totalorder %v4126, 1
      %vm4181 = vcmp.eq.s32.totalorder %v4129, 1
      %vm4182 = vcmp.eq.s32.totalorder %v4132, 1
      %vm4183 = vcmp.eq.s32.totalorder %v4135, 1
      %vm4184 = vcmp.eq.s32.totalorder %v4138, 1
      %vm4185 = vcmp.eq.s32.totalorder %v4141, 1
      %vm4186 = vcmp.eq.s32.totalorder %v4144, 1
      %vm4187 = vcmp.eq.s32.totalorder %v4147, 1
      %vm4188 = vcmp.eq.s32.totalorder %v4150, 1
      %vm4189 = vcmp.eq.s32.totalorder %v4153, 1
      %vm4190 = vcmp.eq.s32.totalorder %v4156, 1
      %vm4191 = vcmp.eq.s32.totalorder %v4159, 1
      %v4192 = vsel %vm4160, %v1049, 0.0
      %v4193 = vsel %vm4161, %v1050, 0.0
      %v4194 = vsel %vm4162, %v1051, 0.0
      %v4195 = vsel %vm4163, %v1052, 0.0
      %v4196 = vsel %vm4164, %v1053, 0.0
      %v4197 = vsel %vm4165, %v1054, 0.0
      %v4198 = vsel %vm4166, %v1055, 0.0
      %v4199 = vsel %vm4167, %v1056, 0.0
      %v4200 = vsel %vm4168, %v1057, 0.0
      %v4201 = vsel %vm4169, %v1058, 0.0
      %v4202 = vsel %vm4170, %v1059, 0.0
      %v4203 = vsel %vm4171, %v1060, 0.0
      %v4204 = vsel %vm4172, %v1061, 0.0
      %v4205 = vsel %vm4173, %v1062, 0.0
      %v4206 = vsel %vm4174, %v1063, 0.0
      %v4207 = vsel %vm4175, %v1064, 0.0
      %v4208 = vsel %vm4176, %v1065, 0.0
      %v4209 = vsel %vm4177, %v1066, 0.0
      %v4210 = vsel %vm4178, %v1067, 0.0
      %v4211 = vsel %vm4179, %v1068, 0.0
      %v4212 = vsel %vm4180, %v1069, 0.0
      %v4213 = vsel %vm4181, %v1070, 0.0
      %v4214 = vsel %vm4182, %v1071, 0.0
      %v4215 = vsel %vm4183, %v1072, 0.0
      %v4216 = vsel %vm4184, %v1073, 0.0
      %v4217 = vsel %vm4185, %v1074, 0.0
      %v4218 = vsel %vm4186, %v1075, 0.0
      %v4219 = vsel %vm4187, %v1076, 0.0
      %v4220 = vsel %vm4188, %v1077, 0.0
      %v4221 = vsel %vm4189, %v1078, 0.0
      %v4222 = vsel %vm4190, %v1079, 0.0
      %v4223 = vsel %vm4191, %v1080, 0.0
      %v4224 = vsel %vm1081, %v4192, -inf
      %v4225 = vsel %vm1081, %v4193, -inf
      %v4226 = vsel %vm1081, %v4194, -inf
      %v4227 = vsel %vm1081, %v4195, -inf
      %v4228 = vsel %vm1081, %v4196, -inf
      %v4229 = vmax.f32 %v4224, %v4228
      %v4230 = vsel %vm1081, %v4197, -inf
      %v4231 = vmax.f32 %v4225, %v4230
      %v4232 = vsel %vm1081, %v4198, -inf
      %v4233 = vmax.f32 %v4226, %v4232
      %v4234 = vsel %vm1081, %v4199, -inf
      %v4235 = vmax.f32 %v4227, %v4234
      %v4236 = vsel %vm1081, %v4200, -inf
      %v4237 = vmax.f32 %v4229, %v4236
      %v4238 = vsel %vm1081, %v4201, -inf
      %v4239 = vmax.f32 %v4231, %v4238
      %v4240 = vsel %vm1081, %v4202, -inf
      %v4241 = vmax.f32 %v4233, %v4240
      %v4242 = vsel %vm1081, %v4203, -inf
      %v4243 = vmax.f32 %v4235, %v4242
      %v4244 = vsel %vm1081, %v4204, -inf
      %v4245 = vmax.f32 %v4237, %v4244
      %v4246 = vsel %vm1081, %v4205, -inf
      %v4247 = vmax.f32 %v4239, %v4246
      %v4248 = vsel %vm1081, %v4206, -inf
      %v4249 = vmax.f32 %v4241, %v4248
      %v4250 = vsel %vm1081, %v4207, -inf
      %v4251 = vmax.f32 %v4243, %v4250
      %v4252 = vsel %vm1081, %v4208, -inf
      %v4253 = vmax.f32 %v4245, %v4252
      %v4254 = vsel %vm1081, %v4209, -inf
      %v4255 = vmax.f32 %v4247, %v4254
      %v4256 = vsel %vm1081, %v4210, -inf
      %v4257 = vmax.f32 %v4249, %v4256
      %v4258 = vsel %vm1081, %v4211, -inf
      %v4259 = vmax.f32 %v4251, %v4258
      %v4260 = vsel %vm1081, %v4212, -inf
      %v4261 = vmax.f32 %v4253, %v4260
      %v4262 = vsel %vm1081, %v4213, -inf
      %v4263 = vmax.f32 %v4255, %v4262
      %v4264 = vsel %vm1081, %v4214, -inf
      %v4265 = vmax.f32 %v4257, %v4264
      %v4266 = vsel %vm1081, %v4215, -inf
      %v4267 = vmax.f32 %v4259, %v4266
      %v4268 = vsel %vm1081, %v4216, -inf
      %v4269 = vmax.f32 %v4261, %v4268
      %v4270 = vsel %vm1081, %v4217, -inf
      %v4271 = vmax.f32 %v4263, %v4270
      %v4272 = vsel %vm1081, %v4218, -inf
      %v4273 = vmax.f32 %v4265, %v4272
      %v4274 = vsel %vm1081, %v4219, -inf
      %v4275 = vmax.f32 %v4267, %v4274
      %v4276 = vsel %vm1081, %v4220, -inf
      %v4277 = vmax.f32 %v4269, %v4276
      %v4278 = vsel %vm1081, %v4221, -inf
      %v4279 = vmax.f32 %v4271, %v4278
      %v4280 = vsel %vm1081, %v4222, -inf
      %v4281 = vmax.f32 %v4273, %v4280
      %v4282 = vsel %vm1081, %v4223, -inf
      %v4283 = vmax.f32 %v4275, %v4282
      %v4284 = vmax.f32 %v4277, %v4279
      %v4285 = vmax.f32 %v4281, %v4283
      %v4286 = vmax.f32 %v4284, %v4285
      %v4287 = vrot.slane %v4286, 4
      %v4288 = vmax.f32 %v4286, %v4287
      %v4289 = vrot.slane %v4288, 2
      %v4290 = vmax.f32 %v4288, %v4289
      %v4291 = vrot.slane %v4290, 1
      %v4292 = vmax.f32 %v4290, %v4291
      %4293 = vset.pattern.permute.xlu0 13
      %4294 = vperm.xlu0 %4293, %v1284
      %v4295 = vpop.permute.xlu0 %4294
      %4296 = vset.pattern.permute.xlu0 13
      %4297 = vperm.xlu0 %4296, %v1285
      %v4298 = vpop.permute.xlu0 %4297
      %4299 = vset.pattern.permute.xlu0 13
      %4300 = vperm.xlu0 %4299, %v1286
      %v4301 = vpop.permute.xlu0 %4300
      %4302 = vset.pattern.permute.xlu0 13
      %4303 = vperm.xlu0 %4302, %v1287
      %v4304 = vpop.permute.xlu0 %4303
      %4305 = vset.pattern.permute.xlu0 13
      %4306 = vperm.xlu0 %4305, %v1288
      %v4307 = vpop.permute.xlu0 %4306
      %4308 = vset.pattern.permute.xlu0 13
      %4309 = vperm.xlu0 %4308, %v1289
      %v4310 = vpop.permute.xlu0 %4309
      %4311 = vset.pattern.permute.xlu0 13
      %4312 = vperm.xlu0 %4311, %v1290
      %v4313 = vpop.permute.xlu0 %4312
      %4314 = vset.pattern.permute.xlu0 13
      %4315 = vperm.xlu0 %4314, %v1291
      %v4316 = vpop.permute.xlu0 %4315
      %4317 = vset.pattern.permute.xlu0 13
      %4318 = vperm.xlu0 %4317, %v1292
      %v4319 = vpop.permute.xlu0 %4318
      %4320 = vset.pattern.permute.xlu0 13
      %4321 = vperm.xlu0 %4320, %v1293
      %v4322 = vpop.permute.xlu0 %4321
      %4323 = vset.pattern.permute.xlu0 13
      %4324 = vperm.xlu0 %4323, %v1294
      %v4325 = vpop.permute.xlu0 %4324
      %4326 = vset.pattern.permute.xlu0 13
      %4327 = vperm.xlu0 %4326, %v1295
      %v4328 = vpop.permute.xlu0 %4327
      %4329 = vset.pattern.permute.xlu0 13
      %4330 = vperm.xlu0 %4329, %v1296
      %v4331 = vpop.permute.xlu0 %4330
      %4332 = vset.pattern.permute.xlu0 13
      %4333 = vperm.xlu0 %4332, %v1297
      %v4334 = vpop.permute.xlu0 %4333
      %4335 = vset.pattern.permute.xlu0 13
      %4336 = vperm.xlu0 %4335, %v1298
      %v4337 = vpop.permute.xlu0 %4336
      %4338 = vset.pattern.permute.xlu0 13
      %4339 = vperm.xlu0 %4338, %v1299
      %v4340 = vpop.permute.xlu0 %4339
      %4341 = vset.pattern.permute.xlu0 13
      %4342 = vperm.xlu0 %4341, %v1300
      %v4343 = vpop.permute.xlu0 %4342
      %4344 = vset.pattern.permute.xlu0 13
      %4345 = vperm.xlu0 %4344, %v1301
      %v4346 = vpop.permute.xlu0 %4345
      %4347 = vset.pattern.permute.xlu0 13
      %4348 = vperm.xlu0 %4347, %v1302
      %v4349 = vpop.permute.xlu0 %4348
      %4350 = vset.pattern.permute.xlu0 13
      %4351 = vperm.xlu0 %4350, %v1303
      %v4352 = vpop.permute.xlu0 %4351
      %4353 = vset.pattern.permute.xlu0 13
      %4354 = vperm.xlu0 %4353, %v1304
      %v4355 = vpop.permute.xlu0 %4354
      %4356 = vset.pattern.permute.xlu0 13
      %4357 = vperm.xlu0 %4356, %v1305
      %v4358 = vpop.permute.xlu0 %4357
      %4359 = vset.pattern.permute.xlu0 13
      %4360 = vperm.xlu0 %4359, %v1306
      %v4361 = vpop.permute.xlu0 %4360
      %4362 = vset.pattern.permute.xlu0 13
      %4363 = vperm.xlu0 %4362, %v1307
      %v4364 = vpop.permute.xlu0 %4363
      %4365 = vset.pattern.permute.xlu0 13
      %4366 = vperm.xlu0 %4365, %v1308
      %v4367 = vpop.permute.xlu0 %4366
      %4368 = vset.pattern.permute.xlu0 13
      %4369 = vperm.xlu0 %4368, %v1309
      %v4370 = vpop.permute.xlu0 %4369
      %4371 = vset.pattern.permute.xlu0 13
      %4372 = vperm.xlu0 %4371, %v1310
      %v4373 = vpop.permute.xlu0 %4372
      %4374 = vset.pattern.permute.xlu0 13
      %4375 = vperm.xlu0 %4374, %v1311
      %v4376 = vpop.permute.xlu0 %4375
      %4377 = vset.pattern.permute.xlu0 13
      %4378 = vperm.xlu0 %4377, %v1312
      %v4379 = vpop.permute.xlu0 %4378
      %4380 = vset.pattern.permute.xlu0 13
      %4381 = vperm.xlu0 %4380, %v1313
      %v4382 = vpop.permute.xlu0 %4381
      %4383 = vset.pattern.permute.xlu0 13
      %4384 = vperm.xlu0 %4383, %v1314
      %v4385 = vpop.permute.xlu0 %4384
      %4386 = vset.pattern.permute.xlu0 13
      %4387 = vperm.xlu0 %4386, %v1315
      %v4388 = vpop.permute.xlu0 %4387
      %vm4389 = vcmp.eq.s32.totalorder %v4295, 1
      %vm4390 = vcmp.eq.s32.totalorder %v4298, 1
      %vm4391 = vcmp.eq.s32.totalorder %v4301, 1
      %vm4392 = vcmp.eq.s32.totalorder %v4304, 1
      %vm4393 = vcmp.eq.s32.totalorder %v4307, 1
      %vm4394 = vcmp.eq.s32.totalorder %v4310, 1
      %vm4395 = vcmp.eq.s32.totalorder %v4313, 1
      %vm4396 = vcmp.eq.s32.totalorder %v4316, 1
      %vm4397 = vcmp.eq.s32.totalorder %v4319, 1
      %vm4398 = vcmp.eq.s32.totalorder %v4322, 1
      %vm4399 = vcmp.eq.s32.totalorder %v4325, 1
      %vm4400 = vcmp.eq.s32.totalorder %v4328, 1
      %vm4401 = vcmp.eq.s32.totalorder %v4331, 1
      %vm4402 = vcmp.eq.s32.totalorder %v4334, 1
      %vm4403 = vcmp.eq.s32.totalorder %v4337, 1
      %vm4404 = vcmp.eq.s32.totalorder %v4340, 1
      %vm4405 = vcmp.eq.s32.totalorder %v4343, 1
      %vm4406 = vcmp.eq.s32.totalorder %v4346, 1
      %vm4407 = vcmp.eq.s32.totalorder %v4349, 1
      %vm4408 = vcmp.eq.s32.totalorder %v4352, 1
      %vm4409 = vcmp.eq.s32.totalorder %v4355, 1
      %vm4410 = vcmp.eq.s32.totalorder %v4358, 1
      %vm4411 = vcmp.eq.s32.totalorder %v4361, 1
      %vm4412 = vcmp.eq.s32.totalorder %v4364, 1
      %vm4413 = vcmp.eq.s32.totalorder %v4367, 1
      %vm4414 = vcmp.eq.s32.totalorder %v4370, 1
      %vm4415 = vcmp.eq.s32.totalorder %v4373, 1
      %vm4416 = vcmp.eq.s32.totalorder %v4376, 1
      %vm4417 = vcmp.eq.s32.totalorder %v4379, 1
      %vm4418 = vcmp.eq.s32.totalorder %v4382, 1
      %vm4419 = vcmp.eq.s32.totalorder %v4385, 1
      %vm4420 = vcmp.eq.s32.totalorder %v4388, 1
      %v4421 = vsel %vm4389, %v1049, 0.0
      %v4422 = vsel %vm4390, %v1050, 0.0
      %v4423 = vsel %vm4391, %v1051, 0.0
      %v4424 = vsel %vm4392, %v1052, 0.0
      %v4425 = vsel %vm4393, %v1053, 0.0
      %v4426 = vsel %vm4394, %v1054, 0.0
      %v4427 = vsel %vm4395, %v1055, 0.0
      %v4428 = vsel %vm4396, %v1056, 0.0
      %v4429 = vsel %vm4397, %v1057, 0.0
      %v4430 = vsel %vm4398, %v1058, 0.0
      %v4431 = vsel %vm4399, %v1059, 0.0
      %v4432 = vsel %vm4400, %v1060, 0.0
      %v4433 = vsel %vm4401, %v1061, 0.0
      %v4434 = vsel %vm4402, %v1062, 0.0
      %v4435 = vsel %vm4403, %v1063, 0.0
      %v4436 = vsel %vm4404, %v1064, 0.0
      %v4437 = vsel %vm4405, %v1065, 0.0
      %v4438 = vsel %vm4406, %v1066, 0.0
      %v4439 = vsel %vm4407, %v1067, 0.0
      %v4440 = vsel %vm4408, %v1068, 0.0
      %v4441 = vsel %vm4409, %v1069, 0.0
      %v4442 = vsel %vm4410, %v1070, 0.0
      %v4443 = vsel %vm4411, %v1071, 0.0
      %v4444 = vsel %vm4412, %v1072, 0.0
      %v4445 = vsel %vm4413, %v1073, 0.0
      %v4446 = vsel %vm4414, %v1074, 0.0
      %v4447 = vsel %vm4415, %v1075, 0.0
      %v4448 = vsel %vm4416, %v1076, 0.0
      %v4449 = vsel %vm4417, %v1077, 0.0
      %v4450 = vsel %vm4418, %v1078, 0.0
      %v4451 = vsel %vm4419, %v1079, 0.0
      %v4452 = vsel %vm4420, %v1080, 0.0
      %v4453 = vsel %vm1081, %v4421, -inf
      %v4454 = vsel %vm1081, %v4422, -inf
      %v4455 = vsel %vm1081, %v4423, -inf
      %v4456 = vsel %vm1081, %v4424, -inf
      %v4457 = vsel %vm1081, %v4425, -inf
      %v4458 = vmax.f32 %v4453, %v4457
      %v4459 = vsel %vm1081, %v4426, -inf
      %v4460 = vmax.f32 %v4454, %v4459
      %v4461 = vsel %vm1081, %v4427, -inf
      %v4462 = vmax.f32 %v4455, %v4461
      %v4463 = vsel %vm1081, %v4428, -inf
      %v4464 = vmax.f32 %v4456, %v4463
      %v4465 = vsel %vm1081, %v4429, -inf
      %v4466 = vmax.f32 %v4458, %v4465
      %v4467 = vsel %vm1081, %v4430, -inf
      %v4468 = vmax.f32 %v4460, %v4467
      %v4469 = vsel %vm1081, %v4431, -inf
      %v4470 = vmax.f32 %v4462, %v4469
      %v4471 = vsel %vm1081, %v4432, -inf
      %v4472 = vmax.f32 %v4464, %v4471
      %v4473 = vsel %vm1081, %v4433, -inf
      %v4474 = vmax.f32 %v4466, %v4473
      %v4475 = vsel %vm1081, %v4434, -inf
      %v4476 = vmax.f32 %v4468, %v4475
      %v4477 = vsel %vm1081, %v4435, -inf
      %v4478 = vmax.f32 %v4470, %v4477
      %v4479 = vsel %vm1081, %v4436, -inf
      %v4480 = vmax.f32 %v4472, %v4479
      %v4481 = vsel %vm1081, %v4437, -inf
      %v4482 = vmax.f32 %v4474, %v4481
      %v4483 = vsel %vm1081, %v4438, -inf
      %v4484 = vmax.f32 %v4476, %v4483
      %v4485 = vsel %vm1081, %v4439, -inf
      %v4486 = vmax.f32 %v4478, %v4485
      %v4487 = vsel %vm1081, %v4440, -inf
      %v4488 = vmax.f32 %v4480, %v4487
      %v4489 = vsel %vm1081, %v4441, -inf
      %v4490 = vmax.f32 %v4482, %v4489
      %v4491 = vsel %vm1081, %v4442, -inf
      %v4492 = vmax.f32 %v4484, %v4491
      %v4493 = vsel %vm1081, %v4443, -inf
      %v4494 = vmax.f32 %v4486, %v4493
      %v4495 = vsel %vm1081, %v4444, -inf
      %v4496 = vmax.f32 %v4488, %v4495
      %v4497 = vsel %vm1081, %v4445, -inf
      %v4498 = vmax.f32 %v4490, %v4497
      %v4499 = vsel %vm1081, %v4446, -inf
      %v4500 = vmax.f32 %v4492, %v4499
      %v4501 = vsel %vm1081, %v4447, -inf
      %v4502 = vmax.f32 %v4494, %v4501
      %v4503 = vsel %vm1081, %v4448, -inf
      %v4504 = vmax.f32 %v4496, %v4503
      %v4505 = vsel %vm1081, %v4449, -inf
      %v4506 = vmax.f32 %v4498, %v4505
      %v4507 = vsel %vm1081, %v4450, -inf
      %v4508 = vmax.f32 %v4500, %v4507
      %v4509 = vsel %vm1081, %v4451, -inf
      %v4510 = vmax.f32 %v4502, %v4509
      %v4511 = vsel %vm1081, %v4452, -inf
      %v4512 = vmax.f32 %v4504, %v4511
      %v4513 = vmax.f32 %v4506, %v4508
      %v4514 = vmax.f32 %v4510, %v4512
      %v4515 = vmax.f32 %v4513, %v4514
      %v4516 = vrot.slane %v4515, 4
      %v4517 = vmax.f32 %v4515, %v4516
      %v4518 = vrot.slane %v4517, 2
      %v4519 = vmax.f32 %v4517, %v4518
      %v4520 = vrot.slane %v4519, 1
      %v4521 = vmax.f32 %v4519, %v4520
      %4522 = vset.pattern.permute.xlu0 14
      %4523 = vperm.xlu0 %4522, %v1284
      %v4524 = vpop.permute.xlu0 %4523
      %4525 = vset.pattern.permute.xlu0 14
      %4526 = vperm.xlu0 %4525, %v1285
      %v4527 = vpop.permute.xlu0 %4526
      %4528 = vset.pattern.permute.xlu0 14
      %4529 = vperm.xlu0 %4528, %v1286
      %v4530 = vpop.permute.xlu0 %4529
      %4531 = vset.pattern.permute.xlu0 14
      %4532 = vperm.xlu0 %4531, %v1287
      %v4533 = vpop.permute.xlu0 %4532
      %4534 = vset.pattern.permute.xlu0 14
      %4535 = vperm.xlu0 %4534, %v1288
      %v4536 = vpop.permute.xlu0 %4535
      %4537 = vset.pattern.permute.xlu0 14
      %4538 = vperm.xlu0 %4537, %v1289
      %v4539 = vpop.permute.xlu0 %4538
      %4540 = vset.pattern.permute.xlu0 14
      %4541 = vperm.xlu0 %4540, %v1290
      %v4542 = vpop.permute.xlu0 %4541
      %4543 = vset.pattern.permute.xlu0 14
      %4544 = vperm.xlu0 %4543, %v1291
      %v4545 = vpop.permute.xlu0 %4544
      %4546 = vset.pattern.permute.xlu0 14
      %4547 = vperm.xlu0 %4546, %v1292
      %v4548 = vpop.permute.xlu0 %4547
      %4549 = vset.pattern.permute.xlu0 14
      %4550 = vperm.xlu0 %4549, %v1293
      %v4551 = vpop.permute.xlu0 %4550
      %4552 = vset.pattern.permute.xlu0 14
      %4553 = vperm.xlu0 %4552, %v1294
      %v4554 = vpop.permute.xlu0 %4553
      %4555 = vset.pattern.permute.xlu0 14
      %4556 = vperm.xlu0 %4555, %v1295
      %v4557 = vpop.permute.xlu0 %4556
      %4558 = vset.pattern.permute.xlu0 14
      %4559 = vperm.xlu0 %4558, %v1296
      %v4560 = vpop.permute.xlu0 %4559
      %4561 = vset.pattern.permute.xlu0 14
      %4562 = vperm.xlu0 %4561, %v1297
      %v4563 = vpop.permute.xlu0 %4562
      %4564 = vset.pattern.permute.xlu0 14
      %4565 = vperm.xlu0 %4564, %v1298
      %v4566 = vpop.permute.xlu0 %4565
      %4567 = vset.pattern.permute.xlu0 14
      %4568 = vperm.xlu0 %4567, %v1299
      %v4569 = vpop.permute.xlu0 %4568
      %4570 = vset.pattern.permute.xlu0 14
      %4571 = vperm.xlu0 %4570, %v1300
      %v4572 = vpop.permute.xlu0 %4571
      %4573 = vset.pattern.permute.xlu0 14
      %4574 = vperm.xlu0 %4573, %v1301
      %v4575 = vpop.permute.xlu0 %4574
      %4576 = vset.pattern.permute.xlu0 14
      %4577 = vperm.xlu0 %4576, %v1302
      %v4578 = vpop.permute.xlu0 %4577
      %4579 = vset.pattern.permute.xlu0 14
      %4580 = vperm.xlu0 %4579, %v1303
      %v4581 = vpop.permute.xlu0 %4580
      %4582 = vset.pattern.permute.xlu0 14
      %4583 = vperm.xlu0 %4582, %v1304
      %v4584 = vpop.permute.xlu0 %4583
      %4585 = vset.pattern.permute.xlu0 14
      %4586 = vperm.xlu0 %4585, %v1305
      %v4587 = vpop.permute.xlu0 %4586
      %4588 = vset.pattern.permute.xlu0 14
      %4589 = vperm.xlu0 %4588, %v1306
      %v4590 = vpop.permute.xlu0 %4589
      %4591 = vset.pattern.permute.xlu0 14
      %4592 = vperm.xlu0 %4591, %v1307
      %v4593 = vpop.permute.xlu0 %4592
      %4594 = vset.pattern.permute.xlu0 14
      %4595 = vperm.xlu0 %4594, %v1308
      %v4596 = vpop.permute.xlu0 %4595
      %4597 = vset.pattern.permute.xlu0 14
      %4598 = vperm.xlu0 %4597, %v1309
      %v4599 = vpop.permute.xlu0 %4598
      %4600 = vset.pattern.permute.xlu0 14
      %4601 = vperm.xlu0 %4600, %v1310
      %v4602 = vpop.permute.xlu0 %4601
      %4603 = vset.pattern.permute.xlu0 14
      %4604 = vperm.xlu0 %4603, %v1311
      %v4605 = vpop.permute.xlu0 %4604
      %4606 = vset.pattern.permute.xlu0 14
      %4607 = vperm.xlu0 %4606, %v1312
      %v4608 = vpop.permute.xlu0 %4607
      %4609 = vset.pattern.permute.xlu0 14
      %4610 = vperm.xlu0 %4609, %v1313
      %v4611 = vpop.permute.xlu0 %4610
      %4612 = vset.pattern.permute.xlu0 14
      %4613 = vperm.xlu0 %4612, %v1314
      %v4614 = vpop.permute.xlu0 %4613
      %4615 = vset.pattern.permute.xlu0 14
      %4616 = vperm.xlu0 %4615, %v1315
      %v4617 = vpop.permute.xlu0 %4616
      %vm4618 = vcmp.eq.s32.totalorder %v4524, 1
      %vm4619 = vcmp.eq.s32.totalorder %v4527, 1
      %vm4620 = vcmp.eq.s32.totalorder %v4530, 1
      %vm4621 = vcmp.eq.s32.totalorder %v4533, 1
      %vm4622 = vcmp.eq.s32.totalorder %v4536, 1
      %vm4623 = vcmp.eq.s32.totalorder %v4539, 1
      %vm4624 = vcmp.eq.s32.totalorder %v4542, 1
      %vm4625 = vcmp.eq.s32.totalorder %v4545, 1
      %vm4626 = vcmp.eq.s32.totalorder %v4548, 1
      %vm4627 = vcmp.eq.s32.totalorder %v4551, 1
      %vm4628 = vcmp.eq.s32.totalorder %v4554, 1
      %vm4629 = vcmp.eq.s32.totalorder %v4557, 1
      %vm4630 = vcmp.eq.s32.totalorder %v4560, 1
      %vm4631 = vcmp.eq.s32.totalorder %v4563, 1
      %vm4632 = vcmp.eq.s32.totalorder %v4566, 1
      %vm4633 = vcmp.eq.s32.totalorder %v4569, 1
      %vm4634 = vcmp.eq.s32.totalorder %v4572, 1
      %vm4635 = vcmp.eq.s32.totalorder %v4575, 1
      %vm4636 = vcmp.eq.s32.totalorder %v4578, 1
      %vm4637 = vcmp.eq.s32.totalorder %v4581, 1
      %vm4638 = vcmp.eq.s32.totalorder %v4584, 1
      %vm4639 = vcmp.eq.s32.totalorder %v4587, 1
      %vm4640 = vcmp.eq.s32.totalorder %v4590, 1
      %vm4641 = vcmp.eq.s32.totalorder %v4593, 1
      %vm4642 = vcmp.eq.s32.totalorder %v4596, 1
      %vm4643 = vcmp.eq.s32.totalorder %v4599, 1
      %vm4644 = vcmp.eq.s32.totalorder %v4602, 1
      %vm4645 = vcmp.eq.s32.totalorder %v4605, 1
      %vm4646 = vcmp.eq.s32.totalorder %v4608, 1
      %vm4647 = vcmp.eq.s32.totalorder %v4611, 1
      %vm4648 = vcmp.eq.s32.totalorder %v4614, 1
      %vm4649 = vcmp.eq.s32.totalorder %v4617, 1
      %v4650 = vsel %vm4618, %v1049, 0.0
      %v4651 = vsel %vm4619, %v1050, 0.0
      %v4652 = vsel %vm4620, %v1051, 0.0
      %v4653 = vsel %vm4621, %v1052, 0.0
      %v4654 = vsel %vm4622, %v1053, 0.0
      %v4655 = vsel %vm4623, %v1054, 0.0
      %v4656 = vsel %vm4624, %v1055, 0.0
      %v4657 = vsel %vm4625, %v1056, 0.0
      %v4658 = vsel %vm4626, %v1057, 0.0
      %v4659 = vsel %vm4627, %v1058, 0.0
      %v4660 = vsel %vm4628, %v1059, 0.0
      %v4661 = vsel %vm4629, %v1060, 0.0
      %v4662 = vsel %vm4630, %v1061, 0.0
      %v4663 = vsel %vm4631, %v1062, 0.0
      %v4664 = vsel %vm4632, %v1063, 0.0
      %v4665 = vsel %vm4633, %v1064, 0.0
      %v4666 = vsel %vm4634, %v1065, 0.0
      %v4667 = vsel %vm4635, %v1066, 0.0
      %v4668 = vsel %vm4636, %v1067, 0.0
      %v4669 = vsel %vm4637, %v1068, 0.0
      %v4670 = vsel %vm4638, %v1069, 0.0
      %v4671 = vsel %vm4639, %v1070, 0.0
      %v4672 = vsel %vm4640, %v1071, 0.0
      %v4673 = vsel %vm4641, %v1072, 0.0
      %v4674 = vsel %vm4642, %v1073, 0.0
      %v4675 = vsel %vm4643, %v1074, 0.0
      %v4676 = vsel %vm4644, %v1075, 0.0
      %v4677 = vsel %vm4645, %v1076, 0.0
      %v4678 = vsel %vm4646, %v1077, 0.0
      %v4679 = vsel %vm4647, %v1078, 0.0
      %v4680 = vsel %vm4648, %v1079, 0.0
      %v4681 = vsel %vm4649, %v1080, 0.0
      %v4682 = vsel %vm1081, %v4650, -inf
      %v4683 = vsel %vm1081, %v4651, -inf
      %v4684 = vsel %vm1081, %v4652, -inf
      %v4685 = vsel %vm1081, %v4653, -inf
      %v4686 = vsel %vm1081, %v4654, -inf
      %v4687 = vmax.f32 %v4682, %v4686
      %v4688 = vsel %vm1081, %v4655, -inf
      %v4689 = vmax.f32 %v4683, %v4688
      %v4690 = vsel %vm1081, %v4656, -inf
      %v4691 = vmax.f32 %v4684, %v4690
      %v4692 = vsel %vm1081, %v4657, -inf
      %v4693 = vmax.f32 %v4685, %v4692
      %v4694 = vsel %vm1081, %v4658, -inf
      %v4695 = vmax.f32 %v4687, %v4694
      %v4696 = vsel %vm1081, %v4659, -inf
      %v4697 = vmax.f32 %v4689, %v4696
      %v4698 = vsel %vm1081, %v4660, -inf
      %v4699 = vmax.f32 %v4691, %v4698
      %v4700 = vsel %vm1081, %v4661, -inf
      %v4701 = vmax.f32 %v4693, %v4700
      %v4702 = vsel %vm1081, %v4662, -inf
      %v4703 = vmax.f32 %v4695, %v4702
      %v4704 = vsel %vm1081, %v4663, -inf
      %v4705 = vmax.f32 %v4697, %v4704
      %v4706 = vsel %vm1081, %v4664, -inf
      %v4707 = vmax.f32 %v4699, %v4706
      %v4708 = vsel %vm1081, %v4665, -inf
      %v4709 = vmax.f32 %v4701, %v4708
      %v4710 = vsel %vm1081, %v4666, -inf
      %v4711 = vmax.f32 %v4703, %v4710
      %v4712 = vsel %vm1081, %v4667, -inf
      %v4713 = vmax.f32 %v4705, %v4712
      %v4714 = vsel %vm1081, %v4668, -inf
      %v4715 = vmax.f32 %v4707, %v4714
      %v4716 = vsel %vm1081, %v4669, -inf
      %v4717 = vmax.f32 %v4709, %v4716
      %v4718 = vsel %vm1081, %v4670, -inf
      %v4719 = vmax.f32 %v4711, %v4718
      %v4720 = vsel %vm1081, %v4671, -inf
      %v4721 = vmax.f32 %v4713, %v4720
      %v4722 = vsel %vm1081, %v4672, -inf
      %v4723 = vmax.f32 %v4715, %v4722
      %v4724 = vsel %vm1081, %v4673, -inf
      %v4725 = vmax.f32 %v4717, %v4724
      %v4726 = vsel %vm1081, %v4674, -inf
      %v4727 = vmax.f32 %v4719, %v4726
      %v4728 = vsel %vm1081, %v4675, -inf
      %v4729 = vmax.f32 %v4721, %v4728
      %v4730 = vsel %vm1081, %v4676, -inf
      %v4731 = vmax.f32 %v4723, %v4730
      %v4732 = vsel %vm1081, %v4677, -inf
      %v4733 = vmax.f32 %v4725, %v4732
      %v4734 = vsel %vm1081, %v4678, -inf
      %v4735 = vmax.f32 %v4727, %v4734
      %v4736 = vsel %vm1081, %v4679, -inf
      %v4737 = vmax.f32 %v4729, %v4736
      %v4738 = vsel %vm1081, %v4680, -inf
      %v4739 = vmax.f32 %v4731, %v4738
      %v4740 = vsel %vm1081, %v4681, -inf
      %v4741 = vmax.f32 %v4733, %v4740
      %v4742 = vmax.f32 %v4735, %v4737
      %v4743 = vmax.f32 %v4739, %v4741
      %v4744 = vmax.f32 %v4742, %v4743
      %v4745 = vrot.slane %v4744, 4
      %v4746 = vmax.f32 %v4744, %v4745
      %v4747 = vrot.slane %v4746, 2
      %v4748 = vmax.f32 %v4746, %v4747
      %v4749 = vrot.slane %v4748, 1
      %v4750 = vmax.f32 %v4748, %v4749
      %4751 = vset.pattern.permute.xlu0 15
      %4752 = vperm.xlu0 %4751, %v1284
      %v4753 = vpop.permute.xlu0 %4752
      %4754 = vset.pattern.permute.xlu0 15
      %4755 = vperm.xlu0 %4754, %v1285
      %v4756 = vpop.permute.xlu0 %4755
      %4757 = vset.pattern.permute.xlu0 15
      %4758 = vperm.xlu0 %4757, %v1286
      %v4759 = vpop.permute.xlu0 %4758
      %4760 = vset.pattern.permute.xlu0 15
      %4761 = vperm.xlu0 %4760, %v1287
      %v4762 = vpop.permute.xlu0 %4761
      %4763 = vset.pattern.permute.xlu0 15
      %4764 = vperm.xlu0 %4763, %v1288
      %v4765 = vpop.permute.xlu0 %4764
      %4766 = vset.pattern.permute.xlu0 15
      %4767 = vperm.xlu0 %4766, %v1289
      %v4768 = vpop.permute.xlu0 %4767
      %4769 = vset.pattern.permute.xlu0 15
      %4770 = vperm.xlu0 %4769, %v1290
      %v4771 = vpop.permute.xlu0 %4770
      %4772 = vset.pattern.permute.xlu0 15
      %4773 = vperm.xlu0 %4772, %v1291
      %v4774 = vpop.permute.xlu0 %4773
      %4775 = vset.pattern.permute.xlu0 15
      %4776 = vperm.xlu0 %4775, %v1292
      %v4777 = vpop.permute.xlu0 %4776
      %4778 = vset.pattern.permute.xlu0 15
      %4779 = vperm.xlu0 %4778, %v1293
      %v4780 = vpop.permute.xlu0 %4779
      %4781 = vset.pattern.permute.xlu0 15
      %4782 = vperm.xlu0 %4781, %v1294
      %v4783 = vpop.permute.xlu0 %4782
      %4784 = vset.pattern.permute.xlu0 15
      %4785 = vperm.xlu0 %4784, %v1295
      %v4786 = vpop.permute.xlu0 %4785
      %4787 = vset.pattern.permute.xlu0 15
      %4788 = vperm.xlu0 %4787, %v1296
      %v4789 = vpop.permute.xlu0 %4788
      %4790 = vset.pattern.permute.xlu0 15
      %4791 = vperm.xlu0 %4790, %v1297
      %v4792 = vpop.permute.xlu0 %4791
      %4793 = vset.pattern.permute.xlu0 15
      %4794 = vperm.xlu0 %4793, %v1298
      %v4795 = vpop.permute.xlu0 %4794
      %4796 = vset.pattern.permute.xlu0 15
      %4797 = vperm.xlu0 %4796, %v1299
      %v4798 = vpop.permute.xlu0 %4797
      %4799 = vset.pattern.permute.xlu0 15
      %4800 = vperm.xlu0 %4799, %v1300
      %v4801 = vpop.permute.xlu0 %4800
      %4802 = vset.pattern.permute.xlu0 15
      %4803 = vperm.xlu0 %4802, %v1301
      %v4804 = vpop.permute.xlu0 %4803
      %4805 = vset.pattern.permute.xlu0 15
      %4806 = vperm.xlu0 %4805, %v1302
      %v4807 = vpop.permute.xlu0 %4806
      %4808 = vset.pattern.permute.xlu0 15
      %4809 = vperm.xlu0 %4808, %v1303
      %v4810 = vpop.permute.xlu0 %4809
      %4811 = vset.pattern.permute.xlu0 15
      %4812 = vperm.xlu0 %4811, %v1304
      %v4813 = vpop.permute.xlu0 %4812
      %4814 = vset.pattern.permute.xlu0 15
      %4815 = vperm.xlu0 %4814, %v1305
      %v4816 = vpop.permute.xlu0 %4815
      %4817 = vset.pattern.permute.xlu0 15
      %4818 = vperm.xlu0 %4817, %v1306
      %v4819 = vpop.permute.xlu0 %4818
      %4820 = vset.pattern.permute.xlu0 15
      %4821 = vperm.xlu0 %4820, %v1307
      %v4822 = vpop.permute.xlu0 %4821
      %4823 = vset.pattern.permute.xlu0 15
      %4824 = vperm.xlu0 %4823, %v1308
      %v4825 = vpop.permute.xlu0 %4824
      %4826 = vset.pattern.permute.xlu0 15
      %4827 = vperm.xlu0 %4826, %v1309
      %v4828 = vpop.permute.xlu0 %4827
      %4829 = vset.pattern.permute.xlu0 15
      %4830 = vperm.xlu0 %4829, %v1310
      %v4831 = vpop.permute.xlu0 %4830
      %4832 = vset.pattern.permute.xlu0 15
      %4833 = vperm.xlu0 %4832, %v1311
      %v4834 = vpop.permute.xlu0 %4833
      %4835 = vset.pattern.permute.xlu0 15
      %4836 = vperm.xlu0 %4835, %v1312
      %v4837 = vpop.permute.xlu0 %4836
      %4838 = vset.pattern.permute.xlu0 15
      %4839 = vperm.xlu0 %4838, %v1313
      %v4840 = vpop.permute.xlu0 %4839
      %4841 = vset.pattern.permute.xlu0 15
      %4842 = vperm.xlu0 %4841, %v1314
      %v4843 = vpop.permute.xlu0 %4842
      %4844 = vset.pattern.permute.xlu0 15
      %4845 = vperm.xlu0 %4844, %v1315
      %v4846 = vpop.permute.xlu0 %4845
      %vm4847 = vcmp.eq.s32.totalorder %v4753, 1
      %vm4848 = vcmp.eq.s32.totalorder %v4756, 1
      %vm4849 = vcmp.eq.s32.totalorder %v4759, 1
      %vm4850 = vcmp.eq.s32.totalorder %v4762, 1
      %vm4851 = vcmp.eq.s32.totalorder %v4765, 1
      %vm4852 = vcmp.eq.s32.totalorder %v4768, 1
      %vm4853 = vcmp.eq.s32.totalorder %v4771, 1
      %vm4854 = vcmp.eq.s32.totalorder %v4774, 1
      %vm4855 = vcmp.eq.s32.totalorder %v4777, 1
      %vm4856 = vcmp.eq.s32.totalorder %v4780, 1
      %vm4857 = vcmp.eq.s32.totalorder %v4783, 1
      %vm4858 = vcmp.eq.s32.totalorder %v4786, 1
      %vm4859 = vcmp.eq.s32.totalorder %v4789, 1
      %vm4860 = vcmp.eq.s32.totalorder %v4792, 1
      %vm4861 = vcmp.eq.s32.totalorder %v4795, 1
      %vm4862 = vcmp.eq.s32.totalorder %v4798, 1
      %vm4863 = vcmp.eq.s32.totalorder %v4801, 1
      %vm4864 = vcmp.eq.s32.totalorder %v4804, 1
      %vm4865 = vcmp.eq.s32.totalorder %v4807, 1
      %vm4866 = vcmp.eq.s32.totalorder %v4810, 1
      %vm4867 = vcmp.eq.s32.totalorder %v4813, 1
      %vm4868 = vcmp.eq.s32.totalorder %v4816, 1
      %vm4869 = vcmp.eq.s32.totalorder %v4819, 1
      %vm4870 = vcmp.eq.s32.totalorder %v4822, 1
      %vm4871 = vcmp.eq.s32.totalorder %v4825, 1
      %vm4872 = vcmp.eq.s32.totalorder %v4828, 1
      %vm4873 = vcmp.eq.s32.totalorder %v4831, 1
      %vm4874 = vcmp.eq.s32.totalorder %v4834, 1
      %vm4875 = vcmp.eq.s32.totalorder %v4837, 1
      %vm4876 = vcmp.eq.s32.totalorder %v4840, 1
      %vm4877 = vcmp.eq.s32.totalorder %v4843, 1
      %vm4878 = vcmp.eq.s32.totalorder %v4846, 1
      %v4879 = vsel %vm4847, %v1049, 0.0
      %v4880 = vsel %vm4848, %v1050, 0.0
      %v4881 = vsel %vm4849, %v1051, 0.0
      %v4882 = vsel %vm4850, %v1052, 0.0
      %v4883 = vsel %vm4851, %v1053, 0.0
      %v4884 = vsel %vm4852, %v1054, 0.0
      %v4885 = vsel %vm4853, %v1055, 0.0
      %v4886 = vsel %vm4854, %v1056, 0.0
      %v4887 = vsel %vm4855, %v1057, 0.0
      %v4888 = vsel %vm4856, %v1058, 0.0
      %v4889 = vsel %vm4857, %v1059, 0.0
      %v4890 = vsel %vm4858, %v1060, 0.0
      %v4891 = vsel %vm4859, %v1061, 0.0
      %v4892 = vsel %vm4860, %v1062, 0.0
      %v4893 = vsel %vm4861, %v1063, 0.0
      %v4894 = vsel %vm4862, %v1064, 0.0
      %v4895 = vsel %vm4863, %v1065, 0.0
      %v4896 = vsel %vm4864, %v1066, 0.0
      %v4897 = vsel %vm4865, %v1067, 0.0
      %v4898 = vsel %vm4866, %v1068, 0.0
      %v4899 = vsel %vm4867, %v1069, 0.0
      %v4900 = vsel %vm4868, %v1070, 0.0
      %v4901 = vsel %vm4869, %v1071, 0.0
      %v4902 = vsel %vm4870, %v1072, 0.0
      %v4903 = vsel %vm4871, %v1073, 0.0
      %v4904 = vsel %vm4872, %v1074, 0.0
      %v4905 = vsel %vm4873, %v1075, 0.0
      %v4906 = vsel %vm4874, %v1076, 0.0
      %v4907 = vsel %vm4875, %v1077, 0.0
      %v4908 = vsel %vm4876, %v1078, 0.0
      %v4909 = vsel %vm4877, %v1079, 0.0
      %v4910 = vsel %vm4878, %v1080, 0.0
      %v4911 = vsel %vm1081, %v4879, -inf
      %v4912 = vsel %vm1081, %v4880, -inf
      %v4913 = vsel %vm1081, %v4881, -inf
      %v4914 = vsel %vm1081, %v4882, -inf
      %v4915 = vsel %vm1081, %v4883, -inf
      %v4916 = vmax.f32 %v4911, %v4915
      %v4917 = vsel %vm1081, %v4884, -inf
      %v4918 = vmax.f32 %v4912, %v4917
      %v4919 = vsel %vm1081, %v4885, -inf
      %v4920 = vmax.f32 %v4913, %v4919
      %v4921 = vsel %vm1081, %v4886, -inf
      %v4922 = vmax.f32 %v4914, %v4921
      %v4923 = vsel %vm1081, %v4887, -inf
      %v4924 = vmax.f32 %v4916, %v4923
      %v4925 = vsel %vm1081, %v4888, -inf
      %v4926 = vmax.f32 %v4918, %v4925
      %v4927 = vsel %vm1081, %v4889, -inf
      %v4928 = vmax.f32 %v4920, %v4927
      %v4929 = vsel %vm1081, %v4890, -inf
      %v4930 = vmax.f32 %v4922, %v4929
      %v4931 = vsel %vm1081, %v4891, -inf
      %v4932 = vmax.f32 %v4924, %v4931
      %v4933 = vsel %vm1081, %v4892, -inf
      %v4934 = vmax.f32 %v4926, %v4933
      %v4935 = vsel %vm1081, %v4893, -inf
      %v4936 = vmax.f32 %v4928, %v4935
      %v4937 = vsel %vm1081, %v4894, -inf
      %v4938 = vmax.f32 %v4930, %v4937
      %v4939 = vsel %vm1081, %v4895, -inf
      %v4940 = vmax.f32 %v4932, %v4939
      %v4941 = vsel %vm1081, %v4896, -inf
      %v4942 = vmax.f32 %v4934, %v4941
      %v4943 = vsel %vm1081, %v4897, -inf
      %v4944 = vmax.f32 %v4936, %v4943
      %v4945 = vsel %vm1081, %v4898, -inf
      %v4946 = vmax.f32 %v4938, %v4945
      %v4947 = vsel %vm1081, %v4899, -inf
      %v4948 = vmax.f32 %v4940, %v4947
      %v4949 = vsel %vm1081, %v4900, -inf
      %v4950 = vmax.f32 %v4942, %v4949
      %v4951 = vsel %vm1081, %v4901, -inf
      %v4952 = vmax.f32 %v4944, %v4951
      %v4953 = vsel %vm1081, %v4902, -inf
      %v4954 = vmax.f32 %v4946, %v4953
      %v4955 = vsel %vm1081, %v4903, -inf
      %v4956 = vmax.f32 %v4948, %v4955
      %v4957 = vsel %vm1081, %v4904, -inf
      %v4958 = vmax.f32 %v4950, %v4957
      %v4959 = vsel %vm1081, %v4905, -inf
      %v4960 = vmax.f32 %v4952, %v4959
      %v4961 = vsel %vm1081, %v4906, -inf
      %v4962 = vmax.f32 %v4954, %v4961
      %v4963 = vsel %vm1081, %v4907, -inf
      %v4964 = vmax.f32 %v4956, %v4963
      %v4965 = vsel %vm1081, %v4908, -inf
      %v4966 = vmax.f32 %v4958, %v4965
      %v4967 = vsel %vm1081, %v4909, -inf
      %v4968 = vmax.f32 %v4960, %v4967
      %v4969 = vsel %vm1081, %v4910, -inf
      %v4970 = vmax.f32 %v4962, %v4969
      %v4971 = vmax.f32 %v4964, %v4966
      %v4972 = vmax.f32 %v4968, %v4970
      %v4973 = vmax.f32 %v4971, %v4972
      %v4974 = vrot.slane %v4973, 4
      %v4975 = vmax.f32 %v4973, %v4974
      %v4976 = vrot.slane %v4975, 2
      %v4977 = vmax.f32 %v4975, %v4976
      %v4978 = vrot.slane %v4977, 1
      %v4979 = vmax.f32 %v4977, %v4978
      %4980 = vset.pattern.permute.xlu0 16
      %4981 = vperm.xlu0 %4980, %v1284
      %v4982 = vpop.permute.xlu0 %4981
      %4983 = vset.pattern.permute.xlu0 16
      %4984 = vperm.xlu0 %4983, %v1285
      %v4985 = vpop.permute.xlu0 %4984
      %4986 = vset.pattern.permute.xlu0 16
      %4987 = vperm.xlu0 %4986, %v1286
      %v4988 = vpop.permute.xlu0 %4987
      %4989 = vset.pattern.permute.xlu0 16
      %4990 = vperm.xlu0 %4989, %v1287
      %v4991 = vpop.permute.xlu0 %4990
      %4992 = vset.pattern.permute.xlu0 16
      %4993 = vperm.xlu0 %4992, %v1288
      %v4994 = vpop.permute.xlu0 %4993
      %4995 = vset.pattern.permute.xlu0 16
      %4996 = vperm.xlu0 %4995, %v1289
      %v4997 = vpop.permute.xlu0 %4996
      %4998 = vset.pattern.permute.xlu0 16
      %4999 = vperm.xlu0 %4998, %v1290
      %v5000 = vpop.permute.xlu0 %4999
      %5001 = vset.pattern.permute.xlu0 16
      %5002 = vperm.xlu0 %5001, %v1291
      %v5003 = vpop.permute.xlu0 %5002
      %5004 = vset.pattern.permute.xlu0 16
      %5005 = vperm.xlu0 %5004, %v1292
      %v5006 = vpop.permute.xlu0 %5005
      %5007 = vset.pattern.permute.xlu0 16
      %5008 = vperm.xlu0 %5007, %v1293
      %v5009 = vpop.permute.xlu0 %5008
      %5010 = vset.pattern.permute.xlu0 16
      %5011 = vperm.xlu0 %5010, %v1294
      %v5012 = vpop.permute.xlu0 %5011
      %5013 = vset.pattern.permute.xlu0 16
      %5014 = vperm.xlu0 %5013, %v1295
      %v5015 = vpop.permute.xlu0 %5014
      %5016 = vset.pattern.permute.xlu0 16
      %5017 = vperm.xlu0 %5016, %v1296
      %v5018 = vpop.permute.xlu0 %5017
      %5019 = vset.pattern.permute.xlu0 16
      %5020 = vperm.xlu0 %5019, %v1297
      %v5021 = vpop.permute.xlu0 %5020
      %5022 = vset.pattern.permute.xlu0 16
      %5023 = vperm.xlu0 %5022, %v1298
      %v5024 = vpop.permute.xlu0 %5023
      %5025 = vset.pattern.permute.xlu0 16
      %5026 = vperm.xlu0 %5025, %v1299
      %v5027 = vpop.permute.xlu0 %5026
      %5028 = vset.pattern.permute.xlu0 16
      %5029 = vperm.xlu0 %5028, %v1300
      %v5030 = vpop.permute.xlu0 %5029
      %5031 = vset.pattern.permute.xlu0 16
      %5032 = vperm.xlu0 %5031, %v1301
      %v5033 = vpop.permute.xlu0 %5032
      %5034 = vset.pattern.permute.xlu0 16
      %5035 = vperm.xlu0 %5034, %v1302
      %v5036 = vpop.permute.xlu0 %5035
      %5037 = vset.pattern.permute.xlu0 16
      %5038 = vperm.xlu0 %5037, %v1303
      %v5039 = vpop.permute.xlu0 %5038
      %5040 = vset.pattern.permute.xlu0 16
      %5041 = vperm.xlu0 %5040, %v1304
      %v5042 = vpop.permute.xlu0 %5041
      %5043 = vset.pattern.permute.xlu0 16
      %5044 = vperm.xlu0 %5043, %v1305
      %v5045 = vpop.permute.xlu0 %5044
      %5046 = vset.pattern.permute.xlu0 16
      %5047 = vperm.xlu0 %5046, %v1306
      %v5048 = vpop.permute.xlu0 %5047
      %5049 = vset.pattern.permute.xlu0 16
      %5050 = vperm.xlu0 %5049, %v1307
      %v5051 = vpop.permute.xlu0 %5050
      %5052 = vset.pattern.permute.xlu0 16
      %5053 = vperm.xlu0 %5052, %v1308
      %v5054 = vpop.permute.xlu0 %5053
      %5055 = vset.pattern.permute.xlu0 16
      %5056 = vperm.xlu0 %5055, %v1309
      %v5057 = vpop.permute.xlu0 %5056
      %5058 = vset.pattern.permute.xlu0 16
      %5059 = vperm.xlu0 %5058, %v1310
      %v5060 = vpop.permute.xlu0 %5059
      %5061 = vset.pattern.permute.xlu0 16
      %5062 = vperm.xlu0 %5061, %v1311
      %v5063 = vpop.permute.xlu0 %5062
      %5064 = vset.pattern.permute.xlu0 16
      %5065 = vperm.xlu0 %5064, %v1312
      %v5066 = vpop.permute.xlu0 %5065
      %5067 = vset.pattern.permute.xlu0 16
      %5068 = vperm.xlu0 %5067, %v1313
      %v5069 = vpop.permute.xlu0 %5068
      %5070 = vset.pattern.permute.xlu0 16
      %5071 = vperm.xlu0 %5070, %v1314
      %v5072 = vpop.permute.xlu0 %5071
      %5073 = vset.pattern.permute.xlu0 16
      %5074 = vperm.xlu0 %5073, %v1315
      %v5075 = vpop.permute.xlu0 %5074
      %vm5076 = vcmp.eq.s32.totalorder %v4982, 1
      %vm5077 = vcmp.eq.s32.totalorder %v4985, 1
      %vm5078 = vcmp.eq.s32.totalorder %v4988, 1
      %vm5079 = vcmp.eq.s32.totalorder %v4991, 1
      %vm5080 = vcmp.eq.s32.totalorder %v4994, 1
      %vm5081 = vcmp.eq.s32.totalorder %v4997, 1
      %vm5082 = vcmp.eq.s32.totalorder %v5000, 1
      %vm5083 = vcmp.eq.s32.totalorder %v5003, 1
      %vm5084 = vcmp.eq.s32.totalorder %v5006, 1
      %vm5085 = vcmp.eq.s32.totalorder %v5009, 1
      %vm5086 = vcmp.eq.s32.totalorder %v5012, 1
      %vm5087 = vcmp.eq.s32.totalorder %v5015, 1
      %vm5088 = vcmp.eq.s32.totalorder %v5018, 1
      %vm5089 = vcmp.eq.s32.totalorder %v5021, 1
      %vm5090 = vcmp.eq.s32.totalorder %v5024, 1
      %vm5091 = vcmp.eq.s32.totalorder %v5027, 1
      %vm5092 = vcmp.eq.s32.totalorder %v5030, 1
      %vm5093 = vcmp.eq.s32.totalorder %v5033, 1
      %vm5094 = vcmp.eq.s32.totalorder %v5036, 1
      %vm5095 = vcmp.eq.s32.totalorder %v5039, 1
      %vm5096 = vcmp.eq.s32.totalorder %v5042, 1
      %vm5097 = vcmp.eq.s32.totalorder %v5045, 1
      %vm5098 = vcmp.eq.s32.totalorder %v5048, 1
      %vm5099 = vcmp.eq.s32.totalorder %v5051, 1
      %vm5100 = vcmp.eq.s32.totalorder %v5054, 1
      %vm5101 = vcmp.eq.s32.totalorder %v5057, 1
      %vm5102 = vcmp.eq.s32.totalorder %v5060, 1
      %vm5103 = vcmp.eq.s32.totalorder %v5063, 1
      %vm5104 = vcmp.eq.s32.totalorder %v5066, 1
      %vm5105 = vcmp.eq.s32.totalorder %v5069, 1
      %vm5106 = vcmp.eq.s32.totalorder %v5072, 1
      %vm5107 = vcmp.eq.s32.totalorder %v5075, 1
      %v5108 = vsel %vm5076, %v1049, 0.0
      %v5109 = vsel %vm5077, %v1050, 0.0
      %v5110 = vsel %vm5078, %v1051, 0.0
      %v5111 = vsel %vm5079, %v1052, 0.0
      %v5112 = vsel %vm5080, %v1053, 0.0
      %v5113 = vsel %vm5081, %v1054, 0.0
      %v5114 = vsel %vm5082, %v1055, 0.0
      %v5115 = vsel %vm5083, %v1056, 0.0
      %v5116 = vsel %vm5084, %v1057, 0.0
      %v5117 = vsel %vm5085, %v1058, 0.0
      %v5118 = vsel %vm5086, %v1059, 0.0
      %v5119 = vsel %vm5087, %v1060, 0.0
      %v5120 = vsel %vm5088, %v1061, 0.0
      %v5121 = vsel %vm5089, %v1062, 0.0
      %v5122 = vsel %vm5090, %v1063, 0.0
      %v5123 = vsel %vm5091, %v1064, 0.0
      %v5124 = vsel %vm5092, %v1065, 0.0
      %v5125 = vsel %vm5093, %v1066, 0.0
      %v5126 = vsel %vm5094, %v1067, 0.0
      %v5127 = vsel %vm5095, %v1068, 0.0
      %v5128 = vsel %vm5096, %v1069, 0.0
      %v5129 = vsel %vm5097, %v1070, 0.0
      %v5130 = vsel %vm5098, %v1071, 0.0
      %v5131 = vsel %vm5099, %v1072, 0.0
      %v5132 = vsel %vm5100, %v1073, 0.0
      %v5133 = vsel %vm5101, %v1074, 0.0
      %v5134 = vsel %vm5102, %v1075, 0.0
      %v5135 = vsel %vm5103, %v1076, 0.0
      %v5136 = vsel %vm5104, %v1077, 0.0
      %v5137 = vsel %vm5105, %v1078, 0.0
      %v5138 = vsel %vm5106, %v1079, 0.0
      %v5139 = vsel %vm5107, %v1080, 0.0
      %v5140 = vsel %vm1081, %v5108, -inf
      %v5141 = vsel %vm1081, %v5109, -inf
      %v5142 = vsel %vm1081, %v5110, -inf
      %v5143 = vsel %vm1081, %v5111, -inf
      %v5144 = vsel %vm1081, %v5112, -inf
      %v5145 = vmax.f32 %v5140, %v5144
      %v5146 = vsel %vm1081, %v5113, -inf
      %v5147 = vmax.f32 %v5141, %v5146
      %v5148 = vsel %vm1081, %v5114, -inf
      %v5149 = vmax.f32 %v5142, %v5148
      %v5150 = vsel %vm1081, %v5115, -inf
      %v5151 = vmax.f32 %v5143, %v5150
      %v5152 = vsel %vm1081, %v5116, -inf
      %v5153 = vmax.f32 %v5145, %v5152
      %v5154 = vsel %vm1081, %v5117, -inf
      %v5155 = vmax.f32 %v5147, %v5154
      %v5156 = vsel %vm1081, %v5118, -inf
      %v5157 = vmax.f32 %v5149, %v5156
      %v5158 = vsel %vm1081, %v5119, -inf
      %v5159 = vmax.f32 %v5151, %v5158
      %v5160 = vsel %vm1081, %v5120, -inf
      %v5161 = vmax.f32 %v5153, %v5160
      %v5162 = vsel %vm1081, %v5121, -inf
      %v5163 = vmax.f32 %v5155, %v5162
      %v5164 = vsel %vm1081, %v5122, -inf
      %v5165 = vmax.f32 %v5157, %v5164
      %v5166 = vsel %vm1081, %v5123, -inf
      %v5167 = vmax.f32 %v5159, %v5166
      %v5168 = vsel %vm1081, %v5124, -inf
      %v5169 = vmax.f32 %v5161, %v5168
      %v5170 = vsel %vm1081, %v5125, -inf
      %v5171 = vmax.f32 %v5163, %v5170
      %v5172 = vsel %vm1081, %v5126, -inf
      %v5173 = vmax.f32 %v5165, %v5172
      %v5174 = vsel %vm1081, %v5127, -inf
      %v5175 = vmax.f32 %v5167, %v5174
      %v5176 = vsel %vm1081, %v5128, -inf
      %v5177 = vmax.f32 %v5169, %v5176
      %v5178 = vsel %vm1081, %v5129, -inf
      %v5179 = vmax.f32 %v5171, %v5178
      %v5180 = vsel %vm1081, %v5130, -inf
      %v5181 = vmax.f32 %v5173, %v5180
      %v5182 = vsel %vm1081, %v5131, -inf
      %v5183 = vmax.f32 %v5175, %v5182
      %v5184 = vsel %vm1081, %v5132, -inf
      %v5185 = vmax.f32 %v5177, %v5184
      %v5186 = vsel %vm1081, %v5133, -inf
      %v5187 = vmax.f32 %v5179, %v5186
      %v5188 = vsel %vm1081, %v5134, -inf
      %v5189 = vmax.f32 %v5181, %v5188
      %v5190 = vsel %vm1081, %v5135, -inf
      %v5191 = vmax.f32 %v5183, %v5190
      %v5192 = vsel %vm1081, %v5136, -inf
      %v5193 = vmax.f32 %v5185, %v5192
      %v5194 = vsel %vm1081, %v5137, -inf
      %v5195 = vmax.f32 %v5187, %v5194
      %v5196 = vsel %vm1081, %v5138, -inf
      %v5197 = vmax.f32 %v5189, %v5196
      %v5198 = vsel %vm1081, %v5139, -inf
      %v5199 = vmax.f32 %v5191, %v5198
      %v5200 = vmax.f32 %v5193, %v5195
      %v5201 = vmax.f32 %v5197, %v5199
      %v5202 = vmax.f32 %v5200, %v5201
      %v5203 = vrot.slane %v5202, 4
      %v5204 = vmax.f32 %v5202, %v5203
      %v5205 = vrot.slane %v5204, 2
      %v5206 = vmax.f32 %v5204, %v5205
      %v5207 = vrot.slane %v5206, 1
      %v5208 = vmax.f32 %v5206, %v5207
      %5209 = vset.pattern.permute.xlu0 17
      %5210 = vperm.xlu0 %5209, %v1284
      %v5211 = vpop.permute.xlu0 %5210
      %5212 = vset.pattern.permute.xlu0 17
      %5213 = vperm.xlu0 %5212, %v1285
      %v5214 = vpop.permute.xlu0 %5213
      %5215 = vset.pattern.permute.xlu0 17
      %5216 = vperm.xlu0 %5215, %v1286
      %v5217 = vpop.permute.xlu0 %5216
      %5218 = vset.pattern.permute.xlu0 17
      %5219 = vperm.xlu0 %5218, %v1287
      %v5220 = vpop.permute.xlu0 %5219
      %5221 = vset.pattern.permute.xlu0 17
      %5222 = vperm.xlu0 %5221, %v1288
      %v5223 = vpop.permute.xlu0 %5222
      %5224 = vset.pattern.permute.xlu0 17
      %5225 = vperm.xlu0 %5224, %v1289
      %v5226 = vpop.permute.xlu0 %5225
      %5227 = vset.pattern.permute.xlu0 17
      %5228 = vperm.xlu0 %5227, %v1290
      %v5229 = vpop.permute.xlu0 %5228
      %5230 = vset.pattern.permute.xlu0 17
      %5231 = vperm.xlu0 %5230, %v1291
      %v5232 = vpop.permute.xlu0 %5231
      %5233 = vset.pattern.permute.xlu0 17
      %5234 = vperm.xlu0 %5233, %v1292
      %v5235 = vpop.permute.xlu0 %5234
      %5236 = vset.pattern.permute.xlu0 17
      %5237 = vperm.xlu0 %5236, %v1293
      %v5238 = vpop.permute.xlu0 %5237
      %5239 = vset.pattern.permute.xlu0 17
      %5240 = vperm.xlu0 %5239, %v1294
      %v5241 = vpop.permute.xlu0 %5240
      %5242 = vset.pattern.permute.xlu0 17
      %5243 = vperm.xlu0 %5242, %v1295
      %v5244 = vpop.permute.xlu0 %5243
      %5245 = vset.pattern.permute.xlu0 17
      %5246 = vperm.xlu0 %5245, %v1296
      %v5247 = vpop.permute.xlu0 %5246
      %5248 = vset.pattern.permute.xlu0 17
      %5249 = vperm.xlu0 %5248, %v1297
      %v5250 = vpop.permute.xlu0 %5249
      %5251 = vset.pattern.permute.xlu0 17
      %5252 = vperm.xlu0 %5251, %v1298
      %v5253 = vpop.permute.xlu0 %5252
      %5254 = vset.pattern.permute.xlu0 17
      %5255 = vperm.xlu0 %5254, %v1299
      %v5256 = vpop.permute.xlu0 %5255
      %5257 = vset.pattern.permute.xlu0 17
      %5258 = vperm.xlu0 %5257, %v1300
      %v5259 = vpop.permute.xlu0 %5258
      %5260 = vset.pattern.permute.xlu0 17
      %5261 = vperm.xlu0 %5260, %v1301
      %v5262 = vpop.permute.xlu0 %5261
      %5263 = vset.pattern.permute.xlu0 17
      %5264 = vperm.xlu0 %5263, %v1302
      %v5265 = vpop.permute.xlu0 %5264
      %5266 = vset.pattern.permute.xlu0 17
      %5267 = vperm.xlu0 %5266, %v1303
      %v5268 = vpop.permute.xlu0 %5267
      %5269 = vset.pattern.permute.xlu0 17
      %5270 = vperm.xlu0 %5269, %v1304
      %v5271 = vpop.permute.xlu0 %5270
      %5272 = vset.pattern.permute.xlu0 17
      %5273 = vperm.xlu0 %5272, %v1305
      %v5274 = vpop.permute.xlu0 %5273
      %5275 = vset.pattern.permute.xlu0 17
      %5276 = vperm.xlu0 %5275, %v1306
      %v5277 = vpop.permute.xlu0 %5276
      %5278 = vset.pattern.permute.xlu0 17
      %5279 = vperm.xlu0 %5278, %v1307
      %v5280 = vpop.permute.xlu0 %5279
      %5281 = vset.pattern.permute.xlu0 17
      %5282 = vperm.xlu0 %5281, %v1308
      %v5283 = vpop.permute.xlu0 %5282
      %5284 = vset.pattern.permute.xlu0 17
      %5285 = vperm.xlu0 %5284, %v1309
      %v5286 = vpop.permute.xlu0 %5285
      %5287 = vset.pattern.permute.xlu0 17
      %5288 = vperm.xlu0 %5287, %v1310
      %v5289 = vpop.permute.xlu0 %5288
      %5290 = vset.pattern.permute.xlu0 17
      %5291 = vperm.xlu0 %5290, %v1311
      %v5292 = vpop.permute.xlu0 %5291
      %5293 = vset.pattern.permute.xlu0 17
      %5294 = vperm.xlu0 %5293, %v1312
      %v5295 = vpop.permute.xlu0 %5294
      %5296 = vset.pattern.permute.xlu0 17
      %5297 = vperm.xlu0 %5296, %v1313
      %v5298 = vpop.permute.xlu0 %5297
      %5299 = vset.pattern.permute.xlu0 17
      %5300 = vperm.xlu0 %5299, %v1314
      %v5301 = vpop.permute.xlu0 %5300
      %5302 = vset.pattern.permute.xlu0 17
      %5303 = vperm.xlu0 %5302, %v1315
      %v5304 = vpop.permute.xlu0 %5303
      %vm5305 = vcmp.eq.s32.totalorder %v5211, 1
      %vm5306 = vcmp.eq.s32.totalorder %v5214, 1
      %vm5307 = vcmp.eq.s32.totalorder %v5217, 1
      %vm5308 = vcmp.eq.s32.totalorder %v5220, 1
      %vm5309 = vcmp.eq.s32.totalorder %v5223, 1
      %vm5310 = vcmp.eq.s32.totalorder %v5226, 1
      %vm5311 = vcmp.eq.s32.totalorder %v5229, 1
      %vm5312 = vcmp.eq.s32.totalorder %v5232, 1
      %vm5313 = vcmp.eq.s32.totalorder %v5235, 1
      %vm5314 = vcmp.eq.s32.totalorder %v5238, 1
      %vm5315 = vcmp.eq.s32.totalorder %v5241, 1
      %vm5316 = vcmp.eq.s32.totalorder %v5244, 1
      %vm5317 = vcmp.eq.s32.totalorder %v5247, 1
      %vm5318 = vcmp.eq.s32.totalorder %v5250, 1
      %vm5319 = vcmp.eq.s32.totalorder %v5253, 1
      %vm5320 = vcmp.eq.s32.totalorder %v5256, 1
      %vm5321 = vcmp.eq.s32.totalorder %v5259, 1
      %vm5322 = vcmp.eq.s32.totalorder %v5262, 1
      %vm5323 = vcmp.eq.s32.totalorder %v5265, 1
      %vm5324 = vcmp.eq.s32.totalorder %v5268, 1
      %vm5325 = vcmp.eq.s32.totalorder %v5271, 1
      %vm5326 = vcmp.eq.s32.totalorder %v5274, 1
      %vm5327 = vcmp.eq.s32.totalorder %v5277, 1
      %vm5328 = vcmp.eq.s32.totalorder %v5280, 1
      %vm5329 = vcmp.eq.s32.totalorder %v5283, 1
      %vm5330 = vcmp.eq.s32.totalorder %v5286, 1
      %vm5331 = vcmp.eq.s32.totalorder %v5289, 1
      %vm5332 = vcmp.eq.s32.totalorder %v5292, 1
      %vm5333 = vcmp.eq.s32.totalorder %v5295, 1
      %vm5334 = vcmp.eq.s32.totalorder %v5298, 1
      %vm5335 = vcmp.eq.s32.totalorder %v5301, 1
      %vm5336 = vcmp.eq.s32.totalorder %v5304, 1
      %v5337 = vsel %vm5305, %v1049, 0.0
      %v5338 = vsel %vm5306, %v1050, 0.0
      %v5339 = vsel %vm5307, %v1051, 0.0
      %v5340 = vsel %vm5308, %v1052, 0.0
      %v5341 = vsel %vm5309, %v1053, 0.0
      %v5342 = vsel %vm5310, %v1054, 0.0
      %v5343 = vsel %vm5311, %v1055, 0.0
      %v5344 = vsel %vm5312, %v1056, 0.0
      %v5345 = vsel %vm5313, %v1057, 0.0
      %v5346 = vsel %vm5314, %v1058, 0.0
      %v5347 = vsel %vm5315, %v1059, 0.0
      %v5348 = vsel %vm5316, %v1060, 0.0
      %v5349 = vsel %vm5317, %v1061, 0.0
      %v5350 = vsel %vm5318, %v1062, 0.0
      %v5351 = vsel %vm5319, %v1063, 0.0
      %v5352 = vsel %vm5320, %v1064, 0.0
      %v5353 = vsel %vm5321, %v1065, 0.0
      %v5354 = vsel %vm5322, %v1066, 0.0
      %v5355 = vsel %vm5323, %v1067, 0.0
      %v5356 = vsel %vm5324, %v1068, 0.0
      %v5357 = vsel %vm5325, %v1069, 0.0
      %v5358 = vsel %vm5326, %v1070, 0.0
      %v5359 = vsel %vm5327, %v1071, 0.0
      %v5360 = vsel %vm5328, %v1072, 0.0
      %v5361 = vsel %vm5329, %v1073, 0.0
      %v5362 = vsel %vm5330, %v1074, 0.0
      %v5363 = vsel %vm5331, %v1075, 0.0
      %v5364 = vsel %vm5332, %v1076, 0.0
      %v5365 = vsel %vm5333, %v1077, 0.0
      %v5366 = vsel %vm5334, %v1078, 0.0
      %v5367 = vsel %vm5335, %v1079, 0.0
      %v5368 = vsel %vm5336, %v1080, 0.0
      %v5369 = vsel %vm1081, %v5337, -inf
      %v5370 = vsel %vm1081, %v5338, -inf
      %v5371 = vsel %vm1081, %v5339, -inf
      %v5372 = vsel %vm1081, %v5340, -inf
      %v5373 = vsel %vm1081, %v5341, -inf
      %v5374 = vmax.f32 %v5369, %v5373
      %v5375 = vsel %vm1081, %v5342, -inf
      %v5376 = vmax.f32 %v5370, %v5375
      %v5377 = vsel %vm1081, %v5343, -inf
      %v5378 = vmax.f32 %v5371, %v5377
      %v5379 = vsel %vm1081, %v5344, -inf
      %v5380 = vmax.f32 %v5372, %v5379
      %v5381 = vsel %vm1081, %v5345, -inf
      %v5382 = vmax.f32 %v5374, %v5381
      %v5383 = vsel %vm1081, %v5346, -inf
      %v5384 = vmax.f32 %v5376, %v5383
      %v5385 = vsel %vm1081, %v5347, -inf
      %v5386 = vmax.f32 %v5378, %v5385
      %v5387 = vsel %vm1081, %v5348, -inf
      %v5388 = vmax.f32 %v5380, %v5387
      %v5389 = vsel %vm1081, %v5349, -inf
      %v5390 = vmax.f32 %v5382, %v5389
      %v5391 = vsel %vm1081, %v5350, -inf
      %v5392 = vmax.f32 %v5384, %v5391
      %v5393 = vsel %vm1081, %v5351, -inf
      %v5394 = vmax.f32 %v5386, %v5393
      %v5395 = vsel %vm1081, %v5352, -inf
      %v5396 = vmax.f32 %v5388, %v5395
      %v5397 = vsel %vm1081, %v5353, -inf
      %v5398 = vmax.f32 %v5390, %v5397
      %v5399 = vsel %vm1081, %v5354, -inf
      %v5400 = vmax.f32 %v5392, %v5399
      %v5401 = vsel %vm1081, %v5355, -inf
      %v5402 = vmax.f32 %v5394, %v5401
      %v5403 = vsel %vm1081, %v5356, -inf
      %v5404 = vmax.f32 %v5396, %v5403
      %v5405 = vsel %vm1081, %v5357, -inf
      %v5406 = vmax.f32 %v5398, %v5405
      %v5407 = vsel %vm1081, %v5358, -inf
      %v5408 = vmax.f32 %v5400, %v5407
      %v5409 = vsel %vm1081, %v5359, -inf
      %v5410 = vmax.f32 %v5402, %v5409
      %v5411 = vsel %vm1081, %v5360, -inf
      %v5412 = vmax.f32 %v5404, %v5411
      %v5413 = vsel %vm1081, %v5361, -inf
      %v5414 = vmax.f32 %v5406, %v5413
      %v5415 = vsel %vm1081, %v5362, -inf
      %v5416 = vmax.f32 %v5408, %v5415
      %v5417 = vsel %vm1081, %v5363, -inf
      %v5418 = vmax.f32 %v5410, %v5417
      %v5419 = vsel %vm1081, %v5364, -inf
      %v5420 = vmax.f32 %v5412, %v5419
      %v5421 = vsel %vm1081, %v5365, -inf
      %v5422 = vmax.f32 %v5414, %v5421
      %v5423 = vsel %vm1081, %v5366, -inf
      %v5424 = vmax.f32 %v5416, %v5423
      %v5425 = vsel %vm1081, %v5367, -inf
      %v5426 = vmax.f32 %v5418, %v5425
      %v5427 = vsel %vm1081, %v5368, -inf
      %v5428 = vmax.f32 %v5420, %v5427
      %v5429 = vmax.f32 %v5422, %v5424
      %v5430 = vmax.f32 %v5426, %v5428
      %v5431 = vmax.f32 %v5429, %v5430
      %v5432 = vrot.slane %v5431, 4
      %v5433 = vmax.f32 %v5431, %v5432
      %v5434 = vrot.slane %v5433, 2
      %v5435 = vmax.f32 %v5433, %v5434
      %v5436 = vrot.slane %v5435, 1
      %v5437 = vmax.f32 %v5435, %v5436
      %5438 = vset.pattern.permute.xlu0 18
      %5439 = vperm.xlu0 %5438, %v1284
      %v5440 = vpop.permute.xlu0 %5439
      %5441 = vset.pattern.permute.xlu0 18
      %5442 = vperm.xlu0 %5441, %v1285
      %v5443 = vpop.permute.xlu0 %5442
      %5444 = vset.pattern.permute.xlu0 18
      %5445 = vperm.xlu0 %5444, %v1286
      %v5446 = vpop.permute.xlu0 %5445
      %5447 = vset.pattern.permute.xlu0 18
      %5448 = vperm.xlu0 %5447, %v1287
      %v5449 = vpop.permute.xlu0 %5448
      %5450 = vset.pattern.permute.xlu0 18
      %5451 = vperm.xlu0 %5450, %v1288
      %v5452 = vpop.permute.xlu0 %5451
      %5453 = vset.pattern.permute.xlu0 18
      %5454 = vperm.xlu0 %5453, %v1289
      %v5455 = vpop.permute.xlu0 %5454
      %5456 = vset.pattern.permute.xlu0 18
      %5457 = vperm.xlu0 %5456, %v1290
      %v5458 = vpop.permute.xlu0 %5457
      %5459 = vset.pattern.permute.xlu0 18
      %5460 = vperm.xlu0 %5459, %v1291
      %v5461 = vpop.permute.xlu0 %5460
      %5462 = vset.pattern.permute.xlu0 18
      %5463 = vperm.xlu0 %5462, %v1292
      %v5464 = vpop.permute.xlu0 %5463
      %5465 = vset.pattern.permute.xlu0 18
      %5466 = vperm.xlu0 %5465, %v1293
      %v5467 = vpop.permute.xlu0 %5466
      %5468 = vset.pattern.permute.xlu0 18
      %5469 = vperm.xlu0 %5468, %v1294
      %v5470 = vpop.permute.xlu0 %5469
      %5471 = vset.pattern.permute.xlu0 18
      %5472 = vperm.xlu0 %5471, %v1295
      %v5473 = vpop.permute.xlu0 %5472
      %5474 = vset.pattern.permute.xlu0 18
      %5475 = vperm.xlu0 %5474, %v1296
      %v5476 = vpop.permute.xlu0 %5475
      %5477 = vset.pattern.permute.xlu0 18
      %5478 = vperm.xlu0 %5477, %v1297
      %v5479 = vpop.permute.xlu0 %5478
      %5480 = vset.pattern.permute.xlu0 18
      %5481 = vperm.xlu0 %5480, %v1298
      %v5482 = vpop.permute.xlu0 %5481
      %5483 = vset.pattern.permute.xlu0 18
      %5484 = vperm.xlu0 %5483, %v1299
      %v5485 = vpop.permute.xlu0 %5484
      %5486 = vset.pattern.permute.xlu0 18
      %5487 = vperm.xlu0 %5486, %v1300
      %v5488 = vpop.permute.xlu0 %5487
      %5489 = vset.pattern.permute.xlu0 18
      %5490 = vperm.xlu0 %5489, %v1301
      %v5491 = vpop.permute.xlu0 %5490
      %5492 = vset.pattern.permute.xlu0 18
      %5493 = vperm.xlu0 %5492, %v1302
      %v5494 = vpop.permute.xlu0 %5493
      %5495 = vset.pattern.permute.xlu0 18
      %5496 = vperm.xlu0 %5495, %v1303
      %v5497 = vpop.permute.xlu0 %5496
      %5498 = vset.pattern.permute.xlu0 18
      %5499 = vperm.xlu0 %5498, %v1304
      %v5500 = vpop.permute.xlu0 %5499
      %5501 = vset.pattern.permute.xlu0 18
      %5502 = vperm.xlu0 %5501, %v1305
      %v5503 = vpop.permute.xlu0 %5502
      %5504 = vset.pattern.permute.xlu0 18
      %5505 = vperm.xlu0 %5504, %v1306
      %v5506 = vpop.permute.xlu0 %5505
      %5507 = vset.pattern.permute.xlu0 18
      %5508 = vperm.xlu0 %5507, %v1307
      %v5509 = vpop.permute.xlu0 %5508
      %5510 = vset.pattern.permute.xlu0 18
      %5511 = vperm.xlu0 %5510, %v1308
      %v5512 = vpop.permute.xlu0 %5511
      %5513 = vset.pattern.permute.xlu0 18
      %5514 = vperm.xlu0 %5513, %v1309
      %v5515 = vpop.permute.xlu0 %5514
      %5516 = vset.pattern.permute.xlu0 18
      %5517 = vperm.xlu0 %5516, %v1310
      %v5518 = vpop.permute.xlu0 %5517
      %5519 = vset.pattern.permute.xlu0 18
      %5520 = vperm.xlu0 %5519, %v1311
      %v5521 = vpop.permute.xlu0 %5520
      %5522 = vset.pattern.permute.xlu0 18
      %5523 = vperm.xlu0 %5522, %v1312
      %v5524 = vpop.permute.xlu0 %5523
      %5525 = vset.pattern.permute.xlu0 18
      %5526 = vperm.xlu0 %5525, %v1313
      %v5527 = vpop.permute.xlu0 %5526
      %5528 = vset.pattern.permute.xlu0 18
      %5529 = vperm.xlu0 %5528, %v1314
      %v5530 = vpop.permute.xlu0 %5529
      %5531 = vset.pattern.permute.xlu0 18
      %5532 = vperm.xlu0 %5531, %v1315
      %v5533 = vpop.permute.xlu0 %5532
      %vm5534 = vcmp.eq.s32.totalorder %v5440, 1
      %vm5535 = vcmp.eq.s32.totalorder %v5443, 1
      %vm5536 = vcmp.eq.s32.totalorder %v5446, 1
      %vm5537 = vcmp.eq.s32.totalorder %v5449, 1
      %vm5538 = vcmp.eq.s32.totalorder %v5452, 1
      %vm5539 = vcmp.eq.s32.totalorder %v5455, 1
      %vm5540 = vcmp.eq.s32.totalorder %v5458, 1
      %vm5541 = vcmp.eq.s32.totalorder %v5461, 1
      %vm5542 = vcmp.eq.s32.totalorder %v5464, 1
      %vm5543 = vcmp.eq.s32.totalorder %v5467, 1
      %vm5544 = vcmp.eq.s32.totalorder %v5470, 1
      %vm5545 = vcmp.eq.s32.totalorder %v5473, 1
      %vm5546 = vcmp.eq.s32.totalorder %v5476, 1
      %vm5547 = vcmp.eq.s32.totalorder %v5479, 1
      %vm5548 = vcmp.eq.s32.totalorder %v5482, 1
      %vm5549 = vcmp.eq.s32.totalorder %v5485, 1
      %vm5550 = vcmp.eq.s32.totalorder %v5488, 1
      %vm5551 = vcmp.eq.s32.totalorder %v5491, 1
      %vm5552 = vcmp.eq.s32.totalorder %v5494, 1
      %vm5553 = vcmp.eq.s32.totalorder %v5497, 1
      %vm5554 = vcmp.eq.s32.totalorder %v5500, 1
      %vm5555 = vcmp.eq.s32.totalorder %v5503, 1
      %vm5556 = vcmp.eq.s32.totalorder %v5506, 1
      %vm5557 = vcmp.eq.s32.totalorder %v5509, 1
      %vm5558 = vcmp.eq.s32.totalorder %v5512, 1
      %vm5559 = vcmp.eq.s32.totalorder %v5515, 1
      %vm5560 = vcmp.eq.s32.totalorder %v5518, 1
      %vm5561 = vcmp.eq.s32.totalorder %v5521, 1
      %vm5562 = vcmp.eq.s32.totalorder %v5524, 1
      %vm5563 = vcmp.eq.s32.totalorder %v5527, 1
      %vm5564 = vcmp.eq.s32.totalorder %v5530, 1
      %vm5565 = vcmp.eq.s32.totalorder %v5533, 1
      %v5566 = vsel %vm5534, %v1049, 0.0
      %v5567 = vsel %vm5535, %v1050, 0.0
      %v5568 = vsel %vm5536, %v1051, 0.0
      %v5569 = vsel %vm5537, %v1052, 0.0
      %v5570 = vsel %vm5538, %v1053, 0.0
      %v5571 = vsel %vm5539, %v1054, 0.0
      %v5572 = vsel %vm5540, %v1055, 0.0
      %v5573 = vsel %vm5541, %v1056, 0.0
      %v5574 = vsel %vm5542, %v1057, 0.0
      %v5575 = vsel %vm5543, %v1058, 0.0
      %v5576 = vsel %vm5544, %v1059, 0.0
      %v5577 = vsel %vm5545, %v1060, 0.0
      %v5578 = vsel %vm5546, %v1061, 0.0
      %v5579 = vsel %vm5547, %v1062, 0.0
      %v5580 = vsel %vm5548, %v1063, 0.0
      %v5581 = vsel %vm5549, %v1064, 0.0
      %v5582 = vsel %vm5550, %v1065, 0.0
      %v5583 = vsel %vm5551, %v1066, 0.0
      %v5584 = vsel %vm5552, %v1067, 0.0
      %v5585 = vsel %vm5553, %v1068, 0.0
      %v5586 = vsel %vm5554, %v1069, 0.0
      %v5587 = vsel %vm5555, %v1070, 0.0
      %v5588 = vsel %vm5556, %v1071, 0.0
      %v5589 = vsel %vm5557, %v1072, 0.0
      %v5590 = vsel %vm5558, %v1073, 0.0
      %v5591 = vsel %vm5559, %v1074, 0.0
      %v5592 = vsel %vm5560, %v1075, 0.0
      %v5593 = vsel %vm5561, %v1076, 0.0
      %v5594 = vsel %vm5562, %v1077, 0.0
      %v5595 = vsel %vm5563, %v1078, 0.0
      %v5596 = vsel %vm5564, %v1079, 0.0
      %v5597 = vsel %vm5565, %v1080, 0.0
      %v5598 = vsel %vm1081, %v5566, -inf
      %v5599 = vsel %vm1081, %v5567, -inf
      %v5600 = vsel %vm1081, %v5568, -inf
      %v5601 = vsel %vm1081, %v5569, -inf
      %v5602 = vsel %vm1081, %v5570, -inf
      %v5603 = vmax.f32 %v5598, %v5602
      %v5604 = vsel %vm1081, %v5571, -inf
      %v5605 = vmax.f32 %v5599, %v5604
      %v5606 = vsel %vm1081, %v5572, -inf
      %v5607 = vmax.f32 %v5600, %v5606
      %v5608 = vsel %vm1081, %v5573, -inf
      %v5609 = vmax.f32 %v5601, %v5608
      %v5610 = vsel %vm1081, %v5574, -inf
      %v5611 = vmax.f32 %v5603, %v5610
      %v5612 = vsel %vm1081, %v5575, -inf
      %v5613 = vmax.f32 %v5605, %v5612
      %v5614 = vsel %vm1081, %v5576, -inf
      %v5615 = vmax.f32 %v5607, %v5614
      %v5616 = vsel %vm1081, %v5577, -inf
      %v5617 = vmax.f32 %v5609, %v5616
      %v5618 = vsel %vm1081, %v5578, -inf
      %v5619 = vmax.f32 %v5611, %v5618
      %v5620 = vsel %vm1081, %v5579, -inf
      %v5621 = vmax.f32 %v5613, %v5620
      %v5622 = vsel %vm1081, %v5580, -inf
      %v5623 = vmax.f32 %v5615, %v5622
      %v5624 = vsel %vm1081, %v5581, -inf
      %v5625 = vmax.f32 %v5617, %v5624
      %v5626 = vsel %vm1081, %v5582, -inf
      %v5627 = vmax.f32 %v5619, %v5626
      %v5628 = vsel %vm1081, %v5583, -inf
      %v5629 = vmax.f32 %v5621, %v5628
      %v5630 = vsel %vm1081, %v5584, -inf
      %v5631 = vmax.f32 %v5623, %v5630
      %v5632 = vsel %vm1081, %v5585, -inf
      %v5633 = vmax.f32 %v5625, %v5632
      %v5634 = vsel %vm1081, %v5586, -inf
      %v5635 = vmax.f32 %v5627, %v5634
      %v5636 = vsel %vm1081, %v5587, -inf
      %v5637 = vmax.f32 %v5629, %v5636
      %v5638 = vsel %vm1081, %v5588, -inf
      %v5639 = vmax.f32 %v5631, %v5638
      %v5640 = vsel %vm1081, %v5589, -inf
      %v5641 = vmax.f32 %v5633, %v5640
      %v5642 = vsel %vm1081, %v5590, -inf
      %v5643 = vmax.f32 %v5635, %v5642
      %v5644 = vsel %vm1081, %v5591, -inf
      %v5645 = vmax.f32 %v5637, %v5644
      %v5646 = vsel %vm1081, %v5592, -inf
      %v5647 = vmax.f32 %v5639, %v5646
      %v5648 = vsel %vm1081, %v5593, -inf
      %v5649 = vmax.f32 %v5641, %v5648
      %v5650 = vsel %vm1081, %v5594, -inf
      %v5651 = vmax.f32 %v5643, %v5650
      %v5652 = vsel %vm1081, %v5595, -inf
      %v5653 = vmax.f32 %v5645, %v5652
      %v5654 = vsel %vm1081, %v5596, -inf
      %v5655 = vmax.f32 %v5647, %v5654
      %v5656 = vsel %vm1081, %v5597, -inf
      %v5657 = vmax.f32 %v5649, %v5656
      %v5658 = vmax.f32 %v5651, %v5653
      %v5659 = vmax.f32 %v5655, %v5657
      %v5660 = vmax.f32 %v5658, %v5659
      %v5661 = vrot.slane %v5660, 4
      %v5662 = vmax.f32 %v5660, %v5661
      %v5663 = vrot.slane %v5662, 2
      %v5664 = vmax.f32 %v5662, %v5663
      %v5665 = vrot.slane %v5664, 1
      %v5666 = vmax.f32 %v5664, %v5665
      %5667 = vset.pattern.permute.xlu0 19
      %5668 = vperm.xlu0 %5667, %v1284
      %v5669 = vpop.permute.xlu0 %5668
      %5670 = vset.pattern.permute.xlu0 19
      %5671 = vperm.xlu0 %5670, %v1285
      %v5672 = vpop.permute.xlu0 %5671
      %5673 = vset.pattern.permute.xlu0 19
      %5674 = vperm.xlu0 %5673, %v1286
      %v5675 = vpop.permute.xlu0 %5674
      %5676 = vset.pattern.permute.xlu0 19
      %5677 = vperm.xlu0 %5676, %v1287
      %v5678 = vpop.permute.xlu0 %5677
      %5679 = vset.pattern.permute.xlu0 19
      %5680 = vperm.xlu0 %5679, %v1288
      %v5681 = vpop.permute.xlu0 %5680
      %5682 = vset.pattern.permute.xlu0 19
      %5683 = vperm.xlu0 %5682, %v1289
      %v5684 = vpop.permute.xlu0 %5683
      %5685 = vset.pattern.permute.xlu0 19
      %5686 = vperm.xlu0 %5685, %v1290
      %v5687 = vpop.permute.xlu0 %5686
      %5688 = vset.pattern.permute.xlu0 19
      %5689 = vperm.xlu0 %5688, %v1291
      %v5690 = vpop.permute.xlu0 %5689
      %5691 = vset.pattern.permute.xlu0 19
      %5692 = vperm.xlu0 %5691, %v1292
      %v5693 = vpop.permute.xlu0 %5692
      %5694 = vset.pattern.permute.xlu0 19
      %5695 = vperm.xlu0 %5694, %v1293
      %v5696 = vpop.permute.xlu0 %5695
      %5697 = vset.pattern.permute.xlu0 19
      %5698 = vperm.xlu0 %5697, %v1294
      %v5699 = vpop.permute.xlu0 %5698
      %5700 = vset.pattern.permute.xlu0 19
      %5701 = vperm.xlu0 %5700, %v1295
      %v5702 = vpop.permute.xlu0 %5701
      %5703 = vset.pattern.permute.xlu0 19
      %5704 = vperm.xlu0 %5703, %v1296
      %v5705 = vpop.permute.xlu0 %5704
      %5706 = vset.pattern.permute.xlu0 19
      %5707 = vperm.xlu0 %5706, %v1297
      %v5708 = vpop.permute.xlu0 %5707
      %5709 = vset.pattern.permute.xlu0 19
      %5710 = vperm.xlu0 %5709, %v1298
      %v5711 = vpop.permute.xlu0 %5710
      %5712 = vset.pattern.permute.xlu0 19
      %5713 = vperm.xlu0 %5712, %v1299
      %v5714 = vpop.permute.xlu0 %5713
      %5715 = vset.pattern.permute.xlu0 19
      %5716 = vperm.xlu0 %5715, %v1300
      %v5717 = vpop.permute.xlu0 %5716
      %5718 = vset.pattern.permute.xlu0 19
      %5719 = vperm.xlu0 %5718, %v1301
      %v5720 = vpop.permute.xlu0 %5719
      %5721 = vset.pattern.permute.xlu0 19
      %5722 = vperm.xlu0 %5721, %v1302
      %v5723 = vpop.permute.xlu0 %5722
      %5724 = vset.pattern.permute.xlu0 19
      %5725 = vperm.xlu0 %5724, %v1303
      %v5726 = vpop.permute.xlu0 %5725
      %5727 = vset.pattern.permute.xlu0 19
      %5728 = vperm.xlu0 %5727, %v1304
      %v5729 = vpop.permute.xlu0 %5728
      %5730 = vset.pattern.permute.xlu0 19
      %5731 = vperm.xlu0 %5730, %v1305
      %v5732 = vpop.permute.xlu0 %5731
      %5733 = vset.pattern.permute.xlu0 19
      %5734 = vperm.xlu0 %5733, %v1306
      %v5735 = vpop.permute.xlu0 %5734
      %5736 = vset.pattern.permute.xlu0 19
      %5737 = vperm.xlu0 %5736, %v1307
      %v5738 = vpop.permute.xlu0 %5737
      %5739 = vset.pattern.permute.xlu0 19
      %5740 = vperm.xlu0 %5739, %v1308
      %v5741 = vpop.permute.xlu0 %5740
      %5742 = vset.pattern.permute.xlu0 19
      %5743 = vperm.xlu0 %5742, %v1309
      %v5744 = vpop.permute.xlu0 %5743
      %5745 = vset.pattern.permute.xlu0 19
      %5746 = vperm.xlu0 %5745, %v1310
      %v5747 = vpop.permute.xlu0 %5746
      %5748 = vset.pattern.permute.xlu0 19
      %5749 = vperm.xlu0 %5748, %v1311
      %v5750 = vpop.permute.xlu0 %5749
      %5751 = vset.pattern.permute.xlu0 19
      %5752 = vperm.xlu0 %5751, %v1312
      %v5753 = vpop.permute.xlu0 %5752
      %5754 = vset.pattern.permute.xlu0 19
      %5755 = vperm.xlu0 %5754, %v1313
      %v5756 = vpop.permute.xlu0 %5755
      %5757 = vset.pattern.permute.xlu0 19
      %5758 = vperm.xlu0 %5757, %v1314
      %v5759 = vpop.permute.xlu0 %5758
      %5760 = vset.pattern.permute.xlu0 19
      %5761 = vperm.xlu0 %5760, %v1315
      %v5762 = vpop.permute.xlu0 %5761
      %vm5763 = vcmp.eq.s32.totalorder %v5669, 1
      %vm5764 = vcmp.eq.s32.totalorder %v5672, 1
      %vm5765 = vcmp.eq.s32.totalorder %v5675, 1
      %vm5766 = vcmp.eq.s32.totalorder %v5678, 1
      %vm5767 = vcmp.eq.s32.totalorder %v5681, 1
      %vm5768 = vcmp.eq.s32.totalorder %v5684, 1
      %vm5769 = vcmp.eq.s32.totalorder %v5687, 1
      %vm5770 = vcmp.eq.s32.totalorder %v5690, 1
      %vm5771 = vcmp.eq.s32.totalorder %v5693, 1
      %vm5772 = vcmp.eq.s32.totalorder %v5696, 1
      %vm5773 = vcmp.eq.s32.totalorder %v5699, 1
      %vm5774 = vcmp.eq.s32.totalorder %v5702, 1
      %vm5775 = vcmp.eq.s32.totalorder %v5705, 1
      %vm5776 = vcmp.eq.s32.totalorder %v5708, 1
      %vm5777 = vcmp.eq.s32.totalorder %v5711, 1
      %vm5778 = vcmp.eq.s32.totalorder %v5714, 1
      %vm5779 = vcmp.eq.s32.totalorder %v5717, 1
      %vm5780 = vcmp.eq.s32.totalorder %v5720, 1
      %vm5781 = vcmp.eq.s32.totalorder %v5723, 1
      %vm5782 = vcmp.eq.s32.totalorder %v5726, 1
      %vm5783 = vcmp.eq.s32.totalorder %v5729, 1
      %vm5784 = vcmp.eq.s32.totalorder %v5732, 1
      %vm5785 = vcmp.eq.s32.totalorder %v5735, 1
      %vm5786 = vcmp.eq.s32.totalorder %v5738, 1
      %vm5787 = vcmp.eq.s32.totalorder %v5741, 1
      %vm5788 = vcmp.eq.s32.totalorder %v5744, 1
      %vm5789 = vcmp.eq.s32.totalorder %v5747, 1
      %vm5790 = vcmp.eq.s32.totalorder %v5750, 1
      %vm5791 = vcmp.eq.s32.totalorder %v5753, 1
      %vm5792 = vcmp.eq.s32.totalorder %v5756, 1
      %vm5793 = vcmp.eq.s32.totalorder %v5759, 1
      %vm5794 = vcmp.eq.s32.totalorder %v5762, 1
      %v5795 = vsel %vm5763, %v1049, 0.0
      %v5796 = vsel %vm5764, %v1050, 0.0
      %v5797 = vsel %vm5765, %v1051, 0.0
      %v5798 = vsel %vm5766, %v1052, 0.0
      %v5799 = vsel %vm5767, %v1053, 0.0
      %v5800 = vsel %vm5768, %v1054, 0.0
      %v5801 = vsel %vm5769, %v1055, 0.0
      %v5802 = vsel %vm5770, %v1056, 0.0
      %v5803 = vsel %vm5771, %v1057, 0.0
      %v5804 = vsel %vm5772, %v1058, 0.0
      %v5805 = vsel %vm5773, %v1059, 0.0
      %v5806 = vsel %vm5774, %v1060, 0.0
      %v5807 = vsel %vm5775, %v1061, 0.0
      %v5808 = vsel %vm5776, %v1062, 0.0
      %v5809 = vsel %vm5777, %v1063, 0.0
      %v5810 = vsel %vm5778, %v1064, 0.0
      %v5811 = vsel %vm5779, %v1065, 0.0
      %v5812 = vsel %vm5780, %v1066, 0.0
      %v5813 = vsel %vm5781, %v1067, 0.0
      %v5814 = vsel %vm5782, %v1068, 0.0
      %v5815 = vsel %vm5783, %v1069, 0.0
      %v5816 = vsel %vm5784, %v1070, 0.0
      %v5817 = vsel %vm5785, %v1071, 0.0
      %v5818 = vsel %vm5786, %v1072, 0.0
      %v5819 = vsel %vm5787, %v1073, 0.0
      %v5820 = vsel %vm5788, %v1074, 0.0
      %v5821 = vsel %vm5789, %v1075, 0.0
      %v5822 = vsel %vm5790, %v1076, 0.0
      %v5823 = vsel %vm5791, %v1077, 0.0
      %v5824 = vsel %vm5792, %v1078, 0.0
      %v5825 = vsel %vm5793, %v1079, 0.0
      %v5826 = vsel %vm5794, %v1080, 0.0
      %v5827 = vsel %vm1081, %v5795, -inf
      %v5828 = vsel %vm1081, %v5796, -inf
      %v5829 = vsel %vm1081, %v5797, -inf
      %v5830 = vsel %vm1081, %v5798, -inf
      %v5831 = vsel %vm1081, %v5799, -inf
      %v5832 = vmax.f32 %v5827, %v5831
      %v5833 = vsel %vm1081, %v5800, -inf
      %v5834 = vmax.f32 %v5828, %v5833
      %v5835 = vsel %vm1081, %v5801, -inf
      %v5836 = vmax.f32 %v5829, %v5835
      %v5837 = vsel %vm1081, %v5802, -inf
      %v5838 = vmax.f32 %v5830, %v5837
      %v5839 = vsel %vm1081, %v5803, -inf
      %v5840 = vmax.f32 %v5832, %v5839
      %v5841 = vsel %vm1081, %v5804, -inf
      %v5842 = vmax.f32 %v5834, %v5841
      %v5843 = vsel %vm1081, %v5805, -inf
      %v5844 = vmax.f32 %v5836, %v5843
      %v5845 = vsel %vm1081, %v5806, -inf
      %v5846 = vmax.f32 %v5838, %v5845
      %v5847 = vsel %vm1081, %v5807, -inf
      %v5848 = vmax.f32 %v5840, %v5847
      %v5849 = vsel %vm1081, %v5808, -inf
      %v5850 = vmax.f32 %v5842, %v5849
      %v5851 = vsel %vm1081, %v5809, -inf
      %v5852 = vmax.f32 %v5844, %v5851
      %v5853 = vsel %vm1081, %v5810, -inf
      %v5854 = vmax.f32 %v5846, %v5853
      %v5855 = vsel %vm1081, %v5811, -inf
      %v5856 = vmax.f32 %v5848, %v5855
      %v5857 = vsel %vm1081, %v5812, -inf
      %v5858 = vmax.f32 %v5850, %v5857
      %v5859 = vsel %vm1081, %v5813, -inf
      %v5860 = vmax.f32 %v5852, %v5859
      %v5861 = vsel %vm1081, %v5814, -inf
      %v5862 = vmax.f32 %v5854, %v5861
      %v5863 = vsel %vm1081, %v5815, -inf
      %v5864 = vmax.f32 %v5856, %v5863
      %v5865 = vsel %vm1081, %v5816, -inf
      %v5866 = vmax.f32 %v5858, %v5865
      %v5867 = vsel %vm1081, %v5817, -inf
      %v5868 = vmax.f32 %v5860, %v5867
      %v5869 = vsel %vm1081, %v5818, -inf
      %v5870 = vmax.f32 %v5862, %v5869
      %v5871 = vsel %vm1081, %v5819, -inf
      %v5872 = vmax.f32 %v5864, %v5871
      %v5873 = vsel %vm1081, %v5820, -inf
      %v5874 = vmax.f32 %v5866, %v5873
      %v5875 = vsel %vm1081, %v5821, -inf
      %v5876 = vmax.f32 %v5868, %v5875
      %v5877 = vsel %vm1081, %v5822, -inf
      %v5878 = vmax.f32 %v5870, %v5877
      %v5879 = vsel %vm1081, %v5823, -inf
      %v5880 = vmax.f32 %v5872, %v5879
      %v5881 = vsel %vm1081, %v5824, -inf
      %v5882 = vmax.f32 %v5874, %v5881
      %v5883 = vsel %vm1081, %v5825, -inf
      %v5884 = vmax.f32 %v5876, %v5883
      %v5885 = vsel %vm1081, %v5826, -inf
      %v5886 = vmax.f32 %v5878, %v5885
      %v5887 = vmax.f32 %v5880, %v5882
      %v5888 = vmax.f32 %v5884, %v5886
      %v5889 = vmax.f32 %v5887, %v5888
      %v5890 = vrot.slane %v5889, 4
      %v5891 = vmax.f32 %v5889, %v5890
      %v5892 = vrot.slane %v5891, 2
      %v5893 = vmax.f32 %v5891, %v5892
      %v5894 = vrot.slane %v5893, 1
      %v5895 = vmax.f32 %v5893, %v5894
      %5896 = vset.pattern.permute.xlu0 20
      %5897 = vperm.xlu0 %5896, %v1284
      %v5898 = vpop.permute.xlu0 %5897
      %5899 = vset.pattern.permute.xlu0 20
      %5900 = vperm.xlu0 %5899, %v1285
      %v5901 = vpop.permute.xlu0 %5900
      %5902 = vset.pattern.permute.xlu0 20
      %5903 = vperm.xlu0 %5902, %v1286
      %v5904 = vpop.permute.xlu0 %5903
      %5905 = vset.pattern.permute.xlu0 20
      %5906 = vperm.xlu0 %5905, %v1287
      %v5907 = vpop.permute.xlu0 %5906
      %5908 = vset.pattern.permute.xlu0 20
      %5909 = vperm.xlu0 %5908, %v1288
      %v5910 = vpop.permute.xlu0 %5909
      %5911 = vset.pattern.permute.xlu0 20
      %5912 = vperm.xlu0 %5911, %v1289
      %v5913 = vpop.permute.xlu0 %5912
      %5914 = vset.pattern.permute.xlu0 20
      %5915 = vperm.xlu0 %5914, %v1290
      %v5916 = vpop.permute.xlu0 %5915
      %5917 = vset.pattern.permute.xlu0 20
      %5918 = vperm.xlu0 %5917, %v1291
      %v5919 = vpop.permute.xlu0 %5918
      %5920 = vset.pattern.permute.xlu0 20
      %5921 = vperm.xlu0 %5920, %v1292
      %v5922 = vpop.permute.xlu0 %5921
      %5923 = vset.pattern.permute.xlu0 20
      %5924 = vperm.xlu0 %5923, %v1293
      %v5925 = vpop.permute.xlu0 %5924
      %5926 = vset.pattern.permute.xlu0 20
      %5927 = vperm.xlu0 %5926, %v1294
      %v5928 = vpop.permute.xlu0 %5927
      %5929 = vset.pattern.permute.xlu0 20
      %5930 = vperm.xlu0 %5929, %v1295
      %v5931 = vpop.permute.xlu0 %5930
      %5932 = vset.pattern.permute.xlu0 20
      %5933 = vperm.xlu0 %5932, %v1296
      %v5934 = vpop.permute.xlu0 %5933
      %5935 = vset.pattern.permute.xlu0 20
      %5936 = vperm.xlu0 %5935, %v1297
      %v5937 = vpop.permute.xlu0 %5936
      %5938 = vset.pattern.permute.xlu0 20
      %5939 = vperm.xlu0 %5938, %v1298
      %v5940 = vpop.permute.xlu0 %5939
      %5941 = vset.pattern.permute.xlu0 20
      %5942 = vperm.xlu0 %5941, %v1299
      %v5943 = vpop.permute.xlu0 %5942
      %5944 = vset.pattern.permute.xlu0 20
      %5945 = vperm.xlu0 %5944, %v1300
      %v5946 = vpop.permute.xlu0 %5945
      %5947 = vset.pattern.permute.xlu0 20
      %5948 = vperm.xlu0 %5947, %v1301
      %v5949 = vpop.permute.xlu0 %5948
      %5950 = vset.pattern.permute.xlu0 20
      %5951 = vperm.xlu0 %5950, %v1302
      %v5952 = vpop.permute.xlu0 %5951
      %5953 = vset.pattern.permute.xlu0 20
      %5954 = vperm.xlu0 %5953, %v1303
      %v5955 = vpop.permute.xlu0 %5954
      %5956 = vset.pattern.permute.xlu0 20
      %5957 = vperm.xlu0 %5956, %v1304
      %v5958 = vpop.permute.xlu0 %5957
      %5959 = vset.pattern.permute.xlu0 20
      %5960 = vperm.xlu0 %5959, %v1305
      %v5961 = vpop.permute.xlu0 %5960
      %5962 = vset.pattern.permute.xlu0 20
      %5963 = vperm.xlu0 %5962, %v1306
      %v5964 = vpop.permute.xlu0 %5963
      %5965 = vset.pattern.permute.xlu0 20
      %5966 = vperm.xlu0 %5965, %v1307
      %v5967 = vpop.permute.xlu0 %5966
      %5968 = vset.pattern.permute.xlu0 20
      %5969 = vperm.xlu0 %5968, %v1308
      %v5970 = vpop.permute.xlu0 %5969
      %5971 = vset.pattern.permute.xlu0 20
      %5972 = vperm.xlu0 %5971, %v1309
      %v5973 = vpop.permute.xlu0 %5972
      %5974 = vset.pattern.permute.xlu0 20
      %5975 = vperm.xlu0 %5974, %v1310
      %v5976 = vpop.permute.xlu0 %5975
      %5977 = vset.pattern.permute.xlu0 20
      %5978 = vperm.xlu0 %5977, %v1311
      %v5979 = vpop.permute.xlu0 %5978
      %5980 = vset.pattern.permute.xlu0 20
      %5981 = vperm.xlu0 %5980, %v1312
      %v5982 = vpop.permute.xlu0 %5981
      %5983 = vset.pattern.permute.xlu0 20
      %5984 = vperm.xlu0 %5983, %v1313
      %v5985 = vpop.permute.xlu0 %5984
      %5986 = vset.pattern.permute.xlu0 20
      %5987 = vperm.xlu0 %5986, %v1314
      %v5988 = vpop.permute.xlu0 %5987
      %5989 = vset.pattern.permute.xlu0 20
      %5990 = vperm.xlu0 %5989, %v1315
      %v5991 = vpop.permute.xlu0 %5990
      %vm5992 = vcmp.eq.s32.totalorder %v5898, 1
      %vm5993 = vcmp.eq.s32.totalorder %v5901, 1
      %vm5994 = vcmp.eq.s32.totalorder %v5904, 1
      %vm5995 = vcmp.eq.s32.totalorder %v5907, 1
      %vm5996 = vcmp.eq.s32.totalorder %v5910, 1
      %vm5997 = vcmp.eq.s32.totalorder %v5913, 1
      %vm5998 = vcmp.eq.s32.totalorder %v5916, 1
      %vm5999 = vcmp.eq.s32.totalorder %v5919, 1
      %vm6000 = vcmp.eq.s32.totalorder %v5922, 1
      %vm6001 = vcmp.eq.s32.totalorder %v5925, 1
      %vm6002 = vcmp.eq.s32.totalorder %v5928, 1
      %vm6003 = vcmp.eq.s32.totalorder %v5931, 1
      %vm6004 = vcmp.eq.s32.totalorder %v5934, 1
      %vm6005 = vcmp.eq.s32.totalorder %v5937, 1
      %vm6006 = vcmp.eq.s32.totalorder %v5940, 1
      %vm6007 = vcmp.eq.s32.totalorder %v5943, 1
      %vm6008 = vcmp.eq.s32.totalorder %v5946, 1
      %vm6009 = vcmp.eq.s32.totalorder %v5949, 1
      %vm6010 = vcmp.eq.s32.totalorder %v5952, 1
      %vm6011 = vcmp.eq.s32.totalorder %v5955, 1
      %vm6012 = vcmp.eq.s32.totalorder %v5958, 1
      %vm6013 = vcmp.eq.s32.totalorder %v5961, 1
      %vm6014 = vcmp.eq.s32.totalorder %v5964, 1
      %vm6015 = vcmp.eq.s32.totalorder %v5967, 1
      %vm6016 = vcmp.eq.s32.totalorder %v5970, 1
      %vm6017 = vcmp.eq.s32.totalorder %v5973, 1
      %vm6018 = vcmp.eq.s32.totalorder %v5976, 1
      %vm6019 = vcmp.eq.s32.totalorder %v5979, 1
      %vm6020 = vcmp.eq.s32.totalorder %v5982, 1
      %vm6021 = vcmp.eq.s32.totalorder %v5985, 1
      %vm6022 = vcmp.eq.s32.totalorder %v5988, 1
      %vm6023 = vcmp.eq.s32.totalorder %v5991, 1
      %v6024 = vsel %vm5992, %v1049, 0.0
      %v6025 = vsel %vm5993, %v1050, 0.0
      %v6026 = vsel %vm5994, %v1051, 0.0
      %v6027 = vsel %vm5995, %v1052, 0.0
      %v6028 = vsel %vm5996, %v1053, 0.0
      %v6029 = vsel %vm5997, %v1054, 0.0
      %v6030 = vsel %vm5998, %v1055, 0.0
      %v6031 = vsel %vm5999, %v1056, 0.0
      %v6032 = vsel %vm6000, %v1057, 0.0
      %v6033 = vsel %vm6001, %v1058, 0.0
      %v6034 = vsel %vm6002, %v1059, 0.0
      %v6035 = vsel %vm6003, %v1060, 0.0
      %v6036 = vsel %vm6004, %v1061, 0.0
      %v6037 = vsel %vm6005, %v1062, 0.0
      %v6038 = vsel %vm6006, %v1063, 0.0
      %v6039 = vsel %vm6007, %v1064, 0.0
      %v6040 = vsel %vm6008, %v1065, 0.0
      %v6041 = vsel %vm6009, %v1066, 0.0
      %v6042 = vsel %vm6010, %v1067, 0.0
      %v6043 = vsel %vm6011, %v1068, 0.0
      %v6044 = vsel %vm6012, %v1069, 0.0
      %v6045 = vsel %vm6013, %v1070, 0.0
      %v6046 = vsel %vm6014, %v1071, 0.0
      %v6047 = vsel %vm6015, %v1072, 0.0
      %v6048 = vsel %vm6016, %v1073, 0.0
      %v6049 = vsel %vm6017, %v1074, 0.0
      %v6050 = vsel %vm6018, %v1075, 0.0
      %v6051 = vsel %vm6019, %v1076, 0.0
      %v6052 = vsel %vm6020, %v1077, 0.0
      %v6053 = vsel %vm6021, %v1078, 0.0
      %v6054 = vsel %vm6022, %v1079, 0.0
      %v6055 = vsel %vm6023, %v1080, 0.0
      %v6056 = vsel %vm1081, %v6024, -inf
      %v6057 = vsel %vm1081, %v6025, -inf
      %v6058 = vsel %vm1081, %v6026, -inf
      %v6059 = vsel %vm1081, %v6027, -inf
      %v6060 = vsel %vm1081, %v6028, -inf
      %v6061 = vmax.f32 %v6056, %v6060
      %v6062 = vsel %vm1081, %v6029, -inf
      %v6063 = vmax.f32 %v6057, %v6062
      %v6064 = vsel %vm1081, %v6030, -inf
      %v6065 = vmax.f32 %v6058, %v6064
      %v6066 = vsel %vm1081, %v6031, -inf
      %v6067 = vmax.f32 %v6059, %v6066
      %v6068 = vsel %vm1081, %v6032, -inf
      %v6069 = vmax.f32 %v6061, %v6068
      %v6070 = vsel %vm1081, %v6033, -inf
      %v6071 = vmax.f32 %v6063, %v6070
      %v6072 = vsel %vm1081, %v6034, -inf
      %v6073 = vmax.f32 %v6065, %v6072
      %v6074 = vsel %vm1081, %v6035, -inf
      %v6075 = vmax.f32 %v6067, %v6074
      %v6076 = vsel %vm1081, %v6036, -inf
      %v6077 = vmax.f32 %v6069, %v6076
      %v6078 = vsel %vm1081, %v6037, -inf
      %v6079 = vmax.f32 %v6071, %v6078
      %v6080 = vsel %vm1081, %v6038, -inf
      %v6081 = vmax.f32 %v6073, %v6080
      %v6082 = vsel %vm1081, %v6039, -inf
      %v6083 = vmax.f32 %v6075, %v6082
      %v6084 = vsel %vm1081, %v6040, -inf
      %v6085 = vmax.f32 %v6077, %v6084
      %v6086 = vsel %vm1081, %v6041, -inf
      %v6087 = vmax.f32 %v6079, %v6086
      %v6088 = vsel %vm1081, %v6042, -inf
      %v6089 = vmax.f32 %v6081, %v6088
      %v6090 = vsel %vm1081, %v6043, -inf
      %v6091 = vmax.f32 %v6083, %v6090
      %v6092 = vsel %vm1081, %v6044, -inf
      %v6093 = vmax.f32 %v6085, %v6092
      %v6094 = vsel %vm1081, %v6045, -inf
      %v6095 = vmax.f32 %v6087, %v6094
      %v6096 = vsel %vm1081, %v6046, -inf
      %v6097 = vmax.f32 %v6089, %v6096
      %v6098 = vsel %vm1081, %v6047, -inf
      %v6099 = vmax.f32 %v6091, %v6098
      %v6100 = vsel %vm1081, %v6048, -inf
      %v6101 = vmax.f32 %v6093, %v6100
      %v6102 = vsel %vm1081, %v6049, -inf
      %v6103 = vmax.f32 %v6095, %v6102
      %v6104 = vsel %vm1081, %v6050, -inf
      %v6105 = vmax.f32 %v6097, %v6104
      %v6106 = vsel %vm1081, %v6051, -inf
      %v6107 = vmax.f32 %v6099, %v6106
      %v6108 = vsel %vm1081, %v6052, -inf
      %v6109 = vmax.f32 %v6101, %v6108
      %v6110 = vsel %vm1081, %v6053, -inf
      %v6111 = vmax.f32 %v6103, %v6110
      %v6112 = vsel %vm1081, %v6054, -inf
      %v6113 = vmax.f32 %v6105, %v6112
      %v6114 = vsel %vm1081, %v6055, -inf
      %v6115 = vmax.f32 %v6107, %v6114
      %v6116 = vmax.f32 %v6109, %v6111
      %v6117 = vmax.f32 %v6113, %v6115
      %v6118 = vmax.f32 %v6116, %v6117
      %v6119 = vrot.slane %v6118, 4
      %v6120 = vmax.f32 %v6118, %v6119
      %v6121 = vrot.slane %v6120, 2
      %v6122 = vmax.f32 %v6120, %v6121
      %v6123 = vrot.slane %v6122, 1
      %v6124 = vmax.f32 %v6122, %v6123
      %6125 = vset.pattern.permute.xlu0 21
      %6126 = vperm.xlu0 %6125, %v1284
      %v6127 = vpop.permute.xlu0 %6126
      %6128 = vset.pattern.permute.xlu0 21
      %6129 = vperm.xlu0 %6128, %v1285
      %v6130 = vpop.permute.xlu0 %6129
      %6131 = vset.pattern.permute.xlu0 21
      %6132 = vperm.xlu0 %6131, %v1286
      %v6133 = vpop.permute.xlu0 %6132
      %6134 = vset.pattern.permute.xlu0 21
      %6135 = vperm.xlu0 %6134, %v1287
      %v6136 = vpop.permute.xlu0 %6135
      %6137 = vset.pattern.permute.xlu0 21
      %6138 = vperm.xlu0 %6137, %v1288
      %v6139 = vpop.permute.xlu0 %6138
      %6140 = vset.pattern.permute.xlu0 21
      %6141 = vperm.xlu0 %6140, %v1289
      %v6142 = vpop.permute.xlu0 %6141
      %6143 = vset.pattern.permute.xlu0 21
      %6144 = vperm.xlu0 %6143, %v1290
      %v6145 = vpop.permute.xlu0 %6144
      %6146 = vset.pattern.permute.xlu0 21
      %6147 = vperm.xlu0 %6146, %v1291
      %v6148 = vpop.permute.xlu0 %6147
      %6149 = vset.pattern.permute.xlu0 21
      %6150 = vperm.xlu0 %6149, %v1292
      %v6151 = vpop.permute.xlu0 %6150
      %6152 = vset.pattern.permute.xlu0 21
      %6153 = vperm.xlu0 %6152, %v1293
      %v6154 = vpop.permute.xlu0 %6153
      %6155 = vset.pattern.permute.xlu0 21
      %6156 = vperm.xlu0 %6155, %v1294
      %v6157 = vpop.permute.xlu0 %6156
      %6158 = vset.pattern.permute.xlu0 21
      %6159 = vperm.xlu0 %6158, %v1295
      %v6160 = vpop.permute.xlu0 %6159
      %6161 = vset.pattern.permute.xlu0 21
      %6162 = vperm.xlu0 %6161, %v1296
      %v6163 = vpop.permute.xlu0 %6162
      %6164 = vset.pattern.permute.xlu0 21
      %6165 = vperm.xlu0 %6164, %v1297
      %v6166 = vpop.permute.xlu0 %6165
      %6167 = vset.pattern.permute.xlu0 21
      %6168 = vperm.xlu0 %6167, %v1298
      %v6169 = vpop.permute.xlu0 %6168
      %6170 = vset.pattern.permute.xlu0 21
      %6171 = vperm.xlu0 %6170, %v1299
      %v6172 = vpop.permute.xlu0 %6171
      %6173 = vset.pattern.permute.xlu0 21
      %6174 = vperm.xlu0 %6173, %v1300
      %v6175 = vpop.permute.xlu0 %6174
      %6176 = vset.pattern.permute.xlu0 21
      %6177 = vperm.xlu0 %6176, %v1301
      %v6178 = vpop.permute.xlu0 %6177
      %6179 = vset.pattern.permute.xlu0 21
      %6180 = vperm.xlu0 %6179, %v1302
      %v6181 = vpop.permute.xlu0 %6180
      %6182 = vset.pattern.permute.xlu0 21
      %6183 = vperm.xlu0 %6182, %v1303
      %v6184 = vpop.permute.xlu0 %6183
      %6185 = vset.pattern.permute.xlu0 21
      %6186 = vperm.xlu0 %6185, %v1304
      %v6187 = vpop.permute.xlu0 %6186
      %6188 = vset.pattern.permute.xlu0 21
      %6189 = vperm.xlu0 %6188, %v1305
      %v6190 = vpop.permute.xlu0 %6189
      %6191 = vset.pattern.permute.xlu0 21
      %6192 = vperm.xlu0 %6191, %v1306
      %v6193 = vpop.permute.xlu0 %6192
      %6194 = vset.pattern.permute.xlu0 21
      %6195 = vperm.xlu0 %6194, %v1307
      %v6196 = vpop.permute.xlu0 %6195
      %6197 = vset.pattern.permute.xlu0 21
      %6198 = vperm.xlu0 %6197, %v1308
      %v6199 = vpop.permute.xlu0 %6198
      %6200 = vset.pattern.permute.xlu0 21
      %6201 = vperm.xlu0 %6200, %v1309
      %v6202 = vpop.permute.xlu0 %6201
      %6203 = vset.pattern.permute.xlu0 21
      %6204 = vperm.xlu0 %6203, %v1310
      %v6205 = vpop.permute.xlu0 %6204
      %6206 = vset.pattern.permute.xlu0 21
      %6207 = vperm.xlu0 %6206, %v1311
      %v6208 = vpop.permute.xlu0 %6207
      %6209 = vset.pattern.permute.xlu0 21
      %6210 = vperm.xlu0 %6209, %v1312
      %v6211 = vpop.permute.xlu0 %6210
      %6212 = vset.pattern.permute.xlu0 21
      %6213 = vperm.xlu0 %6212, %v1313
      %v6214 = vpop.permute.xlu0 %6213
      %6215 = vset.pattern.permute.xlu0 21
      %6216 = vperm.xlu0 %6215, %v1314
      %v6217 = vpop.permute.xlu0 %6216
      %6218 = vset.pattern.permute.xlu0 21
      %6219 = vperm.xlu0 %6218, %v1315
      %v6220 = vpop.permute.xlu0 %6219
      %vm6221 = vcmp.eq.s32.totalorder %v6127, 1
      %vm6222 = vcmp.eq.s32.totalorder %v6130, 1
      %vm6223 = vcmp.eq.s32.totalorder %v6133, 1
      %vm6224 = vcmp.eq.s32.totalorder %v6136, 1
      %vm6225 = vcmp.eq.s32.totalorder %v6139, 1
      %vm6226 = vcmp.eq.s32.totalorder %v6142, 1
      %vm6227 = vcmp.eq.s32.totalorder %v6145, 1
      %vm6228 = vcmp.eq.s32.totalorder %v6148, 1
      %vm6229 = vcmp.eq.s32.totalorder %v6151, 1
      %vm6230 = vcmp.eq.s32.totalorder %v6154, 1
      %vm6231 = vcmp.eq.s32.totalorder %v6157, 1
      %vm6232 = vcmp.eq.s32.totalorder %v6160, 1
      %vm6233 = vcmp.eq.s32.totalorder %v6163, 1
      %vm6234 = vcmp.eq.s32.totalorder %v6166, 1
      %vm6235 = vcmp.eq.s32.totalorder %v6169, 1
      %vm6236 = vcmp.eq.s32.totalorder %v6172, 1
      %vm6237 = vcmp.eq.s32.totalorder %v6175, 1
      %vm6238 = vcmp.eq.s32.totalorder %v6178, 1
      %vm6239 = vcmp.eq.s32.totalorder %v6181, 1
      %vm6240 = vcmp.eq.s32.totalorder %v6184, 1
      %vm6241 = vcmp.eq.s32.totalorder %v6187, 1
      %vm6242 = vcmp.eq.s32.totalorder %v6190, 1
      %vm6243 = vcmp.eq.s32.totalorder %v6193, 1
      %vm6244 = vcmp.eq.s32.totalorder %v6196, 1
      %vm6245 = vcmp.eq.s32.totalorder %v6199, 1
      %vm6246 = vcmp.eq.s32.totalorder %v6202, 1
      %vm6247 = vcmp.eq.s32.totalorder %v6205, 1
      %vm6248 = vcmp.eq.s32.totalorder %v6208, 1
      %vm6249 = vcmp.eq.s32.totalorder %v6211, 1
      %vm6250 = vcmp.eq.s32.totalorder %v6214, 1
      %vm6251 = vcmp.eq.s32.totalorder %v6217, 1
      %vm6252 = vcmp.eq.s32.totalorder %v6220, 1
      %v6253 = vsel %vm6221, %v1049, 0.0
      %v6254 = vsel %vm6222, %v1050, 0.0
      %v6255 = vsel %vm6223, %v1051, 0.0
      %v6256 = vsel %vm6224, %v1052, 0.0
      %v6257 = vsel %vm6225, %v1053, 0.0
      %v6258 = vsel %vm6226, %v1054, 0.0
      %v6259 = vsel %vm6227, %v1055, 0.0
      %v6260 = vsel %vm6228, %v1056, 0.0
      %v6261 = vsel %vm6229, %v1057, 0.0
      %v6262 = vsel %vm6230, %v1058, 0.0
      %v6263 = vsel %vm6231, %v1059, 0.0
      %v6264 = vsel %vm6232, %v1060, 0.0
      %v6265 = vsel %vm6233, %v1061, 0.0
      %v6266 = vsel %vm6234, %v1062, 0.0
      %v6267 = vsel %vm6235, %v1063, 0.0
      %v6268 = vsel %vm6236, %v1064, 0.0
      %v6269 = vsel %vm6237, %v1065, 0.0
      %v6270 = vsel %vm6238, %v1066, 0.0
      %v6271 = vsel %vm6239, %v1067, 0.0
      %v6272 = vsel %vm6240, %v1068, 0.0
      %v6273 = vsel %vm6241, %v1069, 0.0
      %v6274 = vsel %vm6242, %v1070, 0.0
      %v6275 = vsel %vm6243, %v1071, 0.0
      %v6276 = vsel %vm6244, %v1072, 0.0
      %v6277 = vsel %vm6245, %v1073, 0.0
      %v6278 = vsel %vm6246, %v1074, 0.0
      %v6279 = vsel %vm6247, %v1075, 0.0
      %v6280 = vsel %vm6248, %v1076, 0.0
      %v6281 = vsel %vm6249, %v1077, 0.0
      %v6282 = vsel %vm6250, %v1078, 0.0
      %v6283 = vsel %vm6251, %v1079, 0.0
      %v6284 = vsel %vm6252, %v1080, 0.0
      %v6285 = vsel %vm1081, %v6253, -inf
      %v6286 = vsel %vm1081, %v6254, -inf
      %v6287 = vsel %vm1081, %v6255, -inf
      %v6288 = vsel %vm1081, %v6256, -inf
      %v6289 = vsel %vm1081, %v6257, -inf
      %v6290 = vmax.f32 %v6285, %v6289
      %v6291 = vsel %vm1081, %v6258, -inf
      %v6292 = vmax.f32 %v6286, %v6291
      %v6293 = vsel %vm1081, %v6259, -inf
      %v6294 = vmax.f32 %v6287, %v6293
      %v6295 = vsel %vm1081, %v6260, -inf
      %v6296 = vmax.f32 %v6288, %v6295
      %v6297 = vsel %vm1081, %v6261, -inf
      %v6298 = vmax.f32 %v6290, %v6297
      %v6299 = vsel %vm1081, %v6262, -inf
      %v6300 = vmax.f32 %v6292, %v6299
      %v6301 = vsel %vm1081, %v6263, -inf
      %v6302 = vmax.f32 %v6294, %v6301
      %v6303 = vsel %vm1081, %v6264, -inf
      %v6304 = vmax.f32 %v6296, %v6303
      %v6305 = vsel %vm1081, %v6265, -inf
      %v6306 = vmax.f32 %v6298, %v6305
      %v6307 = vsel %vm1081, %v6266, -inf
      %v6308 = vmax.f32 %v6300, %v6307
      %v6309 = vsel %vm1081, %v6267, -inf
      %v6310 = vmax.f32 %v6302, %v6309
      %v6311 = vsel %vm1081, %v6268, -inf
      %v6312 = vmax.f32 %v6304, %v6311
      %v6313 = vsel %vm1081, %v6269, -inf
      %v6314 = vmax.f32 %v6306, %v6313
      %v6315 = vsel %vm1081, %v6270, -inf
      %v6316 = vmax.f32 %v6308, %v6315
      %v6317 = vsel %vm1081, %v6271, -inf
      %v6318 = vmax.f32 %v6310, %v6317
      %v6319 = vsel %vm1081, %v6272, -inf
      %v6320 = vmax.f32 %v6312, %v6319
      %v6321 = vsel %vm1081, %v6273, -inf
      %v6322 = vmax.f32 %v6314, %v6321
      %v6323 = vsel %vm1081, %v6274, -inf
      %v6324 = vmax.f32 %v6316, %v6323
      %v6325 = vsel %vm1081, %v6275, -inf
      %v6326 = vmax.f32 %v6318, %v6325
      %v6327 = vsel %vm1081, %v6276, -inf
      %v6328 = vmax.f32 %v6320, %v6327
      %v6329 = vsel %vm1081, %v6277, -inf
      %v6330 = vmax.f32 %v6322, %v6329
      %v6331 = vsel %vm1081, %v6278, -inf
      %v6332 = vmax.f32 %v6324, %v6331
      %v6333 = vsel %vm1081, %v6279, -inf
      %v6334 = vmax.f32 %v6326, %v6333
      %v6335 = vsel %vm1081, %v6280, -inf
      %v6336 = vmax.f32 %v6328, %v6335
      %v6337 = vsel %vm1081, %v6281, -inf
      %v6338 = vmax.f32 %v6330, %v6337
      %v6339 = vsel %vm1081, %v6282, -inf
      %v6340 = vmax.f32 %v6332, %v6339
      %v6341 = vsel %vm1081, %v6283, -inf
      %v6342 = vmax.f32 %v6334, %v6341
      %v6343 = vsel %vm1081, %v6284, -inf
      %v6344 = vmax.f32 %v6336, %v6343
      %v6345 = vmax.f32 %v6338, %v6340
      %v6346 = vmax.f32 %v6342, %v6344
      %v6347 = vmax.f32 %v6345, %v6346
      %v6348 = vrot.slane %v6347, 4
      %v6349 = vmax.f32 %v6347, %v6348
      %v6350 = vrot.slane %v6349, 2
      %v6351 = vmax.f32 %v6349, %v6350
      %v6352 = vrot.slane %v6351, 1
      %v6353 = vmax.f32 %v6351, %v6352
      %6354 = vset.pattern.permute.xlu0 22
      %6355 = vperm.xlu0 %6354, %v1284
      %v6356 = vpop.permute.xlu0 %6355
      %6357 = vset.pattern.permute.xlu0 22
      %6358 = vperm.xlu0 %6357, %v1285
      %v6359 = vpop.permute.xlu0 %6358
      %6360 = vset.pattern.permute.xlu0 22
      %6361 = vperm.xlu0 %6360, %v1286
      %v6362 = vpop.permute.xlu0 %6361
      %6363 = vset.pattern.permute.xlu0 22
      %6364 = vperm.xlu0 %6363, %v1287
      %v6365 = vpop.permute.xlu0 %6364
      %6366 = vset.pattern.permute.xlu0 22
      %6367 = vperm.xlu0 %6366, %v1288
      %v6368 = vpop.permute.xlu0 %6367
      %6369 = vset.pattern.permute.xlu0 22
      %6370 = vperm.xlu0 %6369, %v1289
      %v6371 = vpop.permute.xlu0 %6370
      %6372 = vset.pattern.permute.xlu0 22
      %6373 = vperm.xlu0 %6372, %v1290
      %v6374 = vpop.permute.xlu0 %6373
      %6375 = vset.pattern.permute.xlu0 22
      %6376 = vperm.xlu0 %6375, %v1291
      %v6377 = vpop.permute.xlu0 %6376
      %6378 = vset.pattern.permute.xlu0 22
      %6379 = vperm.xlu0 %6378, %v1292
      %v6380 = vpop.permute.xlu0 %6379
      %6381 = vset.pattern.permute.xlu0 22
      %6382 = vperm.xlu0 %6381, %v1293
      %v6383 = vpop.permute.xlu0 %6382
      %6384 = vset.pattern.permute.xlu0 22
      %6385 = vperm.xlu0 %6384, %v1294
      %v6386 = vpop.permute.xlu0 %6385
      %6387 = vset.pattern.permute.xlu0 22
      %6388 = vperm.xlu0 %6387, %v1295
      %v6389 = vpop.permute.xlu0 %6388
      %6390 = vset.pattern.permute.xlu0 22
      %6391 = vperm.xlu0 %6390, %v1296
      %v6392 = vpop.permute.xlu0 %6391
      %6393 = vset.pattern.permute.xlu0 22
      %6394 = vperm.xlu0 %6393, %v1297
      %v6395 = vpop.permute.xlu0 %6394
      %6396 = vset.pattern.permute.xlu0 22
      %6397 = vperm.xlu0 %6396, %v1298
      %v6398 = vpop.permute.xlu0 %6397
      %6399 = vset.pattern.permute.xlu0 22
      %6400 = vperm.xlu0 %6399, %v1299
      %v6401 = vpop.permute.xlu0 %6400
      %6402 = vset.pattern.permute.xlu0 22
      %6403 = vperm.xlu0 %6402, %v1300
      %v6404 = vpop.permute.xlu0 %6403
      %6405 = vset.pattern.permute.xlu0 22
      %6406 = vperm.xlu0 %6405, %v1301
      %v6407 = vpop.permute.xlu0 %6406
      %6408 = vset.pattern.permute.xlu0 22
      %6409 = vperm.xlu0 %6408, %v1302
      %v6410 = vpop.permute.xlu0 %6409
      %6411 = vset.pattern.permute.xlu0 22
      %6412 = vperm.xlu0 %6411, %v1303
      %v6413 = vpop.permute.xlu0 %6412
      %6414 = vset.pattern.permute.xlu0 22
      %6415 = vperm.xlu0 %6414, %v1304
      %v6416 = vpop.permute.xlu0 %6415
      %6417 = vset.pattern.permute.xlu0 22
      %6418 = vperm.xlu0 %6417, %v1305
      %v6419 = vpop.permute.xlu0 %6418
      %6420 = vset.pattern.permute.xlu0 22
      %6421 = vperm.xlu0 %6420, %v1306
      %v6422 = vpop.permute.xlu0 %6421
      %6423 = vset.pattern.permute.xlu0 22
      %6424 = vperm.xlu0 %6423, %v1307
      %v6425 = vpop.permute.xlu0 %6424
      %6426 = vset.pattern.permute.xlu0 22
      %6427 = vperm.xlu0 %6426, %v1308
      %v6428 = vpop.permute.xlu0 %6427
      %6429 = vset.pattern.permute.xlu0 22
      %6430 = vperm.xlu0 %6429, %v1309
      %v6431 = vpop.permute.xlu0 %6430
      %6432 = vset.pattern.permute.xlu0 22
      %6433 = vperm.xlu0 %6432, %v1310
      %v6434 = vpop.permute.xlu0 %6433
      %6435 = vset.pattern.permute.xlu0 22
      %6436 = vperm.xlu0 %6435, %v1311
      %v6437 = vpop.permute.xlu0 %6436
      %6438 = vset.pattern.permute.xlu0 22
      %6439 = vperm.xlu0 %6438, %v1312
      %v6440 = vpop.permute.xlu0 %6439
      %6441 = vset.pattern.permute.xlu0 22
      %6442 = vperm.xlu0 %6441, %v1313
      %v6443 = vpop.permute.xlu0 %6442
      %6444 = vset.pattern.permute.xlu0 22
      %6445 = vperm.xlu0 %6444, %v1314
      %v6446 = vpop.permute.xlu0 %6445
      %6447 = vset.pattern.permute.xlu0 22
      %6448 = vperm.xlu0 %6447, %v1315
      %v6449 = vpop.permute.xlu0 %6448
      %vm6450 = vcmp.eq.s32.totalorder %v6356, 1
      %vm6451 = vcmp.eq.s32.totalorder %v6359, 1
      %vm6452 = vcmp.eq.s32.totalorder %v6362, 1
      %vm6453 = vcmp.eq.s32.totalorder %v6365, 1
      %vm6454 = vcmp.eq.s32.totalorder %v6368, 1
      %vm6455 = vcmp.eq.s32.totalorder %v6371, 1
      %vm6456 = vcmp.eq.s32.totalorder %v6374, 1
      %vm6457 = vcmp.eq.s32.totalorder %v6377, 1
      %vm6458 = vcmp.eq.s32.totalorder %v6380, 1
      %vm6459 = vcmp.eq.s32.totalorder %v6383, 1
      %vm6460 = vcmp.eq.s32.totalorder %v6386, 1
      %vm6461 = vcmp.eq.s32.totalorder %v6389, 1
      %vm6462 = vcmp.eq.s32.totalorder %v6392, 1
      %vm6463 = vcmp.eq.s32.totalorder %v6395, 1
      %vm6464 = vcmp.eq.s32.totalorder %v6398, 1
      %vm6465 = vcmp.eq.s32.totalorder %v6401, 1
      %vm6466 = vcmp.eq.s32.totalorder %v6404, 1
      %vm6467 = vcmp.eq.s32.totalorder %v6407, 1
      %vm6468 = vcmp.eq.s32.totalorder %v6410, 1
      %vm6469 = vcmp.eq.s32.totalorder %v6413, 1
      %vm6470 = vcmp.eq.s32.totalorder %v6416, 1
      %vm6471 = vcmp.eq.s32.totalorder %v6419, 1
      %vm6472 = vcmp.eq.s32.totalorder %v6422, 1
      %vm6473 = vcmp.eq.s32.totalorder %v6425, 1
      %vm6474 = vcmp.eq.s32.totalorder %v6428, 1
      %vm6475 = vcmp.eq.s32.totalorder %v6431, 1
      %vm6476 = vcmp.eq.s32.totalorder %v6434, 1
      %vm6477 = vcmp.eq.s32.totalorder %v6437, 1
      %vm6478 = vcmp.eq.s32.totalorder %v6440, 1
      %vm6479 = vcmp.eq.s32.totalorder %v6443, 1
      %vm6480 = vcmp.eq.s32.totalorder %v6446, 1
      %vm6481 = vcmp.eq.s32.totalorder %v6449, 1
      %v6482 = vsel %vm6450, %v1049, 0.0
      %v6483 = vsel %vm6451, %v1050, 0.0
      %v6484 = vsel %vm6452, %v1051, 0.0
      %v6485 = vsel %vm6453, %v1052, 0.0
      %v6486 = vsel %vm6454, %v1053, 0.0
      %v6487 = vsel %vm6455, %v1054, 0.0
      %v6488 = vsel %vm6456, %v1055, 0.0
      %v6489 = vsel %vm6457, %v1056, 0.0
      %v6490 = vsel %vm6458, %v1057, 0.0
      %v6491 = vsel %vm6459, %v1058, 0.0
      %v6492 = vsel %vm6460, %v1059, 0.0
      %v6493 = vsel %vm6461, %v1060, 0.0
      %v6494 = vsel %vm6462, %v1061, 0.0
      %v6495 = vsel %vm6463, %v1062, 0.0
      %v6496 = vsel %vm6464, %v1063, 0.0
      %v6497 = vsel %vm6465, %v1064, 0.0
      %v6498 = vsel %vm6466, %v1065, 0.0
      %v6499 = vsel %vm6467, %v1066, 0.0
      %v6500 = vsel %vm6468, %v1067, 0.0
      %v6501 = vsel %vm6469, %v1068, 0.0
      %v6502 = vsel %vm6470, %v1069, 0.0
      %v6503 = vsel %vm6471, %v1070, 0.0
      %v6504 = vsel %vm6472, %v1071, 0.0
      %v6505 = vsel %vm6473, %v1072, 0.0
      %v6506 = vsel %vm6474, %v1073, 0.0
      %v6507 = vsel %vm6475, %v1074, 0.0
      %v6508 = vsel %vm6476, %v1075, 0.0
      %v6509 = vsel %vm6477, %v1076, 0.0
      %v6510 = vsel %vm6478, %v1077, 0.0
      %v6511 = vsel %vm6479, %v1078, 0.0
      %v6512 = vsel %vm6480, %v1079, 0.0
      %v6513 = vsel %vm6481, %v1080, 0.0
      %v6514 = vsel %vm1081, %v6482, -inf
      %v6515 = vsel %vm1081, %v6483, -inf
      %v6516 = vsel %vm1081, %v6484, -inf
      %v6517 = vsel %vm1081, %v6485, -inf
      %v6518 = vsel %vm1081, %v6486, -inf
      %v6519 = vmax.f32 %v6514, %v6518
      %v6520 = vsel %vm1081, %v6487, -inf
      %v6521 = vmax.f32 %v6515, %v6520
      %v6522 = vsel %vm1081, %v6488, -inf
      %v6523 = vmax.f32 %v6516, %v6522
      %v6524 = vsel %vm1081, %v6489, -inf
      %v6525 = vmax.f32 %v6517, %v6524
      %v6526 = vsel %vm1081, %v6490, -inf
      %v6527 = vmax.f32 %v6519, %v6526
      %v6528 = vsel %vm1081, %v6491, -inf
      %v6529 = vmax.f32 %v6521, %v6528
      %v6530 = vsel %vm1081, %v6492, -inf
      %v6531 = vmax.f32 %v6523, %v6530
      %v6532 = vsel %vm1081, %v6493, -inf
      %v6533 = vmax.f32 %v6525, %v6532
      %v6534 = vsel %vm1081, %v6494, -inf
      %v6535 = vmax.f32 %v6527, %v6534
      %v6536 = vsel %vm1081, %v6495, -inf
      %v6537 = vmax.f32 %v6529, %v6536
      %v6538 = vsel %vm1081, %v6496, -inf
      %v6539 = vmax.f32 %v6531, %v6538
      %v6540 = vsel %vm1081, %v6497, -inf
      %v6541 = vmax.f32 %v6533, %v6540
      %v6542 = vsel %vm1081, %v6498, -inf
      %v6543 = vmax.f32 %v6535, %v6542
      %v6544 = vsel %vm1081, %v6499, -inf
      %v6545 = vmax.f32 %v6537, %v6544
      %v6546 = vsel %vm1081, %v6500, -inf
      %v6547 = vmax.f32 %v6539, %v6546
      %v6548 = vsel %vm1081, %v6501, -inf
      %v6549 = vmax.f32 %v6541, %v6548
      %v6550 = vsel %vm1081, %v6502, -inf
      %v6551 = vmax.f32 %v6543, %v6550
      %v6552 = vsel %vm1081, %v6503, -inf
      %v6553 = vmax.f32 %v6545, %v6552
      %v6554 = vsel %vm1081, %v6504, -inf
      %v6555 = vmax.f32 %v6547, %v6554
      %v6556 = vsel %vm1081, %v6505, -inf
      %v6557 = vmax.f32 %v6549, %v6556
      %v6558 = vsel %vm1081, %v6506, -inf
      %v6559 = vmax.f32 %v6551, %v6558
      %v6560 = vsel %vm1081, %v6507, -inf
      %v6561 = vmax.f32 %v6553, %v6560
      %v6562 = vsel %vm1081, %v6508, -inf
      %v6563 = vmax.f32 %v6555, %v6562
      %v6564 = vsel %vm1081, %v6509, -inf
      %v6565 = vmax.f32 %v6557, %v6564
      %v6566 = vsel %vm1081, %v6510, -inf
      %v6567 = vmax.f32 %v6559, %v6566
      %v6568 = vsel %vm1081, %v6511, -inf
      %v6569 = vmax.f32 %v6561, %v6568
      %v6570 = vsel %vm1081, %v6512, -inf
      %v6571 = vmax.f32 %v6563, %v6570
      %v6572 = vsel %vm1081, %v6513, -inf
      %v6573 = vmax.f32 %v6565, %v6572
      %v6574 = vmax.f32 %v6567, %v6569
      %v6575 = vmax.f32 %v6571, %v6573
      %v6576 = vmax.f32 %v6574, %v6575
      %v6577 = vrot.slane %v6576, 4
      %v6578 = vmax.f32 %v6576, %v6577
      %v6579 = vrot.slane %v6578, 2
      %v6580 = vmax.f32 %v6578, %v6579
      %v6581 = vrot.slane %v6580, 1
      %v6582 = vmax.f32 %v6580, %v6581
      %6583 = vset.pattern.permute.xlu0 23
      %6584 = vperm.xlu0 %6583, %v1284
      %v6585 = vpop.permute.xlu0 %6584
      %6586 = vset.pattern.permute.xlu0 23
      %6587 = vperm.xlu0 %6586, %v1285
      %v6588 = vpop.permute.xlu0 %6587
      %6589 = vset.pattern.permute.xlu0 23
      %6590 = vperm.xlu0 %6589, %v1286
      %v6591 = vpop.permute.xlu0 %6590
      %6592 = vset.pattern.permute.xlu0 23
      %6593 = vperm.xlu0 %6592, %v1287
      %v6594 = vpop.permute.xlu0 %6593
      %6595 = vset.pattern.permute.xlu0 23
      %6596 = vperm.xlu0 %6595, %v1288
      %v6597 = vpop.permute.xlu0 %6596
      %6598 = vset.pattern.permute.xlu0 23
      %6599 = vperm.xlu0 %6598, %v1289
      %v6600 = vpop.permute.xlu0 %6599
      %6601 = vset.pattern.permute.xlu0 23
      %6602 = vperm.xlu0 %6601, %v1290
      %v6603 = vpop.permute.xlu0 %6602
      %6604 = vset.pattern.permute.xlu0 23
      %6605 = vperm.xlu0 %6604, %v1291
      %v6606 = vpop.permute.xlu0 %6605
      %6607 = vset.pattern.permute.xlu0 23
      %6608 = vperm.xlu0 %6607, %v1292
      %v6609 = vpop.permute.xlu0 %6608
      %6610 = vset.pattern.permute.xlu0 23
      %6611 = vperm.xlu0 %6610, %v1293
      %v6612 = vpop.permute.xlu0 %6611
      %6613 = vset.pattern.permute.xlu0 23
      %6614 = vperm.xlu0 %6613, %v1294
      %v6615 = vpop.permute.xlu0 %6614
      %6616 = vset.pattern.permute.xlu0 23
      %6617 = vperm.xlu0 %6616, %v1295
      %v6618 = vpop.permute.xlu0 %6617
      %6619 = vset.pattern.permute.xlu0 23
      %6620 = vperm.xlu0 %6619, %v1296
      %v6621 = vpop.permute.xlu0 %6620
      %6622 = vset.pattern.permute.xlu0 23
      %6623 = vperm.xlu0 %6622, %v1297
      %v6624 = vpop.permute.xlu0 %6623
      %6625 = vset.pattern.permute.xlu0 23
      %6626 = vperm.xlu0 %6625, %v1298
      %v6627 = vpop.permute.xlu0 %6626
      %6628 = vset.pattern.permute.xlu0 23
      %6629 = vperm.xlu0 %6628, %v1299
      %v6630 = vpop.permute.xlu0 %6629
      %6631 = vset.pattern.permute.xlu0 23
      %6632 = vperm.xlu0 %6631, %v1300
      %v6633 = vpop.permute.xlu0 %6632
      %6634 = vset.pattern.permute.xlu0 23
      %6635 = vperm.xlu0 %6634, %v1301
      %v6636 = vpop.permute.xlu0 %6635
      %6637 = vset.pattern.permute.xlu0 23
      %6638 = vperm.xlu0 %6637, %v1302
      %v6639 = vpop.permute.xlu0 %6638
      %6640 = vset.pattern.permute.xlu0 23
      %6641 = vperm.xlu0 %6640, %v1303
      %v6642 = vpop.permute.xlu0 %6641
      %6643 = vset.pattern.permute.xlu0 23
      %6644 = vperm.xlu0 %6643, %v1304
      %v6645 = vpop.permute.xlu0 %6644
      %6646 = vset.pattern.permute.xlu0 23
      %6647 = vperm.xlu0 %6646, %v1305
      %v6648 = vpop.permute.xlu0 %6647
      %6649 = vset.pattern.permute.xlu0 23
      %6650 = vperm.xlu0 %6649, %v1306
      %v6651 = vpop.permute.xlu0 %6650
      %6652 = vset.pattern.permute.xlu0 23
      %6653 = vperm.xlu0 %6652, %v1307
      %v6654 = vpop.permute.xlu0 %6653
      %6655 = vset.pattern.permute.xlu0 23
      %6656 = vperm.xlu0 %6655, %v1308
      %v6657 = vpop.permute.xlu0 %6656
      %6658 = vset.pattern.permute.xlu0 23
      %6659 = vperm.xlu0 %6658, %v1309
      %v6660 = vpop.permute.xlu0 %6659
      %6661 = vset.pattern.permute.xlu0 23
      %6662 = vperm.xlu0 %6661, %v1310
      %v6663 = vpop.permute.xlu0 %6662
      %6664 = vset.pattern.permute.xlu0 23
      %6665 = vperm.xlu0 %6664, %v1311
      %v6666 = vpop.permute.xlu0 %6665
      %6667 = vset.pattern.permute.xlu0 23
      %6668 = vperm.xlu0 %6667, %v1312
      %v6669 = vpop.permute.xlu0 %6668
      %6670 = vset.pattern.permute.xlu0 23
      %6671 = vperm.xlu0 %6670, %v1313
      %v6672 = vpop.permute.xlu0 %6671
      %6673 = vset.pattern.permute.xlu0 23
      %6674 = vperm.xlu0 %6673, %v1314
      %v6675 = vpop.permute.xlu0 %6674
      %6676 = vset.pattern.permute.xlu0 23
      %6677 = vperm.xlu0 %6676, %v1315
      %v6678 = vpop.permute.xlu0 %6677
      %vm6679 = vcmp.eq.s32.totalorder %v6585, 1
      %vm6680 = vcmp.eq.s32.totalorder %v6588, 1
      %vm6681 = vcmp.eq.s32.totalorder %v6591, 1
      %vm6682 = vcmp.eq.s32.totalorder %v6594, 1
      %vm6683 = vcmp.eq.s32.totalorder %v6597, 1
      %vm6684 = vcmp.eq.s32.totalorder %v6600, 1
      %vm6685 = vcmp.eq.s32.totalorder %v6603, 1
      %vm6686 = vcmp.eq.s32.totalorder %v6606, 1
      %vm6687 = vcmp.eq.s32.totalorder %v6609, 1
      %vm6688 = vcmp.eq.s32.totalorder %v6612, 1
      %vm6689 = vcmp.eq.s32.totalorder %v6615, 1
      %vm6690 = vcmp.eq.s32.totalorder %v6618, 1
      %vm6691 = vcmp.eq.s32.totalorder %v6621, 1
      %vm6692 = vcmp.eq.s32.totalorder %v6624, 1
      %vm6693 = vcmp.eq.s32.totalorder %v6627, 1
      %vm6694 = vcmp.eq.s32.totalorder %v6630, 1
      %vm6695 = vcmp.eq.s32.totalorder %v6633, 1
      %vm6696 = vcmp.eq.s32.totalorder %v6636, 1
      %vm6697 = vcmp.eq.s32.totalorder %v6639, 1
      %vm6698 = vcmp.eq.s32.totalorder %v6642, 1
      %vm6699 = vcmp.eq.s32.totalorder %v6645, 1
      %vm6700 = vcmp.eq.s32.totalorder %v6648, 1
      %vm6701 = vcmp.eq.s32.totalorder %v6651, 1
      %vm6702 = vcmp.eq.s32.totalorder %v6654, 1
      %vm6703 = vcmp.eq.s32.totalorder %v6657, 1
      %vm6704 = vcmp.eq.s32.totalorder %v6660, 1
      %vm6705 = vcmp.eq.s32.totalorder %v6663, 1
      %vm6706 = vcmp.eq.s32.totalorder %v6666, 1
      %vm6707 = vcmp.eq.s32.totalorder %v6669, 1
      %vm6708 = vcmp.eq.s32.totalorder %v6672, 1
      %vm6709 = vcmp.eq.s32.totalorder %v6675, 1
      %vm6710 = vcmp.eq.s32.totalorder %v6678, 1
      %v6711 = vsel %vm6679, %v1049, 0.0
      %v6712 = vsel %vm6680, %v1050, 0.0
      %v6713 = vsel %vm6681, %v1051, 0.0
      %v6714 = vsel %vm6682, %v1052, 0.0
      %v6715 = vsel %vm6683, %v1053, 0.0
      %v6716 = vsel %vm6684, %v1054, 0.0
      %v6717 = vsel %vm6685, %v1055, 0.0
      %v6718 = vsel %vm6686, %v1056, 0.0
      %v6719 = vsel %vm6687, %v1057, 0.0
      %v6720 = vsel %vm6688, %v1058, 0.0
      %v6721 = vsel %vm6689, %v1059, 0.0
      %v6722 = vsel %vm6690, %v1060, 0.0
      %v6723 = vsel %vm6691, %v1061, 0.0
      %v6724 = vsel %vm6692, %v1062, 0.0
      %v6725 = vsel %vm6693, %v1063, 0.0
      %v6726 = vsel %vm6694, %v1064, 0.0
      %v6727 = vsel %vm6695, %v1065, 0.0
      %v6728 = vsel %vm6696, %v1066, 0.0
      %v6729 = vsel %vm6697, %v1067, 0.0
      %v6730 = vsel %vm6698, %v1068, 0.0
      %v6731 = vsel %vm6699, %v1069, 0.0
      %v6732 = vsel %vm6700, %v1070, 0.0
      %v6733 = vsel %vm6701, %v1071, 0.0
      %v6734 = vsel %vm6702, %v1072, 0.0
      %v6735 = vsel %vm6703, %v1073, 0.0
      %v6736 = vsel %vm6704, %v1074, 0.0
      %v6737 = vsel %vm6705, %v1075, 0.0
      %v6738 = vsel %vm6706, %v1076, 0.0
      %v6739 = vsel %vm6707, %v1077, 0.0
      %v6740 = vsel %vm6708, %v1078, 0.0
      %v6741 = vsel %vm6709, %v1079, 0.0
      %v6742 = vsel %vm6710, %v1080, 0.0
      %v6743 = vsel %vm1081, %v6711, -inf
      %v6744 = vsel %vm1081, %v6712, -inf
      %v6745 = vsel %vm1081, %v6713, -inf
      %v6746 = vsel %vm1081, %v6714, -inf
      %v6747 = vsel %vm1081, %v6715, -inf
      %v6748 = vmax.f32 %v6743, %v6747
      %v6749 = vsel %vm1081, %v6716, -inf
      %v6750 = vmax.f32 %v6744, %v6749
      %v6751 = vsel %vm1081, %v6717, -inf
      %v6752 = vmax.f32 %v6745, %v6751
      %v6753 = vsel %vm1081, %v6718, -inf
      %v6754 = vmax.f32 %v6746, %v6753
      %v6755 = vsel %vm1081, %v6719, -inf
      %v6756 = vmax.f32 %v6748, %v6755
      %v6757 = vsel %vm1081, %v6720, -inf
      %v6758 = vmax.f32 %v6750, %v6757
      %v6759 = vsel %vm1081, %v6721, -inf
      %v6760 = vmax.f32 %v6752, %v6759
      %v6761 = vsel %vm1081, %v6722, -inf
      %v6762 = vmax.f32 %v6754, %v6761
      %v6763 = vsel %vm1081, %v6723, -inf
      %v6764 = vmax.f32 %v6756, %v6763
      %v6765 = vsel %vm1081, %v6724, -inf
      %v6766 = vmax.f32 %v6758, %v6765
      %v6767 = vsel %vm1081, %v6725, -inf
      %v6768 = vmax.f32 %v6760, %v6767
      %v6769 = vsel %vm1081, %v6726, -inf
      %v6770 = vmax.f32 %v6762, %v6769
      %v6771 = vsel %vm1081, %v6727, -inf
      %v6772 = vmax.f32 %v6764, %v6771
      %v6773 = vsel %vm1081, %v6728, -inf
      %v6774 = vmax.f32 %v6766, %v6773
      %v6775 = vsel %vm1081, %v6729, -inf
      %v6776 = vmax.f32 %v6768, %v6775
      %v6777 = vsel %vm1081, %v6730, -inf
      %v6778 = vmax.f32 %v6770, %v6777
      %v6779 = vsel %vm1081, %v6731, -inf
      %v6780 = vmax.f32 %v6772, %v6779
      %v6781 = vsel %vm1081, %v6732, -inf
      %v6782 = vmax.f32 %v6774, %v6781
      %v6783 = vsel %vm1081, %v6733, -inf
      %v6784 = vmax.f32 %v6776, %v6783
      %v6785 = vsel %vm1081, %v6734, -inf
      %v6786 = vmax.f32 %v6778, %v6785
      %v6787 = vsel %vm1081, %v6735, -inf
      %v6788 = vmax.f32 %v6780, %v6787
      %v6789 = vsel %vm1081, %v6736, -inf
      %v6790 = vmax.f32 %v6782, %v6789
      %v6791 = vsel %vm1081, %v6737, -inf
      %v6792 = vmax.f32 %v6784, %v6791
      %v6793 = vsel %vm1081, %v6738, -inf
      %v6794 = vmax.f32 %v6786, %v6793
      %v6795 = vsel %vm1081, %v6739, -inf
      %v6796 = vmax.f32 %v6788, %v6795
      %v6797 = vsel %vm1081, %v6740, -inf
      %v6798 = vmax.f32 %v6790, %v6797
      %v6799 = vsel %vm1081, %v6741, -inf
      %v6800 = vmax.f32 %v6792, %v6799
      %v6801 = vsel %vm1081, %v6742, -inf
      %v6802 = vmax.f32 %v6794, %v6801
      %v6803 = vmax.f32 %v6796, %v6798
      %v6804 = vmax.f32 %v6800, %v6802
      %v6805 = vmax.f32 %v6803, %v6804
      %v6806 = vrot.slane %v6805, 4
      %v6807 = vmax.f32 %v6805, %v6806
      %v6808 = vrot.slane %v6807, 2
      %v6809 = vmax.f32 %v6807, %v6808
      %v6810 = vrot.slane %v6809, 1
      %v6811 = vmax.f32 %v6809, %v6810
      %6812 = vset.pattern.permute.xlu0 24
      %6813 = vperm.xlu0 %6812, %v1284
      %v6814 = vpop.permute.xlu0 %6813
      %6815 = vset.pattern.permute.xlu0 24
      %6816 = vperm.xlu0 %6815, %v1285
      %v6817 = vpop.permute.xlu0 %6816
      %6818 = vset.pattern.permute.xlu0 24
      %6819 = vperm.xlu0 %6818, %v1286
      %v6820 = vpop.permute.xlu0 %6819
      %6821 = vset.pattern.permute.xlu0 24
      %6822 = vperm.xlu0 %6821, %v1287
      %v6823 = vpop.permute.xlu0 %6822
      %6824 = vset.pattern.permute.xlu0 24
      %6825 = vperm.xlu0 %6824, %v1288
      %v6826 = vpop.permute.xlu0 %6825
      %6827 = vset.pattern.permute.xlu0 24
      %6828 = vperm.xlu0 %6827, %v1289
      %v6829 = vpop.permute.xlu0 %6828
      %6830 = vset.pattern.permute.xlu0 24
      %6831 = vperm.xlu0 %6830, %v1290
      %v6832 = vpop.permute.xlu0 %6831
      %6833 = vset.pattern.permute.xlu0 24
      %6834 = vperm.xlu0 %6833, %v1291
      %v6835 = vpop.permute.xlu0 %6834
      %6836 = vset.pattern.permute.xlu0 24
      %6837 = vperm.xlu0 %6836, %v1292
      %v6838 = vpop.permute.xlu0 %6837
      %6839 = vset.pattern.permute.xlu0 24
      %6840 = vperm.xlu0 %6839, %v1293
      %v6841 = vpop.permute.xlu0 %6840
      %6842 = vset.pattern.permute.xlu0 24
      %6843 = vperm.xlu0 %6842, %v1294
      %v6844 = vpop.permute.xlu0 %6843
      %6845 = vset.pattern.permute.xlu0 24
      %6846 = vperm.xlu0 %6845, %v1295
      %v6847 = vpop.permute.xlu0 %6846
      %6848 = vset.pattern.permute.xlu0 24
      %6849 = vperm.xlu0 %6848, %v1296
      %v6850 = vpop.permute.xlu0 %6849
      %6851 = vset.pattern.permute.xlu0 24
      %6852 = vperm.xlu0 %6851, %v1297
      %v6853 = vpop.permute.xlu0 %6852
      %6854 = vset.pattern.permute.xlu0 24
      %6855 = vperm.xlu0 %6854, %v1298
      %v6856 = vpop.permute.xlu0 %6855
      %6857 = vset.pattern.permute.xlu0 24
      %6858 = vperm.xlu0 %6857, %v1299
      %v6859 = vpop.permute.xlu0 %6858
      %6860 = vset.pattern.permute.xlu0 24
      %6861 = vperm.xlu0 %6860, %v1300
      %v6862 = vpop.permute.xlu0 %6861
      %6863 = vset.pattern.permute.xlu0 24
      %6864 = vperm.xlu0 %6863, %v1301
      %v6865 = vpop.permute.xlu0 %6864
      %6866 = vset.pattern.permute.xlu0 24
      %6867 = vperm.xlu0 %6866, %v1302
      %v6868 = vpop.permute.xlu0 %6867
      %6869 = vset.pattern.permute.xlu0 24
      %6870 = vperm.xlu0 %6869, %v1303
      %v6871 = vpop.permute.xlu0 %6870
      %6872 = vset.pattern.permute.xlu0 24
      %6873 = vperm.xlu0 %6872, %v1304
      %v6874 = vpop.permute.xlu0 %6873
      %6875 = vset.pattern.permute.xlu0 24
      %6876 = vperm.xlu0 %6875, %v1305
      %v6877 = vpop.permute.xlu0 %6876
      %6878 = vset.pattern.permute.xlu0 24
      %6879 = vperm.xlu0 %6878, %v1306
      %v6880 = vpop.permute.xlu0 %6879
      %6881 = vset.pattern.permute.xlu0 24
      %6882 = vperm.xlu0 %6881, %v1307
      %v6883 = vpop.permute.xlu0 %6882
      %6884 = vset.pattern.permute.xlu0 24
      %6885 = vperm.xlu0 %6884, %v1308
      %v6886 = vpop.permute.xlu0 %6885
      %6887 = vset.pattern.permute.xlu0 24
      %6888 = vperm.xlu0 %6887, %v1309
      %v6889 = vpop.permute.xlu0 %6888
      %6890 = vset.pattern.permute.xlu0 24
      %6891 = vperm.xlu0 %6890, %v1310
      %v6892 = vpop.permute.xlu0 %6891
      %6893 = vset.pattern.permute.xlu0 24
      %6894 = vperm.xlu0 %6893, %v1311
      %v6895 = vpop.permute.xlu0 %6894
      %6896 = vset.pattern.permute.xlu0 24
      %6897 = vperm.xlu0 %6896, %v1312
      %v6898 = vpop.permute.xlu0 %6897
      %6899 = vset.pattern.permute.xlu0 24
      %6900 = vperm.xlu0 %6899, %v1313
      %v6901 = vpop.permute.xlu0 %6900
      %6902 = vset.pattern.permute.xlu0 24
      %6903 = vperm.xlu0 %6902, %v1314
      %v6904 = vpop.permute.xlu0 %6903
      %6905 = vset.pattern.permute.xlu0 24
      %6906 = vperm.xlu0 %6905, %v1315
      %v6907 = vpop.permute.xlu0 %6906
      %vm6908 = vcmp.eq.s32.totalorder %v6814, 1
      %vm6909 = vcmp.eq.s32.totalorder %v6817, 1
      %vm6910 = vcmp.eq.s32.totalorder %v6820, 1
      %vm6911 = vcmp.eq.s32.totalorder %v6823, 1
      %vm6912 = vcmp.eq.s32.totalorder %v6826, 1
      %vm6913 = vcmp.eq.s32.totalorder %v6829, 1
      %vm6914 = vcmp.eq.s32.totalorder %v6832, 1
      %vm6915 = vcmp.eq.s32.totalorder %v6835, 1
      %vm6916 = vcmp.eq.s32.totalorder %v6838, 1
      %vm6917 = vcmp.eq.s32.totalorder %v6841, 1
      %vm6918 = vcmp.eq.s32.totalorder %v6844, 1
      %vm6919 = vcmp.eq.s32.totalorder %v6847, 1
      %vm6920 = vcmp.eq.s32.totalorder %v6850, 1
      %vm6921 = vcmp.eq.s32.totalorder %v6853, 1
      %vm6922 = vcmp.eq.s32.totalorder %v6856, 1
      %vm6923 = vcmp.eq.s32.totalorder %v6859, 1
      %vm6924 = vcmp.eq.s32.totalorder %v6862, 1
      %vm6925 = vcmp.eq.s32.totalorder %v6865, 1
      %vm6926 = vcmp.eq.s32.totalorder %v6868, 1
      %vm6927 = vcmp.eq.s32.totalorder %v6871, 1
      %vm6928 = vcmp.eq.s32.totalorder %v6874, 1
      %vm6929 = vcmp.eq.s32.totalorder %v6877, 1
      %vm6930 = vcmp.eq.s32.totalorder %v6880, 1
      %vm6931 = vcmp.eq.s32.totalorder %v6883, 1
      %vm6932 = vcmp.eq.s32.totalorder %v6886, 1
      %vm6933 = vcmp.eq.s32.totalorder %v6889, 1
      %vm6934 = vcmp.eq.s32.totalorder %v6892, 1
      %vm6935 = vcmp.eq.s32.totalorder %v6895, 1
      %vm6936 = vcmp.eq.s32.totalorder %v6898, 1
      %vm6937 = vcmp.eq.s32.totalorder %v6901, 1
      %vm6938 = vcmp.eq.s32.totalorder %v6904, 1
      %vm6939 = vcmp.eq.s32.totalorder %v6907, 1
      %v6940 = vsel %vm6908, %v1049, 0.0
      %v6941 = vsel %vm6909, %v1050, 0.0
      %v6942 = vsel %vm6910, %v1051, 0.0
      %v6943 = vsel %vm6911, %v1052, 0.0
      %v6944 = vsel %vm6912, %v1053, 0.0
      %v6945 = vsel %vm6913, %v1054, 0.0
      %v6946 = vsel %vm6914, %v1055, 0.0
      %v6947 = vsel %vm6915, %v1056, 0.0
      %v6948 = vsel %vm6916, %v1057, 0.0
      %v6949 = vsel %vm6917, %v1058, 0.0
      %v6950 = vsel %vm6918, %v1059, 0.0
      %v6951 = vsel %vm6919, %v1060, 0.0
      %v6952 = vsel %vm6920, %v1061, 0.0
      %v6953 = vsel %vm6921, %v1062, 0.0
      %v6954 = vsel %vm6922, %v1063, 0.0
      %v6955 = vsel %vm6923, %v1064, 0.0
      %v6956 = vsel %vm6924, %v1065, 0.0
      %v6957 = vsel %vm6925, %v1066, 0.0
      %v6958 = vsel %vm6926, %v1067, 0.0
      %v6959 = vsel %vm6927, %v1068, 0.0
      %v6960 = vsel %vm6928, %v1069, 0.0
      %v6961 = vsel %vm6929, %v1070, 0.0
      %v6962 = vsel %vm6930, %v1071, 0.0
      %v6963 = vsel %vm6931, %v1072, 0.0
      %v6964 = vsel %vm6932, %v1073, 0.0
      %v6965 = vsel %vm6933, %v1074, 0.0
      %v6966 = vsel %vm6934, %v1075, 0.0
      %v6967 = vsel %vm6935, %v1076, 0.0
      %v6968 = vsel %vm6936, %v1077, 0.0
      %v6969 = vsel %vm6937, %v1078, 0.0
      %v6970 = vsel %vm6938, %v1079, 0.0
      %v6971 = vsel %vm6939, %v1080, 0.0
      %v6972 = vsel %vm1081, %v6940, -inf
      %v6973 = vsel %vm1081, %v6941, -inf
      %v6974 = vsel %vm1081, %v6942, -inf
      %v6975 = vsel %vm1081, %v6943, -inf
      %v6976 = vsel %vm1081, %v6944, -inf
      %v6977 = vmax.f32 %v6972, %v6976
      %v6978 = vsel %vm1081, %v6945, -inf
      %v6979 = vmax.f32 %v6973, %v6978
      %v6980 = vsel %vm1081, %v6946, -inf
      %v6981 = vmax.f32 %v6974, %v6980
      %v6982 = vsel %vm1081, %v6947, -inf
      %v6983 = vmax.f32 %v6975, %v6982
      %v6984 = vsel %vm1081, %v6948, -inf
      %v6985 = vmax.f32 %v6977, %v6984
      %v6986 = vsel %vm1081, %v6949, -inf
      %v6987 = vmax.f32 %v6979, %v6986
      %v6988 = vsel %vm1081, %v6950, -inf
      %v6989 = vmax.f32 %v6981, %v6988
      %v6990 = vsel %vm1081, %v6951, -inf
      %v6991 = vmax.f32 %v6983, %v6990
      %v6992 = vsel %vm1081, %v6952, -inf
      %v6993 = vmax.f32 %v6985, %v6992
      %v6994 = vsel %vm1081, %v6953, -inf
      %v6995 = vmax.f32 %v6987, %v6994
      %v6996 = vsel %vm1081, %v6954, -inf
      %v6997 = vmax.f32 %v6989, %v6996
      %v6998 = vsel %vm1081, %v6955, -inf
      %v6999 = vmax.f32 %v6991, %v6998
      %v7000 = vsel %vm1081, %v6956, -inf
      %v7001 = vmax.f32 %v6993, %v7000
      %v7002 = vsel %vm1081, %v6957, -inf
      %v7003 = vmax.f32 %v6995, %v7002
      %v7004 = vsel %vm1081, %v6958, -inf
      %v7005 = vmax.f32 %v6997, %v7004
      %v7006 = vsel %vm1081, %v6959, -inf
      %v7007 = vmax.f32 %v6999, %v7006
      %v7008 = vsel %vm1081, %v6960, -inf
      %v7009 = vmax.f32 %v7001, %v7008
      %v7010 = vsel %vm1081, %v6961, -inf
      %v7011 = vmax.f32 %v7003, %v7010
      %v7012 = vsel %vm1081, %v6962, -inf
      %v7013 = vmax.f32 %v7005, %v7012
      %v7014 = vsel %vm1081, %v6963, -inf
      %v7015 = vmax.f32 %v7007, %v7014
      %v7016 = vsel %vm1081, %v6964, -inf
      %v7017 = vmax.f32 %v7009, %v7016
      %v7018 = vsel %vm1081, %v6965, -inf
      %v7019 = vmax.f32 %v7011, %v7018
      %v7020 = vsel %vm1081, %v6966, -inf
      %v7021 = vmax.f32 %v7013, %v7020
      %v7022 = vsel %vm1081, %v6967, -inf
      %v7023 = vmax.f32 %v7015, %v7022
      %v7024 = vsel %vm1081, %v6968, -inf
      %v7025 = vmax.f32 %v7017, %v7024
      %v7026 = vsel %vm1081, %v6969, -inf
      %v7027 = vmax.f32 %v7019, %v7026
      %v7028 = vsel %vm1081, %v6970, -inf
      %v7029 = vmax.f32 %v7021, %v7028
      %v7030 = vsel %vm1081, %v6971, -inf
      %v7031 = vmax.f32 %v7023, %v7030
      %v7032 = vmax.f32 %v7025, %v7027
      %v7033 = vmax.f32 %v7029, %v7031
      %v7034 = vmax.f32 %v7032, %v7033
      %v7035 = vrot.slane %v7034, 4
      %v7036 = vmax.f32 %v7034, %v7035
      %v7037 = vrot.slane %v7036, 2
      %v7038 = vmax.f32 %v7036, %v7037
      %v7039 = vrot.slane %v7038, 1
      %v7040 = vmax.f32 %v7038, %v7039
      %7041 = vset.pattern.permute.xlu0 25
      %7042 = vperm.xlu0 %7041, %v1284
      %v7043 = vpop.permute.xlu0 %7042
      %7044 = vset.pattern.permute.xlu0 25
      %7045 = vperm.xlu0 %7044, %v1285
      %v7046 = vpop.permute.xlu0 %7045
      %7047 = vset.pattern.permute.xlu0 25
      %7048 = vperm.xlu0 %7047, %v1286
      %v7049 = vpop.permute.xlu0 %7048
      %7050 = vset.pattern.permute.xlu0 25
      %7051 = vperm.xlu0 %7050, %v1287
      %v7052 = vpop.permute.xlu0 %7051
      %7053 = vset.pattern.permute.xlu0 25
      %7054 = vperm.xlu0 %7053, %v1288
      %v7055 = vpop.permute.xlu0 %7054
      %7056 = vset.pattern.permute.xlu0 25
      %7057 = vperm.xlu0 %7056, %v1289
      %v7058 = vpop.permute.xlu0 %7057
      %7059 = vset.pattern.permute.xlu0 25
      %7060 = vperm.xlu0 %7059, %v1290
      %v7061 = vpop.permute.xlu0 %7060
      %7062 = vset.pattern.permute.xlu0 25
      %7063 = vperm.xlu0 %7062, %v1291
      %v7064 = vpop.permute.xlu0 %7063
      %7065 = vset.pattern.permute.xlu0 25
      %7066 = vperm.xlu0 %7065, %v1292
      %v7067 = vpop.permute.xlu0 %7066
      %7068 = vset.pattern.permute.xlu0 25
      %7069 = vperm.xlu0 %7068, %v1293
      %v7070 = vpop.permute.xlu0 %7069
      %7071 = vset.pattern.permute.xlu0 25
      %7072 = vperm.xlu0 %7071, %v1294
      %v7073 = vpop.permute.xlu0 %7072
      %7074 = vset.pattern.permute.xlu0 25
      %7075 = vperm.xlu0 %7074, %v1295
      %v7076 = vpop.permute.xlu0 %7075
      %7077 = vset.pattern.permute.xlu0 25
      %7078 = vperm.xlu0 %7077, %v1296
      %v7079 = vpop.permute.xlu0 %7078
      %7080 = vset.pattern.permute.xlu0 25
      %7081 = vperm.xlu0 %7080, %v1297
      %v7082 = vpop.permute.xlu0 %7081
      %7083 = vset.pattern.permute.xlu0 25
      %7084 = vperm.xlu0 %7083, %v1298
      %v7085 = vpop.permute.xlu0 %7084
      %7086 = vset.pattern.permute.xlu0 25
      %7087 = vperm.xlu0 %7086, %v1299
      %v7088 = vpop.permute.xlu0 %7087
      %7089 = vset.pattern.permute.xlu0 25
      %7090 = vperm.xlu0 %7089, %v1300
      %v7091 = vpop.permute.xlu0 %7090
      %7092 = vset.pattern.permute.xlu0 25
      %7093 = vperm.xlu0 %7092, %v1301
      %v7094 = vpop.permute.xlu0 %7093
      %7095 = vset.pattern.permute.xlu0 25
      %7096 = vperm.xlu0 %7095, %v1302
      %v7097 = vpop.permute.xlu0 %7096
      %7098 = vset.pattern.permute.xlu0 25
      %7099 = vperm.xlu0 %7098, %v1303
      %v7100 = vpop.permute.xlu0 %7099
      %7101 = vset.pattern.permute.xlu0 25
      %7102 = vperm.xlu0 %7101, %v1304
      %v7103 = vpop.permute.xlu0 %7102
      %7104 = vset.pattern.permute.xlu0 25
      %7105 = vperm.xlu0 %7104, %v1305
      %v7106 = vpop.permute.xlu0 %7105
      %7107 = vset.pattern.permute.xlu0 25
      %7108 = vperm.xlu0 %7107, %v1306
      %v7109 = vpop.permute.xlu0 %7108
      %7110 = vset.pattern.permute.xlu0 25
      %7111 = vperm.xlu0 %7110, %v1307
      %v7112 = vpop.permute.xlu0 %7111
      %7113 = vset.pattern.permute.xlu0 25
      %7114 = vperm.xlu0 %7113, %v1308
      %v7115 = vpop.permute.xlu0 %7114
      %7116 = vset.pattern.permute.xlu0 25
      %7117 = vperm.xlu0 %7116, %v1309
      %v7118 = vpop.permute.xlu0 %7117
      %7119 = vset.pattern.permute.xlu0 25
      %7120 = vperm.xlu0 %7119, %v1310
      %v7121 = vpop.permute.xlu0 %7120
      %7122 = vset.pattern.permute.xlu0 25
      %7123 = vperm.xlu0 %7122, %v1311
      %v7124 = vpop.permute.xlu0 %7123
      %7125 = vset.pattern.permute.xlu0 25
      %7126 = vperm.xlu0 %7125, %v1312
      %v7127 = vpop.permute.xlu0 %7126
      %7128 = vset.pattern.permute.xlu0 25
      %7129 = vperm.xlu0 %7128, %v1313
      %v7130 = vpop.permute.xlu0 %7129
      %7131 = vset.pattern.permute.xlu0 25
      %7132 = vperm.xlu0 %7131, %v1314
      %v7133 = vpop.permute.xlu0 %7132
      %7134 = vset.pattern.permute.xlu0 25
      %7135 = vperm.xlu0 %7134, %v1315
      %v7136 = vpop.permute.xlu0 %7135
      %vm7137 = vcmp.eq.s32.totalorder %v7043, 1
      %vm7138 = vcmp.eq.s32.totalorder %v7046, 1
      %vm7139 = vcmp.eq.s32.totalorder %v7049, 1
      %vm7140 = vcmp.eq.s32.totalorder %v7052, 1
      %vm7141 = vcmp.eq.s32.totalorder %v7055, 1
      %vm7142 = vcmp.eq.s32.totalorder %v7058, 1
      %vm7143 = vcmp.eq.s32.totalorder %v7061, 1
      %vm7144 = vcmp.eq.s32.totalorder %v7064, 1
      %vm7145 = vcmp.eq.s32.totalorder %v7067, 1
      %vm7146 = vcmp.eq.s32.totalorder %v7070, 1
      %vm7147 = vcmp.eq.s32.totalorder %v7073, 1
      %vm7148 = vcmp.eq.s32.totalorder %v7076, 1
      %vm7149 = vcmp.eq.s32.totalorder %v7079, 1
      %vm7150 = vcmp.eq.s32.totalorder %v7082, 1
      %vm7151 = vcmp.eq.s32.totalorder %v7085, 1
      %vm7152 = vcmp.eq.s32.totalorder %v7088, 1
      %vm7153 = vcmp.eq.s32.totalorder %v7091, 1
      %vm7154 = vcmp.eq.s32.totalorder %v7094, 1
      %vm7155 = vcmp.eq.s32.totalorder %v7097, 1
      %vm7156 = vcmp.eq.s32.totalorder %v7100, 1
      %vm7157 = vcmp.eq.s32.totalorder %v7103, 1
      %vm7158 = vcmp.eq.s32.totalorder %v7106, 1
      %vm7159 = vcmp.eq.s32.totalorder %v7109, 1
      %vm7160 = vcmp.eq.s32.totalorder %v7112, 1
      %vm7161 = vcmp.eq.s32.totalorder %v7115, 1
      %vm7162 = vcmp.eq.s32.totalorder %v7118, 1
      %vm7163 = vcmp.eq.s32.totalorder %v7121, 1
      %vm7164 = vcmp.eq.s32.totalorder %v7124, 1
      %vm7165 = vcmp.eq.s32.totalorder %v7127, 1
      %vm7166 = vcmp.eq.s32.totalorder %v7130, 1
      %vm7167 = vcmp.eq.s32.totalorder %v7133, 1
      %vm7168 = vcmp.eq.s32.totalorder %v7136, 1
      %v7169 = vsel %vm7137, %v1049, 0.0
      %v7170 = vsel %vm7138, %v1050, 0.0
      %v7171 = vsel %vm7139, %v1051, 0.0
      %v7172 = vsel %vm7140, %v1052, 0.0
      %v7173 = vsel %vm7141, %v1053, 0.0
      %v7174 = vsel %vm7142, %v1054, 0.0
      %v7175 = vsel %vm7143, %v1055, 0.0
      %v7176 = vsel %vm7144, %v1056, 0.0
      %v7177 = vsel %vm7145, %v1057, 0.0
      %v7178 = vsel %vm7146, %v1058, 0.0
      %v7179 = vsel %vm7147, %v1059, 0.0
      %v7180 = vsel %vm7148, %v1060, 0.0
      %v7181 = vsel %vm7149, %v1061, 0.0
      %v7182 = vsel %vm7150, %v1062, 0.0
      %v7183 = vsel %vm7151, %v1063, 0.0
      %v7184 = vsel %vm7152, %v1064, 0.0
      %v7185 = vsel %vm7153, %v1065, 0.0
      %v7186 = vsel %vm7154, %v1066, 0.0
      %v7187 = vsel %vm7155, %v1067, 0.0
      %v7188 = vsel %vm7156, %v1068, 0.0
      %v7189 = vsel %vm7157, %v1069, 0.0
      %v7190 = vsel %vm7158, %v1070, 0.0
      %v7191 = vsel %vm7159, %v1071, 0.0
      %v7192 = vsel %vm7160, %v1072, 0.0
      %v7193 = vsel %vm7161, %v1073, 0.0
      %v7194 = vsel %vm7162, %v1074, 0.0
      %v7195 = vsel %vm7163, %v1075, 0.0
      %v7196 = vsel %vm7164, %v1076, 0.0
      %v7197 = vsel %vm7165, %v1077, 0.0
      %v7198 = vsel %vm7166, %v1078, 0.0
      %v7199 = vsel %vm7167, %v1079, 0.0
      %v7200 = vsel %vm7168, %v1080, 0.0
      %v7201 = vsel %vm1081, %v7169, -inf
      %v7202 = vsel %vm1081, %v7170, -inf
      %v7203 = vsel %vm1081, %v7171, -inf
      %v7204 = vsel %vm1081, %v7172, -inf
      %v7205 = vsel %vm1081, %v7173, -inf
      %v7206 = vmax.f32 %v7201, %v7205
      %v7207 = vsel %vm1081, %v7174, -inf
      %v7208 = vmax.f32 %v7202, %v7207
      %v7209 = vsel %vm1081, %v7175, -inf
      %v7210 = vmax.f32 %v7203, %v7209
      %v7211 = vsel %vm1081, %v7176, -inf
      %v7212 = vmax.f32 %v7204, %v7211
      %v7213 = vsel %vm1081, %v7177, -inf
      %v7214 = vmax.f32 %v7206, %v7213
      %v7215 = vsel %vm1081, %v7178, -inf
      %v7216 = vmax.f32 %v7208, %v7215
      %v7217 = vsel %vm1081, %v7179, -inf
      %v7218 = vmax.f32 %v7210, %v7217
      %v7219 = vsel %vm1081, %v7180, -inf
      %v7220 = vmax.f32 %v7212, %v7219
      %v7221 = vsel %vm1081, %v7181, -inf
      %v7222 = vmax.f32 %v7214, %v7221
      %v7223 = vsel %vm1081, %v7182, -inf
      %v7224 = vmax.f32 %v7216, %v7223
      %v7225 = vsel %vm1081, %v7183, -inf
      %v7226 = vmax.f32 %v7218, %v7225
      %v7227 = vsel %vm1081, %v7184, -inf
      %v7228 = vmax.f32 %v7220, %v7227
      %v7229 = vsel %vm1081, %v7185, -inf
      %v7230 = vmax.f32 %v7222, %v7229
      %v7231 = vsel %vm1081, %v7186, -inf
      %v7232 = vmax.f32 %v7224, %v7231
      %v7233 = vsel %vm1081, %v7187, -inf
      %v7234 = vmax.f32 %v7226, %v7233
      %v7235 = vsel %vm1081, %v7188, -inf
      %v7236 = vmax.f32 %v7228, %v7235
      %v7237 = vsel %vm1081, %v7189, -inf
      %v7238 = vmax.f32 %v7230, %v7237
      %v7239 = vsel %vm1081, %v7190, -inf
      %v7240 = vmax.f32 %v7232, %v7239
      %v7241 = vsel %vm1081, %v7191, -inf
      %v7242 = vmax.f32 %v7234, %v7241
      %v7243 = vsel %vm1081, %v7192, -inf
      %v7244 = vmax.f32 %v7236, %v7243
      %v7245 = vsel %vm1081, %v7193, -inf
      %v7246 = vmax.f32 %v7238, %v7245
      %v7247 = vsel %vm1081, %v7194, -inf
      %v7248 = vmax.f32 %v7240, %v7247
      %v7249 = vsel %vm1081, %v7195, -inf
      %v7250 = vmax.f32 %v7242, %v7249
      %v7251 = vsel %vm1081, %v7196, -inf
      %v7252 = vmax.f32 %v7244, %v7251
      %v7253 = vsel %vm1081, %v7197, -inf
      %v7254 = vmax.f32 %v7246, %v7253
      %v7255 = vsel %vm1081, %v7198, -inf
      %v7256 = vmax.f32 %v7248, %v7255
      %v7257 = vsel %vm1081, %v7199, -inf
      %v7258 = vmax.f32 %v7250, %v7257
      %v7259 = vsel %vm1081, %v7200, -inf
      %v7260 = vmax.f32 %v7252, %v7259
      %v7261 = vmax.f32 %v7254, %v7256
      %v7262 = vmax.f32 %v7258, %v7260
      %v7263 = vmax.f32 %v7261, %v7262
      %v7264 = vrot.slane %v7263, 4
      %v7265 = vmax.f32 %v7263, %v7264
      %v7266 = vrot.slane %v7265, 2
      %v7267 = vmax.f32 %v7265, %v7266
      %v7268 = vrot.slane %v7267, 1
      %v7269 = vmax.f32 %v7267, %v7268
      %7270 = vset.pattern.permute.xlu0 26
      %7271 = vperm.xlu0 %7270, %v1284
      %v7272 = vpop.permute.xlu0 %7271
      %7273 = vset.pattern.permute.xlu0 26
      %7274 = vperm.xlu0 %7273, %v1285
      %v7275 = vpop.permute.xlu0 %7274
      %7276 = vset.pattern.permute.xlu0 26
      %7277 = vperm.xlu0 %7276, %v1286
      %v7278 = vpop.permute.xlu0 %7277
      %7279 = vset.pattern.permute.xlu0 26
      %7280 = vperm.xlu0 %7279, %v1287
      %v7281 = vpop.permute.xlu0 %7280
      %7282 = vset.pattern.permute.xlu0 26
      %7283 = vperm.xlu0 %7282, %v1288
      %v7284 = vpop.permute.xlu0 %7283
      %7285 = vset.pattern.permute.xlu0 26
      %7286 = vperm.xlu0 %7285, %v1289
      %v7287 = vpop.permute.xlu0 %7286
      %7288 = vset.pattern.permute.xlu0 26
      %7289 = vperm.xlu0 %7288, %v1290
      %v7290 = vpop.permute.xlu0 %7289
      %7291 = vset.pattern.permute.xlu0 26
      %7292 = vperm.xlu0 %7291, %v1291
      %v7293 = vpop.permute.xlu0 %7292
      %7294 = vset.pattern.permute.xlu0 26
      %7295 = vperm.xlu0 %7294, %v1292
      %v7296 = vpop.permute.xlu0 %7295
      %7297 = vset.pattern.permute.xlu0 26
      %7298 = vperm.xlu0 %7297, %v1293
      %v7299 = vpop.permute.xlu0 %7298
      %7300 = vset.pattern.permute.xlu0 26
      %7301 = vperm.xlu0 %7300, %v1294
      %v7302 = vpop.permute.xlu0 %7301
      %7303 = vset.pattern.permute.xlu0 26
      %7304 = vperm.xlu0 %7303, %v1295
      %v7305 = vpop.permute.xlu0 %7304
      %7306 = vset.pattern.permute.xlu0 26
      %7307 = vperm.xlu0 %7306, %v1296
      %v7308 = vpop.permute.xlu0 %7307
      %7309 = vset.pattern.permute.xlu0 26
      %7310 = vperm.xlu0 %7309, %v1297
      %v7311 = vpop.permute.xlu0 %7310
      %7312 = vset.pattern.permute.xlu0 26
      %7313 = vperm.xlu0 %7312, %v1298
      %v7314 = vpop.permute.xlu0 %7313
      %7315 = vset.pattern.permute.xlu0 26
      %7316 = vperm.xlu0 %7315, %v1299
      %v7317 = vpop.permute.xlu0 %7316
      %7318 = vset.pattern.permute.xlu0 26
      %7319 = vperm.xlu0 %7318, %v1300
      %v7320 = vpop.permute.xlu0 %7319
      %7321 = vset.pattern.permute.xlu0 26
      %7322 = vperm.xlu0 %7321, %v1301
      %v7323 = vpop.permute.xlu0 %7322
      %7324 = vset.pattern.permute.xlu0 26
      %7325 = vperm.xlu0 %7324, %v1302
      %v7326 = vpop.permute.xlu0 %7325
      %7327 = vset.pattern.permute.xlu0 26
      %7328 = vperm.xlu0 %7327, %v1303
      %v7329 = vpop.permute.xlu0 %7328
      %7330 = vset.pattern.permute.xlu0 26
      %7331 = vperm.xlu0 %7330, %v1304
      %v7332 = vpop.permute.xlu0 %7331
      %7333 = vset.pattern.permute.xlu0 26
      %7334 = vperm.xlu0 %7333, %v1305
      %v7335 = vpop.permute.xlu0 %7334
      %7336 = vset.pattern.permute.xlu0 26
      %7337 = vperm.xlu0 %7336, %v1306
      %v7338 = vpop.permute.xlu0 %7337
      %7339 = vset.pattern.permute.xlu0 26
      %7340 = vperm.xlu0 %7339, %v1307
      %v7341 = vpop.permute.xlu0 %7340
      %7342 = vset.pattern.permute.xlu0 26
      %7343 = vperm.xlu0 %7342, %v1308
      %v7344 = vpop.permute.xlu0 %7343
      %7345 = vset.pattern.permute.xlu0 26
      %7346 = vperm.xlu0 %7345, %v1309
      %v7347 = vpop.permute.xlu0 %7346
      %7348 = vset.pattern.permute.xlu0 26
      %7349 = vperm.xlu0 %7348, %v1310
      %v7350 = vpop.permute.xlu0 %7349
      %7351 = vset.pattern.permute.xlu0 26
      %7352 = vperm.xlu0 %7351, %v1311
      %v7353 = vpop.permute.xlu0 %7352
      %7354 = vset.pattern.permute.xlu0 26
      %7355 = vperm.xlu0 %7354, %v1312
      %v7356 = vpop.permute.xlu0 %7355
      %7357 = vset.pattern.permute.xlu0 26
      %7358 = vperm.xlu0 %7357, %v1313
      %v7359 = vpop.permute.xlu0 %7358
      %7360 = vset.pattern.permute.xlu0 26
      %7361 = vperm.xlu0 %7360, %v1314
      %v7362 = vpop.permute.xlu0 %7361
      %7363 = vset.pattern.permute.xlu0 26
      %7364 = vperm.xlu0 %7363, %v1315
      %v7365 = vpop.permute.xlu0 %7364
      %vm7366 = vcmp.eq.s32.totalorder %v7272, 1
      %vm7367 = vcmp.eq.s32.totalorder %v7275, 1
      %vm7368 = vcmp.eq.s32.totalorder %v7278, 1
      %vm7369 = vcmp.eq.s32.totalorder %v7281, 1
      %vm7370 = vcmp.eq.s32.totalorder %v7284, 1
      %vm7371 = vcmp.eq.s32.totalorder %v7287, 1
      %vm7372 = vcmp.eq.s32.totalorder %v7290, 1
      %vm7373 = vcmp.eq.s32.totalorder %v7293, 1
      %vm7374 = vcmp.eq.s32.totalorder %v7296, 1
      %vm7375 = vcmp.eq.s32.totalorder %v7299, 1
      %vm7376 = vcmp.eq.s32.totalorder %v7302, 1
      %vm7377 = vcmp.eq.s32.totalorder %v7305, 1
      %vm7378 = vcmp.eq.s32.totalorder %v7308, 1
      %vm7379 = vcmp.eq.s32.totalorder %v7311, 1
      %vm7380 = vcmp.eq.s32.totalorder %v7314, 1
      %vm7381 = vcmp.eq.s32.totalorder %v7317, 1
      %vm7382 = vcmp.eq.s32.totalorder %v7320, 1
      %vm7383 = vcmp.eq.s32.totalorder %v7323, 1
      %vm7384 = vcmp.eq.s32.totalorder %v7326, 1
      %vm7385 = vcmp.eq.s32.totalorder %v7329, 1
      %vm7386 = vcmp.eq.s32.totalorder %v7332, 1
      %vm7387 = vcmp.eq.s32.totalorder %v7335, 1
      %vm7388 = vcmp.eq.s32.totalorder %v7338, 1
      %vm7389 = vcmp.eq.s32.totalorder %v7341, 1
      %vm7390 = vcmp.eq.s32.totalorder %v7344, 1
      %vm7391 = vcmp.eq.s32.totalorder %v7347, 1
      %vm7392 = vcmp.eq.s32.totalorder %v7350, 1
      %vm7393 = vcmp.eq.s32.totalorder %v7353, 1
      %vm7394 = vcmp.eq.s32.totalorder %v7356, 1
      %vm7395 = vcmp.eq.s32.totalorder %v7359, 1
      %vm7396 = vcmp.eq.s32.totalorder %v7362, 1
      %vm7397 = vcmp.eq.s32.totalorder %v7365, 1
      %v7398 = vsel %vm7366, %v1049, 0.0
      %v7399 = vsel %vm7367, %v1050, 0.0
      %v7400 = vsel %vm7368, %v1051, 0.0
      %v7401 = vsel %vm7369, %v1052, 0.0
      %v7402 = vsel %vm7370, %v1053, 0.0
      %v7403 = vsel %vm7371, %v1054, 0.0
      %v7404 = vsel %vm7372, %v1055, 0.0
      %v7405 = vsel %vm7373, %v1056, 0.0
      %v7406 = vsel %vm7374, %v1057, 0.0
      %v7407 = vsel %vm7375, %v1058, 0.0
      %v7408 = vsel %vm7376, %v1059, 0.0
      %v7409 = vsel %vm7377, %v1060, 0.0
      %v7410 = vsel %vm7378, %v1061, 0.0
      %v7411 = vsel %vm7379, %v1062, 0.0
      %v7412 = vsel %vm7380, %v1063, 0.0
      %v7413 = vsel %vm7381, %v1064, 0.0
      %v7414 = vsel %vm7382, %v1065, 0.0
      %v7415 = vsel %vm7383, %v1066, 0.0
      %v7416 = vsel %vm7384, %v1067, 0.0
      %v7417 = vsel %vm7385, %v1068, 0.0
      %v7418 = vsel %vm7386, %v1069, 0.0
      %v7419 = vsel %vm7387, %v1070, 0.0
      %v7420 = vsel %vm7388, %v1071, 0.0
      %v7421 = vsel %vm7389, %v1072, 0.0
      %v7422 = vsel %vm7390, %v1073, 0.0
      %v7423 = vsel %vm7391, %v1074, 0.0
      %v7424 = vsel %vm7392, %v1075, 0.0
      %v7425 = vsel %vm7393, %v1076, 0.0
      %v7426 = vsel %vm7394, %v1077, 0.0
      %v7427 = vsel %vm7395, %v1078, 0.0
      %v7428 = vsel %vm7396, %v1079, 0.0
      %v7429 = vsel %vm7397, %v1080, 0.0
      %v7430 = vsel %vm1081, %v7398, -inf
      %v7431 = vsel %vm1081, %v7399, -inf
      %v7432 = vsel %vm1081, %v7400, -inf
      %v7433 = vsel %vm1081, %v7401, -inf
      %v7434 = vsel %vm1081, %v7402, -inf
      %v7435 = vmax.f32 %v7430, %v7434
      %v7436 = vsel %vm1081, %v7403, -inf
      %v7437 = vmax.f32 %v7431, %v7436
      %v7438 = vsel %vm1081, %v7404, -inf
      %v7439 = vmax.f32 %v7432, %v7438
      %v7440 = vsel %vm1081, %v7405, -inf
      %v7441 = vmax.f32 %v7433, %v7440
      %v7442 = vsel %vm1081, %v7406, -inf
      %v7443 = vmax.f32 %v7435, %v7442
      %v7444 = vsel %vm1081, %v7407, -inf
      %v7445 = vmax.f32 %v7437, %v7444
      %v7446 = vsel %vm1081, %v7408, -inf
      %v7447 = vmax.f32 %v7439, %v7446
      %v7448 = vsel %vm1081, %v7409, -inf
      %v7449 = vmax.f32 %v7441, %v7448
      %v7450 = vsel %vm1081, %v7410, -inf
      %v7451 = vmax.f32 %v7443, %v7450
      %v7452 = vsel %vm1081, %v7411, -inf
      %v7453 = vmax.f32 %v7445, %v7452
      %v7454 = vsel %vm1081, %v7412, -inf
      %v7455 = vmax.f32 %v7447, %v7454
      %v7456 = vsel %vm1081, %v7413, -inf
      %v7457 = vmax.f32 %v7449, %v7456
      %v7458 = vsel %vm1081, %v7414, -inf
      %v7459 = vmax.f32 %v7451, %v7458
      %v7460 = vsel %vm1081, %v7415, -inf
      %v7461 = vmax.f32 %v7453, %v7460
      %v7462 = vsel %vm1081, %v7416, -inf
      %v7463 = vmax.f32 %v7455, %v7462
      %v7464 = vsel %vm1081, %v7417, -inf
      %v7465 = vmax.f32 %v7457, %v7464
      %v7466 = vsel %vm1081, %v7418, -inf
      %v7467 = vmax.f32 %v7459, %v7466
      %v7468 = vsel %vm1081, %v7419, -inf
      %v7469 = vmax.f32 %v7461, %v7468
      %v7470 = vsel %vm1081, %v7420, -inf
      %v7471 = vmax.f32 %v7463, %v7470
      %v7472 = vsel %vm1081, %v7421, -inf
      %v7473 = vmax.f32 %v7465, %v7472
      %v7474 = vsel %vm1081, %v7422, -inf
      %v7475 = vmax.f32 %v7467, %v7474
      %v7476 = vsel %vm1081, %v7423, -inf
      %v7477 = vmax.f32 %v7469, %v7476
      %v7478 = vsel %vm1081, %v7424, -inf
      %v7479 = vmax.f32 %v7471, %v7478
      %v7480 = vsel %vm1081, %v7425, -inf
      %v7481 = vmax.f32 %v7473, %v7480
      %v7482 = vsel %vm1081, %v7426, -inf
      %v7483 = vmax.f32 %v7475, %v7482
      %v7484 = vsel %vm1081, %v7427, -inf
      %v7485 = vmax.f32 %v7477, %v7484
      %v7486 = vsel %vm1081, %v7428, -inf
      %v7487 = vmax.f32 %v7479, %v7486
      %v7488 = vsel %vm1081, %v7429, -inf
      %v7489 = vmax.f32 %v7481, %v7488
      %v7490 = vmax.f32 %v7483, %v7485
      %v7491 = vmax.f32 %v7487, %v7489
      %v7492 = vmax.f32 %v7490, %v7491
      %v7493 = vrot.slane %v7492, 4
      %v7494 = vmax.f32 %v7492, %v7493
      %v7495 = vrot.slane %v7494, 2
      %v7496 = vmax.f32 %v7494, %v7495
      %v7497 = vrot.slane %v7496, 1
      %v7498 = vmax.f32 %v7496, %v7497
      %7499 = vset.pattern.permute.xlu0 27
      %7500 = vperm.xlu0 %7499, %v1284
      %v7501 = vpop.permute.xlu0 %7500
      %7502 = vset.pattern.permute.xlu0 27
      %7503 = vperm.xlu0 %7502, %v1285
      %v7504 = vpop.permute.xlu0 %7503
      %7505 = vset.pattern.permute.xlu0 27
      %7506 = vperm.xlu0 %7505, %v1286
      %v7507 = vpop.permute.xlu0 %7506
      %7508 = vset.pattern.permute.xlu0 27
      %7509 = vperm.xlu0 %7508, %v1287
      %v7510 = vpop.permute.xlu0 %7509
      %7511 = vset.pattern.permute.xlu0 27
      %7512 = vperm.xlu0 %7511, %v1288
      %v7513 = vpop.permute.xlu0 %7512
      %7514 = vset.pattern.permute.xlu0 27
      %7515 = vperm.xlu0 %7514, %v1289
      %v7516 = vpop.permute.xlu0 %7515
      %7517 = vset.pattern.permute.xlu0 27
      %7518 = vperm.xlu0 %7517, %v1290
      %v7519 = vpop.permute.xlu0 %7518
      %7520 = vset.pattern.permute.xlu0 27
      %7521 = vperm.xlu0 %7520, %v1291
      %v7522 = vpop.permute.xlu0 %7521
      %7523 = vset.pattern.permute.xlu0 27
      %7524 = vperm.xlu0 %7523, %v1292
      %v7525 = vpop.permute.xlu0 %7524
      %7526 = vset.pattern.permute.xlu0 27
      %7527 = vperm.xlu0 %7526, %v1293
      %v7528 = vpop.permute.xlu0 %7527
      %7529 = vset.pattern.permute.xlu0 27
      %7530 = vperm.xlu0 %7529, %v1294
      %v7531 = vpop.permute.xlu0 %7530
      %7532 = vset.pattern.permute.xlu0 27
      %7533 = vperm.xlu0 %7532, %v1295
      %v7534 = vpop.permute.xlu0 %7533
      %7535 = vset.pattern.permute.xlu0 27
      %7536 = vperm.xlu0 %7535, %v1296
      %v7537 = vpop.permute.xlu0 %7536
      %7538 = vset.pattern.permute.xlu0 27
      %7539 = vperm.xlu0 %7538, %v1297
      %v7540 = vpop.permute.xlu0 %7539
      %7541 = vset.pattern.permute.xlu0 27
      %7542 = vperm.xlu0 %7541, %v1298
      %v7543 = vpop.permute.xlu0 %7542
      %7544 = vset.pattern.permute.xlu0 27
      %7545 = vperm.xlu0 %7544, %v1299
      %v7546 = vpop.permute.xlu0 %7545
      %7547 = vset.pattern.permute.xlu0 27
      %7548 = vperm.xlu0 %7547, %v1300
      %v7549 = vpop.permute.xlu0 %7548
      %7550 = vset.pattern.permute.xlu0 27
      %7551 = vperm.xlu0 %7550, %v1301
      %v7552 = vpop.permute.xlu0 %7551
      %7553 = vset.pattern.permute.xlu0 27
      %7554 = vperm.xlu0 %7553, %v1302
      %v7555 = vpop.permute.xlu0 %7554
      %7556 = vset.pattern.permute.xlu0 27
      %7557 = vperm.xlu0 %7556, %v1303
      %v7558 = vpop.permute.xlu0 %7557
      %7559 = vset.pattern.permute.xlu0 27
      %7560 = vperm.xlu0 %7559, %v1304
      %v7561 = vpop.permute.xlu0 %7560
      %7562 = vset.pattern.permute.xlu0 27
      %7563 = vperm.xlu0 %7562, %v1305
      %v7564 = vpop.permute.xlu0 %7563
      %7565 = vset.pattern.permute.xlu0 27
      %7566 = vperm.xlu0 %7565, %v1306
      %v7567 = vpop.permute.xlu0 %7566
      %7568 = vset.pattern.permute.xlu0 27
      %7569 = vperm.xlu0 %7568, %v1307
      %v7570 = vpop.permute.xlu0 %7569
      %7571 = vset.pattern.permute.xlu0 27
      %7572 = vperm.xlu0 %7571, %v1308
      %v7573 = vpop.permute.xlu0 %7572
      %7574 = vset.pattern.permute.xlu0 27
      %7575 = vperm.xlu0 %7574, %v1309
      %v7576 = vpop.permute.xlu0 %7575
      %7577 = vset.pattern.permute.xlu0 27
      %7578 = vperm.xlu0 %7577, %v1310
      %v7579 = vpop.permute.xlu0 %7578
      %7580 = vset.pattern.permute.xlu0 27
      %7581 = vperm.xlu0 %7580, %v1311
      %v7582 = vpop.permute.xlu0 %7581
      %7583 = vset.pattern.permute.xlu0 27
      %7584 = vperm.xlu0 %7583, %v1312
      %v7585 = vpop.permute.xlu0 %7584
      %7586 = vset.pattern.permute.xlu0 27
      %7587 = vperm.xlu0 %7586, %v1313
      %v7588 = vpop.permute.xlu0 %7587
      %7589 = vset.pattern.permute.xlu0 27
      %7590 = vperm.xlu0 %7589, %v1314
      %v7591 = vpop.permute.xlu0 %7590
      %7592 = vset.pattern.permute.xlu0 27
      %7593 = vperm.xlu0 %7592, %v1315
      %v7594 = vpop.permute.xlu0 %7593
      %vm7595 = vcmp.eq.s32.totalorder %v7501, 1
      %vm7596 = vcmp.eq.s32.totalorder %v7504, 1
      %vm7597 = vcmp.eq.s32.totalorder %v7507, 1
      %vm7598 = vcmp.eq.s32.totalorder %v7510, 1
      %vm7599 = vcmp.eq.s32.totalorder %v7513, 1
      %vm7600 = vcmp.eq.s32.totalorder %v7516, 1
      %vm7601 = vcmp.eq.s32.totalorder %v7519, 1
      %vm7602 = vcmp.eq.s32.totalorder %v7522, 1
      %vm7603 = vcmp.eq.s32.totalorder %v7525, 1
      %vm7604 = vcmp.eq.s32.totalorder %v7528, 1
      %vm7605 = vcmp.eq.s32.totalorder %v7531, 1
      %vm7606 = vcmp.eq.s32.totalorder %v7534, 1
      %vm7607 = vcmp.eq.s32.totalorder %v7537, 1
      %vm7608 = vcmp.eq.s32.totalorder %v7540, 1
      %vm7609 = vcmp.eq.s32.totalorder %v7543, 1
      %vm7610 = vcmp.eq.s32.totalorder %v7546, 1
      %vm7611 = vcmp.eq.s32.totalorder %v7549, 1
      %vm7612 = vcmp.eq.s32.totalorder %v7552, 1
      %vm7613 = vcmp.eq.s32.totalorder %v7555, 1
      %vm7614 = vcmp.eq.s32.totalorder %v7558, 1
      %vm7615 = vcmp.eq.s32.totalorder %v7561, 1
      %vm7616 = vcmp.eq.s32.totalorder %v7564, 1
      %vm7617 = vcmp.eq.s32.totalorder %v7567, 1
      %vm7618 = vcmp.eq.s32.totalorder %v7570, 1
      %vm7619 = vcmp.eq.s32.totalorder %v7573, 1
      %vm7620 = vcmp.eq.s32.totalorder %v7576, 1
      %vm7621 = vcmp.eq.s32.totalorder %v7579, 1
      %vm7622 = vcmp.eq.s32.totalorder %v7582, 1
      %vm7623 = vcmp.eq.s32.totalorder %v7585, 1
      %vm7624 = vcmp.eq.s32.totalorder %v7588, 1
      %vm7625 = vcmp.eq.s32.totalorder %v7591, 1
      %vm7626 = vcmp.eq.s32.totalorder %v7594, 1
      %v7627 = vsel %vm7595, %v1049, 0.0
      %v7628 = vsel %vm7596, %v1050, 0.0
      %v7629 = vsel %vm7597, %v1051, 0.0
      %v7630 = vsel %vm7598, %v1052, 0.0
      %v7631 = vsel %vm7599, %v1053, 0.0
      %v7632 = vsel %vm7600, %v1054, 0.0
      %v7633 = vsel %vm7601, %v1055, 0.0
      %v7634 = vsel %vm7602, %v1056, 0.0
      %v7635 = vsel %vm7603, %v1057, 0.0
      %v7636 = vsel %vm7604, %v1058, 0.0
      %v7637 = vsel %vm7605, %v1059, 0.0
      %v7638 = vsel %vm7606, %v1060, 0.0
      %v7639 = vsel %vm7607, %v1061, 0.0
      %v7640 = vsel %vm7608, %v1062, 0.0
      %v7641 = vsel %vm7609, %v1063, 0.0
      %v7642 = vsel %vm7610, %v1064, 0.0
      %v7643 = vsel %vm7611, %v1065, 0.0
      %v7644 = vsel %vm7612, %v1066, 0.0
      %v7645 = vsel %vm7613, %v1067, 0.0
      %v7646 = vsel %vm7614, %v1068, 0.0
      %v7647 = vsel %vm7615, %v1069, 0.0
      %v7648 = vsel %vm7616, %v1070, 0.0
      %v7649 = vsel %vm7617, %v1071, 0.0
      %v7650 = vsel %vm7618, %v1072, 0.0
      %v7651 = vsel %vm7619, %v1073, 0.0
      %v7652 = vsel %vm7620, %v1074, 0.0
      %v7653 = vsel %vm7621, %v1075, 0.0
      %v7654 = vsel %vm7622, %v1076, 0.0
      %v7655 = vsel %vm7623, %v1077, 0.0
      %v7656 = vsel %vm7624, %v1078, 0.0
      %v7657 = vsel %vm7625, %v1079, 0.0
      %v7658 = vsel %vm7626, %v1080, 0.0
      %v7659 = vsel %vm1081, %v7627, -inf
      %v7660 = vsel %vm1081, %v7628, -inf
      %v7661 = vsel %vm1081, %v7629, -inf
      %v7662 = vsel %vm1081, %v7630, -inf
      %v7663 = vsel %vm1081, %v7631, -inf
      %v7664 = vmax.f32 %v7659, %v7663
      %v7665 = vsel %vm1081, %v7632, -inf
      %v7666 = vmax.f32 %v7660, %v7665
      %v7667 = vsel %vm1081, %v7633, -inf
      %v7668 = vmax.f32 %v7661, %v7667
      %v7669 = vsel %vm1081, %v7634, -inf
      %v7670 = vmax.f32 %v7662, %v7669
      %v7671 = vsel %vm1081, %v7635, -inf
      %v7672 = vmax.f32 %v7664, %v7671
      %v7673 = vsel %vm1081, %v7636, -inf
      %v7674 = vmax.f32 %v7666, %v7673
      %v7675 = vsel %vm1081, %v7637, -inf
      %v7676 = vmax.f32 %v7668, %v7675
      %v7677 = vsel %vm1081, %v7638, -inf
      %v7678 = vmax.f32 %v7670, %v7677
      %v7679 = vsel %vm1081, %v7639, -inf
      %v7680 = vmax.f32 %v7672, %v7679
      %v7681 = vsel %vm1081, %v7640, -inf
      %v7682 = vmax.f32 %v7674, %v7681
      %v7683 = vsel %vm1081, %v7641, -inf
      %v7684 = vmax.f32 %v7676, %v7683
      %v7685 = vsel %vm1081, %v7642, -inf
      %v7686 = vmax.f32 %v7678, %v7685
      %v7687 = vsel %vm1081, %v7643, -inf
      %v7688 = vmax.f32 %v7680, %v7687
      %v7689 = vsel %vm1081, %v7644, -inf
      %v7690 = vmax.f32 %v7682, %v7689
      %v7691 = vsel %vm1081, %v7645, -inf
      %v7692 = vmax.f32 %v7684, %v7691
      %v7693 = vsel %vm1081, %v7646, -inf
      %v7694 = vmax.f32 %v7686, %v7693
      %v7695 = vsel %vm1081, %v7647, -inf
      %v7696 = vmax.f32 %v7688, %v7695
      %v7697 = vsel %vm1081, %v7648, -inf
      %v7698 = vmax.f32 %v7690, %v7697
      %v7699 = vsel %vm1081, %v7649, -inf
      %v7700 = vmax.f32 %v7692, %v7699
      %v7701 = vsel %vm1081, %v7650, -inf
      %v7702 = vmax.f32 %v7694, %v7701
      %v7703 = vsel %vm1081, %v7651, -inf
      %v7704 = vmax.f32 %v7696, %v7703
      %v7705 = vsel %vm1081, %v7652, -inf
      %v7706 = vmax.f32 %v7698, %v7705
      %v7707 = vsel %vm1081, %v7653, -inf
      %v7708 = vmax.f32 %v7700, %v7707
      %v7709 = vsel %vm1081, %v7654, -inf
      %v7710 = vmax.f32 %v7702, %v7709
      %v7711 = vsel %vm1081, %v7655, -inf
      %v7712 = vmax.f32 %v7704, %v7711
      %v7713 = vsel %vm1081, %v7656, -inf
      %v7714 = vmax.f32 %v7706, %v7713
      %v7715 = vsel %vm1081, %v7657, -inf
      %v7716 = vmax.f32 %v7708, %v7715
      %v7717 = vsel %vm1081, %v7658, -inf
      %v7718 = vmax.f32 %v7710, %v7717
      %v7719 = vmax.f32 %v7712, %v7714
      %v7720 = vmax.f32 %v7716, %v7718
      %v7721 = vmax.f32 %v7719, %v7720
      %v7722 = vrot.slane %v7721, 4
      %v7723 = vmax.f32 %v7721, %v7722
      %v7724 = vrot.slane %v7723, 2
      %v7725 = vmax.f32 %v7723, %v7724
      %v7726 = vrot.slane %v7725, 1
      %v7727 = vmax.f32 %v7725, %v7726
      %7728 = vset.pattern.permute.xlu0 28
      %7729 = vperm.xlu0 %7728, %v1284
      %v7730 = vpop.permute.xlu0 %7729
      %7731 = vset.pattern.permute.xlu0 28
      %7732 = vperm.xlu0 %7731, %v1285
      %v7733 = vpop.permute.xlu0 %7732
      %7734 = vset.pattern.permute.xlu0 28
      %7735 = vperm.xlu0 %7734, %v1286
      %v7736 = vpop.permute.xlu0 %7735
      %7737 = vset.pattern.permute.xlu0 28
      %7738 = vperm.xlu0 %7737, %v1287
      %v7739 = vpop.permute.xlu0 %7738
      %7740 = vset.pattern.permute.xlu0 28
      %7741 = vperm.xlu0 %7740, %v1288
      %v7742 = vpop.permute.xlu0 %7741
      %7743 = vset.pattern.permute.xlu0 28
      %7744 = vperm.xlu0 %7743, %v1289
      %v7745 = vpop.permute.xlu0 %7744
      %7746 = vset.pattern.permute.xlu0 28
      %7747 = vperm.xlu0 %7746, %v1290
      %v7748 = vpop.permute.xlu0 %7747
      %7749 = vset.pattern.permute.xlu0 28
      %7750 = vperm.xlu0 %7749, %v1291
      %v7751 = vpop.permute.xlu0 %7750
      %7752 = vset.pattern.permute.xlu0 28
      %7753 = vperm.xlu0 %7752, %v1292
      %v7754 = vpop.permute.xlu0 %7753
      %7755 = vset.pattern.permute.xlu0 28
      %7756 = vperm.xlu0 %7755, %v1293
      %v7757 = vpop.permute.xlu0 %7756
      %7758 = vset.pattern.permute.xlu0 28
      %7759 = vperm.xlu0 %7758, %v1294
      %v7760 = vpop.permute.xlu0 %7759
      %7761 = vset.pattern.permute.xlu0 28
      %7762 = vperm.xlu0 %7761, %v1295
      %v7763 = vpop.permute.xlu0 %7762
      %7764 = vset.pattern.permute.xlu0 28
      %7765 = vperm.xlu0 %7764, %v1296
      %v7766 = vpop.permute.xlu0 %7765
      %7767 = vset.pattern.permute.xlu0 28
      %7768 = vperm.xlu0 %7767, %v1297
      %v7769 = vpop.permute.xlu0 %7768
      %7770 = vset.pattern.permute.xlu0 28
      %7771 = vperm.xlu0 %7770, %v1298
      %v7772 = vpop.permute.xlu0 %7771
      %7773 = vset.pattern.permute.xlu0 28
      %7774 = vperm.xlu0 %7773, %v1299
      %v7775 = vpop.permute.xlu0 %7774
      %7776 = vset.pattern.permute.xlu0 28
      %7777 = vperm.xlu0 %7776, %v1300
      %v7778 = vpop.permute.xlu0 %7777
      %7779 = vset.pattern.permute.xlu0 28
      %7780 = vperm.xlu0 %7779, %v1301
      %v7781 = vpop.permute.xlu0 %7780
      %7782 = vset.pattern.permute.xlu0 28
      %7783 = vperm.xlu0 %7782, %v1302
      %v7784 = vpop.permute.xlu0 %7783
      %7785 = vset.pattern.permute.xlu0 28
      %7786 = vperm.xlu0 %7785, %v1303
      %v7787 = vpop.permute.xlu0 %7786
      %7788 = vset.pattern.permute.xlu0 28
      %7789 = vperm.xlu0 %7788, %v1304
      %v7790 = vpop.permute.xlu0 %7789
      %7791 = vset.pattern.permute.xlu0 28
      %7792 = vperm.xlu0 %7791, %v1305
      %v7793 = vpop.permute.xlu0 %7792
      %7794 = vset.pattern.permute.xlu0 28
      %7795 = vperm.xlu0 %7794, %v1306
      %v7796 = vpop.permute.xlu0 %7795
      %7797 = vset.pattern.permute.xlu0 28
      %7798 = vperm.xlu0 %7797, %v1307
      %v7799 = vpop.permute.xlu0 %7798
      %7800 = vset.pattern.permute.xlu0 28
      %7801 = vperm.xlu0 %7800, %v1308
      %v7802 = vpop.permute.xlu0 %7801
      %7803 = vset.pattern.permute.xlu0 28
      %7804 = vperm.xlu0 %7803, %v1309
      %v7805 = vpop.permute.xlu0 %7804
      %7806 = vset.pattern.permute.xlu0 28
      %7807 = vperm.xlu0 %7806, %v1310
      %v7808 = vpop.permute.xlu0 %7807
      %7809 = vset.pattern.permute.xlu0 28
      %7810 = vperm.xlu0 %7809, %v1311
      %v7811 = vpop.permute.xlu0 %7810
      %7812 = vset.pattern.permute.xlu0 28
      %7813 = vperm.xlu0 %7812, %v1312
      %v7814 = vpop.permute.xlu0 %7813
      %7815 = vset.pattern.permute.xlu0 28
      %7816 = vperm.xlu0 %7815, %v1313
      %v7817 = vpop.permute.xlu0 %7816
      %7818 = vset.pattern.permute.xlu0 28
      %7819 = vperm.xlu0 %7818, %v1314
      %v7820 = vpop.permute.xlu0 %7819
      %7821 = vset.pattern.permute.xlu0 28
      %7822 = vperm.xlu0 %7821, %v1315
      %v7823 = vpop.permute.xlu0 %7822
      %vm7824 = vcmp.eq.s32.totalorder %v7730, 1
      %vm7825 = vcmp.eq.s32.totalorder %v7733, 1
      %vm7826 = vcmp.eq.s32.totalorder %v7736, 1
      %vm7827 = vcmp.eq.s32.totalorder %v7739, 1
      %vm7828 = vcmp.eq.s32.totalorder %v7742, 1
      %vm7829 = vcmp.eq.s32.totalorder %v7745, 1
      %vm7830 = vcmp.eq.s32.totalorder %v7748, 1
      %vm7831 = vcmp.eq.s32.totalorder %v7751, 1
      %vm7832 = vcmp.eq.s32.totalorder %v7754, 1
      %vm7833 = vcmp.eq.s32.totalorder %v7757, 1
      %vm7834 = vcmp.eq.s32.totalorder %v7760, 1
      %vm7835 = vcmp.eq.s32.totalorder %v7763, 1
      %vm7836 = vcmp.eq.s32.totalorder %v7766, 1
      %vm7837 = vcmp.eq.s32.totalorder %v7769, 1
      %vm7838 = vcmp.eq.s32.totalorder %v7772, 1
      %vm7839 = vcmp.eq.s32.totalorder %v7775, 1
      %vm7840 = vcmp.eq.s32.totalorder %v7778, 1
      %vm7841 = vcmp.eq.s32.totalorder %v7781, 1
      %vm7842 = vcmp.eq.s32.totalorder %v7784, 1
      %vm7843 = vcmp.eq.s32.totalorder %v7787, 1
      %vm7844 = vcmp.eq.s32.totalorder %v7790, 1
      %vm7845 = vcmp.eq.s32.totalorder %v7793, 1
      %vm7846 = vcmp.eq.s32.totalorder %v7796, 1
      %vm7847 = vcmp.eq.s32.totalorder %v7799, 1
      %vm7848 = vcmp.eq.s32.totalorder %v7802, 1
      %vm7849 = vcmp.eq.s32.totalorder %v7805, 1
      %vm7850 = vcmp.eq.s32.totalorder %v7808, 1
      %vm7851 = vcmp.eq.s32.totalorder %v7811, 1
      %vm7852 = vcmp.eq.s32.totalorder %v7814, 1
      %vm7853 = vcmp.eq.s32.totalorder %v7817, 1
      %vm7854 = vcmp.eq.s32.totalorder %v7820, 1
      %vm7855 = vcmp.eq.s32.totalorder %v7823, 1
      %v7856 = vsel %vm7824, %v1049, 0.0
      %v7857 = vsel %vm7825, %v1050, 0.0
      %v7858 = vsel %vm7826, %v1051, 0.0
      %v7859 = vsel %vm7827, %v1052, 0.0
      %v7860 = vsel %vm7828, %v1053, 0.0
      %v7861 = vsel %vm7829, %v1054, 0.0
      %v7862 = vsel %vm7830, %v1055, 0.0
      %v7863 = vsel %vm7831, %v1056, 0.0
      %v7864 = vsel %vm7832, %v1057, 0.0
      %v7865 = vsel %vm7833, %v1058, 0.0
      %v7866 = vsel %vm7834, %v1059, 0.0
      %v7867 = vsel %vm7835, %v1060, 0.0
      %v7868 = vsel %vm7836, %v1061, 0.0
      %v7869 = vsel %vm7837, %v1062, 0.0
      %v7870 = vsel %vm7838, %v1063, 0.0
      %v7871 = vsel %vm7839, %v1064, 0.0
      %v7872 = vsel %vm7840, %v1065, 0.0
      %v7873 = vsel %vm7841, %v1066, 0.0
      %v7874 = vsel %vm7842, %v1067, 0.0
      %v7875 = vsel %vm7843, %v1068, 0.0
      %v7876 = vsel %vm7844, %v1069, 0.0
      %v7877 = vsel %vm7845, %v1070, 0.0
      %v7878 = vsel %vm7846, %v1071, 0.0
      %v7879 = vsel %vm7847, %v1072, 0.0
      %v7880 = vsel %vm7848, %v1073, 0.0
      %v7881 = vsel %vm7849, %v1074, 0.0
      %v7882 = vsel %vm7850, %v1075, 0.0
      %v7883 = vsel %vm7851, %v1076, 0.0
      %v7884 = vsel %vm7852, %v1077, 0.0
      %v7885 = vsel %vm7853, %v1078, 0.0
      %v7886 = vsel %vm7854, %v1079, 0.0
      %v7887 = vsel %vm7855, %v1080, 0.0
      %v7888 = vsel %vm1081, %v7856, -inf
      %v7889 = vsel %vm1081, %v7857, -inf
      %v7890 = vsel %vm1081, %v7858, -inf
      %v7891 = vsel %vm1081, %v7859, -inf
      %v7892 = vsel %vm1081, %v7860, -inf
      %v7893 = vmax.f32 %v7888, %v7892
      %v7894 = vsel %vm1081, %v7861, -inf
      %v7895 = vmax.f32 %v7889, %v7894
      %v7896 = vsel %vm1081, %v7862, -inf
      %v7897 = vmax.f32 %v7890, %v7896
      %v7898 = vsel %vm1081, %v7863, -inf
      %v7899 = vmax.f32 %v7891, %v7898
      %v7900 = vsel %vm1081, %v7864, -inf
      %v7901 = vmax.f32 %v7893, %v7900
      %v7902 = vsel %vm1081, %v7865, -inf
      %v7903 = vmax.f32 %v7895, %v7902
      %v7904 = vsel %vm1081, %v7866, -inf
      %v7905 = vmax.f32 %v7897, %v7904
      %v7906 = vsel %vm1081, %v7867, -inf
      %v7907 = vmax.f32 %v7899, %v7906
      %v7908 = vsel %vm1081, %v7868, -inf
      %v7909 = vmax.f32 %v7901, %v7908
      %v7910 = vsel %vm1081, %v7869, -inf
      %v7911 = vmax.f32 %v7903, %v7910
      %v7912 = vsel %vm1081, %v7870, -inf
      %v7913 = vmax.f32 %v7905, %v7912
      %v7914 = vsel %vm1081, %v7871, -inf
      %v7915 = vmax.f32 %v7907, %v7914
      %v7916 = vsel %vm1081, %v7872, -inf
      %v7917 = vmax.f32 %v7909, %v7916
      %v7918 = vsel %vm1081, %v7873, -inf
      %v7919 = vmax.f32 %v7911, %v7918
      %v7920 = vsel %vm1081, %v7874, -inf
      %v7921 = vmax.f32 %v7913, %v7920
      %v7922 = vsel %vm1081, %v7875, -inf
      %v7923 = vmax.f32 %v7915, %v7922
      %v7924 = vsel %vm1081, %v7876, -inf
      %v7925 = vmax.f32 %v7917, %v7924
      %v7926 = vsel %vm1081, %v7877, -inf
      %v7927 = vmax.f32 %v7919, %v7926
      %v7928 = vsel %vm1081, %v7878, -inf
      %v7929 = vmax.f32 %v7921, %v7928
      %v7930 = vsel %vm1081, %v7879, -inf
      %v7931 = vmax.f32 %v7923, %v7930
      %v7932 = vsel %vm1081, %v7880, -inf
      %v7933 = vmax.f32 %v7925, %v7932
      %v7934 = vsel %vm1081, %v7881, -inf
      %v7935 = vmax.f32 %v7927, %v7934
      %v7936 = vsel %vm1081, %v7882, -inf
      %v7937 = vmax.f32 %v7929, %v7936
      %v7938 = vsel %vm1081, %v7883, -inf
      %v7939 = vmax.f32 %v7931, %v7938
      %v7940 = vsel %vm1081, %v7884, -inf
      %v7941 = vmax.f32 %v7933, %v7940
      %v7942 = vsel %vm1081, %v7885, -inf
      %v7943 = vmax.f32 %v7935, %v7942
      %v7944 = vsel %vm1081, %v7886, -inf
      %v7945 = vmax.f32 %v7937, %v7944
      %v7946 = vsel %vm1081, %v7887, -inf
      %v7947 = vmax.f32 %v7939, %v7946
      %v7948 = vmax.f32 %v7941, %v7943
      %v7949 = vmax.f32 %v7945, %v7947
      %v7950 = vmax.f32 %v7948, %v7949
      %v7951 = vrot.slane %v7950, 4
      %v7952 = vmax.f32 %v7950, %v7951
      %v7953 = vrot.slane %v7952, 2
      %v7954 = vmax.f32 %v7952, %v7953
      %v7955 = vrot.slane %v7954, 1
      %v7956 = vmax.f32 %v7954, %v7955
      %7957 = vset.pattern.permute.xlu0 29
      %7958 = vperm.xlu0 %7957, %v1284
      %v7959 = vpop.permute.xlu0 %7958
      %7960 = vset.pattern.permute.xlu0 29
      %7961 = vperm.xlu0 %7960, %v1285
      %v7962 = vpop.permute.xlu0 %7961
      %7963 = vset.pattern.permute.xlu0 29
      %7964 = vperm.xlu0 %7963, %v1286
      %v7965 = vpop.permute.xlu0 %7964
      %7966 = vset.pattern.permute.xlu0 29
      %7967 = vperm.xlu0 %7966, %v1287
      %v7968 = vpop.permute.xlu0 %7967
      %7969 = vset.pattern.permute.xlu0 29
      %7970 = vperm.xlu0 %7969, %v1288
      %v7971 = vpop.permute.xlu0 %7970
      %7972 = vset.pattern.permute.xlu0 29
      %7973 = vperm.xlu0 %7972, %v1289
      %v7974 = vpop.permute.xlu0 %7973
      %7975 = vset.pattern.permute.xlu0 29
      %7976 = vperm.xlu0 %7975, %v1290
      %v7977 = vpop.permute.xlu0 %7976
      %7978 = vset.pattern.permute.xlu0 29
      %7979 = vperm.xlu0 %7978, %v1291
      %v7980 = vpop.permute.xlu0 %7979
      %7981 = vset.pattern.permute.xlu0 29
      %7982 = vperm.xlu0 %7981, %v1292
      %v7983 = vpop.permute.xlu0 %7982
      %7984 = vset.pattern.permute.xlu0 29
      %7985 = vperm.xlu0 %7984, %v1293
      %v7986 = vpop.permute.xlu0 %7985
      %7987 = vset.pattern.permute.xlu0 29
      %7988 = vperm.xlu0 %7987, %v1294
      %v7989 = vpop.permute.xlu0 %7988
      %7990 = vset.pattern.permute.xlu0 29
      %7991 = vperm.xlu0 %7990, %v1295
      %v7992 = vpop.permute.xlu0 %7991
      %7993 = vset.pattern.permute.xlu0 29
      %7994 = vperm.xlu0 %7993, %v1296
      %v7995 = vpop.permute.xlu0 %7994
      %7996 = vset.pattern.permute.xlu0 29
      %7997 = vperm.xlu0 %7996, %v1297
      %v7998 = vpop.permute.xlu0 %7997
      %7999 = vset.pattern.permute.xlu0 29
      %8000 = vperm.xlu0 %7999, %v1298
      %v8001 = vpop.permute.xlu0 %8000
      %8002 = vset.pattern.permute.xlu0 29
      %8003 = vperm.xlu0 %8002, %v1299
      %v8004 = vpop.permute.xlu0 %8003
      %8005 = vset.pattern.permute.xlu0 29
      %8006 = vperm.xlu0 %8005, %v1300
      %v8007 = vpop.permute.xlu0 %8006
      %8008 = vset.pattern.permute.xlu0 29
      %8009 = vperm.xlu0 %8008, %v1301
      %v8010 = vpop.permute.xlu0 %8009
      %8011 = vset.pattern.permute.xlu0 29
      %8012 = vperm.xlu0 %8011, %v1302
      %v8013 = vpop.permute.xlu0 %8012
      %8014 = vset.pattern.permute.xlu0 29
      %8015 = vperm.xlu0 %8014, %v1303
      %v8016 = vpop.permute.xlu0 %8015
      %8017 = vset.pattern.permute.xlu0 29
      %8018 = vperm.xlu0 %8017, %v1304
      %v8019 = vpop.permute.xlu0 %8018
      %8020 = vset.pattern.permute.xlu0 29
      %8021 = vperm.xlu0 %8020, %v1305
      %v8022 = vpop.permute.xlu0 %8021
      %8023 = vset.pattern.permute.xlu0 29
      %8024 = vperm.xlu0 %8023, %v1306
      %v8025 = vpop.permute.xlu0 %8024
      %8026 = vset.pattern.permute.xlu0 29
      %8027 = vperm.xlu0 %8026, %v1307
      %v8028 = vpop.permute.xlu0 %8027
      %8029 = vset.pattern.permute.xlu0 29
      %8030 = vperm.xlu0 %8029, %v1308
      %v8031 = vpop.permute.xlu0 %8030
      %8032 = vset.pattern.permute.xlu0 29
      %8033 = vperm.xlu0 %8032, %v1309
      %v8034 = vpop.permute.xlu0 %8033
      %8035 = vset.pattern.permute.xlu0 29
      %8036 = vperm.xlu0 %8035, %v1310
      %v8037 = vpop.permute.xlu0 %8036
      %8038 = vset.pattern.permute.xlu0 29
      %8039 = vperm.xlu0 %8038, %v1311
      %v8040 = vpop.permute.xlu0 %8039
      %8041 = vset.pattern.permute.xlu0 29
      %8042 = vperm.xlu0 %8041, %v1312
      %v8043 = vpop.permute.xlu0 %8042
      %8044 = vset.pattern.permute.xlu0 29
      %8045 = vperm.xlu0 %8044, %v1313
      %v8046 = vpop.permute.xlu0 %8045
      %8047 = vset.pattern.permute.xlu0 29
      %8048 = vperm.xlu0 %8047, %v1314
      %v8049 = vpop.permute.xlu0 %8048
      %8050 = vset.pattern.permute.xlu0 29
      %8051 = vperm.xlu0 %8050, %v1315
      %v8052 = vpop.permute.xlu0 %8051
      %vm8053 = vcmp.eq.s32.totalorder %v7959, 1
      %vm8054 = vcmp.eq.s32.totalorder %v7962, 1
      %vm8055 = vcmp.eq.s32.totalorder %v7965, 1
      %vm8056 = vcmp.eq.s32.totalorder %v7968, 1
      %vm8057 = vcmp.eq.s32.totalorder %v7971, 1
      %vm8058 = vcmp.eq.s32.totalorder %v7974, 1
      %vm8059 = vcmp.eq.s32.totalorder %v7977, 1
      %vm8060 = vcmp.eq.s32.totalorder %v7980, 1
      %vm8061 = vcmp.eq.s32.totalorder %v7983, 1
      %vm8062 = vcmp.eq.s32.totalorder %v7986, 1
      %vm8063 = vcmp.eq.s32.totalorder %v7989, 1
      %vm8064 = vcmp.eq.s32.totalorder %v7992, 1
      %vm8065 = vcmp.eq.s32.totalorder %v7995, 1
      %vm8066 = vcmp.eq.s32.totalorder %v7998, 1
      %vm8067 = vcmp.eq.s32.totalorder %v8001, 1
      %vm8068 = vcmp.eq.s32.totalorder %v8004, 1
      %vm8069 = vcmp.eq.s32.totalorder %v8007, 1
      %vm8070 = vcmp.eq.s32.totalorder %v8010, 1
      %vm8071 = vcmp.eq.s32.totalorder %v8013, 1
      %vm8072 = vcmp.eq.s32.totalorder %v8016, 1
      %vm8073 = vcmp.eq.s32.totalorder %v8019, 1
      %vm8074 = vcmp.eq.s32.totalorder %v8022, 1
      %vm8075 = vcmp.eq.s32.totalorder %v8025, 1
      %vm8076 = vcmp.eq.s32.totalorder %v8028, 1
      %vm8077 = vcmp.eq.s32.totalorder %v8031, 1
      %vm8078 = vcmp.eq.s32.totalorder %v8034, 1
      %vm8079 = vcmp.eq.s32.totalorder %v8037, 1
      %vm8080 = vcmp.eq.s32.totalorder %v8040, 1
      %vm8081 = vcmp.eq.s32.totalorder %v8043, 1
      %vm8082 = vcmp.eq.s32.totalorder %v8046, 1
      %vm8083 = vcmp.eq.s32.totalorder %v8049, 1
      %vm8084 = vcmp.eq.s32.totalorder %v8052, 1
      %v8085 = vsel %vm8053, %v1049, 0.0
      %v8086 = vsel %vm8054, %v1050, 0.0
      %v8087 = vsel %vm8055, %v1051, 0.0
      %v8088 = vsel %vm8056, %v1052, 0.0
      %v8089 = vsel %vm8057, %v1053, 0.0
      %v8090 = vsel %vm8058, %v1054, 0.0
      %v8091 = vsel %vm8059, %v1055, 0.0
      %v8092 = vsel %vm8060, %v1056, 0.0
      %v8093 = vsel %vm8061, %v1057, 0.0
      %v8094 = vsel %vm8062, %v1058, 0.0
      %v8095 = vsel %vm8063, %v1059, 0.0
      %v8096 = vsel %vm8064, %v1060, 0.0
      %v8097 = vsel %vm8065, %v1061, 0.0
      %v8098 = vsel %vm8066, %v1062, 0.0
      %v8099 = vsel %vm8067, %v1063, 0.0
      %v8100 = vsel %vm8068, %v1064, 0.0
      %v8101 = vsel %vm8069, %v1065, 0.0
      %v8102 = vsel %vm8070, %v1066, 0.0
      %v8103 = vsel %vm8071, %v1067, 0.0
      %v8104 = vsel %vm8072, %v1068, 0.0
      %v8105 = vsel %vm8073, %v1069, 0.0
      %v8106 = vsel %vm8074, %v1070, 0.0
      %v8107 = vsel %vm8075, %v1071, 0.0
      %v8108 = vsel %vm8076, %v1072, 0.0
      %v8109 = vsel %vm8077, %v1073, 0.0
      %v8110 = vsel %vm8078, %v1074, 0.0
      %v8111 = vsel %vm8079, %v1075, 0.0
      %v8112 = vsel %vm8080, %v1076, 0.0
      %v8113 = vsel %vm8081, %v1077, 0.0
      %v8114 = vsel %vm8082, %v1078, 0.0
      %v8115 = vsel %vm8083, %v1079, 0.0
      %v8116 = vsel %vm8084, %v1080, 0.0
      %v8117 = vsel %vm1081, %v8085, -inf
      %v8118 = vsel %vm1081, %v8086, -inf
      %v8119 = vsel %vm1081, %v8087, -inf
      %v8120 = vsel %vm1081, %v8088, -inf
      %v8121 = vsel %vm1081, %v8089, -inf
      %v8122 = vmax.f32 %v8117, %v8121
      %v8123 = vsel %vm1081, %v8090, -inf
      %v8124 = vmax.f32 %v8118, %v8123
      %v8125 = vsel %vm1081, %v8091, -inf
      %v8126 = vmax.f32 %v8119, %v8125
      %v8127 = vsel %vm1081, %v8092, -inf
      %v8128 = vmax.f32 %v8120, %v8127
      %v8129 = vsel %vm1081, %v8093, -inf
      %v8130 = vmax.f32 %v8122, %v8129
      %v8131 = vsel %vm1081, %v8094, -inf
      %v8132 = vmax.f32 %v8124, %v8131
      %v8133 = vsel %vm1081, %v8095, -inf
      %v8134 = vmax.f32 %v8126, %v8133
      %v8135 = vsel %vm1081, %v8096, -inf
      %v8136 = vmax.f32 %v8128, %v8135
      %v8137 = vsel %vm1081, %v8097, -inf
      %v8138 = vmax.f32 %v8130, %v8137
      %v8139 = vsel %vm1081, %v8098, -inf
      %v8140 = vmax.f32 %v8132, %v8139
      %v8141 = vsel %vm1081, %v8099, -inf
      %v8142 = vmax.f32 %v8134, %v8141
      %v8143 = vsel %vm1081, %v8100, -inf
      %v8144 = vmax.f32 %v8136, %v8143
      %v8145 = vsel %vm1081, %v8101, -inf
      %v8146 = vmax.f32 %v8138, %v8145
      %v8147 = vsel %vm1081, %v8102, -inf
      %v8148 = vmax.f32 %v8140, %v8147
      %v8149 = vsel %vm1081, %v8103, -inf
      %v8150 = vmax.f32 %v8142, %v8149
      %v8151 = vsel %vm1081, %v8104, -inf
      %v8152 = vmax.f32 %v8144, %v8151
      %v8153 = vsel %vm1081, %v8105, -inf
      %v8154 = vmax.f32 %v8146, %v8153
      %v8155 = vsel %vm1081, %v8106, -inf
      %v8156 = vmax.f32 %v8148, %v8155
      %v8157 = vsel %vm1081, %v8107, -inf
      %v8158 = vmax.f32 %v8150, %v8157
      %v8159 = vsel %vm1081, %v8108, -inf
      %v8160 = vmax.f32 %v8152, %v8159
      %v8161 = vsel %vm1081, %v8109, -inf
      %v8162 = vmax.f32 %v8154, %v8161
      %v8163 = vsel %vm1081, %v8110, -inf
      %v8164 = vmax.f32 %v8156, %v8163
      %v8165 = vsel %vm1081, %v8111, -inf
      %v8166 = vmax.f32 %v8158, %v8165
      %v8167 = vsel %vm1081, %v8112, -inf
      %v8168 = vmax.f32 %v8160, %v8167
      %v8169 = vsel %vm1081, %v8113, -inf
      %v8170 = vmax.f32 %v8162, %v8169
      %v8171 = vsel %vm1081, %v8114, -inf
      %v8172 = vmax.f32 %v8164, %v8171
      %v8173 = vsel %vm1081, %v8115, -inf
      %v8174 = vmax.f32 %v8166, %v8173
      %v8175 = vsel %vm1081, %v8116, -inf
      %v8176 = vmax.f32 %v8168, %v8175
      %v8177 = vmax.f32 %v8170, %v8172
      %v8178 = vmax.f32 %v8174, %v8176
      %v8179 = vmax.f32 %v8177, %v8178
      %v8180 = vrot.slane %v8179, 4
      %v8181 = vmax.f32 %v8179, %v8180
      %v8182 = vrot.slane %v8181, 2
      %v8183 = vmax.f32 %v8181, %v8182
      %v8184 = vrot.slane %v8183, 1
      %v8185 = vmax.f32 %v8183, %v8184
      %8186 = vset.pattern.permute.xlu0 30
      %8187 = vperm.xlu0 %8186, %v1284
      %v8188 = vpop.permute.xlu0 %8187
      %8189 = vset.pattern.permute.xlu0 30
      %8190 = vperm.xlu0 %8189, %v1285
      %v8191 = vpop.permute.xlu0 %8190
      %8192 = vset.pattern.permute.xlu0 30
      %8193 = vperm.xlu0 %8192, %v1286
      %v8194 = vpop.permute.xlu0 %8193
      %8195 = vset.pattern.permute.xlu0 30
      %8196 = vperm.xlu0 %8195, %v1287
      %v8197 = vpop.permute.xlu0 %8196
      %8198 = vset.pattern.permute.xlu0 30
      %8199 = vperm.xlu0 %8198, %v1288
      %v8200 = vpop.permute.xlu0 %8199
      %8201 = vset.pattern.permute.xlu0 30
      %8202 = vperm.xlu0 %8201, %v1289
      %v8203 = vpop.permute.xlu0 %8202
      %8204 = vset.pattern.permute.xlu0 30
      %8205 = vperm.xlu0 %8204, %v1290
      %v8206 = vpop.permute.xlu0 %8205
      %8207 = vset.pattern.permute.xlu0 30
      %8208 = vperm.xlu0 %8207, %v1291
      %v8209 = vpop.permute.xlu0 %8208
      %8210 = vset.pattern.permute.xlu0 30
      %8211 = vperm.xlu0 %8210, %v1292
      %v8212 = vpop.permute.xlu0 %8211
      %8213 = vset.pattern.permute.xlu0 30
      %8214 = vperm.xlu0 %8213, %v1293
      %v8215 = vpop.permute.xlu0 %8214
      %8216 = vset.pattern.permute.xlu0 30
      %8217 = vperm.xlu0 %8216, %v1294
      %v8218 = vpop.permute.xlu0 %8217
      %8219 = vset.pattern.permute.xlu0 30
      %8220 = vperm.xlu0 %8219, %v1295
      %v8221 = vpop.permute.xlu0 %8220
      %8222 = vset.pattern.permute.xlu0 30
      %8223 = vperm.xlu0 %8222, %v1296
      %v8224 = vpop.permute.xlu0 %8223
      %8225 = vset.pattern.permute.xlu0 30
      %8226 = vperm.xlu0 %8225, %v1297
      %v8227 = vpop.permute.xlu0 %8226
      %8228 = vset.pattern.permute.xlu0 30
      %8229 = vperm.xlu0 %8228, %v1298
      %v8230 = vpop.permute.xlu0 %8229
      %8231 = vset.pattern.permute.xlu0 30
      %8232 = vperm.xlu0 %8231, %v1299
      %v8233 = vpop.permute.xlu0 %8232
      %8234 = vset.pattern.permute.xlu0 30
      %8235 = vperm.xlu0 %8234, %v1300
      %v8236 = vpop.permute.xlu0 %8235
      %8237 = vset.pattern.permute.xlu0 30
      %8238 = vperm.xlu0 %8237, %v1301
      %v8239 = vpop.permute.xlu0 %8238
      %8240 = vset.pattern.permute.xlu0 30
      %8241 = vperm.xlu0 %8240, %v1302
      %v8242 = vpop.permute.xlu0 %8241
      %8243 = vset.pattern.permute.xlu0 30
      %8244 = vperm.xlu0 %8243, %v1303
      %v8245 = vpop.permute.xlu0 %8244
      %8246 = vset.pattern.permute.xlu0 30
      %8247 = vperm.xlu0 %8246, %v1304
      %v8248 = vpop.permute.xlu0 %8247
      %8249 = vset.pattern.permute.xlu0 30
      %8250 = vperm.xlu0 %8249, %v1305
      %v8251 = vpop.permute.xlu0 %8250
      %8252 = vset.pattern.permute.xlu0 30
      %8253 = vperm.xlu0 %8252, %v1306
      %v8254 = vpop.permute.xlu0 %8253
      %8255 = vset.pattern.permute.xlu0 30
      %8256 = vperm.xlu0 %8255, %v1307
      %v8257 = vpop.permute.xlu0 %8256
      %8258 = vset.pattern.permute.xlu0 30
      %8259 = vperm.xlu0 %8258, %v1308
      %v8260 = vpop.permute.xlu0 %8259
      %8261 = vset.pattern.permute.xlu0 30
      %8262 = vperm.xlu0 %8261, %v1309
      %v8263 = vpop.permute.xlu0 %8262
      %8264 = vset.pattern.permute.xlu0 30
      %8265 = vperm.xlu0 %8264, %v1310
      %v8266 = vpop.permute.xlu0 %8265
      %8267 = vset.pattern.permute.xlu0 30
      %8268 = vperm.xlu0 %8267, %v1311
      %v8269 = vpop.permute.xlu0 %8268
      %8270 = vset.pattern.permute.xlu0 30
      %8271 = vperm.xlu0 %8270, %v1312
      %v8272 = vpop.permute.xlu0 %8271
      %8273 = vset.pattern.permute.xlu0 30
      %8274 = vperm.xlu0 %8273, %v1313
      %v8275 = vpop.permute.xlu0 %8274
      %8276 = vset.pattern.permute.xlu0 30
      %8277 = vperm.xlu0 %8276, %v1314
      %v8278 = vpop.permute.xlu0 %8277
      %8279 = vset.pattern.permute.xlu0 30
      %8280 = vperm.xlu0 %8279, %v1315
      %v8281 = vpop.permute.xlu0 %8280
      %vm8282 = vcmp.eq.s32.totalorder %v8188, 1
      %vm8283 = vcmp.eq.s32.totalorder %v8191, 1
      %vm8284 = vcmp.eq.s32.totalorder %v8194, 1
      %vm8285 = vcmp.eq.s32.totalorder %v8197, 1
      %vm8286 = vcmp.eq.s32.totalorder %v8200, 1
      %vm8287 = vcmp.eq.s32.totalorder %v8203, 1
      %vm8288 = vcmp.eq.s32.totalorder %v8206, 1
      %vm8289 = vcmp.eq.s32.totalorder %v8209, 1
      %vm8290 = vcmp.eq.s32.totalorder %v8212, 1
      %vm8291 = vcmp.eq.s32.totalorder %v8215, 1
      %vm8292 = vcmp.eq.s32.totalorder %v8218, 1
      %vm8293 = vcmp.eq.s32.totalorder %v8221, 1
      %vm8294 = vcmp.eq.s32.totalorder %v8224, 1
      %vm8295 = vcmp.eq.s32.totalorder %v8227, 1
      %vm8296 = vcmp.eq.s32.totalorder %v8230, 1
      %vm8297 = vcmp.eq.s32.totalorder %v8233, 1
      %vm8298 = vcmp.eq.s32.totalorder %v8236, 1
      %vm8299 = vcmp.eq.s32.totalorder %v8239, 1
      %vm8300 = vcmp.eq.s32.totalorder %v8242, 1
      %vm8301 = vcmp.eq.s32.totalorder %v8245, 1
      %vm8302 = vcmp.eq.s32.totalorder %v8248, 1
      %vm8303 = vcmp.eq.s32.totalorder %v8251, 1
      %vm8304 = vcmp.eq.s32.totalorder %v8254, 1
      %vm8305 = vcmp.eq.s32.totalorder %v8257, 1
      %vm8306 = vcmp.eq.s32.totalorder %v8260, 1
      %vm8307 = vcmp.eq.s32.totalorder %v8263, 1
      %vm8308 = vcmp.eq.s32.totalorder %v8266, 1
      %vm8309 = vcmp.eq.s32.totalorder %v8269, 1
      %vm8310 = vcmp.eq.s32.totalorder %v8272, 1
      %vm8311 = vcmp.eq.s32.totalorder %v8275, 1
      %vm8312 = vcmp.eq.s32.totalorder %v8278, 1
      %vm8313 = vcmp.eq.s32.totalorder %v8281, 1
      %v8314 = vsel %vm8282, %v1049, 0.0
      %v8315 = vsel %vm8283, %v1050, 0.0
      %v8316 = vsel %vm8284, %v1051, 0.0
      %v8317 = vsel %vm8285, %v1052, 0.0
      %v8318 = vsel %vm8286, %v1053, 0.0
      %v8319 = vsel %vm8287, %v1054, 0.0
      %v8320 = vsel %vm8288, %v1055, 0.0
      %v8321 = vsel %vm8289, %v1056, 0.0
      %v8322 = vsel %vm8290, %v1057, 0.0
      %v8323 = vsel %vm8291, %v1058, 0.0
      %v8324 = vsel %vm8292, %v1059, 0.0
      %v8325 = vsel %vm8293, %v1060, 0.0
      %v8326 = vsel %vm8294, %v1061, 0.0
      %v8327 = vsel %vm8295, %v1062, 0.0
      %v8328 = vsel %vm8296, %v1063, 0.0
      %v8329 = vsel %vm8297, %v1064, 0.0
      %v8330 = vsel %vm8298, %v1065, 0.0
      %v8331 = vsel %vm8299, %v1066, 0.0
      %v8332 = vsel %vm8300, %v1067, 0.0
      %v8333 = vsel %vm8301, %v1068, 0.0
      %v8334 = vsel %vm8302, %v1069, 0.0
      %v8335 = vsel %vm8303, %v1070, 0.0
      %v8336 = vsel %vm8304, %v1071, 0.0
      %v8337 = vsel %vm8305, %v1072, 0.0
      %v8338 = vsel %vm8306, %v1073, 0.0
      %v8339 = vsel %vm8307, %v1074, 0.0
      %v8340 = vsel %vm8308, %v1075, 0.0
      %v8341 = vsel %vm8309, %v1076, 0.0
      %v8342 = vsel %vm8310, %v1077, 0.0
      %v8343 = vsel %vm8311, %v1078, 0.0
      %v8344 = vsel %vm8312, %v1079, 0.0
      %v8345 = vsel %vm8313, %v1080, 0.0
      %v8346 = vsel %vm1081, %v8314, -inf
      %v8347 = vsel %vm1081, %v8315, -inf
      %v8348 = vsel %vm1081, %v8316, -inf
      %v8349 = vsel %vm1081, %v8317, -inf
      %v8350 = vsel %vm1081, %v8318, -inf
      %v8351 = vmax.f32 %v8346, %v8350
      %v8352 = vsel %vm1081, %v8319, -inf
      %v8353 = vmax.f32 %v8347, %v8352
      %v8354 = vsel %vm1081, %v8320, -inf
      %v8355 = vmax.f32 %v8348, %v8354
      %v8356 = vsel %vm1081, %v8321, -inf
      %v8357 = vmax.f32 %v8349, %v8356
      %v8358 = vsel %vm1081, %v8322, -inf
      %v8359 = vmax.f32 %v8351, %v8358
      %v8360 = vsel %vm1081, %v8323, -inf
      %v8361 = vmax.f32 %v8353, %v8360
      %v8362 = vsel %vm1081, %v8324, -inf
      %v8363 = vmax.f32 %v8355, %v8362
      %v8364 = vsel %vm1081, %v8325, -inf
      %v8365 = vmax.f32 %v8357, %v8364
      %v8366 = vsel %vm1081, %v8326, -inf
      %v8367 = vmax.f32 %v8359, %v8366
      %v8368 = vsel %vm1081, %v8327, -inf
      %v8369 = vmax.f32 %v8361, %v8368
      %v8370 = vsel %vm1081, %v8328, -inf
      %v8371 = vmax.f32 %v8363, %v8370
      %v8372 = vsel %vm1081, %v8329, -inf
      %v8373 = vmax.f32 %v8365, %v8372
      %v8374 = vsel %vm1081, %v8330, -inf
      %v8375 = vmax.f32 %v8367, %v8374
      %v8376 = vsel %vm1081, %v8331, -inf
      %v8377 = vmax.f32 %v8369, %v8376
      %v8378 = vsel %vm1081, %v8332, -inf
      %v8379 = vmax.f32 %v8371, %v8378
      %v8380 = vsel %vm1081, %v8333, -inf
      %v8381 = vmax.f32 %v8373, %v8380
      %v8382 = vsel %vm1081, %v8334, -inf
      %v8383 = vmax.f32 %v8375, %v8382
      %v8384 = vsel %vm1081, %v8335, -inf
      %v8385 = vmax.f32 %v8377, %v8384
      %v8386 = vsel %vm1081, %v8336, -inf
      %v8387 = vmax.f32 %v8379, %v8386
      %v8388 = vsel %vm1081, %v8337, -inf
      %v8389 = vmax.f32 %v8381, %v8388
      %v8390 = vsel %vm1081, %v8338, -inf
      %v8391 = vmax.f32 %v8383, %v8390
      %v8392 = vsel %vm1081, %v8339, -inf
      %v8393 = vmax.f32 %v8385, %v8392
      %v8394 = vsel %vm1081, %v8340, -inf
      %v8395 = vmax.f32 %v8387, %v8394
      %v8396 = vsel %vm1081, %v8341, -inf
      %v8397 = vmax.f32 %v8389, %v8396
      %v8398 = vsel %vm1081, %v8342, -inf
      %v8399 = vmax.f32 %v8391, %v8398
      %v8400 = vsel %vm1081, %v8343, -inf
      %v8401 = vmax.f32 %v8393, %v8400
      %v8402 = vsel %vm1081, %v8344, -inf
      %v8403 = vmax.f32 %v8395, %v8402
      %v8404 = vsel %vm1081, %v8345, -inf
      %v8405 = vmax.f32 %v8397, %v8404
      %v8406 = vmax.f32 %v8399, %v8401
      %v8407 = vmax.f32 %v8403, %v8405
      %v8408 = vmax.f32 %v8406, %v8407
      %v8409 = vrot.slane %v8408, 4
      %v8410 = vmax.f32 %v8408, %v8409
      %v8411 = vrot.slane %v8410, 2
      %v8412 = vmax.f32 %v8410, %v8411
      %v8413 = vrot.slane %v8412, 1
      %v8414 = vmax.f32 %v8412, %v8413
      %8415 = vset.pattern.permute.xlu0 31
      %8416 = vperm.xlu0 %8415, %v1284
      %v8417 = vpop.permute.xlu0 %8416
      %8418 = vset.pattern.permute.xlu0 31
      %8419 = vperm.xlu0 %8418, %v1285
      %v8420 = vpop.permute.xlu0 %8419
      %8421 = vset.pattern.permute.xlu0 31
      %8422 = vperm.xlu0 %8421, %v1286
      %v8423 = vpop.permute.xlu0 %8422
      %8424 = vset.pattern.permute.xlu0 31
      %8425 = vperm.xlu0 %8424, %v1287
      %v8426 = vpop.permute.xlu0 %8425
      %8427 = vset.pattern.permute.xlu0 31
      %8428 = vperm.xlu0 %8427, %v1288
      %v8429 = vpop.permute.xlu0 %8428
      %8430 = vset.pattern.permute.xlu0 31
      %8431 = vperm.xlu0 %8430, %v1289
      %v8432 = vpop.permute.xlu0 %8431
      %8433 = vset.pattern.permute.xlu0 31
      %8434 = vperm.xlu0 %8433, %v1290
      %v8435 = vpop.permute.xlu0 %8434
      %8436 = vset.pattern.permute.xlu0 31
      %8437 = vperm.xlu0 %8436, %v1291
      %v8438 = vpop.permute.xlu0 %8437
      %8439 = vset.pattern.permute.xlu0 31
      %8440 = vperm.xlu0 %8439, %v1292
      %v8441 = vpop.permute.xlu0 %8440
      %8442 = vset.pattern.permute.xlu0 31
      %8443 = vperm.xlu0 %8442, %v1293
      %v8444 = vpop.permute.xlu0 %8443
      %8445 = vset.pattern.permute.xlu0 31
      %8446 = vperm.xlu0 %8445, %v1294
      %v8447 = vpop.permute.xlu0 %8446
      %8448 = vset.pattern.permute.xlu0 31
      %8449 = vperm.xlu0 %8448, %v1295
      %v8450 = vpop.permute.xlu0 %8449
      %8451 = vset.pattern.permute.xlu0 31
      %8452 = vperm.xlu0 %8451, %v1296
      %v8453 = vpop.permute.xlu0 %8452
      %8454 = vset.pattern.permute.xlu0 31
      %8455 = vperm.xlu0 %8454, %v1297
      %v8456 = vpop.permute.xlu0 %8455
      %8457 = vset.pattern.permute.xlu0 31
      %8458 = vperm.xlu0 %8457, %v1298
      %v8459 = vpop.permute.xlu0 %8458
      %8460 = vset.pattern.permute.xlu0 31
      %8461 = vperm.xlu0 %8460, %v1299
      %v8462 = vpop.permute.xlu0 %8461
      %8463 = vset.pattern.permute.xlu0 31
      %8464 = vperm.xlu0 %8463, %v1300
      %v8465 = vpop.permute.xlu0 %8464
      %8466 = vset.pattern.permute.xlu0 31
      %8467 = vperm.xlu0 %8466, %v1301
      %v8468 = vpop.permute.xlu0 %8467
      %8469 = vset.pattern.permute.xlu0 31
      %8470 = vperm.xlu0 %8469, %v1302
      %v8471 = vpop.permute.xlu0 %8470
      %8472 = vset.pattern.permute.xlu0 31
      %8473 = vperm.xlu0 %8472, %v1303
      %v8474 = vpop.permute.xlu0 %8473
      %8475 = vset.pattern.permute.xlu0 31
      %8476 = vperm.xlu0 %8475, %v1304
      %v8477 = vpop.permute.xlu0 %8476
      %8478 = vset.pattern.permute.xlu0 31
      %8479 = vperm.xlu0 %8478, %v1305
      %v8480 = vpop.permute.xlu0 %8479
      %8481 = vset.pattern.permute.xlu0 31
      %8482 = vperm.xlu0 %8481, %v1306
      %v8483 = vpop.permute.xlu0 %8482
      %8484 = vset.pattern.permute.xlu0 31
      %8485 = vperm.xlu0 %8484, %v1307
      %v8486 = vpop.permute.xlu0 %8485
      %8487 = vset.pattern.permute.xlu0 31
      %8488 = vperm.xlu0 %8487, %v1308
      %v8489 = vpop.permute.xlu0 %8488
      %8490 = vset.pattern.permute.xlu0 31
      %8491 = vperm.xlu0 %8490, %v1309
      %v8492 = vpop.permute.xlu0 %8491
      %8493 = vset.pattern.permute.xlu0 31
      %8494 = vperm.xlu0 %8493, %v1310
      %v8495 = vpop.permute.xlu0 %8494
      %8496 = vset.pattern.permute.xlu0 31
      %8497 = vperm.xlu0 %8496, %v1311
      %v8498 = vpop.permute.xlu0 %8497
      %8499 = vset.pattern.permute.xlu0 31
      %8500 = vperm.xlu0 %8499, %v1312
      %v8501 = vpop.permute.xlu0 %8500
      %8502 = vset.pattern.permute.xlu0 31
      %8503 = vperm.xlu0 %8502, %v1313
      %v8504 = vpop.permute.xlu0 %8503
      %8505 = vset.pattern.permute.xlu0 31
      %8506 = vperm.xlu0 %8505, %v1314
      %v8507 = vpop.permute.xlu0 %8506
      %8508 = vset.pattern.permute.xlu0 31
      %8509 = vperm.xlu0 %8508, %v1315
      %v8510 = vpop.permute.xlu0 %8509
      %vm8511 = vcmp.eq.s32.totalorder %v8417, 1
      %vm8512 = vcmp.eq.s32.totalorder %v8420, 1
      %vm8513 = vcmp.eq.s32.totalorder %v8423, 1
      %vm8514 = vcmp.eq.s32.totalorder %v8426, 1
      %vm8515 = vcmp.eq.s32.totalorder %v8429, 1
      %vm8516 = vcmp.eq.s32.totalorder %v8432, 1
      %vm8517 = vcmp.eq.s32.totalorder %v8435, 1
      %vm8518 = vcmp.eq.s32.totalorder %v8438, 1
      %vm8519 = vcmp.eq.s32.totalorder %v8441, 1
      %vm8520 = vcmp.eq.s32.totalorder %v8444, 1
      %vm8521 = vcmp.eq.s32.totalorder %v8447, 1
      %vm8522 = vcmp.eq.s32.totalorder %v8450, 1
      %vm8523 = vcmp.eq.s32.totalorder %v8453, 1
      %vm8524 = vcmp.eq.s32.totalorder %v8456, 1
      %vm8525 = vcmp.eq.s32.totalorder %v8459, 1
      %vm8526 = vcmp.eq.s32.totalorder %v8462, 1
      %vm8527 = vcmp.eq.s32.totalorder %v8465, 1
      %vm8528 = vcmp.eq.s32.totalorder %v8468, 1
      %vm8529 = vcmp.eq.s32.totalorder %v8471, 1
      %vm8530 = vcmp.eq.s32.totalorder %v8474, 1
      %vm8531 = vcmp.eq.s32.totalorder %v8477, 1
      %vm8532 = vcmp.eq.s32.totalorder %v8480, 1
      %vm8533 = vcmp.eq.s32.totalorder %v8483, 1
      %vm8534 = vcmp.eq.s32.totalorder %v8486, 1
      %vm8535 = vcmp.eq.s32.totalorder %v8489, 1
      %vm8536 = vcmp.eq.s32.totalorder %v8492, 1
      %vm8537 = vcmp.eq.s32.totalorder %v8495, 1
      %vm8538 = vcmp.eq.s32.totalorder %v8498, 1
      %vm8539 = vcmp.eq.s32.totalorder %v8501, 1
      %vm8540 = vcmp.eq.s32.totalorder %v8504, 1
      %vm8541 = vcmp.eq.s32.totalorder %v8507, 1
      %vm8542 = vcmp.eq.s32.totalorder %v8510, 1
      %v8543 = vsel %vm8511, %v1049, 0.0
      %v8544 = vsel %vm8512, %v1050, 0.0
      %v8545 = vsel %vm8513, %v1051, 0.0
      %v8546 = vsel %vm8514, %v1052, 0.0
      %v8547 = vsel %vm8515, %v1053, 0.0
      %v8548 = vsel %vm8516, %v1054, 0.0
      %v8549 = vsel %vm8517, %v1055, 0.0
      %v8550 = vsel %vm8518, %v1056, 0.0
      %v8551 = vsel %vm8519, %v1057, 0.0
      %v8552 = vsel %vm8520, %v1058, 0.0
      %v8553 = vsel %vm8521, %v1059, 0.0
      %v8554 = vsel %vm8522, %v1060, 0.0
      %v8555 = vsel %vm8523, %v1061, 0.0
      %v8556 = vsel %vm8524, %v1062, 0.0
      %v8557 = vsel %vm8525, %v1063, 0.0
      %v8558 = vsel %vm8526, %v1064, 0.0
      %v8559 = vsel %vm8527, %v1065, 0.0
      %v8560 = vsel %vm8528, %v1066, 0.0
      %v8561 = vsel %vm8529, %v1067, 0.0
      %v8562 = vsel %vm8530, %v1068, 0.0
      %v8563 = vsel %vm8531, %v1069, 0.0
      %v8564 = vsel %vm8532, %v1070, 0.0
      %v8565 = vsel %vm8533, %v1071, 0.0
      %v8566 = vsel %vm8534, %v1072, 0.0
      %v8567 = vsel %vm8535, %v1073, 0.0
      %v8568 = vsel %vm8536, %v1074, 0.0
      %v8569 = vsel %vm8537, %v1075, 0.0
      %v8570 = vsel %vm8538, %v1076, 0.0
      %v8571 = vsel %vm8539, %v1077, 0.0
      %v8572 = vsel %vm8540, %v1078, 0.0
      %v8573 = vsel %vm8541, %v1079, 0.0
      %v8574 = vsel %vm8542, %v1080, 0.0
      %v8575 = vsel %vm1081, %v8543, -inf
      %v8576 = vsel %vm1081, %v8544, -inf
      %v8577 = vsel %vm1081, %v8545, -inf
      %v8578 = vsel %vm1081, %v8546, -inf
      %v8579 = vsel %vm1081, %v8547, -inf
      %v8580 = vmax.f32 %v8575, %v8579
      %v8581 = vsel %vm1081, %v8548, -inf
      %v8582 = vmax.f32 %v8576, %v8581
      %v8583 = vsel %vm1081, %v8549, -inf
      %v8584 = vmax.f32 %v8577, %v8583
      %v8585 = vsel %vm1081, %v8550, -inf
      %v8586 = vmax.f32 %v8578, %v8585
      %v8587 = vsel %vm1081, %v8551, -inf
      %v8588 = vmax.f32 %v8580, %v8587
      %v8589 = vsel %vm1081, %v8552, -inf
      %v8590 = vmax.f32 %v8582, %v8589
      %v8591 = vsel %vm1081, %v8553, -inf
      %v8592 = vmax.f32 %v8584, %v8591
      %v8593 = vsel %vm1081, %v8554, -inf
      %v8594 = vmax.f32 %v8586, %v8593
      %v8595 = vsel %vm1081, %v8555, -inf
      %v8596 = vmax.f32 %v8588, %v8595
      %v8597 = vsel %vm1081, %v8556, -inf
      %v8598 = vmax.f32 %v8590, %v8597
      %v8599 = vsel %vm1081, %v8557, -inf
      %v8600 = vmax.f32 %v8592, %v8599
      %v8601 = vsel %vm1081, %v8558, -inf
      %v8602 = vmax.f32 %v8594, %v8601
      %v8603 = vsel %vm1081, %v8559, -inf
      %v8604 = vmax.f32 %v8596, %v8603
      %v8605 = vsel %vm1081, %v8560, -inf
      %v8606 = vmax.f32 %v8598, %v8605
      %v8607 = vsel %vm1081, %v8561, -inf
      %v8608 = vmax.f32 %v8600, %v8607
      %v8609 = vsel %vm1081, %v8562, -inf
      %v8610 = vmax.f32 %v8602, %v8609
      %v8611 = vsel %vm1081, %v8563, -inf
      %v8612 = vmax.f32 %v8604, %v8611
      %v8613 = vsel %vm1081, %v8564, -inf
      %v8614 = vmax.f32 %v8606, %v8613
      %v8615 = vsel %vm1081, %v8565, -inf
      %v8616 = vmax.f32 %v8608, %v8615
      %v8617 = vsel %vm1081, %v8566, -inf
      %v8618 = vmax.f32 %v8610, %v8617
      %v8619 = vsel %vm1081, %v8567, -inf
      %v8620 = vmax.f32 %v8612, %v8619
      %v8621 = vsel %vm1081, %v8568, -inf
      %v8622 = vmax.f32 %v8614, %v8621
      %v8623 = vsel %vm1081, %v8569, -inf
      %v8624 = vmax.f32 %v8616, %v8623
      %v8625 = vsel %vm1081, %v8570, -inf
      %v8626 = vmax.f32 %v8618, %v8625
      %v8627 = vsel %vm1081, %v8571, -inf
      %v8628 = vmax.f32 %v8620, %v8627
      %v8629 = vsel %vm1081, %v8572, -inf
      %v8630 = vmax.f32 %v8622, %v8629
      %v8631 = vsel %vm1081, %v8573, -inf
      %v8632 = vmax.f32 %v8624, %v8631
      %v8633 = vsel %vm1081, %v8574, -inf
      %v8634 = vmax.f32 %v8626, %v8633
      %v8635 = vmax.f32 %v8628, %v8630
      %v8636 = vmax.f32 %v8632, %v8634
      %v8637 = vmax.f32 %v8635, %v8636
      %v8638 = vrot.slane %v8637, 4
      %v8639 = vmax.f32 %v8637, %v8638
      %v8640 = vrot.slane %v8639, 2
      %v8641 = vmax.f32 %v8639, %v8640
      %v8642 = vrot.slane %v8641, 1
      %v8643 = vmax.f32 %v8641, %v8642
      %vm8644 = vcmask 1040384
      %v8645 = vsel %vm8644, %v1544, %v1773
      %vm8646 = vcmask 1041408
      %v8647 = vsel %vm8646, %v8645, %v2002
      %vm8648 = vcmask 1042432
      %v8649 = vsel %vm8648, %v8647, %v2231
      %vm8650 = vcmask 1043456
      %v8651 = vsel %vm8650, %v8649, %v2460
      %vm8652 = vcmask 1044480
      %v8653 = vsel %vm8652, %v8651, %v2689
      %vm8654 = vcmask 1045504
      %v8655 = vsel %vm8654, %v8653, %v2918
      %v8656 = vsel %vm436, %v8655, %v3147
      %v8657 = vsel %vm8644, %v3376, %v3605
      %v8658 = vsel %vm8646, %v8657, %v3834
      %v8659 = vsel %vm8648, %v8658, %v4063
      %v8660 = vsel %vm8650, %v8659, %v4292
      %v8661 = vsel %vm8652, %v8660, %v4521
      %v8662 = vsel %vm8654, %v8661, %v4750
      %v8663 = vsel %vm436, %v8662, %v4979
      %v8664 = vsel %vm8644, %v5208, %v5437
      %v8665 = vsel %vm8646, %v8664, %v5666
      %v8666 = vsel %vm8648, %v8665, %v5895
      %v8667 = vsel %vm8650, %v8666, %v6124
      %v8668 = vsel %vm8652, %v8667, %v6353
      %v8669 = vsel %vm8654, %v8668, %v6582
      %v8670 = vsel %vm436, %v8669, %v6811
      %v8671 = vsel %vm8644, %v7040, %v7269
      %v8672 = vsel %vm8646, %v8671, %v7498
      %v8673 = vsel %vm8648, %v8672, %v7727
      %v8674 = vsel %vm8650, %v8673, %v7956
      %v8675 = vsel %vm8652, %v8674, %v8185
      %v8676 = vsel %vm8654, %v8675, %v8414
      %v8677 = vsel %vm436, %v8676, %v8643
      %v8678 = vld [vmem:[%s6] sm:$0xff]
      %v8679 = vld [vmem:[%s6 + $0x8] sm:$0xff]
      %v8680 = vld [vmem:[%s6 + $0x10] sm:$0xff]
      %v8681 = vld [vmem:[%s6 + $0x18] sm:$0xff]
      %v8682 = vmax.f32 %v8678, %v8656
      %v8683 = vmax.f32 %v8679, %v8663
      %v8684 = vmax.f32 %v8680, %v8670
      %v8685 = vmax.f32 %v8681, %v8677
      %8686 = vst.msk [vmem:[%s6] sm:$0xff] %vm1081, %v8682
      %8687 = vst.msk [vmem:[%s6 + $0x8] sm:$0xff] %vm1081, %v8683
      %8688 = vst.msk [vmem:[%s6 + $0x10] sm:$0xff] %vm1081, %v8684
      %8689 = vst.msk [vmem:[%s6 + $0x18] sm:$0xff] %vm1081, %v8685
      %s8690 = smul.u32 32, %s18
      %p8691 = scmp.lt.s32.totalorder %s8690, 127
      %s8692 = scalar_select %p8691, %s8690, 127
      %s8693 = smul.addr %s8692, 8
      %s8694 = scalar_lea.vmem %s5, %s8693
      // Predicated region
      $region45: #{tpu_custom_call.1} parent=39 // pred_check
        %p8695 = pneg %p156
      $region46: #{tpu_custom_call.1} parent=39 // pred_check_branch
        %8697 = sbr.rel (%p8695) target = $region48
      $region47: #{tpu_custom_call.1} parent=39 // pred_region
        %s8698 = smul.u32 32, %s18
      $region48: #{tpu_custom_call.1} parent=39 // pred_fallthru
        _
      // Predicated region
      $region49: #{tpu_custom_call.1} parent=39 // pred_check
        %p8699 = pneg %p177
      $region50: #{tpu_custom_call.1} parent=39 // pred_check_branch
        %8701 = sbr.rel (%p8699) target = $region52
      $region51: #{tpu_custom_call.1} parent=39 // pred_region
        _
      $region52: #{tpu_custom_call.1} parent=39 // pred_fallthru
        _
      // Predicated region
      $region53: #{tpu_custom_call.1} parent=39 // pred_check
        %p8702 = pneg %p177
      $region54: #{tpu_custom_call.1} parent=39 // pred_check_branch
        %8704 = sbr.rel (%p8702) target = $region56
      $region55: #{tpu_custom_call.1} parent=39 // pred_region
        _
      $region56: #{tpu_custom_call.1} parent=39 // pred_fallthru
        _
    $region40: #{tpu_custom_call.1} parent=5 // pred_fallthru
      _
    %p8705 = scmp.le.s32.totalorder 2, %s13
    // Predicated region
    $region57: #{tpu_custom_call.1} parent=5 // pred_check
      %p8706 = pneg %p8705
    $region58: #{tpu_custom_call.1} parent=5 // pred_check_branch
      %8708 = sbr.rel (%p8706) target = $region60
    $region59: #{tpu_custom_call.1} parent=5 // pred_region
      %s8709 = ssub.s32 %s13, 2
      // Predicated region
      $region61: #{tpu_custom_call.1} parent=59 // pred_check
        %p8710 = pneg %p162
      $region62: #{tpu_custom_call.1} parent=59 // pred_check_branch
        %8712 = sbr.rel (%p8710) target = $region64
      $region63: #{tpu_custom_call.1} parent=59 // pred_region
        %s8713 = smul.u32 32, %s19
        %p8714 = scmp.lt.s32.totalorder %s8713, 127
        %s8715 = scalar_select %p8714, %s8713, 127
        %s8716 = smul.addr %s8715, 8
        %s8717 = scalar_lea.vmem %s5, %s8716
      $region64: #{tpu_custom_call.1} parent=59 // pred_fallthru
        _
    $region60: #{tpu_custom_call.1} parent=5 // pred_fallthru
      _
  $region6: #{tpu_custom_call.1} parent=0 // loop_footer
    %s17 = sadd.s32 1, %s13
  $region7: #{tpu_custom_call.1} parent=0 // loop_footer_branch
    %12 = sbr.rel target = $region3
  $region8: #{tpu_custom_call.1} parent=0 // loop_exit
    _

</llo_original>
